<compile_context>
chip_gen: v7x
topology: tpu7x:2x2x1
jax: 0.10.0
libtpu: 0.0.40
codegen_flags: <defaults>
</compile_context>

<pallas_src>
import functools
import math

import jax
import jax.numpy as jnp
from jax.experimental import pallas as pl
from jax.experimental.pallas import tpu as pltpu


# ----------------------------------------------------------------------------
# Fused Pallas kernel: the whole AttentionBlock2 forward in one invocation.
#
# refs = (x_ref, *param_refs, o_ref).  The parameter refs are consumed strictly in
# the order produced by `fold_and_flatten_params` below.
# ----------------------------------------------------------------------------

def _fused_forward_kernel(*refs):
    x_ref = refs[0]
    o_ref = refs[-1]
    it = iter(refs[1:-1])

    def lin(x, relu=False):
        # y = x @ W' + b'   (BatchNorm already folded into W', b')
        w = next(it)[...]
        b = next(it)[...]
        y = jnp.dot(x, w, preferred_element_type=jnp.float32) + b
        return jnp.maximum(y, 0.0) if relu else y

    def lin_cat(x_top, x_bot, relu=False):
        # split-weight matmul standing in for a channel-concat followed by a linear
        w_top = next(it)[...]
        w_bot = next(it)[...]
        b = next(it)[...]
        y = (jnp.dot(x_top, w_top, preferred_element_type=jnp.float32)
             + jnp.dot(x_bot, w_bot, preferred_element_type=jnp.float32) + b)
        return jnp.maximum(y, 0.0) if relu else y

    def resblock(x, has_down):
        y = lin(x, relu=True)     # conv1 + BN + ReLU
        y = lin(y)                # conv2 + BN
        d = lin(x) if has_down else x
        return jnp.maximum(y + d, 0.0)

    def resblock_cat(x_top, x_bot):
        y = lin_cat(x_top, x_bot, relu=True)
        y = lin(y)
        d = lin_cat(x_top, x_bot)
        return jnp.maximum(y + d, 0.0)

    x = x_ref[...]                       # (2N, Cin): rows [0:N)=hidden, [N:2N)=query
    n = x.shape[0] // 2

    # stem (shared weights -> run on the stacked batch)
    h0 = lin(x, relu=True)               # (2N, 8)   [hidden_vinit ; query_vinit]

    # downsample1
    d1 = lin(h0, relu=True)              # BasicConvolutionBlock
    d1 = resblock(d1, has_down=True)     # 8 -> 16
    d1 = resblock(d1, has_down=False)    # 16 -> 16   => (2N, 16) [hidden_l1 ; query_l1]

    # downsample2
    d2 = lin(d1, relu=True)
    d2 = resblock(d2, has_down=True)     # 16 -> 32
    d2 = resblock(d2, has_down=False)    # 32 -> 32   => (2N, 32) [hidden_l2 ; query_l2]

    hidden_l2 = d2[:n]
    query_l2 = d2[n:]
    query_vinit = h0[n:]
    query_l1 = d1[n:]

    # --- attention (1/sqrt(hidden_dim) already folded into Wq/bq) ---------------
    q = lin(query_l2)                    # (N, 32)
    k = lin(hidden_l2)                   # (N, 32)
    v = lin(hidden_l2)                   # (N, 32)
    s = jax.lax.dot_general(q, k, (((1,), (1,)), ((), ())),
                            preferred_element_type=jnp.float32)   # q @ k^T
    m = jnp.max(s, axis=-1, keepdims=True)
    p = jnp.exp(s - m)
    l = jnp.sum(p, axis=-1, keepdims=True)
    attn = jnp.dot(p, v, preferred_element_type=jnp.float32)
    attn = attn * pl.reciprocal(l, approx=True)                   # (N, 32)

    # point_transforms[0] + residual add (voxel<->point maps are identity here)
    q_pbottom = attn + lin(query_vinit, relu=True)                # (N, 32)

    # upsample1: deconv, then residual blocks on concat([up, query_l1])
    u1 = lin(q_pbottom, relu=True)                                # (N, 24)
    u1 = resblock_cat(u1, query_l1)                               # (24 + 16) -> 24
    u1 = resblock(u1, has_down=False)                             # 24 -> 24

    # upsample2: deconv, then residual blocks on concat([up, query_vinit])
    u2 = lin(u1, relu=True)                                       # (N, 24)
    u2 = resblock_cat(u2, query_vinit)                            # (24 + 8) -> 24
    u2 = resblock(u2, has_down=False)                             # 24 -> 24

    # point_transforms[1] + final residual add
    out = u2 + lin(q_pbottom, relu=True)                          # (N, 24)
    o_ref[...] = out


# ----------------------------------------------------------------------------
# Wrapper: BN folding, stream stacking, parameter flattening, single pallas_call
# ----------------------------------------------------------------------------

def _fold_bn(layer, extra_scale=1.0):
    """Fold BatchNorm (eps=1e-5) and an optional extra scalar into (W, b)."""
    scale = layer["gamma"] * jax.lax.rsqrt(layer["var"] + 1e-5)
    w = layer["W"] * (scale * extra_scale)
    b = ((layer["b"] - layer["mean"]) * scale + layer["beta"]) * extra_scale
    return w, b


def fold_and_flatten_params(params):
    """Flat list of folded weights/biases, in the exact kernel consumption order."""
    flat = []

    def add(layer, extra_scale=1.0):
        w, b = _fold_bn(layer, extra_scale)
        flat.extend([w, b])

    def add_split(layer, top):
        w, b = _fold_bn(layer)
        flat.extend([w[:top], w[top:], b])   # split rows: [x_up ; x_skip] concat

    def add_res(rp):
        add(rp["conv1"])
        add(rp["conv2"])
        if rp["down"] is not None:
            add(rp["down"])

    def add_res_split(rp, top):
        add_split(rp["conv1"], top)
        add(rp["conv2"])
        add_split(rp["down"], top)

    add(params["stem"])
    add(params["down1"]["bcb"])
    add_res(params["down1"]["rb1"])
    add_res(params["down1"]["rb2"])
    add(params["down2"]["bcb"])
    add_res(params["down2"]["rb1"])
    add_res(params["down2"]["rb2"])
    add(params["attn"]["wq"], extra_scale=1.0 / math.sqrt(32.0))  # attention scale
    add(params["attn"]["wk"])
    add(params["attn"]["wv"])
    add(params["pt0"])
    add(params["up1"]["deconv"])
    add_res_split(params["up1"]["rb1"], top=24)   # concat([u1(24), query_l1(16)])
    add_res(params["up1"]["rb2"])
    add(params["up2"]["deconv"])
    add_res_split(params["up2"]["rb1"], top=24)   # concat([u2(24), query_vinit(8)])
    add_res(params["up2"]["rb2"])
    add(params["pt1"])
    return flat


def attention_block2_forward(params, hidden_f, query_f):
    # TODO(synk): initial_voxelize / voxel_to_point / point_to_voxel (sparse trilinear
    # scatter/gather) and the stride-2 sparse (de)conv coordinate maps have no clean
    # Pallas equivalent; they act as identity on the fixed point set here.
    n, _ = hidden_f.shape
    x = jnp.concatenate([hidden_f, query_f], axis=0)      # (2N, Cin) stacked streams
    flat_params = fold_and_flatten_params(params)
    out = pl.pallas_call(
        _fused_forward_kernel,
        out_shape=jax.ShapeDtypeStruct((n, 24), jnp.float32),
        compiler_params=pltpu.CompilerParams(vmem_limit_bytes=16 * 1024 * 1024),
    )(x, *flat_params)
    return out


# ----------------------------------------------------------------------------
# Deterministic parameter construction (identity BatchNorm stats, as after init)
# ----------------------------------------------------------------------------

def _linear_bn_params(key, inc, outc, bias=False):
    kw, kb = jax.random.split(key)
    w = jax.random.normal(kw, (inc, outc), jnp.float32) * (1.0 / math.sqrt(inc))
    b = (jax.random.normal(kb, (1, outc), jnp.float32) * 0.01
         if bias else jnp.zeros((1, outc), jnp.float32))
    return dict(
        W=w, b=b,
        gamma=jnp.ones((1, outc), jnp.float32),
        beta=jnp.zeros((1, outc), jnp.float32),
        mean=jnp.zeros((1, outc), jnp.float32),
        var=jnp.ones((1, outc), jnp.float32),
    )


def _residual_params(key, inc, outc):
    k1, k2, k3 = jax.random.split(key, 3)
    return dict(
        conv1=_linear_bn_params(k1, inc, outc),
        conv2=_linear_bn_params(k2, outc, outc),
        down=None if inc == outc else _linear_bn_params(k3, inc, outc),
    )


def init_params(key, in_channels):
    cs = [8, 16, 32, 24, 24]
    keys = iter(jax.random.split(key, 32))
    nk = lambda: next(keys)
    params = {}
    params["stem"] = _linear_bn_params(nk(), in_channels, cs[0])
    params["down1"] = dict(
        bcb=_linear_bn_params(nk(), cs[0], cs[0]),
        rb1=_residual_params(nk(), cs[0], cs[1]),
        rb2=_residual_params(nk(), cs[1], cs[1]))
    params["down2"] = dict(
        bcb=_linear_bn_params(nk(), cs[1], cs[1]),
        rb1=_residual_params(nk(), cs[1], cs[2]),
        rb2=_residual_params(nk(), cs[2], cs[2]))
    params["up1"] = dict(
        deconv=_linear_bn_params(nk(), cs[2], cs[3]),
        rb1=_residual_params(nk(), cs[3] + cs[1], cs[3]),
        rb2=_residual_params(nk(), cs[3], cs[3]))
    params["up2"] = dict(
        deconv=_linear_bn_params(nk(), cs[3], cs[4]),
        rb1=_residual_params(nk(), cs[4] + cs[0], cs[4]),
        rb2=_residual_params(nk(), cs[4], cs[4]))
    params["pt0"] = _linear_bn_params(nk(), cs[0], cs[2], bias=True)
    params["pt1"] = _linear_bn_params(nk(), cs[2], cs[4], bias=True)
    params["attn"] = dict(
        wq=_linear_bn_params(nk(), 32, 32),
        wk=_linear_bn_params(nk(), 32, 32),
        wv=_linear_bn_params(nk(), 32, 32))
    return params


# ----------------------------------------------------------------------------

if __name__ == "__main__":
    key = jax.random.PRNGKey(0)
    k_h, k_q, k_p = jax.random.split(key, 3)

    N = 64            # number of points / active voxels
    IN_CHANNELS = 4   # input feature channels

    hidden_feats = jax.random.normal(k_h, (N, IN_CHANNELS), jnp.float32)
    query_feats = jax.random.normal(k_q, (N, IN_CHANNELS), jnp.float32)
    params = init_params(k_p, IN_CHANNELS)

    fwd = jax.jit(attention_block2_forward)
    out = fwd(params, hidden_feats, query_feats)
    jax.block_until_ready(out)
    assert out.shape == (N, 24)
    print("KERNEL_OK")
</pallas_src>

<mosaic_0001>
module attributes {stable_mosaic.version = 11 : i64} {
  func.func @_fused_forward_kernel(%arg0: memref<128x4xf32, #tpu.memory_space<vmem>>, %arg1: memref<4x8xf32, #tpu.memory_space<vmem>>, %arg2: memref<1x8xf32, #tpu.memory_space<vmem>>, %arg3: memref<8x8xf32, #tpu.memory_space<vmem>>, %arg4: memref<1x8xf32, #tpu.memory_space<vmem>>, %arg5: memref<8x16xf32, #tpu.memory_space<vmem>>, %arg6: memref<1x16xf32, #tpu.memory_space<vmem>>, %arg7: memref<16x16xf32, #tpu.memory_space<vmem>>, %arg8: memref<1x16xf32, #tpu.memory_space<vmem>>, %arg9: memref<8x16xf32, #tpu.memory_space<vmem>>, %arg10: memref<1x16xf32, #tpu.memory_space<vmem>>, %arg11: memref<16x16xf32, #tpu.memory_space<vmem>>, %arg12: memref<1x16xf32, #tpu.memory_space<vmem>>, %arg13: memref<16x16xf32, #tpu.memory_space<vmem>>, %arg14: memref<1x16xf32, #tpu.memory_space<vmem>>, %arg15: memref<16x16xf32, #tpu.memory_space<vmem>>, %arg16: memref<1x16xf32, #tpu.memory_space<vmem>>, %arg17: memref<16x32xf32, #tpu.memory_space<vmem>>, %arg18: memref<1x32xf32, #tpu.memory_space<vmem>>, %arg19: memref<32x32xf32, #tpu.memory_space<vmem>>, %arg20: memref<1x32xf32, #tpu.memory_space<vmem>>, %arg21: memref<16x32xf32, #tpu.memory_space<vmem>>, %arg22: memref<1x32xf32, #tpu.memory_space<vmem>>, %arg23: memref<32x32xf32, #tpu.memory_space<vmem>>, %arg24: memref<1x32xf32, #tpu.memory_space<vmem>>, %arg25: memref<32x32xf32, #tpu.memory_space<vmem>>, %arg26: memref<1x32xf32, #tpu.memory_space<vmem>>, %arg27: memref<32x32xf32, #tpu.memory_space<vmem>>, %arg28: memref<1x32xf32, #tpu.memory_space<vmem>>, %arg29: memref<32x32xf32, #tpu.memory_space<vmem>>, %arg30: memref<1x32xf32, #tpu.memory_space<vmem>>, %arg31: memref<32x32xf32, #tpu.memory_space<vmem>>, %arg32: memref<1x32xf32, #tpu.memory_space<vmem>>, %arg33: memref<8x32xf32, #tpu.memory_space<vmem>>, %arg34: memref<1x32xf32, #tpu.memory_space<vmem>>, %arg35: memref<32x24xf32, #tpu.memory_space<vmem>>, %arg36: memref<1x24xf32, #tpu.memory_space<vmem>>, %arg37: memref<24x24xf32, #tpu.memory_space<vmem>>, %arg38: memref<16x24xf32, #tpu.memory_space<vmem>>, %arg39: memref<1x24xf32, #tpu.memory_space<vmem>>, %arg40: memref<24x24xf32, #tpu.memory_space<vmem>>, %arg41: memref<1x24xf32, #tpu.memory_space<vmem>>, %arg42: memref<24x24xf32, #tpu.memory_space<vmem>>, %arg43: memref<16x24xf32, #tpu.memory_space<vmem>>, %arg44: memref<1x24xf32, #tpu.memory_space<vmem>>, %arg45: memref<24x24xf32, #tpu.memory_space<vmem>>, %arg46: memref<1x24xf32, #tpu.memory_space<vmem>>, %arg47: memref<24x24xf32, #tpu.memory_space<vmem>>, %arg48: memref<1x24xf32, #tpu.memory_space<vmem>>, %arg49: memref<24x24xf32, #tpu.memory_space<vmem>>, %arg50: memref<1x24xf32, #tpu.memory_space<vmem>>, %arg51: memref<24x24xf32, #tpu.memory_space<vmem>>, %arg52: memref<8x24xf32, #tpu.memory_space<vmem>>, %arg53: memref<1x24xf32, #tpu.memory_space<vmem>>, %arg54: memref<24x24xf32, #tpu.memory_space<vmem>>, %arg55: memref<1x24xf32, #tpu.memory_space<vmem>>, %arg56: memref<24x24xf32, #tpu.memory_space<vmem>>, %arg57: memref<8x24xf32, #tpu.memory_space<vmem>>, %arg58: memref<1x24xf32, #tpu.memory_space<vmem>>, %arg59: memref<24x24xf32, #tpu.memory_space<vmem>>, %arg60: memref<1x24xf32, #tpu.memory_space<vmem>>, %arg61: memref<24x24xf32, #tpu.memory_space<vmem>>, %arg62: memref<1x24xf32, #tpu.memory_space<vmem>>, %arg63: memref<32x24xf32, #tpu.memory_space<vmem>>, %arg64: memref<1x24xf32, #tpu.memory_space<vmem>>, %arg65: memref<64x24xf32, #tpu.memory_space<vmem>>) attributes {dimension_semantics = [], scalar_prefetch = 0 : i64, scratch_operands = 0 : i64, tpu.core_type = #tpu.core_type<tc>} {
    %c0 = arith.constant 0 : index
    %c0_0 = arith.constant 0 : index
    %0 = vector.load %arg0[%c0, %c0_0] : memref<128x4xf32, #tpu.memory_space<vmem>>, vector<128x4xf32>
    %c0_1 = arith.constant 0 : index
    %c0_2 = arith.constant 0 : index
    %1 = vector.load %arg1[%c0_1, %c0_2] : memref<4x8xf32, #tpu.memory_space<vmem>>, vector<4x8xf32>
    %c0_3 = arith.constant 0 : index
    %c0_4 = arith.constant 0 : index
    %2 = vector.load %arg2[%c0_3, %c0_4] : memref<1x8xf32, #tpu.memory_space<vmem>>, vector<1x8xf32>
    %cst = arith.constant dense<0.000000e+00> : vector<128x8xf32>
    %3 = tpu.matmul %0, %1, %cst {dimension_numbers = #tpu.dot_dimension_numbers<[1], [0], [0], [1], [0, 0, 1, 1], [], []>} : vector<128x4xf32>, vector<4x8xf32>, vector<128x8xf32> -> vector<128x8xf32>
    %4 = vector.broadcast %2 : vector<1x8xf32> to vector<128x8xf32>
    %5 = arith.addf %3, %4 : vector<128x8xf32>
    %cst_5 = arith.constant 0.000000e+00 : f32
    %6 = vector.broadcast %cst_5 : f32 to vector<128x8xf32>
    %7 = arith.maximumf %5, %6 : vector<128x8xf32>
    %c0_6 = arith.constant 0 : index
    %c0_7 = arith.constant 0 : index
    %8 = vector.load %arg3[%c0_6, %c0_7] : memref<8x8xf32, #tpu.memory_space<vmem>>, vector<8x8xf32>
    %c0_8 = arith.constant 0 : index
    %c0_9 = arith.constant 0 : index
    %9 = vector.load %arg4[%c0_8, %c0_9] : memref<1x8xf32, #tpu.memory_space<vmem>>, vector<1x8xf32>
    %cst_10 = arith.constant dense<0.000000e+00> : vector<128x8xf32>
    %10 = tpu.matmul %7, %8, %cst_10 {dimension_numbers = #tpu.dot_dimension_numbers<[1], [0], [0], [1], [0, 0, 1, 1], [], []>} : vector<128x8xf32>, vector<8x8xf32>, vector<128x8xf32> -> vector<128x8xf32>
    %11 = vector.broadcast %9 : vector<1x8xf32> to vector<128x8xf32>
    %12 = arith.addf %10, %11 : vector<128x8xf32>
    %cst_11 = arith.constant 0.000000e+00 : f32
    %13 = vector.broadcast %cst_11 : f32 to vector<128x8xf32>
    %14 = arith.maximumf %12, %13 : vector<128x8xf32>
    %c0_12 = arith.constant 0 : index
    %c0_13 = arith.constant 0 : index
    %15 = vector.load %arg5[%c0_12, %c0_13] : memref<8x16xf32, #tpu.memory_space<vmem>>, vector<8x16xf32>
    %c0_14 = arith.constant 0 : index
    %c0_15 = arith.constant 0 : index
    %16 = vector.load %arg6[%c0_14, %c0_15] : memref<1x16xf32, #tpu.memory_space<vmem>>, vector<1x16xf32>
    %cst_16 = arith.constant dense<0.000000e+00> : vector<128x16xf32>
    %17 = tpu.matmul %14, %15, %cst_16 {dimension_numbers = #tpu.dot_dimension_numbers<[1], [0], [0], [1], [0, 0, 1, 1], [], []>} : vector<128x8xf32>, vector<8x16xf32>, vector<128x16xf32> -> vector<128x16xf32>
    %18 = vector.broadcast %16 : vector<1x16xf32> to vector<128x16xf32>
    %19 = arith.addf %17, %18 : vector<128x16xf32>
    %cst_17 = arith.constant 0.000000e+00 : f32
    %20 = vector.broadcast %cst_17 : f32 to vector<128x16xf32>
    %21 = arith.maximumf %19, %20 : vector<128x16xf32>
    %c0_18 = arith.constant 0 : index
    %c0_19 = arith.constant 0 : index
    %22 = vector.load %arg7[%c0_18, %c0_19] : memref<16x16xf32, #tpu.memory_space<vmem>>, vector<16x16xf32>
    %c0_20 = arith.constant 0 : index
    %c0_21 = arith.constant 0 : index
    %23 = vector.load %arg8[%c0_20, %c0_21] : memref<1x16xf32, #tpu.memory_space<vmem>>, vector<1x16xf32>
    %cst_22 = arith.constant dense<0.000000e+00> : vector<128x16xf32>
    %24 = tpu.matmul %21, %22, %cst_22 {dimension_numbers = #tpu.dot_dimension_numbers<[1], [0], [0], [1], [0, 0, 1, 1], [], []>} : vector<128x16xf32>, vector<16x16xf32>, vector<128x16xf32> -> vector<128x16xf32>
    %25 = vector.broadcast %23 : vector<1x16xf32> to vector<128x16xf32>
    %26 = arith.addf %24, %25 : vector<128x16xf32>
    %c0_23 = arith.constant 0 : index
    %c0_24 = arith.constant 0 : index
    %27 = vector.load %arg9[%c0_23, %c0_24] : memref<8x16xf32, #tpu.memory_space<vmem>>, vector<8x16xf32>
    %c0_25 = arith.constant 0 : index
    %c0_26 = arith.constant 0 : index
    %28 = vector.load %arg10[%c0_25, %c0_26] : memref<1x16xf32, #tpu.memory_space<vmem>>, vector<1x16xf32>
    %cst_27 = arith.constant dense<0.000000e+00> : vector<128x16xf32>
    %29 = tpu.matmul %14, %27, %cst_27 {dimension_numbers = #tpu.dot_dimension_numbers<[1], [0], [0], [1], [0, 0, 1, 1], [], []>} : vector<128x8xf32>, vector<8x16xf32>, vector<128x16xf32> -> vector<128x16xf32>
    %30 = vector.broadcast %28 : vector<1x16xf32> to vector<128x16xf32>
    %31 = arith.addf %29, %30 : vector<128x16xf32>
    %32 = arith.addf %26, %31 : vector<128x16xf32>
    %cst_28 = arith.constant 0.000000e+00 : f32
    %33 = vector.broadcast %cst_28 : f32 to vector<128x16xf32>
    %34 = arith.maximumf %32, %33 : vector<128x16xf32>
    %c0_29 = arith.constant 0 : index
    %c0_30 = arith.constant 0 : index
    %35 = vector.load %arg11[%c0_29, %c0_30] : memref<16x16xf32, #tpu.memory_space<vmem>>, vector<16x16xf32>
    %c0_31 = arith.constant 0 : index
    %c0_32 = arith.constant 0 : index
    %36 = vector.load %arg12[%c0_31, %c0_32] : memref<1x16xf32, #tpu.memory_space<vmem>>, vector<1x16xf32>
    %cst_33 = arith.constant dense<0.000000e+00> : vector<128x16xf32>
    %37 = tpu.matmul %34, %35, %cst_33 {dimension_numbers = #tpu.dot_dimension_numbers<[1], [0], [0], [1], [0, 0, 1, 1], [], []>} : vector<128x16xf32>, vector<16x16xf32>, vector<128x16xf32> -> vector<128x16xf32>
    %38 = vector.broadcast %36 : vector<1x16xf32> to vector<128x16xf32>
    %39 = arith.addf %37, %38 : vector<128x16xf32>
    %cst_34 = arith.constant 0.000000e+00 : f32
    %40 = vector.broadcast %cst_34 : f32 to vector<128x16xf32>
    %41 = arith.maximumf %39, %40 : vector<128x16xf32>
    %c0_35 = arith.constant 0 : index
    %c0_36 = arith.constant 0 : index
    %42 = vector.load %arg13[%c0_35, %c0_36] : memref<16x16xf32, #tpu.memory_space<vmem>>, vector<16x16xf32>
    %c0_37 = arith.constant 0 : index
    %c0_38 = arith.constant 0 : index
    %43 = vector.load %arg14[%c0_37, %c0_38] : memref<1x16xf32, #tpu.memory_space<vmem>>, vector<1x16xf32>
    %cst_39 = arith.constant dense<0.000000e+00> : vector<128x16xf32>
    %44 = tpu.matmul %41, %42, %cst_39 {dimension_numbers = #tpu.dot_dimension_numbers<[1], [0], [0], [1], [0, 0, 1, 1], [], []>} : vector<128x16xf32>, vector<16x16xf32>, vector<128x16xf32> -> vector<128x16xf32>
    %45 = vector.broadcast %43 : vector<1x16xf32> to vector<128x16xf32>
    %46 = arith.addf %44, %45 : vector<128x16xf32>
    %47 = arith.addf %46, %34 : vector<128x16xf32>
    %cst_40 = arith.constant 0.000000e+00 : f32
    %48 = vector.broadcast %cst_40 : f32 to vector<128x16xf32>
    %49 = arith.maximumf %47, %48 : vector<128x16xf32>
    %c0_41 = arith.constant 0 : index
    %c0_42 = arith.constant 0 : index
    %50 = vector.load %arg15[%c0_41, %c0_42] : memref<16x16xf32, #tpu.memory_space<vmem>>, vector<16x16xf32>
    %c0_43 = arith.constant 0 : index
    %c0_44 = arith.constant 0 : index
    %51 = vector.load %arg16[%c0_43, %c0_44] : memref<1x16xf32, #tpu.memory_space<vmem>>, vector<1x16xf32>
    %cst_45 = arith.constant dense<0.000000e+00> : vector<128x16xf32>
    %52 = tpu.matmul %49, %50, %cst_45 {dimension_numbers = #tpu.dot_dimension_numbers<[1], [0], [0], [1], [0, 0, 1, 1], [], []>} : vector<128x16xf32>, vector<16x16xf32>, vector<128x16xf32> -> vector<128x16xf32>
    %53 = vector.broadcast %51 : vector<1x16xf32> to vector<128x16xf32>
    %54 = arith.addf %52, %53 : vector<128x16xf32>
    %cst_46 = arith.constant 0.000000e+00 : f32
    %55 = vector.broadcast %cst_46 : f32 to vector<128x16xf32>
    %56 = arith.maximumf %54, %55 : vector<128x16xf32>
    %c0_47 = arith.constant 0 : index
    %c0_48 = arith.constant 0 : index
    %57 = vector.load %arg17[%c0_47, %c0_48] : memref<16x32xf32, #tpu.memory_space<vmem>>, vector<16x32xf32>
    %c0_49 = arith.constant 0 : index
    %c0_50 = arith.constant 0 : index
    %58 = vector.load %arg18[%c0_49, %c0_50] : memref<1x32xf32, #tpu.memory_space<vmem>>, vector<1x32xf32>
    %cst_51 = arith.constant dense<0.000000e+00> : vector<128x32xf32>
    %59 = tpu.matmul %56, %57, %cst_51 {dimension_numbers = #tpu.dot_dimension_numbers<[1], [0], [0], [1], [0, 0, 1, 1], [], []>} : vector<128x16xf32>, vector<16x32xf32>, vector<128x32xf32> -> vector<128x32xf32>
    %60 = vector.broadcast %58 : vector<1x32xf32> to vector<128x32xf32>
    %61 = arith.addf %59, %60 : vector<128x32xf32>
    %cst_52 = arith.constant 0.000000e+00 : f32
    %62 = vector.broadcast %cst_52 : f32 to vector<128x32xf32>
    %63 = arith.maximumf %61, %62 : vector<128x32xf32>
    %c0_53 = arith.constant 0 : index
    %c0_54 = arith.constant 0 : index
    %64 = vector.load %arg19[%c0_53, %c0_54] : memref<32x32xf32, #tpu.memory_space<vmem>>, vector<32x32xf32>
    %c0_55 = arith.constant 0 : index
    %c0_56 = arith.constant 0 : index
    %65 = vector.load %arg20[%c0_55, %c0_56] : memref<1x32xf32, #tpu.memory_space<vmem>>, vector<1x32xf32>
    %cst_57 = arith.constant dense<0.000000e+00> : vector<128x32xf32>
    %66 = tpu.matmul %63, %64, %cst_57 {dimension_numbers = #tpu.dot_dimension_numbers<[1], [0], [0], [1], [0, 0, 1, 1], [], []>} : vector<128x32xf32>, vector<32x32xf32>, vector<128x32xf32> -> vector<128x32xf32>
    %67 = vector.broadcast %65 : vector<1x32xf32> to vector<128x32xf32>
    %68 = arith.addf %66, %67 : vector<128x32xf32>
    %c0_58 = arith.constant 0 : index
    %c0_59 = arith.constant 0 : index
    %69 = vector.load %arg21[%c0_58, %c0_59] : memref<16x32xf32, #tpu.memory_space<vmem>>, vector<16x32xf32>
    %c0_60 = arith.constant 0 : index
    %c0_61 = arith.constant 0 : index
    %70 = vector.load %arg22[%c0_60, %c0_61] : memref<1x32xf32, #tpu.memory_space<vmem>>, vector<1x32xf32>
    %cst_62 = arith.constant dense<0.000000e+00> : vector<128x32xf32>
    %71 = tpu.matmul %56, %69, %cst_62 {dimension_numbers = #tpu.dot_dimension_numbers<[1], [0], [0], [1], [0, 0, 1, 1], [], []>} : vector<128x16xf32>, vector<16x32xf32>, vector<128x32xf32> -> vector<128x32xf32>
    %72 = vector.broadcast %70 : vector<1x32xf32> to vector<128x32xf32>
    %73 = arith.addf %71, %72 : vector<128x32xf32>
    %74 = arith.addf %68, %73 : vector<128x32xf32>
    %cst_63 = arith.constant 0.000000e+00 : f32
    %75 = vector.broadcast %cst_63 : f32 to vector<128x32xf32>
    %76 = arith.maximumf %74, %75 : vector<128x32xf32>
    %c0_64 = arith.constant 0 : index
    %c0_65 = arith.constant 0 : index
    %77 = vector.load %arg23[%c0_64, %c0_65] : memref<32x32xf32, #tpu.memory_space<vmem>>, vector<32x32xf32>
    %c0_66 = arith.constant 0 : index
    %c0_67 = arith.constant 0 : index
    %78 = vector.load %arg24[%c0_66, %c0_67] : memref<1x32xf32, #tpu.memory_space<vmem>>, vector<1x32xf32>
    %cst_68 = arith.constant dense<0.000000e+00> : vector<128x32xf32>
    %79 = tpu.matmul %76, %77, %cst_68 {dimension_numbers = #tpu.dot_dimension_numbers<[1], [0], [0], [1], [0, 0, 1, 1], [], []>} : vector<128x32xf32>, vector<32x32xf32>, vector<128x32xf32> -> vector<128x32xf32>
    %80 = vector.broadcast %78 : vector<1x32xf32> to vector<128x32xf32>
    %81 = arith.addf %79, %80 : vector<128x32xf32>
    %cst_69 = arith.constant 0.000000e+00 : f32
    %82 = vector.broadcast %cst_69 : f32 to vector<128x32xf32>
    %83 = arith.maximumf %81, %82 : vector<128x32xf32>
    %c0_70 = arith.constant 0 : index
    %c0_71 = arith.constant 0 : index
    %84 = vector.load %arg25[%c0_70, %c0_71] : memref<32x32xf32, #tpu.memory_space<vmem>>, vector<32x32xf32>
    %c0_72 = arith.constant 0 : index
    %c0_73 = arith.constant 0 : index
    %85 = vector.load %arg26[%c0_72, %c0_73] : memref<1x32xf32, #tpu.memory_space<vmem>>, vector<1x32xf32>
    %cst_74 = arith.constant dense<0.000000e+00> : vector<128x32xf32>
    %86 = tpu.matmul %83, %84, %cst_74 {dimension_numbers = #tpu.dot_dimension_numbers<[1], [0], [0], [1], [0, 0, 1, 1], [], []>} : vector<128x32xf32>, vector<32x32xf32>, vector<128x32xf32> -> vector<128x32xf32>
    %87 = vector.broadcast %85 : vector<1x32xf32> to vector<128x32xf32>
    %88 = arith.addf %86, %87 : vector<128x32xf32>
    %89 = arith.addf %88, %76 : vector<128x32xf32>
    %cst_75 = arith.constant 0.000000e+00 : f32
    %90 = vector.broadcast %cst_75 : f32 to vector<128x32xf32>
    %91 = arith.maximumf %89, %90 : vector<128x32xf32>
    %92 = vector.extract_strided_slice %91 {offsets = [0, 0], sizes = [64, 32], strides = [1, 1]} : vector<128x32xf32> to vector<64x32xf32>
    %93 = vector.extract_strided_slice %91 {offsets = [64, 0], sizes = [64, 32], strides = [1, 1]} : vector<128x32xf32> to vector<64x32xf32>
    %94 = vector.extract_strided_slice %7 {offsets = [64, 0], sizes = [64, 8], strides = [1, 1]} : vector<128x8xf32> to vector<64x8xf32>
    %95 = vector.extract_strided_slice %49 {offsets = [64, 0], sizes = [64, 16], strides = [1, 1]} : vector<128x16xf32> to vector<64x16xf32>
    %c0_76 = arith.constant 0 : index
    %c0_77 = arith.constant 0 : index
    %96 = vector.load %arg27[%c0_76, %c0_77] : memref<32x32xf32, #tpu.memory_space<vmem>>, vector<32x32xf32>
    %c0_78 = arith.constant 0 : index
    %c0_79 = arith.constant 0 : index
    %97 = vector.load %arg28[%c0_78, %c0_79] : memref<1x32xf32, #tpu.memory_space<vmem>>, vector<1x32xf32>
    %cst_80 = arith.constant dense<0.000000e+00> : vector<64x32xf32>
    %98 = tpu.matmul %93, %96, %cst_80 {dimension_numbers = #tpu.dot_dimension_numbers<[1], [0], [0], [1], [0, 0, 1, 1], [], []>} : vector<64x32xf32>, vector<32x32xf32>, vector<64x32xf32> -> vector<64x32xf32>
    %99 = vector.broadcast %97 : vector<1x32xf32> to vector<64x32xf32>
    %100 = arith.addf %98, %99 : vector<64x32xf32>
    %c0_81 = arith.constant 0 : index
    %c0_82 = arith.constant 0 : index
    %101 = vector.load %arg29[%c0_81, %c0_82] : memref<32x32xf32, #tpu.memory_space<vmem>>, vector<32x32xf32>
    %c0_83 = arith.constant 0 : index
    %c0_84 = arith.constant 0 : index
    %102 = vector.load %arg30[%c0_83, %c0_84] : memref<1x32xf32, #tpu.memory_space<vmem>>, vector<1x32xf32>
    %cst_85 = arith.constant dense<0.000000e+00> : vector<64x32xf32>
    %103 = tpu.matmul %92, %101, %cst_85 {dimension_numbers = #tpu.dot_dimension_numbers<[1], [0], [0], [1], [0, 0, 1, 1], [], []>} : vector<64x32xf32>, vector<32x32xf32>, vector<64x32xf32> -> vector<64x32xf32>
    %104 = vector.broadcast %102 : vector<1x32xf32> to vector<64x32xf32>
    %105 = arith.addf %103, %104 : vector<64x32xf32>
    %c0_86 = arith.constant 0 : index
    %c0_87 = arith.constant 0 : index
    %106 = vector.load %arg31[%c0_86, %c0_87] : memref<32x32xf32, #tpu.memory_space<vmem>>, vector<32x32xf32>
    %c0_88 = arith.constant 0 : index
    %c0_89 = arith.constant 0 : index
    %107 = vector.load %arg32[%c0_88, %c0_89] : memref<1x32xf32, #tpu.memory_space<vmem>>, vector<1x32xf32>
    %cst_90 = arith.constant dense<0.000000e+00> : vector<64x32xf32>
    %108 = tpu.matmul %92, %106, %cst_90 {dimension_numbers = #tpu.dot_dimension_numbers<[1], [0], [0], [1], [0, 0, 1, 1], [], []>} : vector<64x32xf32>, vector<32x32xf32>, vector<64x32xf32> -> vector<64x32xf32>
    %109 = vector.broadcast %107 : vector<1x32xf32> to vector<64x32xf32>
    %110 = arith.addf %108, %109 : vector<64x32xf32>
    %cst_91 = arith.constant dense<0.000000e+00> : vector<64x64xf32>
    %111 = tpu.matmul %100, %105, %cst_91 {dimension_numbers = #tpu.dot_dimension_numbers<[1], [1], [0], [0], [0, 0, 1, 0], [], []>} : vector<64x32xf32>, vector<64x32xf32>, vector<64x64xf32> -> vector<64x64xf32>
    %cst_92 = arith.constant dense<0xFF800000> : vector<64xf32>
    %112 = vector.multi_reduction <maximumf>, %111, %cst_92 [1] : vector<64x64xf32> to vector<64xf32>
    %113 = vector.shape_cast %112 : vector<64xf32> to vector<64x1xf32>
    %114 = vector.broadcast %113 : vector<64x1xf32> to vector<64x64xf32>
    %115 = arith.subf %111, %114 : vector<64x64xf32>
    %116 = math.exp %115 : vector<64x64xf32>
    %cst_93 = arith.constant dense<0.000000e+00> : vector<64xf32>
    %117 = vector.multi_reduction <add>, %116, %cst_93 [1] : vector<64x64xf32> to vector<64xf32>
    %118 = vector.shape_cast %117 : vector<64xf32> to vector<64x1xf32>
    %cst_94 = arith.constant dense<0.000000e+00> : vector<64x32xf32>
    %119 = tpu.matmul %116, %110, %cst_94 {dimension_numbers = #tpu.dot_dimension_numbers<[1], [0], [0], [1], [0, 0, 1, 1], [], []>} : vector<64x64xf32>, vector<64x32xf32>, vector<64x32xf32> -> vector<64x32xf32>
    %120 = tpu.reciprocal %118 {approx = true} : vector<64x1xf32> -> vector<64x1xf32>
    %121 = vector.broadcast %120 : vector<64x1xf32> to vector<64x32xf32>
    %122 = arith.mulf %119, %121 : vector<64x32xf32>
    %c0_95 = arith.constant 0 : index
    %c0_96 = arith.constant 0 : index
    %123 = vector.load %arg33[%c0_95, %c0_96] : memref<8x32xf32, #tpu.memory_space<vmem>>, vector<8x32xf32>
    %c0_97 = arith.constant 0 : index
    %c0_98 = arith.constant 0 : index
    %124 = vector.load %arg34[%c0_97, %c0_98] : memref<1x32xf32, #tpu.memory_space<vmem>>, vector<1x32xf32>
    %cst_99 = arith.constant dense<0.000000e+00> : vector<64x32xf32>
    %125 = tpu.matmul %94, %123, %cst_99 {dimension_numbers = #tpu.dot_dimension_numbers<[1], [0], [0], [1], [0, 0, 1, 1], [], []>} : vector<64x8xf32>, vector<8x32xf32>, vector<64x32xf32> -> vector<64x32xf32>
    %126 = vector.broadcast %124 : vector<1x32xf32> to vector<64x32xf32>
    %127 = arith.addf %125, %126 : vector<64x32xf32>
    %cst_100 = arith.constant 0.000000e+00 : f32
    %128 = vector.broadcast %cst_100 : f32 to vector<64x32xf32>
    %129 = arith.maximumf %127, %128 : vector<64x32xf32>
    %130 = arith.addf %122, %129 : vector<64x32xf32>
    %c0_101 = arith.constant 0 : index
    %c0_102 = arith.constant 0 : index
    %131 = vector.load %arg35[%c0_101, %c0_102] : memref<32x24xf32, #tpu.memory_space<vmem>>, vector<32x24xf32>
    %c0_103 = arith.constant 0 : index
    %c0_104 = arith.constant 0 : index
    %132 = vector.load %arg36[%c0_103, %c0_104] : memref<1x24xf32, #tpu.memory_space<vmem>>, vector<1x24xf32>
    %cst_105 = arith.constant dense<0.000000e+00> : vector<64x24xf32>
    %133 = tpu.matmul %130, %131, %cst_105 {dimension_numbers = #tpu.dot_dimension_numbers<[1], [0], [0], [1], [0, 0, 1, 1], [], []>} : vector<64x32xf32>, vector<32x24xf32>, vector<64x24xf32> -> vector<64x24xf32>
    %134 = vector.broadcast %132 : vector<1x24xf32> to vector<64x24xf32>
    %135 = arith.addf %133, %134 : vector<64x24xf32>
    %cst_106 = arith.constant 0.000000e+00 : f32
    %136 = vector.broadcast %cst_106 : f32 to vector<64x24xf32>
    %137 = arith.maximumf %135, %136 : vector<64x24xf32>
    %c0_107 = arith.constant 0 : index
    %c0_108 = arith.constant 0 : index
    %138 = vector.load %arg37[%c0_107, %c0_108] : memref<24x24xf32, #tpu.memory_space<vmem>>, vector<24x24xf32>
    %c0_109 = arith.constant 0 : index
    %c0_110 = arith.constant 0 : index
    %139 = vector.load %arg38[%c0_109, %c0_110] : memref<16x24xf32, #tpu.memory_space<vmem>>, vector<16x24xf32>
    %c0_111 = arith.constant 0 : index
    %c0_112 = arith.constant 0 : index
    %140 = vector.load %arg39[%c0_111, %c0_112] : memref<1x24xf32, #tpu.memory_space<vmem>>, vector<1x24xf32>
    %cst_113 = arith.constant dense<0.000000e+00> : vector<64x24xf32>
    %141 = tpu.matmul %137, %138, %cst_113 {dimension_numbers = #tpu.dot_dimension_numbers<[1], [0], [0], [1], [0, 0, 1, 1], [], []>} : vector<64x24xf32>, vector<24x24xf32>, vector<64x24xf32> -> vector<64x24xf32>
    %cst_114 = arith.constant dense<0.000000e+00> : vector<64x24xf32>
    %142 = tpu.matmul %95, %139, %cst_114 {dimension_numbers = #tpu.dot_dimension_numbers<[1], [0], [0], [1], [0, 0, 1, 1], [], []>} : vector<64x16xf32>, vector<16x24xf32>, vector<64x24xf32> -> vector<64x24xf32>
    %143 = arith.addf %141, %142 : vector<64x24xf32>
    %144 = vector.broadcast %140 : vector<1x24xf32> to vector<64x24xf32>
    %145 = arith.addf %143, %144 : vector<64x24xf32>
    %cst_115 = arith.constant 0.000000e+00 : f32
    %146 = vector.broadcast %cst_115 : f32 to vector<64x24xf32>
    %147 = arith.maximumf %145, %146 : vector<64x24xf32>
    %c0_116 = arith.constant 0 : index
    %c0_117 = arith.constant 0 : index
    %148 = vector.load %arg40[%c0_116, %c0_117] : memref<24x24xf32, #tpu.memory_space<vmem>>, vector<24x24xf32>
    %c0_118 = arith.constant 0 : index
    %c0_119 = arith.constant 0 : index
    %149 = vector.load %arg41[%c0_118, %c0_119] : memref<1x24xf32, #tpu.memory_space<vmem>>, vector<1x24xf32>
    %cst_120 = arith.constant dense<0.000000e+00> : vector<64x24xf32>
    %150 = tpu.matmul %147, %148, %cst_120 {dimension_numbers = #tpu.dot_dimension_numbers<[1], [0], [0], [1], [0, 0, 1, 1], [], []>} : vector<64x24xf32>, vector<24x24xf32>, vector<64x24xf32> -> vector<64x24xf32>
    %151 = vector.broadcast %149 : vector<1x24xf32> to vector<64x24xf32>
    %152 = arith.addf %150, %151 : vector<64x24xf32>
    %c0_121 = arith.constant 0 : index
    %c0_122 = arith.constant 0 : index
    %153 = vector.load %arg42[%c0_121, %c0_122] : memref<24x24xf32, #tpu.memory_space<vmem>>, vector<24x24xf32>
    %c0_123 = arith.constant 0 : index
    %c0_124 = arith.constant 0 : index
    %154 = vector.load %arg43[%c0_123, %c0_124] : memref<16x24xf32, #tpu.memory_space<vmem>>, vector<16x24xf32>
    %c0_125 = arith.constant 0 : index
    %c0_126 = arith.constant 0 : index
    %155 = vector.load %arg44[%c0_125, %c0_126] : memref<1x24xf32, #tpu.memory_space<vmem>>, vector<1x24xf32>
    %cst_127 = arith.constant dense<0.000000e+00> : vector<64x24xf32>
    %156 = tpu.matmul %137, %153, %cst_127 {dimension_numbers = #tpu.dot_dimension_numbers<[1], [0], [0], [1], [0, 0, 1, 1], [], []>} : vector<64x24xf32>, vector<24x24xf32>, vector<64x24xf32> -> vector<64x24xf32>
    %cst_128 = arith.constant dense<0.000000e+00> : vector<64x24xf32>
    %157 = tpu.matmul %95, %154, %cst_128 {dimension_numbers = #tpu.dot_dimension_numbers<[1], [0], [0], [1], [0, 0, 1, 1], [], []>} : vector<64x16xf32>, vector<16x24xf32>, vector<64x24xf32> -> vector<64x24xf32>
    %158 = arith.addf %156, %157 : vector<64x24xf32>
    %159 = vector.broadcast %155 : vector<1x24xf32> to vector<64x24xf32>
    %160 = arith.addf %158, %159 : vector<64x24xf32>
    %161 = arith.addf %152, %160 : vector<64x24xf32>
    %cst_129 = arith.constant 0.000000e+00 : f32
    %162 = vector.broadcast %cst_129 : f32 to vector<64x24xf32>
    %163 = arith.maximumf %161, %162 : vector<64x24xf32>
    %c0_130 = arith.constant 0 : index
    %c0_131 = arith.constant 0 : index
    %164 = vector.load %arg45[%c0_130, %c0_131] : memref<24x24xf32, #tpu.memory_space<vmem>>, vector<24x24xf32>
    %c0_132 = arith.constant 0 : index
    %c0_133 = arith.constant 0 : index
    %165 = vector.load %arg46[%c0_132, %c0_133] : memref<1x24xf32, #tpu.memory_space<vmem>>, vector<1x24xf32>
    %cst_134 = arith.constant dense<0.000000e+00> : vector<64x24xf32>
    %166 = tpu.matmul %163, %164, %cst_134 {dimension_numbers = #tpu.dot_dimension_numbers<[1], [0], [0], [1], [0, 0, 1, 1], [], []>} : vector<64x24xf32>, vector<24x24xf32>, vector<64x24xf32> -> vector<64x24xf32>
    %167 = vector.broadcast %165 : vector<1x24xf32> to vector<64x24xf32>
    %168 = arith.addf %166, %167 : vector<64x24xf32>
    %cst_135 = arith.constant 0.000000e+00 : f32
    %169 = vector.broadcast %cst_135 : f32 to vector<64x24xf32>
    %170 = arith.maximumf %168, %169 : vector<64x24xf32>
    %c0_136 = arith.constant 0 : index
    %c0_137 = arith.constant 0 : index
    %171 = vector.load %arg47[%c0_136, %c0_137] : memref<24x24xf32, #tpu.memory_space<vmem>>, vector<24x24xf32>
    %c0_138 = arith.constant 0 : index
    %c0_139 = arith.constant 0 : index
    %172 = vector.load %arg48[%c0_138, %c0_139] : memref<1x24xf32, #tpu.memory_space<vmem>>, vector<1x24xf32>
    %cst_140 = arith.constant dense<0.000000e+00> : vector<64x24xf32>
    %173 = tpu.matmul %170, %171, %cst_140 {dimension_numbers = #tpu.dot_dimension_numbers<[1], [0], [0], [1], [0, 0, 1, 1], [], []>} : vector<64x24xf32>, vector<24x24xf32>, vector<64x24xf32> -> vector<64x24xf32>
    %174 = vector.broadcast %172 : vector<1x24xf32> to vector<64x24xf32>
    %175 = arith.addf %173, %174 : vector<64x24xf32>
    %176 = arith.addf %175, %163 : vector<64x24xf32>
    %cst_141 = arith.constant 0.000000e+00 : f32
    %177 = vector.broadcast %cst_141 : f32 to vector<64x24xf32>
    %178 = arith.maximumf %176, %177 : vector<64x24xf32>
    %c0_142 = arith.constant 0 : index
    %c0_143 = arith.constant 0 : index
    %179 = vector.load %arg49[%c0_142, %c0_143] : memref<24x24xf32, #tpu.memory_space<vmem>>, vector<24x24xf32>
    %c0_144 = arith.constant 0 : index
    %c0_145 = arith.constant 0 : index
    %180 = vector.load %arg50[%c0_144, %c0_145] : memref<1x24xf32, #tpu.memory_space<vmem>>, vector<1x24xf32>
    %cst_146 = arith.constant dense<0.000000e+00> : vector<64x24xf32>
    %181 = tpu.matmul %178, %179, %cst_146 {dimension_numbers = #tpu.dot_dimension_numbers<[1], [0], [0], [1], [0, 0, 1, 1], [], []>} : vector<64x24xf32>, vector<24x24xf32>, vector<64x24xf32> -> vector<64x24xf32>
    %182 = vector.broadcast %180 : vector<1x24xf32> to vector<64x24xf32>
    %183 = arith.addf %181, %182 : vector<64x24xf32>
    %cst_147 = arith.constant 0.000000e+00 : f32
    %184 = vector.broadcast %cst_147 : f32 to vector<64x24xf32>
    %185 = arith.maximumf %183, %184 : vector<64x24xf32>
    %c0_148 = arith.constant 0 : index
    %c0_149 = arith.constant 0 : index
    %186 = vector.load %arg51[%c0_148, %c0_149] : memref<24x24xf32, #tpu.memory_space<vmem>>, vector<24x24xf32>
    %c0_150 = arith.constant 0 : index
    %c0_151 = arith.constant 0 : index
    %187 = vector.load %arg52[%c0_150, %c0_151] : memref<8x24xf32, #tpu.memory_space<vmem>>, vector<8x24xf32>
    %c0_152 = arith.constant 0 : index
    %c0_153 = arith.constant 0 : index
    %188 = vector.load %arg53[%c0_152, %c0_153] : memref<1x24xf32, #tpu.memory_space<vmem>>, vector<1x24xf32>
    %cst_154 = arith.constant dense<0.000000e+00> : vector<64x24xf32>
    %189 = tpu.matmul %185, %186, %cst_154 {dimension_numbers = #tpu.dot_dimension_numbers<[1], [0], [0], [1], [0, 0, 1, 1], [], []>} : vector<64x24xf32>, vector<24x24xf32>, vector<64x24xf32> -> vector<64x24xf32>
    %cst_155 = arith.constant dense<0.000000e+00> : vector<64x24xf32>
    %190 = tpu.matmul %94, %187, %cst_155 {dimension_numbers = #tpu.dot_dimension_numbers<[1], [0], [0], [1], [0, 0, 1, 1], [], []>} : vector<64x8xf32>, vector<8x24xf32>, vector<64x24xf32> -> vector<64x24xf32>
    %191 = arith.addf %189, %190 : vector<64x24xf32>
    %192 = vector.broadcast %188 : vector<1x24xf32> to vector<64x24xf32>
    %193 = arith.addf %191, %192 : vector<64x24xf32>
    %cst_156 = arith.constant 0.000000e+00 : f32
    %194 = vector.broadcast %cst_156 : f32 to vector<64x24xf32>
    %195 = arith.maximumf %193, %194 : vector<64x24xf32>
    %c0_157 = arith.constant 0 : index
    %c0_158 = arith.constant 0 : index
    %196 = vector.load %arg54[%c0_157, %c0_158] : memref<24x24xf32, #tpu.memory_space<vmem>>, vector<24x24xf32>
    %c0_159 = arith.constant 0 : index
    %c0_160 = arith.constant 0 : index
    %197 = vector.load %arg55[%c0_159, %c0_160] : memref<1x24xf32, #tpu.memory_space<vmem>>, vector<1x24xf32>
    %cst_161 = arith.constant dense<0.000000e+00> : vector<64x24xf32>
    %198 = tpu.matmul %195, %196, %cst_161 {dimension_numbers = #tpu.dot_dimension_numbers<[1], [0], [0], [1], [0, 0, 1, 1], [], []>} : vector<64x24xf32>, vector<24x24xf32>, vector<64x24xf32> -> vector<64x24xf32>
    %199 = vector.broadcast %197 : vector<1x24xf32> to vector<64x24xf32>
    %200 = arith.addf %198, %199 : vector<64x24xf32>
    %c0_162 = arith.constant 0 : index
    %c0_163 = arith.constant 0 : index
    %201 = vector.load %arg56[%c0_162, %c0_163] : memref<24x24xf32, #tpu.memory_space<vmem>>, vector<24x24xf32>
    %c0_164 = arith.constant 0 : index
    %c0_165 = arith.constant 0 : index
    %202 = vector.load %arg57[%c0_164, %c0_165] : memref<8x24xf32, #tpu.memory_space<vmem>>, vector<8x24xf32>
    %c0_166 = arith.constant 0 : index
    %c0_167 = arith.constant 0 : index
    %203 = vector.load %arg58[%c0_166, %c0_167] : memref<1x24xf32, #tpu.memory_space<vmem>>, vector<1x24xf32>
    %cst_168 = arith.constant dense<0.000000e+00> : vector<64x24xf32>
    %204 = tpu.matmul %185, %201, %cst_168 {dimension_numbers = #tpu.dot_dimension_numbers<[1], [0], [0], [1], [0, 0, 1, 1], [], []>} : vector<64x24xf32>, vector<24x24xf32>, vector<64x24xf32> -> vector<64x24xf32>
    %cst_169 = arith.constant dense<0.000000e+00> : vector<64x24xf32>
    %205 = tpu.matmul %94, %202, %cst_169 {dimension_numbers = #tpu.dot_dimension_numbers<[1], [0], [0], [1], [0, 0, 1, 1], [], []>} : vector<64x8xf32>, vector<8x24xf32>, vector<64x24xf32> -> vector<64x24xf32>
    %206 = arith.addf %204, %205 : vector<64x24xf32>
    %207 = vector.broadcast %203 : vector<1x24xf32> to vector<64x24xf32>
    %208 = arith.addf %206, %207 : vector<64x24xf32>
    %209 = arith.addf %200, %208 : vector<64x24xf32>
    %cst_170 = arith.constant 0.000000e+00 : f32
    %210 = vector.broadcast %cst_170 : f32 to vector<64x24xf32>
    %211 = arith.maximumf %209, %210 : vector<64x24xf32>
    %c0_171 = arith.constant 0 : index
    %c0_172 = arith.constant 0 : index
    %212 = vector.load %arg59[%c0_171, %c0_172] : memref<24x24xf32, #tpu.memory_space<vmem>>, vector<24x24xf32>
    %c0_173 = arith.constant 0 : index
    %c0_174 = arith.constant 0 : index
    %213 = vector.load %arg60[%c0_173, %c0_174] : memref<1x24xf32, #tpu.memory_space<vmem>>, vector<1x24xf32>
    %cst_175 = arith.constant dense<0.000000e+00> : vector<64x24xf32>
    %214 = tpu.matmul %211, %212, %cst_175 {dimension_numbers = #tpu.dot_dimension_numbers<[1], [0], [0], [1], [0, 0, 1, 1], [], []>} : vector<64x24xf32>, vector<24x24xf32>, vector<64x24xf32> -> vector<64x24xf32>
    %215 = vector.broadcast %213 : vector<1x24xf32> to vector<64x24xf32>
    %216 = arith.addf %214, %215 : vector<64x24xf32>
    %cst_176 = arith.constant 0.000000e+00 : f32
    %217 = vector.broadcast %cst_176 : f32 to vector<64x24xf32>
    %218 = arith.maximumf %216, %217 : vector<64x24xf32>
    %c0_177 = arith.constant 0 : index
    %c0_178 = arith.constant 0 : index
    %219 = vector.load %arg61[%c0_177, %c0_178] : memref<24x24xf32, #tpu.memory_space<vmem>>, vector<24x24xf32>
    %c0_179 = arith.constant 0 : index
    %c0_180 = arith.constant 0 : index
    %220 = vector.load %arg62[%c0_179, %c0_180] : memref<1x24xf32, #tpu.memory_space<vmem>>, vector<1x24xf32>
    %cst_181 = arith.constant dense<0.000000e+00> : vector<64x24xf32>
    %221 = tpu.matmul %218, %219, %cst_181 {dimension_numbers = #tpu.dot_dimension_numbers<[1], [0], [0], [1], [0, 0, 1, 1], [], []>} : vector<64x24xf32>, vector<24x24xf32>, vector<64x24xf32> -> vector<64x24xf32>
    %222 = vector.broadcast %220 : vector<1x24xf32> to vector<64x24xf32>
    %223 = arith.addf %221, %222 : vector<64x24xf32>
    %224 = arith.addf %223, %211 : vector<64x24xf32>
    %cst_182 = arith.constant 0.000000e+00 : f32
    %225 = vector.broadcast %cst_182 : f32 to vector<64x24xf32>
    %226 = arith.maximumf %224, %225 : vector<64x24xf32>
    %c0_183 = arith.constant 0 : index
    %c0_184 = arith.constant 0 : index
    %227 = vector.load %arg63[%c0_183, %c0_184] : memref<32x24xf32, #tpu.memory_space<vmem>>, vector<32x24xf32>
    %c0_185 = arith.constant 0 : index
    %c0_186 = arith.constant 0 : index
    %228 = vector.load %arg64[%c0_185, %c0_186] : memref<1x24xf32, #tpu.memory_space<vmem>>, vector<1x24xf32>
    %cst_187 = arith.constant dense<0.000000e+00> : vector<64x24xf32>
    %229 = tpu.matmul %130, %227, %cst_187 {dimension_numbers = #tpu.dot_dimension_numbers<[1], [0], [0], [1], [0, 0, 1, 1], [], []>} : vector<64x32xf32>, vector<32x24xf32>, vector<64x24xf32> -> vector<64x24xf32>
    %230 = vector.broadcast %228 : vector<1x24xf32> to vector<64x24xf32>
    %231 = arith.addf %229, %230 : vector<64x24xf32>
    %cst_188 = arith.constant 0.000000e+00 : f32
    %232 = vector.broadcast %cst_188 : f32 to vector<64x24xf32>
    %233 = arith.maximumf %231, %232 : vector<64x24xf32>
    %234 = arith.addf %226, %233 : vector<64x24xf32>
    %c0_189 = arith.constant 0 : index
    %c0_190 = arith.constant 0 : index
    %235 = vector.load %arg65[%c0_189, %c0_190] : memref<64x24xf32, #tpu.memory_space<vmem>>, vector<64x24xf32>
    tpu.vector_store %arg65[%c0_189, %c0_190], %234 {strides = array<i32>} : memref<64x24xf32, #tpu.memory_space<vmem>>, vector<64x24xf32>,
    return
  }
}

</mosaic_0001>

<llo_original>
// kernel: attention_block2_forward.1
$region0: #{attention_block2_forward.1}
  #allocation0 [shape = 'u32[]', space=smem, size = 0x4, offset = 0x4, fixed_abs, tag = 'smem constant byte address 0x4 - core index']
  #allocation1 [shape = 'u32[144,128]{1,0:T(1,128)}', space=vmem, size = 0x12000, scoped, tag = 'internal scratch']
  %s0 = inlined_call_operand.smem [shape: u32[66], index: -1, kind: input, shape index: {}]
  %s1 = sld [smem:[%s0]]
  %s2 = scalar_lea.smem %s0, 1
  %s3 = sld [smem:[%s2]]
  %s4 = scalar_lea.smem %s0, 2
  %s5 = sld [smem:[%s4]]
  %s6 = scalar_lea.smem %s0, 3
  %s7 = sld [smem:[%s6]]
  %s8 = scalar_lea.smem %s0, 4
  %s9 = sld [smem:[%s8]]
  %s10 = scalar_lea.smem %s0, 5
  %s11 = sld [smem:[%s10]]
  %s12 = scalar_lea.smem %s0, 6
  %s13 = sld [smem:[%s12]]
  %s14 = scalar_lea.smem %s0, 7
  %s15 = sld [smem:[%s14]]
  %s16 = scalar_lea.smem %s0, 8
  %s17 = sld [smem:[%s16]]
  %s18 = scalar_lea.smem %s0, 9
  %s19 = sld [smem:[%s18]]
  %s20 = scalar_lea.smem %s0, 10
  %s21 = sld [smem:[%s20]]
  %s22 = scalar_lea.smem %s0, 11
  %s23 = sld [smem:[%s22]]
  %s24 = scalar_lea.smem %s0, 12
  %s25 = sld [smem:[%s24]]
  %s26 = scalar_lea.smem %s0, 13
  %s27 = sld [smem:[%s26]]
  %s28 = scalar_lea.smem %s0, 14
  %s29 = sld [smem:[%s28]]
  %s30 = scalar_lea.smem %s0, 15
  %s31 = sld [smem:[%s30]]
  %s32 = scalar_lea.smem %s0, 16
  %s33 = sld [smem:[%s32]]
  %s34 = scalar_lea.smem %s0, 17
  %s35 = sld [smem:[%s34]]
  %s36 = scalar_lea.smem %s0, 18
  %s37 = sld [smem:[%s36]]
  %s38 = scalar_lea.smem %s0, 19
  %s39 = sld [smem:[%s38]]
  %s40 = scalar_lea.smem %s0, 20
  %s41 = sld [smem:[%s40]]
  %s42 = scalar_lea.smem %s0, 21
  %s43 = sld [smem:[%s42]]
  %s44 = scalar_lea.smem %s0, 22
  %s45 = sld [smem:[%s44]]
  %s46 = scalar_lea.smem %s0, 23
  %s47 = sld [smem:[%s46]]
  %s48 = scalar_lea.smem %s0, 24
  %s49 = sld [smem:[%s48]]
  %s50 = scalar_lea.smem %s0, 25
  %s51 = sld [smem:[%s50]]
  %s52 = scalar_lea.smem %s0, 26
  %s53 = sld [smem:[%s52]]
  %s54 = scalar_lea.smem %s0, 27
  %s55 = sld [smem:[%s54]]
  %s56 = scalar_lea.smem %s0, 28
  %s57 = sld [smem:[%s56]]
  %s58 = scalar_lea.smem %s0, 29
  %s59 = sld [smem:[%s58]]
  %s60 = scalar_lea.smem %s0, 30
  %s61 = sld [smem:[%s60]]
  %s62 = scalar_lea.smem %s0, 31
  %s63 = sld [smem:[%s62]]
  %s64 = scalar_lea.smem %s0, 32
  %s65 = sld [smem:[%s64]]
  %s66 = scalar_lea.smem %s0, 33
  %s67 = sld [smem:[%s66]]
  %s68 = scalar_lea.smem %s0, 34
  %s69 = sld [smem:[%s68]]
  %s70 = scalar_lea.smem %s0, 35
  %s71 = sld [smem:[%s70]]
  %s72 = scalar_lea.smem %s0, 36
  %s73 = sld [smem:[%s72]]
  %s74 = scalar_lea.smem %s0, 37
  %s75 = sld [smem:[%s74]]
  %s76 = scalar_lea.smem %s0, 38
  %s77 = sld [smem:[%s76]]
  %s78 = scalar_lea.smem %s0, 39
  %s79 = sld [smem:[%s78]]
  %s80 = scalar_lea.smem %s0, 40
  %s81 = sld [smem:[%s80]]
  %s82 = scalar_lea.smem %s0, 41
  %s83 = sld [smem:[%s82]]
  %s84 = scalar_lea.smem %s0, 42
  %s85 = sld [smem:[%s84]]
  %s86 = scalar_lea.smem %s0, 43
  %s87 = sld [smem:[%s86]]
  %s88 = scalar_lea.smem %s0, 44
  %s89 = sld [smem:[%s88]]
  %s90 = scalar_lea.smem %s0, 45
  %s91 = sld [smem:[%s90]]
  %s92 = scalar_lea.smem %s0, 46
  %s93 = sld [smem:[%s92]]
  %s94 = scalar_lea.smem %s0, 47
  %s95 = sld [smem:[%s94]]
  %s96 = scalar_lea.smem %s0, 48
  %s97 = sld [smem:[%s96]]
  %s98 = scalar_lea.smem %s0, 49
  %s99 = sld [smem:[%s98]]
  %s100 = scalar_lea.smem %s0, 50
  %s101 = sld [smem:[%s100]]
  %s102 = scalar_lea.smem %s0, 51
  %s103 = sld [smem:[%s102]]
  %s104 = scalar_lea.smem %s0, 52
  %s105 = sld [smem:[%s104]]
  %s106 = scalar_lea.smem %s0, 53
  %s107 = sld [smem:[%s106]]
  %s108 = scalar_lea.smem %s0, 54
  %s109 = sld [smem:[%s108]]
  %s110 = scalar_lea.smem %s0, 55
  %s111 = sld [smem:[%s110]]
  %s112 = scalar_lea.smem %s0, 56
  %s113 = sld [smem:[%s112]]
  %s114 = scalar_lea.smem %s0, 57
  %s115 = sld [smem:[%s114]]
  %s116 = scalar_lea.smem %s0, 58
  %s117 = sld [smem:[%s116]]
  %s118 = scalar_lea.smem %s0, 59
  %s119 = sld [smem:[%s118]]
  %s120 = scalar_lea.smem %s0, 60
  %s121 = sld [smem:[%s120]]
  %s122 = scalar_lea.smem %s0, 61
  %s123 = sld [smem:[%s122]]
  %s124 = scalar_lea.smem %s0, 62
  %s125 = sld [smem:[%s124]]
  %s126 = scalar_lea.smem %s0, 63
  %s127 = sld [smem:[%s126]]
  %s128 = scalar_lea.smem %s0, 64
  %s129 = sld [smem:[%s128]]
  %s130 = scalar_lea.smem %s0, 65
  %s131 = sld [smem:[%s130]]
  %s132 = sld [smem:[#allocation0]]
  $region270: #{attention_block2_forward.1} parent=0
    _
  %s134 = ssub.s32 1, %s132
  %s135 = scalar_select 0, %s134, %s132
  // Predicated region
  $region2: #{attention_block2_forward.1} parent=0 // pred_check
    _
  $region3: #{attention_block2_forward.1} parent=0 // pred_check_branch
    %137 = sbr.rel (0) target = $region5
  $region4: #{attention_block2_forward.1} parent=0 // pred_region
    _
  $region5: #{attention_block2_forward.1} parent=0 // pred_fallthru
    _
  // Predicated region
  $region6: #{attention_block2_forward.1} parent=0 // pred_check
    _
  $region7: #{attention_block2_forward.1} parent=0 // pred_check_branch
    %139 = sbr.rel (0) target = $region9
  $region8: #{attention_block2_forward.1} parent=0 // pred_region
    _
  $region9: #{attention_block2_forward.1} parent=0 // pred_fallthru
    _
  // Predicated region
  $region10: #{attention_block2_forward.1} parent=0 // pred_check
    _
  $region11: #{attention_block2_forward.1} parent=0 // pred_check_branch
    %141 = sbr.rel (0) target = $region13
  $region12: #{attention_block2_forward.1} parent=0 // pred_region
    _
  $region13: #{attention_block2_forward.1} parent=0 // pred_fallthru
    _
  // Predicated region
  $region14: #{attention_block2_forward.1} parent=0 // pred_check
    _
  $region15: #{attention_block2_forward.1} parent=0 // pred_check_branch
    %143 = sbr.rel (0) target = $region17
  $region16: #{attention_block2_forward.1} parent=0 // pred_region
    _
  $region17: #{attention_block2_forward.1} parent=0 // pred_fallthru
    _
  // Predicated region
  $region18: #{attention_block2_forward.1} parent=0 // pred_check
    _
  $region19: #{attention_block2_forward.1} parent=0 // pred_check_branch
    %145 = sbr.rel (0) target = $region21
  $region20: #{attention_block2_forward.1} parent=0 // pred_region
    _
  $region21: #{attention_block2_forward.1} parent=0 // pred_fallthru
    _
  // Predicated region
  $region22: #{attention_block2_forward.1} parent=0 // pred_check
    _
  $region23: #{attention_block2_forward.1} parent=0 // pred_check_branch
    %147 = sbr.rel (0) target = $region25
  $region24: #{attention_block2_forward.1} parent=0 // pred_region
    _
  $region25: #{attention_block2_forward.1} parent=0 // pred_fallthru
    _
  // Predicated region
  $region26: #{attention_block2_forward.1} parent=0 // pred_check
    _
  $region27: #{attention_block2_forward.1} parent=0 // pred_check_branch
    %149 = sbr.rel (0) target = $region29
  $region28: #{attention_block2_forward.1} parent=0 // pred_region
    _
  $region29: #{attention_block2_forward.1} parent=0 // pred_fallthru
    _
  // Predicated region
  $region30: #{attention_block2_forward.1} parent=0 // pred_check
    _
  $region31: #{attention_block2_forward.1} parent=0 // pred_check_branch
    %151 = sbr.rel (0) target = $region33
  $region32: #{attention_block2_forward.1} parent=0 // pred_region
    _
  $region33: #{attention_block2_forward.1} parent=0 // pred_fallthru
    _
  // Predicated region
  $region34: #{attention_block2_forward.1} parent=0 // pred_check
    _
  $region35: #{attention_block2_forward.1} parent=0 // pred_check_branch
    %153 = sbr.rel (0) target = $region37
  $region36: #{attention_block2_forward.1} parent=0 // pred_region
    _
  $region37: #{attention_block2_forward.1} parent=0 // pred_fallthru
    _
  // Predicated region
  $region38: #{attention_block2_forward.1} parent=0 // pred_check
    _
  $region39: #{attention_block2_forward.1} parent=0 // pred_check_branch
    %155 = sbr.rel (0) target = $region41
  $region40: #{attention_block2_forward.1} parent=0 // pred_region
    _
  $region41: #{attention_block2_forward.1} parent=0 // pred_fallthru
    _
  // Predicated region
  $region42: #{attention_block2_forward.1} parent=0 // pred_check
    _
  $region43: #{attention_block2_forward.1} parent=0 // pred_check_branch
    %157 = sbr.rel (0) target = $region45
  $region44: #{attention_block2_forward.1} parent=0 // pred_region
    _
  $region45: #{attention_block2_forward.1} parent=0 // pred_fallthru
    _
  // Predicated region
  $region46: #{attention_block2_forward.1} parent=0 // pred_check
    _
  $region47: #{attention_block2_forward.1} parent=0 // pred_check_branch
    %159 = sbr.rel (0) target = $region49
  $region48: #{attention_block2_forward.1} parent=0 // pred_region
    _
  $region49: #{attention_block2_forward.1} parent=0 // pred_fallthru
    _
  // Predicated region
  $region50: #{attention_block2_forward.1} parent=0 // pred_check
    _
  $region51: #{attention_block2_forward.1} parent=0 // pred_check_branch
    %161 = sbr.rel (0) target = $region53
  $region52: #{attention_block2_forward.1} parent=0 // pred_region
    _
  $region53: #{attention_block2_forward.1} parent=0 // pred_fallthru
    _
  // Predicated region
  $region54: #{attention_block2_forward.1} parent=0 // pred_check
    _
  $region55: #{attention_block2_forward.1} parent=0 // pred_check_branch
    %163 = sbr.rel (0) target = $region57
  $region56: #{attention_block2_forward.1} parent=0 // pred_region
    _
  $region57: #{attention_block2_forward.1} parent=0 // pred_fallthru
    _
  // Predicated region
  $region58: #{attention_block2_forward.1} parent=0 // pred_check
    _
  $region59: #{attention_block2_forward.1} parent=0 // pred_check_branch
    %165 = sbr.rel (0) target = $region61
  $region60: #{attention_block2_forward.1} parent=0 // pred_region
    _
  $region61: #{attention_block2_forward.1} parent=0 // pred_fallthru
    _
  // Predicated region
  $region62: #{attention_block2_forward.1} parent=0 // pred_check
    _
  $region63: #{attention_block2_forward.1} parent=0 // pred_check_branch
    %167 = sbr.rel (0) target = $region65
  $region64: #{attention_block2_forward.1} parent=0 // pred_region
    _
  $region65: #{attention_block2_forward.1} parent=0 // pred_fallthru
    _
  // Predicated region
  $region66: #{attention_block2_forward.1} parent=0 // pred_check
    _
  $region67: #{attention_block2_forward.1} parent=0 // pred_check_branch
    %169 = sbr.rel (0) target = $region69
  $region68: #{attention_block2_forward.1} parent=0 // pred_region
    _
  $region69: #{attention_block2_forward.1} parent=0 // pred_fallthru
    _
  // Predicated region
  $region70: #{attention_block2_forward.1} parent=0 // pred_check
    _
  $region71: #{attention_block2_forward.1} parent=0 // pred_check_branch
    %171 = sbr.rel (0) target = $region73
  $region72: #{attention_block2_forward.1} parent=0 // pred_region
    _
  $region73: #{attention_block2_forward.1} parent=0 // pred_fallthru
    _
  // Predicated region
  $region74: #{attention_block2_forward.1} parent=0 // pred_check
    _
  $region75: #{attention_block2_forward.1} parent=0 // pred_check_branch
    %173 = sbr.rel (0) target = $region77
  $region76: #{attention_block2_forward.1} parent=0 // pred_region
    _
  $region77: #{attention_block2_forward.1} parent=0 // pred_fallthru
    _
  // Predicated region
  $region78: #{attention_block2_forward.1} parent=0 // pred_check
    _
  $region79: #{attention_block2_forward.1} parent=0 // pred_check_branch
    %175 = sbr.rel (0) target = $region81
  $region80: #{attention_block2_forward.1} parent=0 // pred_region
    _
  $region81: #{attention_block2_forward.1} parent=0 // pred_fallthru
    _
  // Predicated region
  $region82: #{attention_block2_forward.1} parent=0 // pred_check
    _
  $region83: #{attention_block2_forward.1} parent=0 // pred_check_branch
    %177 = sbr.rel (0) target = $region85
  $region84: #{attention_block2_forward.1} parent=0 // pred_region
    _
  $region85: #{attention_block2_forward.1} parent=0 // pred_fallthru
    _
  // Predicated region
  $region86: #{attention_block2_forward.1} parent=0 // pred_check
    _
  $region87: #{attention_block2_forward.1} parent=0 // pred_check_branch
    %179 = sbr.rel (0) target = $region89
  $region88: #{attention_block2_forward.1} parent=0 // pred_region
    _
  $region89: #{attention_block2_forward.1} parent=0 // pred_fallthru
    _
  // Predicated region
  $region90: #{attention_block2_forward.1} parent=0 // pred_check
    _
  $region91: #{attention_block2_forward.1} parent=0 // pred_check_branch
    %181 = sbr.rel (0) target = $region93
  $region92: #{attention_block2_forward.1} parent=0 // pred_region
    _
  $region93: #{attention_block2_forward.1} parent=0 // pred_fallthru
    _
  // Predicated region
  $region94: #{attention_block2_forward.1} parent=0 // pred_check
    _
  $region95: #{attention_block2_forward.1} parent=0 // pred_check_branch
    %183 = sbr.rel (0) target = $region97
  $region96: #{attention_block2_forward.1} parent=0 // pred_region
    _
  $region97: #{attention_block2_forward.1} parent=0 // pred_fallthru
    _
  // Predicated region
  $region98: #{attention_block2_forward.1} parent=0 // pred_check
    _
  $region99: #{attention_block2_forward.1} parent=0 // pred_check_branch
    %185 = sbr.rel (0) target = $region101
  $region100: #{attention_block2_forward.1} parent=0 // pred_region
    _
  $region101: #{attention_block2_forward.1} parent=0 // pred_fallthru
    _
  // Predicated region
  $region102: #{attention_block2_forward.1} parent=0 // pred_check
    _
  $region103: #{attention_block2_forward.1} parent=0 // pred_check_branch
    %187 = sbr.rel (0) target = $region105
  $region104: #{attention_block2_forward.1} parent=0 // pred_region
    _
  $region105: #{attention_block2_forward.1} parent=0 // pred_fallthru
    _
  // Predicated region
  $region106: #{attention_block2_forward.1} parent=0 // pred_check
    _
  $region107: #{attention_block2_forward.1} parent=0 // pred_check_branch
    %189 = sbr.rel (0) target = $region109
  $region108: #{attention_block2_forward.1} parent=0 // pred_region
    _
  $region109: #{attention_block2_forward.1} parent=0 // pred_fallthru
    _
  // Predicated region
  $region110: #{attention_block2_forward.1} parent=0 // pred_check
    _
  $region111: #{attention_block2_forward.1} parent=0 // pred_check_branch
    %191 = sbr.rel (0) target = $region113
  $region112: #{attention_block2_forward.1} parent=0 // pred_region
    _
  $region113: #{attention_block2_forward.1} parent=0 // pred_fallthru
    _
  // Predicated region
  $region114: #{attention_block2_forward.1} parent=0 // pred_check
    _
  $region115: #{attention_block2_forward.1} parent=0 // pred_check_branch
    %193 = sbr.rel (0) target = $region117
  $region116: #{attention_block2_forward.1} parent=0 // pred_region
    _
  $region117: #{attention_block2_forward.1} parent=0 // pred_fallthru
    _
  // Predicated region
  $region118: #{attention_block2_forward.1} parent=0 // pred_check
    _
  $region119: #{attention_block2_forward.1} parent=0 // pred_check_branch
    %195 = sbr.rel (0) target = $region121
  $region120: #{attention_block2_forward.1} parent=0 // pred_region
    _
  $region121: #{attention_block2_forward.1} parent=0 // pred_fallthru
    _
  // Predicated region
  $region122: #{attention_block2_forward.1} parent=0 // pred_check
    _
  $region123: #{attention_block2_forward.1} parent=0 // pred_check_branch
    %197 = sbr.rel (0) target = $region125
  $region124: #{attention_block2_forward.1} parent=0 // pred_region
    _
  $region125: #{attention_block2_forward.1} parent=0 // pred_fallthru
    _
  // Predicated region
  $region126: #{attention_block2_forward.1} parent=0 // pred_check
    _
  $region127: #{attention_block2_forward.1} parent=0 // pred_check_branch
    %199 = sbr.rel (0) target = $region129
  $region128: #{attention_block2_forward.1} parent=0 // pred_region
    _
  $region129: #{attention_block2_forward.1} parent=0 // pred_fallthru
    _
  // Predicated region
  $region130: #{attention_block2_forward.1} parent=0 // pred_check
    _
  $region131: #{attention_block2_forward.1} parent=0 // pred_check_branch
    %201 = sbr.rel (0) target = $region133
  $region132: #{attention_block2_forward.1} parent=0 // pred_region
    _
  $region133: #{attention_block2_forward.1} parent=0 // pred_fallthru
    _
  // Predicated region
  $region134: #{attention_block2_forward.1} parent=0 // pred_check
    _
  $region135: #{attention_block2_forward.1} parent=0 // pred_check_branch
    %203 = sbr.rel (0) target = $region137
  $region136: #{attention_block2_forward.1} parent=0 // pred_region
    _
  $region137: #{attention_block2_forward.1} parent=0 // pred_fallthru
    _
  // Predicated region
  $region138: #{attention_block2_forward.1} parent=0 // pred_check
    _
  $region139: #{attention_block2_forward.1} parent=0 // pred_check_branch
    %205 = sbr.rel (0) target = $region141
  $region140: #{attention_block2_forward.1} parent=0 // pred_region
    _
  $region141: #{attention_block2_forward.1} parent=0 // pred_fallthru
    _
  // Predicated region
  $region142: #{attention_block2_forward.1} parent=0 // pred_check
    _
  $region143: #{attention_block2_forward.1} parent=0 // pred_check_branch
    %207 = sbr.rel (0) target = $region145
  $region144: #{attention_block2_forward.1} parent=0 // pred_region
    _
  $region145: #{attention_block2_forward.1} parent=0 // pred_fallthru
    _
  // Predicated region
  $region146: #{attention_block2_forward.1} parent=0 // pred_check
    _
  $region147: #{attention_block2_forward.1} parent=0 // pred_check_branch
    %209 = sbr.rel (0) target = $region149
  $region148: #{attention_block2_forward.1} parent=0 // pred_region
    _
  $region149: #{attention_block2_forward.1} parent=0 // pred_fallthru
    _
  // Predicated region
  $region150: #{attention_block2_forward.1} parent=0 // pred_check
    _
  $region151: #{attention_block2_forward.1} parent=0 // pred_check_branch
    %211 = sbr.rel (0) target = $region153
  $region152: #{attention_block2_forward.1} parent=0 // pred_region
    _
  $region153: #{attention_block2_forward.1} parent=0 // pred_fallthru
    _
  // Predicated region
  $region154: #{attention_block2_forward.1} parent=0 // pred_check
    _
  $region155: #{attention_block2_forward.1} parent=0 // pred_check_branch
    %213 = sbr.rel (0) target = $region157
  $region156: #{attention_block2_forward.1} parent=0 // pred_region
    _
  $region157: #{attention_block2_forward.1} parent=0 // pred_fallthru
    _
  // Predicated region
  $region158: #{attention_block2_forward.1} parent=0 // pred_check
    _
  $region159: #{attention_block2_forward.1} parent=0 // pred_check_branch
    %215 = sbr.rel (0) target = $region161
  $region160: #{attention_block2_forward.1} parent=0 // pred_region
    _
  $region161: #{attention_block2_forward.1} parent=0 // pred_fallthru
    _
  // Predicated region
  $region162: #{attention_block2_forward.1} parent=0 // pred_check
    _
  $region163: #{attention_block2_forward.1} parent=0 // pred_check_branch
    %217 = sbr.rel (0) target = $region165
  $region164: #{attention_block2_forward.1} parent=0 // pred_region
    _
  $region165: #{attention_block2_forward.1} parent=0 // pred_fallthru
    _
  // Predicated region
  $region166: #{attention_block2_forward.1} parent=0 // pred_check
    _
  $region167: #{attention_block2_forward.1} parent=0 // pred_check_branch
    %219 = sbr.rel (0) target = $region169
  $region168: #{attention_block2_forward.1} parent=0 // pred_region
    _
  $region169: #{attention_block2_forward.1} parent=0 // pred_fallthru
    _
  // Predicated region
  $region170: #{attention_block2_forward.1} parent=0 // pred_check
    _
  $region171: #{attention_block2_forward.1} parent=0 // pred_check_branch
    %221 = sbr.rel (0) target = $region173
  $region172: #{attention_block2_forward.1} parent=0 // pred_region
    _
  $region173: #{attention_block2_forward.1} parent=0 // pred_fallthru
    _
  // Predicated region
  $region174: #{attention_block2_forward.1} parent=0 // pred_check
    _
  $region175: #{attention_block2_forward.1} parent=0 // pred_check_branch
    %223 = sbr.rel (0) target = $region177
  $region176: #{attention_block2_forward.1} parent=0 // pred_region
    _
  $region177: #{attention_block2_forward.1} parent=0 // pred_fallthru
    _
  // Predicated region
  $region178: #{attention_block2_forward.1} parent=0 // pred_check
    _
  $region179: #{attention_block2_forward.1} parent=0 // pred_check_branch
    %225 = sbr.rel (0) target = $region181
  $region180: #{attention_block2_forward.1} parent=0 // pred_region
    _
  $region181: #{attention_block2_forward.1} parent=0 // pred_fallthru
    _
  // Predicated region
  $region182: #{attention_block2_forward.1} parent=0 // pred_check
    _
  $region183: #{attention_block2_forward.1} parent=0 // pred_check_branch
    %227 = sbr.rel (0) target = $region185
  $region184: #{attention_block2_forward.1} parent=0 // pred_region
    _
  $region185: #{attention_block2_forward.1} parent=0 // pred_fallthru
    _
  // Predicated region
  $region186: #{attention_block2_forward.1} parent=0 // pred_check
    _
  $region187: #{attention_block2_forward.1} parent=0 // pred_check_branch
    %229 = sbr.rel (0) target = $region189
  $region188: #{attention_block2_forward.1} parent=0 // pred_region
    _
  $region189: #{attention_block2_forward.1} parent=0 // pred_fallthru
    _
  // Predicated region
  $region190: #{attention_block2_forward.1} parent=0 // pred_check
    _
  $region191: #{attention_block2_forward.1} parent=0 // pred_check_branch
    %231 = sbr.rel (0) target = $region193
  $region192: #{attention_block2_forward.1} parent=0 // pred_region
    _
  $region193: #{attention_block2_forward.1} parent=0 // pred_fallthru
    _
  // Predicated region
  $region194: #{attention_block2_forward.1} parent=0 // pred_check
    _
  $region195: #{attention_block2_forward.1} parent=0 // pred_check_branch
    %233 = sbr.rel (0) target = $region197
  $region196: #{attention_block2_forward.1} parent=0 // pred_region
    _
  $region197: #{attention_block2_forward.1} parent=0 // pred_fallthru
    _
  // Predicated region
  $region198: #{attention_block2_forward.1} parent=0 // pred_check
    _
  $region199: #{attention_block2_forward.1} parent=0 // pred_check_branch
    %235 = sbr.rel (0) target = $region201
  $region200: #{attention_block2_forward.1} parent=0 // pred_region
    _
  $region201: #{attention_block2_forward.1} parent=0 // pred_fallthru
    _
  // Predicated region
  $region202: #{attention_block2_forward.1} parent=0 // pred_check
    _
  $region203: #{attention_block2_forward.1} parent=0 // pred_check_branch
    %237 = sbr.rel (0) target = $region205
  $region204: #{attention_block2_forward.1} parent=0 // pred_region
    _
  $region205: #{attention_block2_forward.1} parent=0 // pred_fallthru
    _
  // Predicated region
  $region206: #{attention_block2_forward.1} parent=0 // pred_check
    _
  $region207: #{attention_block2_forward.1} parent=0 // pred_check_branch
    %239 = sbr.rel (0) target = $region209
  $region208: #{attention_block2_forward.1} parent=0 // pred_region
    _
  $region209: #{attention_block2_forward.1} parent=0 // pred_fallthru
    _
  // Predicated region
  $region210: #{attention_block2_forward.1} parent=0 // pred_check
    _
  $region211: #{attention_block2_forward.1} parent=0 // pred_check_branch
    %241 = sbr.rel (0) target = $region213
  $region212: #{attention_block2_forward.1} parent=0 // pred_region
    _
  $region213: #{attention_block2_forward.1} parent=0 // pred_fallthru
    _
  // Predicated region
  $region214: #{attention_block2_forward.1} parent=0 // pred_check
    _
  $region215: #{attention_block2_forward.1} parent=0 // pred_check_branch
    %243 = sbr.rel (0) target = $region217
  $region216: #{attention_block2_forward.1} parent=0 // pred_region
    _
  $region217: #{attention_block2_forward.1} parent=0 // pred_fallthru
    _
  // Predicated region
  $region218: #{attention_block2_forward.1} parent=0 // pred_check
    _
  $region219: #{attention_block2_forward.1} parent=0 // pred_check_branch
    %245 = sbr.rel (0) target = $region221
  $region220: #{attention_block2_forward.1} parent=0 // pred_region
    _
  $region221: #{attention_block2_forward.1} parent=0 // pred_fallthru
    _
  // Predicated region
  $region222: #{attention_block2_forward.1} parent=0 // pred_check
    _
  $region223: #{attention_block2_forward.1} parent=0 // pred_check_branch
    %247 = sbr.rel (0) target = $region225
  $region224: #{attention_block2_forward.1} parent=0 // pred_region
    _
  $region225: #{attention_block2_forward.1} parent=0 // pred_fallthru
    _
  // Predicated region
  $region226: #{attention_block2_forward.1} parent=0 // pred_check
    _
  $region227: #{attention_block2_forward.1} parent=0 // pred_check_branch
    %249 = sbr.rel (0) target = $region229
  $region228: #{attention_block2_forward.1} parent=0 // pred_region
    _
  $region229: #{attention_block2_forward.1} parent=0 // pred_fallthru
    _
  // Predicated region
  $region230: #{attention_block2_forward.1} parent=0 // pred_check
    _
  $region231: #{attention_block2_forward.1} parent=0 // pred_check_branch
    %251 = sbr.rel (0) target = $region233
  $region232: #{attention_block2_forward.1} parent=0 // pred_region
    _
  $region233: #{attention_block2_forward.1} parent=0 // pred_fallthru
    _
  // Predicated region
  $region234: #{attention_block2_forward.1} parent=0 // pred_check
    _
  $region235: #{attention_block2_forward.1} parent=0 // pred_check_branch
    %253 = sbr.rel (0) target = $region237
  $region236: #{attention_block2_forward.1} parent=0 // pred_region
    _
  $region237: #{attention_block2_forward.1} parent=0 // pred_fallthru
    _
  // Predicated region
  $region238: #{attention_block2_forward.1} parent=0 // pred_check
    _
  $region239: #{attention_block2_forward.1} parent=0 // pred_check_branch
    %255 = sbr.rel (0) target = $region241
  $region240: #{attention_block2_forward.1} parent=0 // pred_region
    _
  $region241: #{attention_block2_forward.1} parent=0 // pred_fallthru
    _
  // Predicated region
  $region242: #{attention_block2_forward.1} parent=0 // pred_check
    _
  $region243: #{attention_block2_forward.1} parent=0 // pred_check_branch
    %257 = sbr.rel (0) target = $region245
  $region244: #{attention_block2_forward.1} parent=0 // pred_region
    _
  $region245: #{attention_block2_forward.1} parent=0 // pred_fallthru
    _
  // Predicated region
  $region246: #{attention_block2_forward.1} parent=0 // pred_check
    _
  $region247: #{attention_block2_forward.1} parent=0 // pred_check_branch
    %259 = sbr.rel (0) target = $region249
  $region248: #{attention_block2_forward.1} parent=0 // pred_region
    _
  $region249: #{attention_block2_forward.1} parent=0 // pred_fallthru
    _
  // Predicated region
  $region250: #{attention_block2_forward.1} parent=0 // pred_check
    _
  $region251: #{attention_block2_forward.1} parent=0 // pred_check_branch
    %261 = sbr.rel (0) target = $region253
  $region252: #{attention_block2_forward.1} parent=0 // pred_region
    _
  $region253: #{attention_block2_forward.1} parent=0 // pred_fallthru
    _
  // Predicated region
  $region254: #{attention_block2_forward.1} parent=0 // pred_check
    _
  $region255: #{attention_block2_forward.1} parent=0 // pred_check_branch
    %263 = sbr.rel (0) target = $region257
  $region256: #{attention_block2_forward.1} parent=0 // pred_region
    _
  $region257: #{attention_block2_forward.1} parent=0 // pred_fallthru
    _
  // Predicated region
  $region258: #{attention_block2_forward.1} parent=0 // pred_check
    _
  $region259: #{attention_block2_forward.1} parent=0 // pred_check_branch
    %265 = sbr.rel (0) target = $region261
  $region260: #{attention_block2_forward.1} parent=0 // pred_region
    _
  $region261: #{attention_block2_forward.1} parent=0 // pred_fallthru
    _
  %v266 = vld [vmem:[%s1] sm:$0xff]
  %v267 = vld [vmem:[%s1 + $0x8] sm:$0xff]
  %v268 = vld [vmem:[%s1 + $0x10] sm:$0xff]
  %v269 = vld [vmem:[%s1 + $0x18] sm:$0xff]
  %v270 = vld [vmem:[%s1 + $0x20] sm:$0xff]
  %v271 = vld [vmem:[%s1 + $0x28] sm:$0xff]
  %v272 = vld [vmem:[%s1 + $0x30] sm:$0xff]
  %v273 = vld [vmem:[%s1 + $0x38] sm:$0xff]
  %v274 = vld [vmem:[%s1 + $0x40] sm:$0xff]
  %v275 = vld [vmem:[%s1 + $0x48] sm:$0xff]
  %v276 = vld [vmem:[%s1 + $0x50] sm:$0xff]
  %v277 = vld [vmem:[%s1 + $0x58] sm:$0xff]
  %v278 = vld [vmem:[%s1 + $0x60] sm:$0xff]
  %v279 = vld [vmem:[%s1 + $0x68] sm:$0xff]
  %v280 = vld [vmem:[%s1 + $0x70] sm:$0xff]
  %v281 = vld [vmem:[%s1 + $0x78] sm:$0xff]
  %v282 = vld [vmem:[%s3] sm:$0xf]
  %v283 = vld [vmem:[%s5] sm:$0x1]
  %v285 = vlaneseq
  %v286 = vshrl.u32 %v285, 7
  %v287 = vsub.s32 0, %v286
  %v288 = vrot.slane %v283, %v287
  %vm290 = vcmask 31744
  %v292 = vsel %vm290, %v266, 0
  %v295 = vsel %vm290, %v267, 0
  %v298 = vsel %vm290, %v268, 0
  %v301 = vsel %vm290, %v269, 0
  %v304 = vsel %vm290, %v270, 0
  %v307 = vsel %vm290, %v271, 0
  %v310 = vsel %vm290, %v272, 0
  %v313 = vsel %vm290, %v273, 0
  %v316 = vsel %vm290, %v274, 0
  %v319 = vsel %vm290, %v275, 0
  %v322 = vsel %vm290, %v276, 0
  %v325 = vsel %vm290, %v277, 0
  %v328 = vsel %vm290, %v278, 0
  %v331 = vsel %vm290, %v279, 0
  %v334 = vsel %vm290, %v280, 0
  %v337 = vsel %vm290, %v281, 0
  %vm339 = vcmask 1043456
  %v341 = vsel %vm339, %v282, 0
  %343 = vmatprep.subr.mxu0 0.0
  %344 = vmatpush1.msra.mxu0 %v341
  %345 = vmatprep.subr.mxu0 0.0
  %346 = vmatpush1.msra.mxu0 0.0
  %347 = vmatprep.subr.mxu0 0.0
  %348 = vmatpush1.msra.mxu0 0.0
  %349 = vmatprep.subr.mxu0 0.0
  %350 = vmatpush1.msra.mxu0 0.0
  %351 = vmatprep.subr.mxu0 0.0
  %352 = vmatpush1.msra.mxu0 0.0
  %353 = vmatprep.subr.mxu0 0.0
  %354 = vmatpush1.msra.mxu0 0.0
  %355 = vmatprep.subr.mxu0 0.0
  %356 = vmatpush1.msra.mxu0 0.0
  %357 = vmatprep.subr.mxu0 0.0
  %358 = vmatpush1.msra.mxu0 0.0
  %359 = vmatprep.subr.mxu0 0.0
  %360 = vmatpush1.msra.mxu0 0.0
  %361 = vmatprep.subr.mxu0 0.0
  %362 = vmatpush1.msra.mxu0 0.0
  %363 = vmatprep.subr.mxu0 0.0
  %364 = vmatpush1.msra.mxu0 0.0
  %365 = vmatprep.subr.mxu0 0.0
  %366 = vmatpush1.msra.mxu0 0.0
  %367 = vmatprep.subr.mxu0 0.0
  %368 = vmatpush1.msra.mxu0 0.0
  %369 = vmatprep.subr.mxu0 0.0
  %370 = vmatpush1.msra.mxu0 0.0
  %371 = vmatprep.subr.mxu0 0.0
  %372 = vmatpush1.msra.mxu0 0.0
  %373 = vmatprep.subr.mxu0 0.0
  %374 = vmatpush1.msra.mxu0 0.0
  %375 = vmatprep.subr.mxu0 0.0
  %376 = vmatpush1.msra.mxu0 0.0
  %377 = vmatprep.subr.mxu0 0.0
  %378 = vmatpush1.msra.mxu0 0.0
  %379 = vmatprep.subr.mxu0 0.0
  %380 = vmatpush1.msra.mxu0 0.0
  %381 = vmatprep.subr.mxu0 0.0
  %382 = vmatpush1.msra.mxu0 0.0
  %383 = vmatprep.subr.mxu0 0.0
  %384 = vmatpush1.msra.mxu0 0.0
  %385 = vmatprep.subr.mxu0 0.0
  %386 = vmatpush1.msra.mxu0 0.0
  %387 = vmatprep.subr.mxu0 0.0
  %388 = vmatpush1.msra.mxu0 0.0
  %389 = vmatprep.subr.mxu0 0.0
  %390 = vmatpush1.msra.mxu0 0.0
  %391 = vmatprep.subr.mxu0 0.0
  %392 = vmatpush1.msra.mxu0 0.0
  %393 = vmatprep.subr.mxu0 0.0
  %394 = vmatpush1.msra.mxu0 0.0
  %395 = vmatprep.subr.mxu0 0.0
  %396 = vmatpush1.msra.mxu0 0.0
  %397 = vmatprep.subr.mxu0 0.0
  %398 = vmatpush1.msra.mxu0 0.0
  %399 = vmatprep.subr.mxu0 0.0
  %400 = vmatpush1.msra.mxu0 0.0
  %401 = vmatprep.subr.mxu0 0.0
  %402 = vmatpush1.msra.mxu0 0.0
  %403 = vmatprep.subr.mxu0 0.0
  %404 = vmatpush1.msra.mxu0 0.0
  %405 = vmatprep.subr.mxu0 0.0
  %406 = vmatpush1.msra.mxu0 0.0
  %407 = vmatprep.mubr.f32.mxu0 0.0
  %408 = vmatmul.mubr.f32.gmra.mrb[0].mxu0 %v292
  %v409 = vpop.f32.mrb[0].mxu0
  %v410 = vadd.f32 %v288, %v409
  %v411 = vpop.f32.mrb[0].mxu0
  %412 = vmatprep.mubr.f32.mxu0 0.0
  %413 = vmatmul.mubr.f32.gmra.mrb[0].mxu0 %v295
  %v414 = vpop.f32.mrb[0].mxu0
  %v415 = vadd.f32 %v288, %v414
  %v416 = vpop.f32.mrb[0].mxu0
  %417 = vmatprep.mubr.f32.mxu0 0.0
  %418 = vmatmul.mubr.f32.gmra.mrb[0].mxu0 %v298
  %v419 = vpop.f32.mrb[0].mxu0
  %v420 = vadd.f32 %v288, %v419
  %v421 = vpop.f32.mrb[0].mxu0
  %422 = vmatprep.mubr.f32.mxu0 0.0
  %423 = vmatmul.mubr.f32.gmra.mrb[0].mxu0 %v301
  %v424 = vpop.f32.mrb[0].mxu0
  %v425 = vadd.f32 %v288, %v424
  %v426 = vpop.f32.mrb[0].mxu0
  %427 = vmatprep.mubr.f32.mxu0 0.0
  %428 = vmatmul.mubr.f32.gmra.mrb[0].mxu0 %v304
  %v429 = vpop.f32.mrb[0].mxu0
  %v430 = vadd.f32 %v288, %v429
  %v431 = vpop.f32.mrb[0].mxu0
  %432 = vmatprep.mubr.f32.mxu0 0.0
  %433 = vmatmul.mubr.f32.gmra.mrb[0].mxu0 %v307
  %v434 = vpop.f32.mrb[0].mxu0
  %v435 = vadd.f32 %v288, %v434
  %v436 = vpop.f32.mrb[0].mxu0
  %437 = vmatprep.mubr.f32.mxu0 0.0
  %438 = vmatmul.mubr.f32.gmra.mrb[0].mxu0 %v310
  %v439 = vpop.f32.mrb[0].mxu0
  %v440 = vadd.f32 %v288, %v439
  %v441 = vpop.f32.mrb[0].mxu0
  %442 = vmatprep.mubr.f32.mxu0 0.0
  %443 = vmatmul.mubr.f32.gmra.mrb[0].mxu0 %v313
  %v444 = vpop.f32.mrb[0].mxu0
  %v445 = vadd.f32 %v288, %v444
  %v446 = vpop.f32.mrb[0].mxu0
  %447 = vmatprep.mubr.f32.mxu0 0.0
  %448 = vmatmul.mubr.f32.gmra.mrb[0].mxu0 %v316
  %v449 = vpop.f32.mrb[0].mxu0
  %v450 = vadd.f32 %v288, %v449
  %v451 = vpop.f32.mrb[0].mxu0
  %452 = vmatprep.mubr.f32.mxu0 0.0
  %453 = vmatmul.mubr.f32.gmra.mrb[0].mxu0 %v319
  %v454 = vpop.f32.mrb[0].mxu0
  %v455 = vadd.f32 %v288, %v454
  %v456 = vpop.f32.mrb[0].mxu0
  %457 = vmatprep.mubr.f32.mxu0 0.0
  %458 = vmatmul.mubr.f32.gmra.mrb[0].mxu0 %v322
  %v459 = vpop.f32.mrb[0].mxu0
  %v460 = vadd.f32 %v288, %v459
  %v461 = vpop.f32.mrb[0].mxu0
  %462 = vmatprep.mubr.f32.mxu0 0.0
  %463 = vmatmul.mubr.f32.gmra.mrb[0].mxu0 %v325
  %v464 = vpop.f32.mrb[0].mxu0
  %v465 = vadd.f32 %v288, %v464
  %v466 = vpop.f32.mrb[0].mxu0
  %467 = vmatprep.mubr.f32.mxu0 0.0
  %468 = vmatmul.mubr.f32.gmra.mrb[0].mxu0 %v328
  %v469 = vpop.f32.mrb[0].mxu0
  %v470 = vadd.f32 %v288, %v469
  %v471 = vpop.f32.mrb[0].mxu0
  %472 = vmatprep.mubr.f32.mxu0 0.0
  %473 = vmatmul.mubr.f32.gmra.mrb[0].mxu0 %v331
  %v474 = vpop.f32.mrb[0].mxu0
  %v475 = vadd.f32 %v288, %v474
  %v476 = vpop.f32.mrb[0].mxu0
  %477 = vmatprep.mubr.f32.mxu0 0.0
  %478 = vmatmul.mubr.f32.gmra.mrb[0].mxu0 %v334
  %v479 = vpop.f32.mrb[0].mxu0
  %v480 = vadd.f32 %v288, %v479
  %v481 = vpop.f32.mrb[0].mxu0
  %482 = vmatprep.mubr.f32.mxu0 0.0
  %483 = vmatmul.mubr.f32.gmra.mrb[0].mxu0 %v337
  %v484 = vpop.f32.mrb[0].mxu0
  %v485 = vadd.f32 %v288, %v484
  %v486 = vpop.f32.mrb[0].mxu0
  %487 = vdwg.mxu0
  %v488 = vmax.f32 %v410, 0.0
  %v489 = vmax.f32 %v415, 0.0
  %v490 = vmax.f32 %v420, 0.0
  %v491 = vmax.f32 %v425, 0.0
  %v492 = vmax.f32 %v430, 0.0
  %v493 = vmax.f32 %v435, 0.0
  %v494 = vmax.f32 %v440, 0.0
  %v495 = vmax.f32 %v445, 0.0
  %v496 = vmax.f32 %v450, 0.0
  %v497 = vmax.f32 %v455, 0.0
  %v498 = vmax.f32 %v460, 0.0
  %v499 = vmax.f32 %v465, 0.0
  %v500 = vmax.f32 %v470, 0.0
  %v501 = vmax.f32 %v475, 0.0
  %v502 = vmax.f32 %v480, 0.0
  %v503 = vmax.f32 %v485, 0.0
  %v504 = vld [vmem:[%s7] sm:$0xff]
  %v505 = vld [vmem:[%s9] sm:$0x1]
  %v507 = vlaneseq
  %v508 = vshrl.u32 %v507, 7
  %v509 = vsub.s32 0, %v508
  %v510 = vrot.slane %v505, %v509
  %vm512 = vcmask 64512
  %v514 = vsel %vm512, %v488, 0
  %v517 = vsel %vm512, %v489, 0
  %v520 = vsel %vm512, %v490, 0
  %v523 = vsel %vm512, %v491, 0
  %v526 = vsel %vm512, %v492, 0
  %v529 = vsel %vm512, %v493, 0
  %v532 = vsel %vm512, %v494, 0
  %v535 = vsel %vm512, %v495, 0
  %v538 = vsel %vm512, %v496, 0
  %v541 = vsel %vm512, %v497, 0
  %v544 = vsel %vm512, %v498, 0
  %v547 = vsel %vm512, %v499, 0
  %v550 = vsel %vm512, %v500, 0
  %v553 = vsel %vm512, %v501, 0
  %v556 = vsel %vm512, %v502, 0
  %v559 = vsel %vm512, %v503, 0
  %561 = vmatprep.subr.mxu0 0.0
  %562 = vmatpush1.msra.mxu0 %v504
  %563 = vmatprep.subr.mxu0 0.0
  %564 = vmatpush1.msra.mxu0 0.0
  %565 = vmatprep.subr.mxu0 0.0
  %566 = vmatpush1.msra.mxu0 0.0
  %567 = vmatprep.subr.mxu0 0.0
  %568 = vmatpush1.msra.mxu0 0.0
  %569 = vmatprep.subr.mxu0 0.0
  %570 = vmatpush1.msra.mxu0 0.0
  %571 = vmatprep.subr.mxu0 0.0
  %572 = vmatpush1.msra.mxu0 0.0
  %573 = vmatprep.subr.mxu0 0.0
  %574 = vmatpush1.msra.mxu0 0.0
  %575 = vmatprep.subr.mxu0 0.0
  %576 = vmatpush1.msra.mxu0 0.0
  %577 = vmatprep.subr.mxu0 0.0
  %578 = vmatpush1.msra.mxu0 0.0
  %579 = vmatprep.subr.mxu0 0.0
  %580 = vmatpush1.msra.mxu0 0.0
  %581 = vmatprep.subr.mxu0 0.0
  %582 = vmatpush1.msra.mxu0 0.0
  %583 = vmatprep.subr.mxu0 0.0
  %584 = vmatpush1.msra.mxu0 0.0
  %585 = vmatprep.subr.mxu0 0.0
  %586 = vmatpush1.msra.mxu0 0.0
  %587 = vmatprep.subr.mxu0 0.0
  %588 = vmatpush1.msra.mxu0 0.0
  %589 = vmatprep.subr.mxu0 0.0
  %590 = vmatpush1.msra.mxu0 0.0
  %591 = vmatprep.subr.mxu0 0.0
  %592 = vmatpush1.msra.mxu0 0.0
  %593 = vmatprep.subr.mxu0 0.0
  %594 = vmatpush1.msra.mxu0 0.0
  %595 = vmatprep.subr.mxu0 0.0
  %596 = vmatpush1.msra.mxu0 0.0
  %597 = vmatprep.subr.mxu0 0.0
  %598 = vmatpush1.msra.mxu0 0.0
  %599 = vmatprep.subr.mxu0 0.0
  %600 = vmatpush1.msra.mxu0 0.0
  %601 = vmatprep.subr.mxu0 0.0
  %602 = vmatpush1.msra.mxu0 0.0
  %603 = vmatprep.subr.mxu0 0.0
  %604 = vmatpush1.msra.mxu0 0.0
  %605 = vmatprep.subr.mxu0 0.0
  %606 = vmatpush1.msra.mxu0 0.0
  %607 = vmatprep.subr.mxu0 0.0
  %608 = vmatpush1.msra.mxu0 0.0
  %609 = vmatprep.subr.mxu0 0.0
  %610 = vmatpush1.msra.mxu0 0.0
  %611 = vmatprep.subr.mxu0 0.0
  %612 = vmatpush1.msra.mxu0 0.0
  %613 = vmatprep.subr.mxu0 0.0
  %614 = vmatpush1.msra.mxu0 0.0
  %615 = vmatprep.subr.mxu0 0.0
  %616 = vmatpush1.msra.mxu0 0.0
  %617 = vmatprep.subr.mxu0 0.0
  %618 = vmatpush1.msra.mxu0 0.0
  %619 = vmatprep.subr.mxu0 0.0
  %620 = vmatpush1.msra.mxu0 0.0
  %621 = vmatprep.subr.mxu0 0.0
  %622 = vmatpush1.msra.mxu0 0.0
  %623 = vmatprep.subr.mxu0 0.0
  %624 = vmatpush1.msra.mxu0 0.0
  %625 = vmatprep.mubr.f32.mxu0 0.0
  %626 = vmatmul.mubr.f32.gmra.mrb[0].mxu0 %v514
  %v627 = vpop.f32.mrb[0].mxu0
  %v628 = vadd.f32 %v510, %v627
  %v629 = vpop.f32.mrb[0].mxu0
  %630 = vmatprep.mubr.f32.mxu0 0.0
  %631 = vmatmul.mubr.f32.gmra.mrb[0].mxu0 %v517
  %v632 = vpop.f32.mrb[0].mxu0
  %v633 = vadd.f32 %v510, %v632
  %v634 = vpop.f32.mrb[0].mxu0
  %635 = vmatprep.mubr.f32.mxu0 0.0
  %636 = vmatmul.mubr.f32.gmra.mrb[0].mxu0 %v520
  %v637 = vpop.f32.mrb[0].mxu0
  %v638 = vadd.f32 %v510, %v637
  %v639 = vpop.f32.mrb[0].mxu0
  %640 = vmatprep.mubr.f32.mxu0 0.0
  %641 = vmatmul.mubr.f32.gmra.mrb[0].mxu0 %v523
  %v642 = vpop.f32.mrb[0].mxu0
  %v643 = vadd.f32 %v510, %v642
  %v644 = vpop.f32.mrb[0].mxu0
  %645 = vmatprep.mubr.f32.mxu0 0.0
  %646 = vmatmul.mubr.f32.gmra.mrb[0].mxu0 %v526
  %v647 = vpop.f32.mrb[0].mxu0
  %v648 = vadd.f32 %v510, %v647
  %v649 = vpop.f32.mrb[0].mxu0
  %650 = vmatprep.mubr.f32.mxu0 0.0
  %651 = vmatmul.mubr.f32.gmra.mrb[0].mxu0 %v529
  %v652 = vpop.f32.mrb[0].mxu0
  %v653 = vadd.f32 %v510, %v652
  %v654 = vpop.f32.mrb[0].mxu0
  %655 = vmatprep.mubr.f32.mxu0 0.0
  %656 = vmatmul.mubr.f32.gmra.mrb[0].mxu0 %v532
  %v657 = vpop.f32.mrb[0].mxu0
  %v658 = vadd.f32 %v510, %v657
  %v659 = vpop.f32.mrb[0].mxu0
  %660 = vmatprep.mubr.f32.mxu0 0.0
  %661 = vmatmul.mubr.f32.gmra.mrb[0].mxu0 %v535
  %v662 = vpop.f32.mrb[0].mxu0
  %v663 = vadd.f32 %v510, %v662
  %v664 = vpop.f32.mrb[0].mxu0
  %665 = vmatprep.mubr.f32.mxu0 0.0
  %666 = vmatmul.mubr.f32.gmra.mrb[0].mxu0 %v538
  %v667 = vpop.f32.mrb[0].mxu0
  %v668 = vadd.f32 %v510, %v667
  %v669 = vpop.f32.mrb[0].mxu0
  %670 = vmatprep.mubr.f32.mxu0 0.0
  %671 = vmatmul.mubr.f32.gmra.mrb[0].mxu0 %v541
  %v672 = vpop.f32.mrb[0].mxu0
  %v673 = vadd.f32 %v510, %v672
  %v674 = vpop.f32.mrb[0].mxu0
  %675 = vmatprep.mubr.f32.mxu0 0.0
  %676 = vmatmul.mubr.f32.gmra.mrb[0].mxu0 %v544
  %v677 = vpop.f32.mrb[0].mxu0
  %v678 = vadd.f32 %v510, %v677
  %v679 = vpop.f32.mrb[0].mxu0
  %680 = vmatprep.mubr.f32.mxu0 0.0
  %681 = vmatmul.mubr.f32.gmra.mrb[0].mxu0 %v547
  %v682 = vpop.f32.mrb[0].mxu0
  %v683 = vadd.f32 %v510, %v682
  %v684 = vpop.f32.mrb[0].mxu0
  %685 = vmatprep.mubr.f32.mxu0 0.0
  %686 = vmatmul.mubr.f32.gmra.mrb[0].mxu0 %v550
  %v687 = vpop.f32.mrb[0].mxu0
  %v688 = vadd.f32 %v510, %v687
  %v689 = vpop.f32.mrb[0].mxu0
  %690 = vmatprep.mubr.f32.mxu0 0.0
  %691 = vmatmul.mubr.f32.gmra.mrb[0].mxu0 %v553
  %v692 = vpop.f32.mrb[0].mxu0
  %v693 = vadd.f32 %v510, %v692
  %v694 = vpop.f32.mrb[0].mxu0
  %695 = vmatprep.mubr.f32.mxu0 0.0
  %696 = vmatmul.mubr.f32.gmra.mrb[0].mxu0 %v556
  %v697 = vpop.f32.mrb[0].mxu0
  %v698 = vadd.f32 %v510, %v697
  %v699 = vpop.f32.mrb[0].mxu0
  %700 = vmatprep.mubr.f32.mxu0 0.0
  %701 = vmatmul.mubr.f32.gmra.mrb[0].mxu0 %v559
  %v702 = vpop.f32.mrb[0].mxu0
  %v703 = vadd.f32 %v510, %v702
  %v704 = vpop.f32.mrb[0].mxu0
  %705 = vdwg.mxu0
  %v706 = vmax.f32 %v628, 0.0
  %v707 = vmax.f32 %v633, 0.0
  %v708 = vmax.f32 %v638, 0.0
  %v709 = vmax.f32 %v643, 0.0
  %v710 = vmax.f32 %v648, 0.0
  %v711 = vmax.f32 %v653, 0.0
  %v712 = vmax.f32 %v658, 0.0
  %v713 = vmax.f32 %v663, 0.0
  %v714 = vmax.f32 %v668, 0.0
  %v715 = vmax.f32 %v673, 0.0
  %v716 = vmax.f32 %v678, 0.0
  %v717 = vmax.f32 %v683, 0.0
  %v718 = vmax.f32 %v688, 0.0
  %v719 = vmax.f32 %v693, 0.0
  %v720 = vmax.f32 %v698, 0.0
  %v721 = vmax.f32 %v703, 0.0
  %v722 = vld [vmem:[%s11] sm:$0xff]
  %v723 = vld [vmem:[%s13] sm:$0x1]
  %v725 = vlaneseq
  %v726 = vshrl.u32 %v725, 7
  %v727 = vsub.s32 0, %v726
  %v728 = vrot.slane %v723, %v727
  %v731 = vsel %vm512, %v706, 0
  %v734 = vsel %vm512, %v707, 0
  %v737 = vsel %vm512, %v708, 0
  %v740 = vsel %vm512, %v709, 0
  %v743 = vsel %vm512, %v710, 0
  %v746 = vsel %vm512, %v711, 0
  %v749 = vsel %vm512, %v712, 0
  %v752 = vsel %vm512, %v713, 0
  %v755 = vsel %vm512, %v714, 0
  %v758 = vsel %vm512, %v715, 0
  %v761 = vsel %vm512, %v716, 0
  %v764 = vsel %vm512, %v717, 0
  %v767 = vsel %vm512, %v718, 0
  %v770 = vsel %vm512, %v719, 0
  %v773 = vsel %vm512, %v720, 0
  %v776 = vsel %vm512, %v721, 0
  %778 = vmatprep.subr.mxu0 0.0
  %779 = vmatpush1.msra.mxu0 %v722
  %780 = vmatprep.subr.mxu0 0.0
  %781 = vmatpush1.msra.mxu0 0.0
  %782 = vmatprep.subr.mxu0 0.0
  %783 = vmatpush1.msra.mxu0 0.0
  %784 = vmatprep.subr.mxu0 0.0
  %785 = vmatpush1.msra.mxu0 0.0
  %786 = vmatprep.subr.mxu0 0.0
  %787 = vmatpush1.msra.mxu0 0.0
  %788 = vmatprep.subr.mxu0 0.0
  %789 = vmatpush1.msra.mxu0 0.0
  %790 = vmatprep.subr.mxu0 0.0
  %791 = vmatpush1.msra.mxu0 0.0
  %792 = vmatprep.subr.mxu0 0.0
  %793 = vmatpush1.msra.mxu0 0.0
  %794 = vmatprep.subr.mxu0 0.0
  %795 = vmatpush1.msra.mxu0 0.0
  %796 = vmatprep.subr.mxu0 0.0
  %797 = vmatpush1.msra.mxu0 0.0
  %798 = vmatprep.subr.mxu0 0.0
  %799 = vmatpush1.msra.mxu0 0.0
  %800 = vmatprep.subr.mxu0 0.0
  %801 = vmatpush1.msra.mxu0 0.0
  %802 = vmatprep.subr.mxu0 0.0
  %803 = vmatpush1.msra.mxu0 0.0
  %804 = vmatprep.subr.mxu0 0.0
  %805 = vmatpush1.msra.mxu0 0.0
  %806 = vmatprep.subr.mxu0 0.0
  %807 = vmatpush1.msra.mxu0 0.0
  %808 = vmatprep.subr.mxu0 0.0
  %809 = vmatpush1.msra.mxu0 0.0
  %810 = vmatprep.subr.mxu0 0.0
  %811 = vmatpush1.msra.mxu0 0.0
  %812 = vmatprep.subr.mxu0 0.0
  %813 = vmatpush1.msra.mxu0 0.0
  %814 = vmatprep.subr.mxu0 0.0
  %815 = vmatpush1.msra.mxu0 0.0
  %816 = vmatprep.subr.mxu0 0.0
  %817 = vmatpush1.msra.mxu0 0.0
  %818 = vmatprep.subr.mxu0 0.0
  %819 = vmatpush1.msra.mxu0 0.0
  %820 = vmatprep.subr.mxu0 0.0
  %821 = vmatpush1.msra.mxu0 0.0
  %822 = vmatprep.subr.mxu0 0.0
  %823 = vmatpush1.msra.mxu0 0.0
  %824 = vmatprep.subr.mxu0 0.0
  %825 = vmatpush1.msra.mxu0 0.0
  %826 = vmatprep.subr.mxu0 0.0
  %827 = vmatpush1.msra.mxu0 0.0
  %828 = vmatprep.subr.mxu0 0.0
  %829 = vmatpush1.msra.mxu0 0.0
  %830 = vmatprep.subr.mxu0 0.0
  %831 = vmatpush1.msra.mxu0 0.0
  %832 = vmatprep.subr.mxu0 0.0
  %833 = vmatpush1.msra.mxu0 0.0
  %834 = vmatprep.subr.mxu0 0.0
  %835 = vmatpush1.msra.mxu0 0.0
  %836 = vmatprep.subr.mxu0 0.0
  %837 = vmatpush1.msra.mxu0 0.0
  %838 = vmatprep.subr.mxu0 0.0
  %839 = vmatpush1.msra.mxu0 0.0
  %840 = vmatprep.subr.mxu0 0.0
  %841 = vmatpush1.msra.mxu0 0.0
  %842 = vmatprep.mubr.f32.mxu0 0.0
  %843 = vmatmul.mubr.f32.gmra.mrb[0].mxu0 %v731
  %v844 = vpop.f32.mrb[0].mxu0
  %v845 = vadd.f32 %v728, %v844
  %v846 = vpop.f32.mrb[0].mxu0
  %847 = vmatprep.mubr.f32.mxu0 0.0
  %848 = vmatmul.mubr.f32.gmra.mrb[0].mxu0 %v734
  %v849 = vpop.f32.mrb[0].mxu0
  %v850 = vadd.f32 %v728, %v849
  %v851 = vpop.f32.mrb[0].mxu0
  %852 = vmatprep.mubr.f32.mxu0 0.0
  %853 = vmatmul.mubr.f32.gmra.mrb[0].mxu0 %v737
  %v854 = vpop.f32.mrb[0].mxu0
  %v855 = vadd.f32 %v728, %v854
  %v856 = vpop.f32.mrb[0].mxu0
  %857 = vmatprep.mubr.f32.mxu0 0.0
  %858 = vmatmul.mubr.f32.gmra.mrb[0].mxu0 %v740
  %v859 = vpop.f32.mrb[0].mxu0
  %v860 = vadd.f32 %v728, %v859
  %v861 = vpop.f32.mrb[0].mxu0
  %862 = vmatprep.mubr.f32.mxu0 0.0
  %863 = vmatmul.mubr.f32.gmra.mrb[0].mxu0 %v743
  %v864 = vpop.f32.mrb[0].mxu0
  %v865 = vadd.f32 %v728, %v864
  %v866 = vpop.f32.mrb[0].mxu0
  %867 = vmatprep.mubr.f32.mxu0 0.0
  %868 = vmatmul.mubr.f32.gmra.mrb[0].mxu0 %v746
  %v869 = vpop.f32.mrb[0].mxu0
  %v870 = vadd.f32 %v728, %v869
  %v871 = vpop.f32.mrb[0].mxu0
  %872 = vmatprep.mubr.f32.mxu0 0.0
  %873 = vmatmul.mubr.f32.gmra.mrb[0].mxu0 %v749
  %v874 = vpop.f32.mrb[0].mxu0
  %v875 = vadd.f32 %v728, %v874
  %v876 = vpop.f32.mrb[0].mxu0
  %877 = vmatprep.mubr.f32.mxu0 0.0
  %878 = vmatmul.mubr.f32.gmra.mrb[0].mxu0 %v752
  %v879 = vpop.f32.mrb[0].mxu0
  %v880 = vadd.f32 %v728, %v879
  %v881 = vpop.f32.mrb[0].mxu0
  %882 = vmatprep.mubr.f32.mxu0 0.0
  %883 = vmatmul.mubr.f32.gmra.mrb[0].mxu0 %v755
  %v884 = vpop.f32.mrb[0].mxu0
  %v885 = vadd.f32 %v728, %v884
  %v886 = vpop.f32.mrb[0].mxu0
  %887 = vmatprep.mubr.f32.mxu0 0.0
  %888 = vmatmul.mubr.f32.gmra.mrb[0].mxu0 %v758
  %v889 = vpop.f32.mrb[0].mxu0
  %v890 = vadd.f32 %v728, %v889
  %v891 = vpop.f32.mrb[0].mxu0
  %892 = vmatprep.mubr.f32.mxu0 0.0
  %893 = vmatmul.mubr.f32.gmra.mrb[0].mxu0 %v761
  %v894 = vpop.f32.mrb[0].mxu0
  %v895 = vadd.f32 %v728, %v894
  %v896 = vpop.f32.mrb[0].mxu0
  %897 = vmatprep.mubr.f32.mxu0 0.0
  %898 = vmatmul.mubr.f32.gmra.mrb[0].mxu0 %v764
  %v899 = vpop.f32.mrb[0].mxu0
  %v900 = vadd.f32 %v728, %v899
  %v901 = vpop.f32.mrb[0].mxu0
  %902 = vmatprep.mubr.f32.mxu0 0.0
  %903 = vmatmul.mubr.f32.gmra.mrb[0].mxu0 %v767
  %v904 = vpop.f32.mrb[0].mxu0
  %v905 = vadd.f32 %v728, %v904
  %v906 = vpop.f32.mrb[0].mxu0
  %907 = vmatprep.mubr.f32.mxu0 0.0
  %908 = vmatmul.mubr.f32.gmra.mrb[0].mxu0 %v770
  %v909 = vpop.f32.mrb[0].mxu0
  %v910 = vadd.f32 %v728, %v909
  %v911 = vpop.f32.mrb[0].mxu0
  %912 = vmatprep.mubr.f32.mxu0 0.0
  %913 = vmatmul.mubr.f32.gmra.mrb[0].mxu0 %v773
  %v914 = vpop.f32.mrb[0].mxu0
  %v915 = vadd.f32 %v728, %v914
  %v916 = vpop.f32.mrb[0].mxu0
  %917 = vmatprep.mubr.f32.mxu0 0.0
  %918 = vmatmul.mubr.f32.gmra.mrb[0].mxu0 %v776
  %v919 = vpop.f32.mrb[0].mxu0
  %v920 = vadd.f32 %v728, %v919
  %v921 = vpop.f32.mrb[0].mxu0
  %922 = vdwg.mxu0
  %v923 = vmax.f32 %v845, 0.0
  %v924 = vmax.f32 %v850, 0.0
  %v925 = vmax.f32 %v855, 0.0
  %v926 = vmax.f32 %v860, 0.0
  %v927 = vmax.f32 %v865, 0.0
  %v928 = vmax.f32 %v870, 0.0
  %v929 = vmax.f32 %v875, 0.0
  %v930 = vmax.f32 %v880, 0.0
  %v931 = vmax.f32 %v885, 0.0
  %v932 = vmax.f32 %v890, 0.0
  %v933 = vmax.f32 %v895, 0.0
  %v934 = vmax.f32 %v900, 0.0
  %v935 = vmax.f32 %v905, 0.0
  %v936 = vmax.f32 %v910, 0.0
  %v937 = vmax.f32 %v915, 0.0
  %v938 = vmax.f32 %v920, 0.0
  %v939 = vld [vmem:[%s15] sm:$0xff]
  %v940 = vld [vmem:[%s15 + $0x8] sm:$0xff]
  %v941 = vld [vmem:[%s17] sm:$0x1]
  %v943 = vlaneseq
  %v944 = vshrl.u32 %v943, 7
  %v945 = vsub.s32 0, %v944
  %v946 = vrot.slane %v941, %v945
  %vm948 = vcmask 130048
  %v950 = vsel %vm948, %v923, 0
  %v953 = vsel %vm948, %v924, 0
  %v956 = vsel %vm948, %v925, 0
  %v959 = vsel %vm948, %v926, 0
  %v962 = vsel %vm948, %v927, 0
  %v965 = vsel %vm948, %v928, 0
  %v968 = vsel %vm948, %v929, 0
  %v971 = vsel %vm948, %v930, 0
  %v974 = vsel %vm948, %v931, 0
  %v977 = vsel %vm948, %v932, 0
  %v980 = vsel %vm948, %v933, 0
  %v983 = vsel %vm948, %v934, 0
  %v986 = vsel %vm948, %v935, 0
  %v989 = vsel %vm948, %v936, 0
  %v992 = vsel %vm948, %v937, 0
  %v995 = vsel %vm948, %v938, 0
  %997 = vmatprep.subr.mxu0 0.0
  %998 = vmatpush1.msra.mxu0 %v939
  %999 = vmatprep.subr.mxu0 0.0
  %1000 = vmatpush1.msra.mxu0 %v940
  %1001 = vmatprep.subr.mxu0 0.0
  %1002 = vmatpush1.msra.mxu0 0.0
  %1003 = vmatprep.subr.mxu0 0.0
  %1004 = vmatpush1.msra.mxu0 0.0
  %1005 = vmatprep.subr.mxu0 0.0
  %1006 = vmatpush1.msra.mxu0 0.0
  %1007 = vmatprep.subr.mxu0 0.0
  %1008 = vmatpush1.msra.mxu0 0.0
  %1009 = vmatprep.subr.mxu0 0.0
  %1010 = vmatpush1.msra.mxu0 0.0
  %1011 = vmatprep.subr.mxu0 0.0
  %1012 = vmatpush1.msra.mxu0 0.0
  %1013 = vmatprep.subr.mxu0 0.0
  %1014 = vmatpush1.msra.mxu0 0.0
  %1015 = vmatprep.subr.mxu0 0.0
  %1016 = vmatpush1.msra.mxu0 0.0
  %1017 = vmatprep.subr.mxu0 0.0
  %1018 = vmatpush1.msra.mxu0 0.0
  %1019 = vmatprep.subr.mxu0 0.0
  %1020 = vmatpush1.msra.mxu0 0.0
  %1021 = vmatprep.subr.mxu0 0.0
  %1022 = vmatpush1.msra.mxu0 0.0
  %1023 = vmatprep.subr.mxu0 0.0
  %1024 = vmatpush1.msra.mxu0 0.0
  %1025 = vmatprep.subr.mxu0 0.0
  %1026 = vmatpush1.msra.mxu0 0.0
  %1027 = vmatprep.subr.mxu0 0.0
  %1028 = vmatpush1.msra.mxu0 0.0
  %1029 = vmatprep.subr.mxu0 0.0
  %1030 = vmatpush1.msra.mxu0 0.0
  %1031 = vmatprep.subr.mxu0 0.0
  %1032 = vmatpush1.msra.mxu0 0.0
  %1033 = vmatprep.subr.mxu0 0.0
  %1034 = vmatpush1.msra.mxu0 0.0
  %1035 = vmatprep.subr.mxu0 0.0
  %1036 = vmatpush1.msra.mxu0 0.0
  %1037 = vmatprep.subr.mxu0 0.0
  %1038 = vmatpush1.msra.mxu0 0.0
  %1039 = vmatprep.subr.mxu0 0.0
  %1040 = vmatpush1.msra.mxu0 0.0
  %1041 = vmatprep.subr.mxu0 0.0
  %1042 = vmatpush1.msra.mxu0 0.0
  %1043 = vmatprep.subr.mxu0 0.0
  %1044 = vmatpush1.msra.mxu0 0.0
  %1045 = vmatprep.subr.mxu0 0.0
  %1046 = vmatpush1.msra.mxu0 0.0
  %1047 = vmatprep.subr.mxu0 0.0
  %1048 = vmatpush1.msra.mxu0 0.0
  %1049 = vmatprep.subr.mxu0 0.0
  %1050 = vmatpush1.msra.mxu0 0.0
  %1051 = vmatprep.subr.mxu0 0.0
  %1052 = vmatpush1.msra.mxu0 0.0
  %1053 = vmatprep.subr.mxu0 0.0
  %1054 = vmatpush1.msra.mxu0 0.0
  %1055 = vmatprep.subr.mxu0 0.0
  %1056 = vmatpush1.msra.mxu0 0.0
  %1057 = vmatprep.subr.mxu0 0.0
  %1058 = vmatpush1.msra.mxu0 0.0
  %1059 = vmatprep.subr.mxu0 0.0
  %1060 = vmatpush1.msra.mxu0 0.0
  %1061 = vmatprep.mubr.f32.mxu0 0.0
  %1062 = vmatmul.mubr.f32.gmra.mrb[0].mxu0 %v950
  %v1063 = vpop.f32.mrb[0].mxu0
  %v1064 = vadd.f32 %v946, %v1063
  %v1065 = vpop.f32.mrb[0].mxu0
  %1066 = vmatprep.mubr.f32.mxu0 0.0
  %1067 = vmatmul.mubr.f32.gmra.mrb[0].mxu0 %v953
  %v1068 = vpop.f32.mrb[0].mxu0
  %v1069 = vadd.f32 %v946, %v1068
  %v1070 = vpop.f32.mrb[0].mxu0
  %1071 = vmatprep.mubr.f32.mxu0 0.0
  %1072 = vmatmul.mubr.f32.gmra.mrb[0].mxu0 %v956
  %v1073 = vpop.f32.mrb[0].mxu0
  %v1074 = vadd.f32 %v946, %v1073
  %v1075 = vpop.f32.mrb[0].mxu0
  %1076 = vmatprep.mubr.f32.mxu0 0.0
  %1077 = vmatmul.mubr.f32.gmra.mrb[0].mxu0 %v959
  %v1078 = vpop.f32.mrb[0].mxu0
  %v1079 = vadd.f32 %v946, %v1078
  %v1080 = vpop.f32.mrb[0].mxu0
  %1081 = vmatprep.mubr.f32.mxu0 0.0
  %1082 = vmatmul.mubr.f32.gmra.mrb[0].mxu0 %v962
  %v1083 = vpop.f32.mrb[0].mxu0
  %v1084 = vadd.f32 %v946, %v1083
  %v1085 = vpop.f32.mrb[0].mxu0
  %1086 = vmatprep.mubr.f32.mxu0 0.0
  %1087 = vmatmul.mubr.f32.gmra.mrb[0].mxu0 %v965
  %v1088 = vpop.f32.mrb[0].mxu0
  %v1089 = vadd.f32 %v946, %v1088
  %v1090 = vpop.f32.mrb[0].mxu0
  %1091 = vmatprep.mubr.f32.mxu0 0.0
  %1092 = vmatmul.mubr.f32.gmra.mrb[0].mxu0 %v968
  %v1093 = vpop.f32.mrb[0].mxu0
  %v1094 = vadd.f32 %v946, %v1093
  %v1095 = vpop.f32.mrb[0].mxu0
  %1096 = vmatprep.mubr.f32.mxu0 0.0
  %1097 = vmatmul.mubr.f32.gmra.mrb[0].mxu0 %v971
  %v1098 = vpop.f32.mrb[0].mxu0
  %v1099 = vadd.f32 %v946, %v1098
  %v1100 = vpop.f32.mrb[0].mxu0
  %1101 = vmatprep.mubr.f32.mxu0 0.0
  %1102 = vmatmul.mubr.f32.gmra.mrb[0].mxu0 %v974
  %v1103 = vpop.f32.mrb[0].mxu0
  %v1104 = vadd.f32 %v946, %v1103
  %v1105 = vpop.f32.mrb[0].mxu0
  %1106 = vmatprep.mubr.f32.mxu0 0.0
  %1107 = vmatmul.mubr.f32.gmra.mrb[0].mxu0 %v977
  %v1108 = vpop.f32.mrb[0].mxu0
  %v1109 = vadd.f32 %v946, %v1108
  %v1110 = vpop.f32.mrb[0].mxu0
  %1111 = vmatprep.mubr.f32.mxu0 0.0
  %1112 = vmatmul.mubr.f32.gmra.mrb[0].mxu0 %v980
  %v1113 = vpop.f32.mrb[0].mxu0
  %v1114 = vadd.f32 %v946, %v1113
  %v1115 = vpop.f32.mrb[0].mxu0
  %1116 = vmatprep.mubr.f32.mxu0 0.0
  %1117 = vmatmul.mubr.f32.gmra.mrb[0].mxu0 %v983
  %v1118 = vpop.f32.mrb[0].mxu0
  %v1119 = vadd.f32 %v946, %v1118
  %v1120 = vpop.f32.mrb[0].mxu0
  %1121 = vmatprep.mubr.f32.mxu0 0.0
  %1122 = vmatmul.mubr.f32.gmra.mrb[0].mxu0 %v986
  %v1123 = vpop.f32.mrb[0].mxu0
  %v1124 = vadd.f32 %v946, %v1123
  %v1125 = vpop.f32.mrb[0].mxu0
  %1126 = vmatprep.mubr.f32.mxu0 0.0
  %1127 = vmatmul.mubr.f32.gmra.mrb[0].mxu0 %v989
  %v1128 = vpop.f32.mrb[0].mxu0
  %v1129 = vadd.f32 %v946, %v1128
  %v1130 = vpop.f32.mrb[0].mxu0
  %1131 = vmatprep.mubr.f32.mxu0 0.0
  %1132 = vmatmul.mubr.f32.gmra.mrb[0].mxu0 %v992
  %v1133 = vpop.f32.mrb[0].mxu0
  %v1134 = vadd.f32 %v946, %v1133
  %v1135 = vpop.f32.mrb[0].mxu0
  %1136 = vmatprep.mubr.f32.mxu0 0.0
  %1137 = vmatmul.mubr.f32.gmra.mrb[0].mxu0 %v995
  %v1138 = vpop.f32.mrb[0].mxu0
  %v1139 = vadd.f32 %v946, %v1138
  %v1140 = vpop.f32.mrb[0].mxu0
  %1141 = vdwg.mxu0
  %v1142 = vld [vmem:[%s19] sm:$0xff]
  %v1143 = vld [vmem:[%s21] sm:$0x1]
  %v1145 = vlaneseq
  %v1146 = vshrl.u32 %v1145, 7
  %v1147 = vsub.s32 0, %v1146
  %v1148 = vrot.slane %v1143, %v1147
  %1150 = vmatprep.subr.mxu0 0.0
  %1151 = vmatpush1.msra.mxu0 %v1142
  %1152 = vmatprep.subr.mxu0 0.0
  %1153 = vmatpush1.msra.mxu0 0.0
  %1154 = vmatprep.subr.mxu0 0.0
  %1155 = vmatpush1.msra.mxu0 0.0
  %1156 = vmatprep.subr.mxu0 0.0
  %1157 = vmatpush1.msra.mxu0 0.0
  %1158 = vmatprep.subr.mxu0 0.0
  %1159 = vmatpush1.msra.mxu0 0.0
  %1160 = vmatprep.subr.mxu0 0.0
  %1161 = vmatpush1.msra.mxu0 0.0
  %1162 = vmatprep.subr.mxu0 0.0
  %1163 = vmatpush1.msra.mxu0 0.0
  %1164 = vmatprep.subr.mxu0 0.0
  %1165 = vmatpush1.msra.mxu0 0.0
  %1166 = vmatprep.subr.mxu0 0.0
  %1167 = vmatpush1.msra.mxu0 0.0
  %1168 = vmatprep.subr.mxu0 0.0
  %1169 = vmatpush1.msra.mxu0 0.0
  %1170 = vmatprep.subr.mxu0 0.0
  %1171 = vmatpush1.msra.mxu0 0.0
  %1172 = vmatprep.subr.mxu0 0.0
  %1173 = vmatpush1.msra.mxu0 0.0
  %1174 = vmatprep.subr.mxu0 0.0
  %1175 = vmatpush1.msra.mxu0 0.0
  %1176 = vmatprep.subr.mxu0 0.0
  %1177 = vmatpush1.msra.mxu0 0.0
  %1178 = vmatprep.subr.mxu0 0.0
  %1179 = vmatpush1.msra.mxu0 0.0
  %1180 = vmatprep.subr.mxu0 0.0
  %1181 = vmatpush1.msra.mxu0 0.0
  %1182 = vmatprep.subr.mxu0 0.0
  %1183 = vmatpush1.msra.mxu0 0.0
  %1184 = vmatprep.subr.mxu0 0.0
  %1185 = vmatpush1.msra.mxu0 0.0
  %1186 = vmatprep.subr.mxu0 0.0
  %1187 = vmatpush1.msra.mxu0 0.0
  %1188 = vmatprep.subr.mxu0 0.0
  %1189 = vmatpush1.msra.mxu0 0.0
  %1190 = vmatprep.subr.mxu0 0.0
  %1191 = vmatpush1.msra.mxu0 0.0
  %1192 = vmatprep.subr.mxu0 0.0
  %1193 = vmatpush1.msra.mxu0 0.0
  %1194 = vmatprep.subr.mxu0 0.0
  %1195 = vmatpush1.msra.mxu0 0.0
  %1196 = vmatprep.subr.mxu0 0.0
  %1197 = vmatpush1.msra.mxu0 0.0
  %1198 = vmatprep.subr.mxu0 0.0
  %1199 = vmatpush1.msra.mxu0 0.0
  %1200 = vmatprep.subr.mxu0 0.0
  %1201 = vmatpush1.msra.mxu0 0.0
  %1202 = vmatprep.subr.mxu0 0.0
  %1203 = vmatpush1.msra.mxu0 0.0
  %1204 = vmatprep.subr.mxu0 0.0
  %1205 = vmatpush1.msra.mxu0 0.0
  %1206 = vmatprep.subr.mxu0 0.0
  %1207 = vmatpush1.msra.mxu0 0.0
  %1208 = vmatprep.subr.mxu0 0.0
  %1209 = vmatpush1.msra.mxu0 0.0
  %1210 = vmatprep.subr.mxu0 0.0
  %1211 = vmatpush1.msra.mxu0 0.0
  %1212 = vmatprep.subr.mxu0 0.0
  %1213 = vmatpush1.msra.mxu0 0.0
  %1214 = vmatprep.mubr.f32.mxu0 0.0
  %1215 = vmatmul.mubr.f32.gmra.mrb[0].mxu0 %v731
  %v1216 = vpop.f32.mrb[0].mxu0
  %v1217 = vadd.f32 %v1148, %v1216
  %v1218 = vpop.f32.mrb[0].mxu0
  %1219 = vmatprep.mubr.f32.mxu0 0.0
  %1220 = vmatmul.mubr.f32.gmra.mrb[0].mxu0 %v734
  %v1221 = vpop.f32.mrb[0].mxu0
  %v1222 = vadd.f32 %v1148, %v1221
  %v1223 = vpop.f32.mrb[0].mxu0
  %1224 = vmatprep.mubr.f32.mxu0 0.0
  %1225 = vmatmul.mubr.f32.gmra.mrb[0].mxu0 %v737
  %v1226 = vpop.f32.mrb[0].mxu0
  %v1227 = vadd.f32 %v1148, %v1226
  %v1228 = vpop.f32.mrb[0].mxu0
  %1229 = vmatprep.mubr.f32.mxu0 0.0
  %1230 = vmatmul.mubr.f32.gmra.mrb[0].mxu0 %v740
  %v1231 = vpop.f32.mrb[0].mxu0
  %v1232 = vadd.f32 %v1148, %v1231
  %v1233 = vpop.f32.mrb[0].mxu0
  %1234 = vmatprep.mubr.f32.mxu0 0.0
  %1235 = vmatmul.mubr.f32.gmra.mrb[0].mxu0 %v743
  %v1236 = vpop.f32.mrb[0].mxu0
  %v1237 = vadd.f32 %v1148, %v1236
  %v1238 = vpop.f32.mrb[0].mxu0
  %1239 = vmatprep.mubr.f32.mxu0 0.0
  %1240 = vmatmul.mubr.f32.gmra.mrb[0].mxu0 %v746
  %v1241 = vpop.f32.mrb[0].mxu0
  %v1242 = vadd.f32 %v1148, %v1241
  %v1243 = vpop.f32.mrb[0].mxu0
  %1244 = vmatprep.mubr.f32.mxu0 0.0
  %1245 = vmatmul.mubr.f32.gmra.mrb[0].mxu0 %v749
  %v1246 = vpop.f32.mrb[0].mxu0
  %v1247 = vadd.f32 %v1148, %v1246
  %v1248 = vpop.f32.mrb[0].mxu0
  %1249 = vmatprep.mubr.f32.mxu0 0.0
  %1250 = vmatmul.mubr.f32.gmra.mrb[0].mxu0 %v752
  %v1251 = vpop.f32.mrb[0].mxu0
  %v1252 = vadd.f32 %v1148, %v1251
  %v1253 = vpop.f32.mrb[0].mxu0
  %1254 = vmatprep.mubr.f32.mxu0 0.0
  %1255 = vmatmul.mubr.f32.gmra.mrb[0].mxu0 %v755
  %v1256 = vpop.f32.mrb[0].mxu0
  %v1257 = vadd.f32 %v1148, %v1256
  %v1258 = vpop.f32.mrb[0].mxu0
  %1259 = vmatprep.mubr.f32.mxu0 0.0
  %1260 = vmatmul.mubr.f32.gmra.mrb[0].mxu0 %v758
  %v1261 = vpop.f32.mrb[0].mxu0
  %v1262 = vadd.f32 %v1148, %v1261
  %v1263 = vpop.f32.mrb[0].mxu0
  %1264 = vmatprep.mubr.f32.mxu0 0.0
  %1265 = vmatmul.mubr.f32.gmra.mrb[0].mxu0 %v761
  %v1266 = vpop.f32.mrb[0].mxu0
  %v1267 = vadd.f32 %v1148, %v1266
  %v1268 = vpop.f32.mrb[0].mxu0
  %1269 = vmatprep.mubr.f32.mxu0 0.0
  %1270 = vmatmul.mubr.f32.gmra.mrb[0].mxu0 %v764
  %v1271 = vpop.f32.mrb[0].mxu0
  %v1272 = vadd.f32 %v1148, %v1271
  %v1273 = vpop.f32.mrb[0].mxu0
  %1274 = vmatprep.mubr.f32.mxu0 0.0
  %1275 = vmatmul.mubr.f32.gmra.mrb[0].mxu0 %v767
  %v1276 = vpop.f32.mrb[0].mxu0
  %v1277 = vadd.f32 %v1148, %v1276
  %v1278 = vpop.f32.mrb[0].mxu0
  %1279 = vmatprep.mubr.f32.mxu0 0.0
  %1280 = vmatmul.mubr.f32.gmra.mrb[0].mxu0 %v770
  %v1281 = vpop.f32.mrb[0].mxu0
  %v1282 = vadd.f32 %v1148, %v1281
  %v1283 = vpop.f32.mrb[0].mxu0
  %1284 = vmatprep.mubr.f32.mxu0 0.0
  %1285 = vmatmul.mubr.f32.gmra.mrb[0].mxu0 %v773
  %v1286 = vpop.f32.mrb[0].mxu0
  %v1287 = vadd.f32 %v1148, %v1286
  %v1288 = vpop.f32.mrb[0].mxu0
  %1289 = vmatprep.mubr.f32.mxu0 0.0
  %1290 = vmatmul.mubr.f32.gmra.mrb[0].mxu0 %v776
  %v1291 = vpop.f32.mrb[0].mxu0
  %v1292 = vadd.f32 %v1148, %v1291
  %v1293 = vpop.f32.mrb[0].mxu0
  %1294 = vdwg.mxu0
  %v1295 = vadd.f32 %v1064, %v1217
  %v1296 = vadd.f32 %v1069, %v1222
  %v1297 = vadd.f32 %v1074, %v1227
  %v1298 = vadd.f32 %v1079, %v1232
  %v1299 = vadd.f32 %v1084, %v1237
  %v1300 = vadd.f32 %v1089, %v1242
  %v1301 = vadd.f32 %v1094, %v1247
  %v1302 = vadd.f32 %v1099, %v1252
  %v1303 = vadd.f32 %v1104, %v1257
  %v1304 = vadd.f32 %v1109, %v1262
  %v1305 = vadd.f32 %v1114, %v1267
  %v1306 = vadd.f32 %v1119, %v1272
  %v1307 = vadd.f32 %v1124, %v1277
  %v1308 = vadd.f32 %v1129, %v1282
  %v1309 = vadd.f32 %v1134, %v1287
  %v1310 = vadd.f32 %v1139, %v1292
  %v1311 = vmax.f32 %v1295, 0.0
  %v1312 = vmax.f32 %v1296, 0.0
  %v1313 = vmax.f32 %v1297, 0.0
  %v1314 = vmax.f32 %v1298, 0.0
  %v1315 = vmax.f32 %v1299, 0.0
  %v1316 = vmax.f32 %v1300, 0.0
  %v1317 = vmax.f32 %v1301, 0.0
  %v1318 = vmax.f32 %v1302, 0.0
  %v1319 = vmax.f32 %v1303, 0.0
  %v1320 = vmax.f32 %v1304, 0.0
  %v1321 = vmax.f32 %v1305, 0.0
  %v1322 = vmax.f32 %v1306, 0.0
  %v1323 = vmax.f32 %v1307, 0.0
  %v1324 = vmax.f32 %v1308, 0.0
  %v1325 = vmax.f32 %v1309, 0.0
  %v1326 = vmax.f32 %v1310, 0.0
  %v1327 = vld [vmem:[%s23] sm:$0xff]
  %v1328 = vld [vmem:[%s23 + $0x8] sm:$0xff]
  %v1329 = vld [vmem:[%s25] sm:$0x1]
  %v1331 = vlaneseq
  %v1332 = vshrl.u32 %v1331, 7
  %v1333 = vsub.s32 0, %v1332
  %v1334 = vrot.slane %v1329, %v1333
  %v1337 = vsel %vm948, %v1311, 0
  %v1340 = vsel %vm948, %v1312, 0
  %v1343 = vsel %vm948, %v1313, 0
  %v1346 = vsel %vm948, %v1314, 0
  %v1349 = vsel %vm948, %v1315, 0
  %v1352 = vsel %vm948, %v1316, 0
  %v1355 = vsel %vm948, %v1317, 0
  %v1358 = vsel %vm948, %v1318, 0
  %v1361 = vsel %vm948, %v1319, 0
  %v1364 = vsel %vm948, %v1320, 0
  %v1367 = vsel %vm948, %v1321, 0
  %v1370 = vsel %vm948, %v1322, 0
  %v1373 = vsel %vm948, %v1323, 0
  %v1376 = vsel %vm948, %v1324, 0
  %v1379 = vsel %vm948, %v1325, 0
  %v1382 = vsel %vm948, %v1326, 0
  %1384 = vmatprep.subr.mxu0 0.0
  %1385 = vmatpush1.msra.mxu0 %v1327
  %1386 = vmatprep.subr.mxu0 0.0
  %1387 = vmatpush1.msra.mxu0 %v1328
  %1388 = vmatprep.subr.mxu0 0.0
  %1389 = vmatpush1.msra.mxu0 0.0
  %1390 = vmatprep.subr.mxu0 0.0
  %1391 = vmatpush1.msra.mxu0 0.0
  %1392 = vmatprep.subr.mxu0 0.0
  %1393 = vmatpush1.msra.mxu0 0.0
  %1394 = vmatprep.subr.mxu0 0.0
  %1395 = vmatpush1.msra.mxu0 0.0
  %1396 = vmatprep.subr.mxu0 0.0
  %1397 = vmatpush1.msra.mxu0 0.0
  %1398 = vmatprep.subr.mxu0 0.0
  %1399 = vmatpush1.msra.mxu0 0.0
  %1400 = vmatprep.subr.mxu0 0.0
  %1401 = vmatpush1.msra.mxu0 0.0
  %1402 = vmatprep.subr.mxu0 0.0
  %1403 = vmatpush1.msra.mxu0 0.0
  %1404 = vmatprep.subr.mxu0 0.0
  %1405 = vmatpush1.msra.mxu0 0.0
  %1406 = vmatprep.subr.mxu0 0.0
  %1407 = vmatpush1.msra.mxu0 0.0
  %1408 = vmatprep.subr.mxu0 0.0
  %1409 = vmatpush1.msra.mxu0 0.0
  %1410 = vmatprep.subr.mxu0 0.0
  %1411 = vmatpush1.msra.mxu0 0.0
  %1412 = vmatprep.subr.mxu0 0.0
  %1413 = vmatpush1.msra.mxu0 0.0
  %1414 = vmatprep.subr.mxu0 0.0
  %1415 = vmatpush1.msra.mxu0 0.0
  %1416 = vmatprep.subr.mxu0 0.0
  %1417 = vmatpush1.msra.mxu0 0.0
  %1418 = vmatprep.subr.mxu0 0.0
  %1419 = vmatpush1.msra.mxu0 0.0
  %1420 = vmatprep.subr.mxu0 0.0
  %1421 = vmatpush1.msra.mxu0 0.0
  %1422 = vmatprep.subr.mxu0 0.0
  %1423 = vmatpush1.msra.mxu0 0.0
  %1424 = vmatprep.subr.mxu0 0.0
  %1425 = vmatpush1.msra.mxu0 0.0
  %1426 = vmatprep.subr.mxu0 0.0
  %1427 = vmatpush1.msra.mxu0 0.0
  %1428 = vmatprep.subr.mxu0 0.0
  %1429 = vmatpush1.msra.mxu0 0.0
  %1430 = vmatprep.subr.mxu0 0.0
  %1431 = vmatpush1.msra.mxu0 0.0
  %1432 = vmatprep.subr.mxu0 0.0
  %1433 = vmatpush1.msra.mxu0 0.0
  %1434 = vmatprep.subr.mxu0 0.0
  %1435 = vmatpush1.msra.mxu0 0.0
  %1436 = vmatprep.subr.mxu0 0.0
  %1437 = vmatpush1.msra.mxu0 0.0
  %1438 = vmatprep.subr.mxu0 0.0
  %1439 = vmatpush1.msra.mxu0 0.0
  %1440 = vmatprep.subr.mxu0 0.0
  %1441 = vmatpush1.msra.mxu0 0.0
  %1442 = vmatprep.subr.mxu0 0.0
  %1443 = vmatpush1.msra.mxu0 0.0
  %1444 = vmatprep.subr.mxu0 0.0
  %1445 = vmatpush1.msra.mxu0 0.0
  %1446 = vmatprep.subr.mxu0 0.0
  %1447 = vmatpush1.msra.mxu0 0.0
  %1448 = vmatprep.mubr.f32.mxu0 0.0
  %1449 = vmatmul.mubr.f32.gmra.mrb[0].mxu0 %v1337
  %v1450 = vpop.f32.mrb[0].mxu0
  %v1451 = vadd.f32 %v1334, %v1450
  %v1452 = vpop.f32.mrb[0].mxu0
  %1453 = vmatprep.mubr.f32.mxu0 0.0
  %1454 = vmatmul.mubr.f32.gmra.mrb[0].mxu0 %v1340
  %v1455 = vpop.f32.mrb[0].mxu0
  %v1456 = vadd.f32 %v1334, %v1455
  %v1457 = vpop.f32.mrb[0].mxu0
  %1458 = vmatprep.mubr.f32.mxu0 0.0
  %1459 = vmatmul.mubr.f32.gmra.mrb[0].mxu0 %v1343
  %v1460 = vpop.f32.mrb[0].mxu0
  %v1461 = vadd.f32 %v1334, %v1460
  %v1462 = vpop.f32.mrb[0].mxu0
  %1463 = vmatprep.mubr.f32.mxu0 0.0
  %1464 = vmatmul.mubr.f32.gmra.mrb[0].mxu0 %v1346
  %v1465 = vpop.f32.mrb[0].mxu0
  %v1466 = vadd.f32 %v1334, %v1465
  %v1467 = vpop.f32.mrb[0].mxu0
  %1468 = vmatprep.mubr.f32.mxu0 0.0
  %1469 = vmatmul.mubr.f32.gmra.mrb[0].mxu0 %v1349
  %v1470 = vpop.f32.mrb[0].mxu0
  %v1471 = vadd.f32 %v1334, %v1470
  %v1472 = vpop.f32.mrb[0].mxu0
  %1473 = vmatprep.mubr.f32.mxu0 0.0
  %1474 = vmatmul.mubr.f32.gmra.mrb[0].mxu0 %v1352
  %v1475 = vpop.f32.mrb[0].mxu0
  %v1476 = vadd.f32 %v1334, %v1475
  %v1477 = vpop.f32.mrb[0].mxu0
  %1478 = vmatprep.mubr.f32.mxu0 0.0
  %1479 = vmatmul.mubr.f32.gmra.mrb[0].mxu0 %v1355
  %v1480 = vpop.f32.mrb[0].mxu0
  %v1481 = vadd.f32 %v1334, %v1480
  %v1482 = vpop.f32.mrb[0].mxu0
  %1483 = vmatprep.mubr.f32.mxu0 0.0
  %1484 = vmatmul.mubr.f32.gmra.mrb[0].mxu0 %v1358
  %v1485 = vpop.f32.mrb[0].mxu0
  %v1486 = vadd.f32 %v1334, %v1485
  %v1487 = vpop.f32.mrb[0].mxu0
  %1488 = vmatprep.mubr.f32.mxu0 0.0
  %1489 = vmatmul.mubr.f32.gmra.mrb[0].mxu0 %v1361
  %v1490 = vpop.f32.mrb[0].mxu0
  %v1491 = vadd.f32 %v1334, %v1490
  %v1492 = vpop.f32.mrb[0].mxu0
  %1493 = vmatprep.mubr.f32.mxu0 0.0
  %1494 = vmatmul.mubr.f32.gmra.mrb[0].mxu0 %v1364
  %v1495 = vpop.f32.mrb[0].mxu0
  %v1496 = vadd.f32 %v1334, %v1495
  %v1497 = vpop.f32.mrb[0].mxu0
  %1498 = vmatprep.mubr.f32.mxu0 0.0
  %1499 = vmatmul.mubr.f32.gmra.mrb[0].mxu0 %v1367
  %v1500 = vpop.f32.mrb[0].mxu0
  %v1501 = vadd.f32 %v1334, %v1500
  %v1502 = vpop.f32.mrb[0].mxu0
  %1503 = vmatprep.mubr.f32.mxu0 0.0
  %1504 = vmatmul.mubr.f32.gmra.mrb[0].mxu0 %v1370
  %v1505 = vpop.f32.mrb[0].mxu0
  %v1506 = vadd.f32 %v1334, %v1505
  %v1507 = vpop.f32.mrb[0].mxu0
  %1508 = vmatprep.mubr.f32.mxu0 0.0
  %1509 = vmatmul.mubr.f32.gmra.mrb[0].mxu0 %v1373
  %v1510 = vpop.f32.mrb[0].mxu0
  %v1511 = vadd.f32 %v1334, %v1510
  %v1512 = vpop.f32.mrb[0].mxu0
  %1513 = vmatprep.mubr.f32.mxu0 0.0
  %1514 = vmatmul.mubr.f32.gmra.mrb[0].mxu0 %v1376
  %v1515 = vpop.f32.mrb[0].mxu0
  %v1516 = vadd.f32 %v1334, %v1515
  %v1517 = vpop.f32.mrb[0].mxu0
  %1518 = vmatprep.mubr.f32.mxu0 0.0
  %1519 = vmatmul.mubr.f32.gmra.mrb[0].mxu0 %v1379
  %v1520 = vpop.f32.mrb[0].mxu0
  %v1521 = vadd.f32 %v1334, %v1520
  %v1522 = vpop.f32.mrb[0].mxu0
  %1523 = vmatprep.mubr.f32.mxu0 0.0
  %1524 = vmatmul.mubr.f32.gmra.mrb[0].mxu0 %v1382
  %v1525 = vpop.f32.mrb[0].mxu0
  %v1526 = vadd.f32 %v1334, %v1525
  %v1527 = vpop.f32.mrb[0].mxu0
  %1528 = vdwg.mxu0
  %v1529 = vmax.f32 %v1451, 0.0
  %v1530 = vmax.f32 %v1456, 0.0
  %v1531 = vmax.f32 %v1461, 0.0
  %v1532 = vmax.f32 %v1466, 0.0
  %v1533 = vmax.f32 %v1471, 0.0
  %v1534 = vmax.f32 %v1476, 0.0
  %v1535 = vmax.f32 %v1481, 0.0
  %v1536 = vmax.f32 %v1486, 0.0
  %v1537 = vmax.f32 %v1491, 0.0
  %v1538 = vmax.f32 %v1496, 0.0
  %v1539 = vmax.f32 %v1501, 0.0
  %v1540 = vmax.f32 %v1506, 0.0
  %v1541 = vmax.f32 %v1511, 0.0
  %v1542 = vmax.f32 %v1516, 0.0
  %v1543 = vmax.f32 %v1521, 0.0
  %v1544 = vmax.f32 %v1526, 0.0
  %v1545 = vld [vmem:[%s27] sm:$0xff]
  %v1546 = vld [vmem:[%s27 + $0x8] sm:$0xff]
  %v1547 = vld [vmem:[%s29] sm:$0x1]
  %v1549 = vlaneseq
  %v1550 = vshrl.u32 %v1549, 7
  %v1551 = vsub.s32 0, %v1550
  %v1552 = vrot.slane %v1547, %v1551
  %v1555 = vsel %vm948, %v1529, 0
  %v1558 = vsel %vm948, %v1530, 0
  %v1561 = vsel %vm948, %v1531, 0
  %v1564 = vsel %vm948, %v1532, 0
  %v1567 = vsel %vm948, %v1533, 0
  %v1570 = vsel %vm948, %v1534, 0
  %v1573 = vsel %vm948, %v1535, 0
  %v1576 = vsel %vm948, %v1536, 0
  %v1579 = vsel %vm948, %v1537, 0
  %v1582 = vsel %vm948, %v1538, 0
  %v1585 = vsel %vm948, %v1539, 0
  %v1588 = vsel %vm948, %v1540, 0
  %v1591 = vsel %vm948, %v1541, 0
  %v1594 = vsel %vm948, %v1542, 0
  %v1597 = vsel %vm948, %v1543, 0
  %v1600 = vsel %vm948, %v1544, 0
  %1602 = vmatprep.subr.mxu0 0.0
  %1603 = vmatpush1.msra.mxu0 %v1545
  %1604 = vmatprep.subr.mxu0 0.0
  %1605 = vmatpush1.msra.mxu0 %v1546
  %1606 = vmatprep.subr.mxu0 0.0
  %1607 = vmatpush1.msra.mxu0 0.0
  %1608 = vmatprep.subr.mxu0 0.0
  %1609 = vmatpush1.msra.mxu0 0.0
  %1610 = vmatprep.subr.mxu0 0.0
  %1611 = vmatpush1.msra.mxu0 0.0
  %1612 = vmatprep.subr.mxu0 0.0
  %1613 = vmatpush1.msra.mxu0 0.0
  %1614 = vmatprep.subr.mxu0 0.0
  %1615 = vmatpush1.msra.mxu0 0.0
  %1616 = vmatprep.subr.mxu0 0.0
  %1617 = vmatpush1.msra.mxu0 0.0
  %1618 = vmatprep.subr.mxu0 0.0
  %1619 = vmatpush1.msra.mxu0 0.0
  %1620 = vmatprep.subr.mxu0 0.0
  %1621 = vmatpush1.msra.mxu0 0.0
  %1622 = vmatprep.subr.mxu0 0.0
  %1623 = vmatpush1.msra.mxu0 0.0
  %1624 = vmatprep.subr.mxu0 0.0
  %1625 = vmatpush1.msra.mxu0 0.0
  %1626 = vmatprep.subr.mxu0 0.0
  %1627 = vmatpush1.msra.mxu0 0.0
  %1628 = vmatprep.subr.mxu0 0.0
  %1629 = vmatpush1.msra.mxu0 0.0
  %1630 = vmatprep.subr.mxu0 0.0
  %1631 = vmatpush1.msra.mxu0 0.0
  %1632 = vmatprep.subr.mxu0 0.0
  %1633 = vmatpush1.msra.mxu0 0.0
  %1634 = vmatprep.subr.mxu0 0.0
  %1635 = vmatpush1.msra.mxu0 0.0
  %1636 = vmatprep.subr.mxu0 0.0
  %1637 = vmatpush1.msra.mxu0 0.0
  %1638 = vmatprep.subr.mxu0 0.0
  %1639 = vmatpush1.msra.mxu0 0.0
  %1640 = vmatprep.subr.mxu0 0.0
  %1641 = vmatpush1.msra.mxu0 0.0
  %1642 = vmatprep.subr.mxu0 0.0
  %1643 = vmatpush1.msra.mxu0 0.0
  %1644 = vmatprep.subr.mxu0 0.0
  %1645 = vmatpush1.msra.mxu0 0.0
  %1646 = vmatprep.subr.mxu0 0.0
  %1647 = vmatpush1.msra.mxu0 0.0
  %1648 = vmatprep.subr.mxu0 0.0
  %1649 = vmatpush1.msra.mxu0 0.0
  %1650 = vmatprep.subr.mxu0 0.0
  %1651 = vmatpush1.msra.mxu0 0.0
  %1652 = vmatprep.subr.mxu0 0.0
  %1653 = vmatpush1.msra.mxu0 0.0
  %1654 = vmatprep.subr.mxu0 0.0
  %1655 = vmatpush1.msra.mxu0 0.0
  %1656 = vmatprep.subr.mxu0 0.0
  %1657 = vmatpush1.msra.mxu0 0.0
  %1658 = vmatprep.subr.mxu0 0.0
  %1659 = vmatpush1.msra.mxu0 0.0
  %1660 = vmatprep.subr.mxu0 0.0
  %1661 = vmatpush1.msra.mxu0 0.0
  %1662 = vmatprep.subr.mxu0 0.0
  %1663 = vmatpush1.msra.mxu0 0.0
  %1664 = vmatprep.subr.mxu0 0.0
  %1665 = vmatpush1.msra.mxu0 0.0
  %1666 = vmatprep.mubr.f32.mxu0 0.0
  %1667 = vmatmul.mubr.f32.gmra.mrb[0].mxu0 %v1555
  %v1668 = vpop.f32.mrb[0].mxu0
  %v1669 = vadd.f32 %v1552, %v1668
  %v1670 = vpop.f32.mrb[0].mxu0
  %1671 = vmatprep.mubr.f32.mxu0 0.0
  %1672 = vmatmul.mubr.f32.gmra.mrb[0].mxu0 %v1558
  %v1673 = vpop.f32.mrb[0].mxu0
  %v1674 = vadd.f32 %v1552, %v1673
  %v1675 = vpop.f32.mrb[0].mxu0
  %1676 = vmatprep.mubr.f32.mxu0 0.0
  %1677 = vmatmul.mubr.f32.gmra.mrb[0].mxu0 %v1561
  %v1678 = vpop.f32.mrb[0].mxu0
  %v1679 = vadd.f32 %v1552, %v1678
  %v1680 = vpop.f32.mrb[0].mxu0
  %1681 = vmatprep.mubr.f32.mxu0 0.0
  %1682 = vmatmul.mubr.f32.gmra.mrb[0].mxu0 %v1564
  %v1683 = vpop.f32.mrb[0].mxu0
  %v1684 = vadd.f32 %v1552, %v1683
  %v1685 = vpop.f32.mrb[0].mxu0
  %1686 = vmatprep.mubr.f32.mxu0 0.0
  %1687 = vmatmul.mubr.f32.gmra.mrb[0].mxu0 %v1567
  %v1688 = vpop.f32.mrb[0].mxu0
  %v1689 = vadd.f32 %v1552, %v1688
  %v1690 = vpop.f32.mrb[0].mxu0
  %1691 = vmatprep.mubr.f32.mxu0 0.0
  %1692 = vmatmul.mubr.f32.gmra.mrb[0].mxu0 %v1570
  %v1693 = vpop.f32.mrb[0].mxu0
  %v1694 = vadd.f32 %v1552, %v1693
  %v1695 = vpop.f32.mrb[0].mxu0
  %1696 = vmatprep.mubr.f32.mxu0 0.0
  %1697 = vmatmul.mubr.f32.gmra.mrb[0].mxu0 %v1573
  %v1698 = vpop.f32.mrb[0].mxu0
  %v1699 = vadd.f32 %v1552, %v1698
  %v1700 = vpop.f32.mrb[0].mxu0
  %1701 = vmatprep.mubr.f32.mxu0 0.0
  %1702 = vmatmul.mubr.f32.gmra.mrb[0].mxu0 %v1576
  %v1703 = vpop.f32.mrb[0].mxu0
  %v1704 = vadd.f32 %v1552, %v1703
  %v1705 = vpop.f32.mrb[0].mxu0
  %1706 = vmatprep.mubr.f32.mxu0 0.0
  %1707 = vmatmul.mubr.f32.gmra.mrb[0].mxu0 %v1579
  %v1708 = vpop.f32.mrb[0].mxu0
  %v1709 = vadd.f32 %v1552, %v1708
  %v1710 = vpop.f32.mrb[0].mxu0
  %1711 = vmatprep.mubr.f32.mxu0 0.0
  %1712 = vmatmul.mubr.f32.gmra.mrb[0].mxu0 %v1582
  %v1713 = vpop.f32.mrb[0].mxu0
  %v1714 = vadd.f32 %v1552, %v1713
  %v1715 = vpop.f32.mrb[0].mxu0
  %1716 = vmatprep.mubr.f32.mxu0 0.0
  %1717 = vmatmul.mubr.f32.gmra.mrb[0].mxu0 %v1585
  %v1718 = vpop.f32.mrb[0].mxu0
  %v1719 = vadd.f32 %v1552, %v1718
  %v1720 = vpop.f32.mrb[0].mxu0
  %1721 = vmatprep.mubr.f32.mxu0 0.0
  %1722 = vmatmul.mubr.f32.gmra.mrb[0].mxu0 %v1588
  %v1723 = vpop.f32.mrb[0].mxu0
  %v1724 = vadd.f32 %v1552, %v1723
  %v1725 = vpop.f32.mrb[0].mxu0
  %1726 = vmatprep.mubr.f32.mxu0 0.0
  %1727 = vmatmul.mubr.f32.gmra.mrb[0].mxu0 %v1591
  %v1728 = vpop.f32.mrb[0].mxu0
  %v1729 = vadd.f32 %v1552, %v1728
  %v1730 = vpop.f32.mrb[0].mxu0
  %1731 = vmatprep.mubr.f32.mxu0 0.0
  %1732 = vmatmul.mubr.f32.gmra.mrb[0].mxu0 %v1594
  %v1733 = vpop.f32.mrb[0].mxu0
  %v1734 = vadd.f32 %v1552, %v1733
  %v1735 = vpop.f32.mrb[0].mxu0
  %1736 = vmatprep.mubr.f32.mxu0 0.0
  %1737 = vmatmul.mubr.f32.gmra.mrb[0].mxu0 %v1597
  %v1738 = vpop.f32.mrb[0].mxu0
  %v1739 = vadd.f32 %v1552, %v1738
  %v1740 = vpop.f32.mrb[0].mxu0
  %1741 = vmatprep.mubr.f32.mxu0 0.0
  %1742 = vmatmul.mubr.f32.gmra.mrb[0].mxu0 %v1600
  %v1743 = vpop.f32.mrb[0].mxu0
  %v1744 = vadd.f32 %v1552, %v1743
  %v1745 = vpop.f32.mrb[0].mxu0
  %1746 = vdwg.mxu0
  %v1747 = vadd.f32 %v1669, %v1311
  %v1748 = vadd.f32 %v1674, %v1312
  %v1749 = vadd.f32 %v1679, %v1313
  %v1750 = vadd.f32 %v1684, %v1314
  %v1751 = vadd.f32 %v1689, %v1315
  %v1752 = vadd.f32 %v1694, %v1316
  %v1753 = vadd.f32 %v1699, %v1317
  %v1754 = vadd.f32 %v1704, %v1318
  %v1755 = vadd.f32 %v1709, %v1319
  %v1756 = vadd.f32 %v1714, %v1320
  %v1757 = vadd.f32 %v1719, %v1321
  %v1758 = vadd.f32 %v1724, %v1322
  %v1759 = vadd.f32 %v1729, %v1323
  %v1760 = vadd.f32 %v1734, %v1324
  %v1761 = vadd.f32 %v1739, %v1325
  %v1762 = vadd.f32 %v1744, %v1326
  %v1763 = vmax.f32 %v1747, 0.0
  %v1764 = vmax.f32 %v1748, 0.0
  %v1765 = vmax.f32 %v1749, 0.0
  %v1766 = vmax.f32 %v1750, 0.0
  %v1767 = vmax.f32 %v1751, 0.0
  %v1768 = vmax.f32 %v1752, 0.0
  %v1769 = vmax.f32 %v1753, 0.0
  %v1770 = vmax.f32 %v1754, 0.0
  %v1771 = vmax.f32 %v1755, 0.0
  %v1772 = vmax.f32 %v1756, 0.0
  %v1773 = vmax.f32 %v1757, 0.0
  %v1774 = vmax.f32 %v1758, 0.0
  %v1775 = vmax.f32 %v1759, 0.0
  %v1776 = vmax.f32 %v1760, 0.0
  %v1777 = vmax.f32 %v1761, 0.0
  %v1778 = vmax.f32 %v1762, 0.0
  %v1779 = vld [vmem:[%s31] sm:$0xff]
  %v1780 = vld [vmem:[%s31 + $0x8] sm:$0xff]
  %v1781 = vld [vmem:[%s33] sm:$0x1]
  %v1783 = vlaneseq
  %v1784 = vshrl.u32 %v1783, 7
  %v1785 = vsub.s32 0, %v1784
  %v1786 = vrot.slane %v1781, %v1785
  %v1789 = vsel %vm948, %v1763, 0
  %v1792 = vsel %vm948, %v1764, 0
  %v1795 = vsel %vm948, %v1765, 0
  %v1798 = vsel %vm948, %v1766, 0
  %v1801 = vsel %vm948, %v1767, 0
  %v1804 = vsel %vm948, %v1768, 0
  %v1807 = vsel %vm948, %v1769, 0
  %v1810 = vsel %vm948, %v1770, 0
  %v1813 = vsel %vm948, %v1771, 0
  %v1816 = vsel %vm948, %v1772, 0
  %v1819 = vsel %vm948, %v1773, 0
  %v1822 = vsel %vm948, %v1774, 0
  %v1825 = vsel %vm948, %v1775, 0
  %v1828 = vsel %vm948, %v1776, 0
  %v1831 = vsel %vm948, %v1777, 0
  %v1834 = vsel %vm948, %v1778, 0
  %1836 = vmatprep.subr.mxu0 0.0
  %1837 = vmatpush1.msra.mxu0 %v1779
  %1838 = vmatprep.subr.mxu0 0.0
  %1839 = vmatpush1.msra.mxu0 %v1780
  %1840 = vmatprep.subr.mxu0 0.0
  %1841 = vmatpush1.msra.mxu0 0.0
  %1842 = vmatprep.subr.mxu0 0.0
  %1843 = vmatpush1.msra.mxu0 0.0
  %1844 = vmatprep.subr.mxu0 0.0
  %1845 = vmatpush1.msra.mxu0 0.0
  %1846 = vmatprep.subr.mxu0 0.0
  %1847 = vmatpush1.msra.mxu0 0.0
  %1848 = vmatprep.subr.mxu0 0.0
  %1849 = vmatpush1.msra.mxu0 0.0
  %1850 = vmatprep.subr.mxu0 0.0
  %1851 = vmatpush1.msra.mxu0 0.0
  %1852 = vmatprep.subr.mxu0 0.0
  %1853 = vmatpush1.msra.mxu0 0.0
  %1854 = vmatprep.subr.mxu0 0.0
  %1855 = vmatpush1.msra.mxu0 0.0
  %1856 = vmatprep.subr.mxu0 0.0
  %1857 = vmatpush1.msra.mxu0 0.0
  %1858 = vmatprep.subr.mxu0 0.0
  %1859 = vmatpush1.msra.mxu0 0.0
  %1860 = vmatprep.subr.mxu0 0.0
  %1861 = vmatpush1.msra.mxu0 0.0
  %1862 = vmatprep.subr.mxu0 0.0
  %1863 = vmatpush1.msra.mxu0 0.0
  %1864 = vmatprep.subr.mxu0 0.0
  %1865 = vmatpush1.msra.mxu0 0.0
  %1866 = vmatprep.subr.mxu0 0.0
  %1867 = vmatpush1.msra.mxu0 0.0
  %1868 = vmatprep.subr.mxu0 0.0
  %1869 = vmatpush1.msra.mxu0 0.0
  %1870 = vmatprep.subr.mxu0 0.0
  %1871 = vmatpush1.msra.mxu0 0.0
  %1872 = vmatprep.subr.mxu0 0.0
  %1873 = vmatpush1.msra.mxu0 0.0
  %1874 = vmatprep.subr.mxu0 0.0
  %1875 = vmatpush1.msra.mxu0 0.0
  %1876 = vmatprep.subr.mxu0 0.0
  %1877 = vmatpush1.msra.mxu0 0.0
  %1878 = vmatprep.subr.mxu0 0.0
  %1879 = vmatpush1.msra.mxu0 0.0
  %1880 = vmatprep.subr.mxu0 0.0
  %1881 = vmatpush1.msra.mxu0 0.0
  %1882 = vmatprep.subr.mxu0 0.0
  %1883 = vmatpush1.msra.mxu0 0.0
  %1884 = vmatprep.subr.mxu0 0.0
  %1885 = vmatpush1.msra.mxu0 0.0
  %1886 = vmatprep.subr.mxu0 0.0
  %1887 = vmatpush1.msra.mxu0 0.0
  %1888 = vmatprep.subr.mxu0 0.0
  %1889 = vmatpush1.msra.mxu0 0.0
  %1890 = vmatprep.subr.mxu0 0.0
  %1891 = vmatpush1.msra.mxu0 0.0
  %1892 = vmatprep.subr.mxu0 0.0
  %1893 = vmatpush1.msra.mxu0 0.0
  %1894 = vmatprep.subr.mxu0 0.0
  %1895 = vmatpush1.msra.mxu0 0.0
  %1896 = vmatprep.subr.mxu0 0.0
  %1897 = vmatpush1.msra.mxu0 0.0
  %1898 = vmatprep.subr.mxu0 0.0
  %1899 = vmatpush1.msra.mxu0 0.0
  %1900 = vmatprep.mubr.f32.mxu0 0.0
  %1901 = vmatmul.mubr.f32.gmra.mrb[0].mxu0 %v1789
  %v1902 = vpop.f32.mrb[0].mxu0
  %v1903 = vadd.f32 %v1786, %v1902
  %v1904 = vpop.f32.mrb[0].mxu0
  %1905 = vmatprep.mubr.f32.mxu0 0.0
  %1906 = vmatmul.mubr.f32.gmra.mrb[0].mxu0 %v1792
  %v1907 = vpop.f32.mrb[0].mxu0
  %v1908 = vadd.f32 %v1786, %v1907
  %v1909 = vpop.f32.mrb[0].mxu0
  %1910 = vmatprep.mubr.f32.mxu0 0.0
  %1911 = vmatmul.mubr.f32.gmra.mrb[0].mxu0 %v1795
  %v1912 = vpop.f32.mrb[0].mxu0
  %v1913 = vadd.f32 %v1786, %v1912
  %v1914 = vpop.f32.mrb[0].mxu0
  %1915 = vmatprep.mubr.f32.mxu0 0.0
  %1916 = vmatmul.mubr.f32.gmra.mrb[0].mxu0 %v1798
  %v1917 = vpop.f32.mrb[0].mxu0
  %v1918 = vadd.f32 %v1786, %v1917
  %v1919 = vpop.f32.mrb[0].mxu0
  %1920 = vmatprep.mubr.f32.mxu0 0.0
  %1921 = vmatmul.mubr.f32.gmra.mrb[0].mxu0 %v1801
  %v1922 = vpop.f32.mrb[0].mxu0
  %v1923 = vadd.f32 %v1786, %v1922
  %v1924 = vpop.f32.mrb[0].mxu0
  %1925 = vmatprep.mubr.f32.mxu0 0.0
  %1926 = vmatmul.mubr.f32.gmra.mrb[0].mxu0 %v1804
  %v1927 = vpop.f32.mrb[0].mxu0
  %v1928 = vadd.f32 %v1786, %v1927
  %v1929 = vpop.f32.mrb[0].mxu0
  %1930 = vmatprep.mubr.f32.mxu0 0.0
  %1931 = vmatmul.mubr.f32.gmra.mrb[0].mxu0 %v1807
  %v1932 = vpop.f32.mrb[0].mxu0
  %v1933 = vadd.f32 %v1786, %v1932
  %v1934 = vpop.f32.mrb[0].mxu0
  %1935 = vmatprep.mubr.f32.mxu0 0.0
  %1936 = vmatmul.mubr.f32.gmra.mrb[0].mxu0 %v1810
  %v1937 = vpop.f32.mrb[0].mxu0
  %v1938 = vadd.f32 %v1786, %v1937
  %v1939 = vpop.f32.mrb[0].mxu0
  %1940 = vmatprep.mubr.f32.mxu0 0.0
  %1941 = vmatmul.mubr.f32.gmra.mrb[0].mxu0 %v1813
  %v1942 = vpop.f32.mrb[0].mxu0
  %v1943 = vadd.f32 %v1786, %v1942
  %v1944 = vpop.f32.mrb[0].mxu0
  %1945 = vmatprep.mubr.f32.mxu0 0.0
  %1946 = vmatmul.mubr.f32.gmra.mrb[0].mxu0 %v1816
  %v1947 = vpop.f32.mrb[0].mxu0
  %v1948 = vadd.f32 %v1786, %v1947
  %v1949 = vpop.f32.mrb[0].mxu0
  %1950 = vmatprep.mubr.f32.mxu0 0.0
  %1951 = vmatmul.mubr.f32.gmra.mrb[0].mxu0 %v1819
  %v1952 = vpop.f32.mrb[0].mxu0
  %v1953 = vadd.f32 %v1786, %v1952
  %v1954 = vpop.f32.mrb[0].mxu0
  %1955 = vmatprep.mubr.f32.mxu0 0.0
  %1956 = vmatmul.mubr.f32.gmra.mrb[0].mxu0 %v1822
  %v1957 = vpop.f32.mrb[0].mxu0
  %v1958 = vadd.f32 %v1786, %v1957
  %v1959 = vpop.f32.mrb[0].mxu0
  %1960 = vmatprep.mubr.f32.mxu0 0.0
  %1961 = vmatmul.mubr.f32.gmra.mrb[0].mxu0 %v1825
  %v1962 = vpop.f32.mrb[0].mxu0
  %v1963 = vadd.f32 %v1786, %v1962
  %v1964 = vpop.f32.mrb[0].mxu0
  %1965 = vmatprep.mubr.f32.mxu0 0.0
  %1966 = vmatmul.mubr.f32.gmra.mrb[0].mxu0 %v1828
  %v1967 = vpop.f32.mrb[0].mxu0
  %v1968 = vadd.f32 %v1786, %v1967
  %v1969 = vpop.f32.mrb[0].mxu0
  %1970 = vmatprep.mubr.f32.mxu0 0.0
  %1971 = vmatmul.mubr.f32.gmra.mrb[0].mxu0 %v1831
  %v1972 = vpop.f32.mrb[0].mxu0
  %v1973 = vadd.f32 %v1786, %v1972
  %v1974 = vpop.f32.mrb[0].mxu0
  %1975 = vmatprep.mubr.f32.mxu0 0.0
  %1976 = vmatmul.mubr.f32.gmra.mrb[0].mxu0 %v1834
  %v1977 = vpop.f32.mrb[0].mxu0
  %v1978 = vadd.f32 %v1786, %v1977
  %v1979 = vpop.f32.mrb[0].mxu0
  %1980 = vdwg.mxu0
  %v1981 = vmax.f32 %v1903, 0.0
  %v1982 = vmax.f32 %v1908, 0.0
  %v1983 = vmax.f32 %v1913, 0.0
  %v1984 = vmax.f32 %v1918, 0.0
  %v1985 = vmax.f32 %v1923, 0.0
  %v1986 = vmax.f32 %v1928, 0.0
  %v1987 = vmax.f32 %v1933, 0.0
  %v1988 = vmax.f32 %v1938, 0.0
  %v1989 = vmax.f32 %v1943, 0.0
  %v1990 = vmax.f32 %v1948, 0.0
  %v1991 = vmax.f32 %v1953, 0.0
  %v1992 = vmax.f32 %v1958, 0.0
  %v1993 = vmax.f32 %v1963, 0.0
  %v1994 = vmax.f32 %v1968, 0.0
  %v1995 = vmax.f32 %v1973, 0.0
  %v1996 = vmax.f32 %v1978, 0.0
  %v1997 = vld [vmem:[%s35] sm:$0xff]
  %v1998 = vld [vmem:[%s35 + $0x8] sm:$0xff]
  %v1999 = vld [vmem:[%s37] sm:$0x1]
  %v2001 = vlaneseq
  %v2002 = vshrl.u32 %v2001, 7
  %v2003 = vsub.s32 0, %v2002
  %v2004 = vrot.slane %v1999, %v2003
  %v2007 = vsel %vm948, %v1981, 0
  %v2010 = vsel %vm948, %v1982, 0
  %v2013 = vsel %vm948, %v1983, 0
  %v2016 = vsel %vm948, %v1984, 0
  %v2019 = vsel %vm948, %v1985, 0
  %v2022 = vsel %vm948, %v1986, 0
  %v2025 = vsel %vm948, %v1987, 0
  %v2028 = vsel %vm948, %v1988, 0
  %v2031 = vsel %vm948, %v1989, 0
  %v2034 = vsel %vm948, %v1990, 0
  %v2037 = vsel %vm948, %v1991, 0
  %v2040 = vsel %vm948, %v1992, 0
  %v2043 = vsel %vm948, %v1993, 0
  %v2046 = vsel %vm948, %v1994, 0
  %v2049 = vsel %vm948, %v1995, 0
  %v2052 = vsel %vm948, %v1996, 0
  %2054 = vmatprep.subr.mxu0 0.0
  %2055 = vmatpush1.msra.mxu0 %v1997
  %2056 = vmatprep.subr.mxu0 0.0
  %2057 = vmatpush1.msra.mxu0 %v1998
  %2058 = vmatprep.subr.mxu0 0.0
  %2059 = vmatpush1.msra.mxu0 0.0
  %2060 = vmatprep.subr.mxu0 0.0
  %2061 = vmatpush1.msra.mxu0 0.0
  %2062 = vmatprep.subr.mxu0 0.0
  %2063 = vmatpush1.msra.mxu0 0.0
  %2064 = vmatprep.subr.mxu0 0.0
  %2065 = vmatpush1.msra.mxu0 0.0
  %2066 = vmatprep.subr.mxu0 0.0
  %2067 = vmatpush1.msra.mxu0 0.0
  %2068 = vmatprep.subr.mxu0 0.0
  %2069 = vmatpush1.msra.mxu0 0.0
  %2070 = vmatprep.subr.mxu0 0.0
  %2071 = vmatpush1.msra.mxu0 0.0
  %2072 = vmatprep.subr.mxu0 0.0
  %2073 = vmatpush1.msra.mxu0 0.0
  %2074 = vmatprep.subr.mxu0 0.0
  %2075 = vmatpush1.msra.mxu0 0.0
  %2076 = vmatprep.subr.mxu0 0.0
  %2077 = vmatpush1.msra.mxu0 0.0
  %2078 = vmatprep.subr.mxu0 0.0
  %2079 = vmatpush1.msra.mxu0 0.0
  %2080 = vmatprep.subr.mxu0 0.0
  %2081 = vmatpush1.msra.mxu0 0.0
  %2082 = vmatprep.subr.mxu0 0.0
  %2083 = vmatpush1.msra.mxu0 0.0
  %2084 = vmatprep.subr.mxu0 0.0
  %2085 = vmatpush1.msra.mxu0 0.0
  %2086 = vmatprep.subr.mxu0 0.0
  %2087 = vmatpush1.msra.mxu0 0.0
  %2088 = vmatprep.subr.mxu0 0.0
  %2089 = vmatpush1.msra.mxu0 0.0
  %2090 = vmatprep.subr.mxu0 0.0
  %2091 = vmatpush1.msra.mxu0 0.0
  %2092 = vmatprep.subr.mxu0 0.0
  %2093 = vmatpush1.msra.mxu0 0.0
  %2094 = vmatprep.subr.mxu0 0.0
  %2095 = vmatpush1.msra.mxu0 0.0
  %2096 = vmatprep.subr.mxu0 0.0
  %2097 = vmatpush1.msra.mxu0 0.0
  %2098 = vmatprep.subr.mxu0 0.0
  %2099 = vmatpush1.msra.mxu0 0.0
  %2100 = vmatprep.subr.mxu0 0.0
  %2101 = vmatpush1.msra.mxu0 0.0
  %2102 = vmatprep.subr.mxu0 0.0
  %2103 = vmatpush1.msra.mxu0 0.0
  %2104 = vmatprep.subr.mxu0 0.0
  %2105 = vmatpush1.msra.mxu0 0.0
  %2106 = vmatprep.subr.mxu0 0.0
  %2107 = vmatpush1.msra.mxu0 0.0
  %2108 = vmatprep.subr.mxu0 0.0
  %2109 = vmatpush1.msra.mxu0 0.0
  %2110 = vmatprep.subr.mxu0 0.0
  %2111 = vmatpush1.msra.mxu0 0.0
  %2112 = vmatprep.subr.mxu0 0.0
  %2113 = vmatpush1.msra.mxu0 0.0
  %2114 = vmatprep.subr.mxu0 0.0
  %2115 = vmatpush1.msra.mxu0 0.0
  %2116 = vmatprep.subr.mxu0 0.0
  %2117 = vmatpush1.msra.mxu0 0.0
  %2118 = vmatprep.mubr.f32.mxu0 0.0
  %2119 = vmatmul.mubr.f32.gmra.mrb[0].mxu0 %v2007
  %v2120 = vpop.f32.mrb[0].mxu0
  %v2121 = vadd.f32 %v2004, %v2120
  %v2122 = vpop.f32.mrb[0].mxu0
  %2123 = vmatprep.mubr.f32.mxu0 0.0
  %2124 = vmatmul.mubr.f32.gmra.mrb[0].mxu0 %v2010
  %v2125 = vpop.f32.mrb[0].mxu0
  %v2126 = vadd.f32 %v2004, %v2125
  %v2127 = vpop.f32.mrb[0].mxu0
  %2128 = vmatprep.mubr.f32.mxu0 0.0
  %2129 = vmatmul.mubr.f32.gmra.mrb[0].mxu0 %v2013
  %v2130 = vpop.f32.mrb[0].mxu0
  %v2131 = vadd.f32 %v2004, %v2130
  %v2132 = vpop.f32.mrb[0].mxu0
  %2133 = vmatprep.mubr.f32.mxu0 0.0
  %2134 = vmatmul.mubr.f32.gmra.mrb[0].mxu0 %v2016
  %v2135 = vpop.f32.mrb[0].mxu0
  %v2136 = vadd.f32 %v2004, %v2135
  %v2137 = vpop.f32.mrb[0].mxu0
  %2138 = vmatprep.mubr.f32.mxu0 0.0
  %2139 = vmatmul.mubr.f32.gmra.mrb[0].mxu0 %v2019
  %v2140 = vpop.f32.mrb[0].mxu0
  %v2141 = vadd.f32 %v2004, %v2140
  %v2142 = vpop.f32.mrb[0].mxu0
  %2143 = vmatprep.mubr.f32.mxu0 0.0
  %2144 = vmatmul.mubr.f32.gmra.mrb[0].mxu0 %v2022
  %v2145 = vpop.f32.mrb[0].mxu0
  %v2146 = vadd.f32 %v2004, %v2145
  %v2147 = vpop.f32.mrb[0].mxu0
  %2148 = vmatprep.mubr.f32.mxu0 0.0
  %2149 = vmatmul.mubr.f32.gmra.mrb[0].mxu0 %v2025
  %v2150 = vpop.f32.mrb[0].mxu0
  %v2151 = vadd.f32 %v2004, %v2150
  %v2152 = vpop.f32.mrb[0].mxu0
  %2153 = vmatprep.mubr.f32.mxu0 0.0
  %2154 = vmatmul.mubr.f32.gmra.mrb[0].mxu0 %v2028
  %v2155 = vpop.f32.mrb[0].mxu0
  %v2156 = vadd.f32 %v2004, %v2155
  %v2157 = vpop.f32.mrb[0].mxu0
  %2158 = vmatprep.mubr.f32.mxu0 0.0
  %2159 = vmatmul.mubr.f32.gmra.mrb[0].mxu0 %v2031
  %v2160 = vpop.f32.mrb[0].mxu0
  %v2161 = vadd.f32 %v2004, %v2160
  %v2162 = vpop.f32.mrb[0].mxu0
  %2163 = vmatprep.mubr.f32.mxu0 0.0
  %2164 = vmatmul.mubr.f32.gmra.mrb[0].mxu0 %v2034
  %v2165 = vpop.f32.mrb[0].mxu0
  %v2166 = vadd.f32 %v2004, %v2165
  %v2167 = vpop.f32.mrb[0].mxu0
  %2168 = vmatprep.mubr.f32.mxu0 0.0
  %2169 = vmatmul.mubr.f32.gmra.mrb[0].mxu0 %v2037
  %v2170 = vpop.f32.mrb[0].mxu0
  %v2171 = vadd.f32 %v2004, %v2170
  %v2172 = vpop.f32.mrb[0].mxu0
  %2173 = vmatprep.mubr.f32.mxu0 0.0
  %2174 = vmatmul.mubr.f32.gmra.mrb[0].mxu0 %v2040
  %v2175 = vpop.f32.mrb[0].mxu0
  %v2176 = vadd.f32 %v2004, %v2175
  %v2177 = vpop.f32.mrb[0].mxu0
  %2178 = vmatprep.mubr.f32.mxu0 0.0
  %2179 = vmatmul.mubr.f32.gmra.mrb[0].mxu0 %v2043
  %v2180 = vpop.f32.mrb[0].mxu0
  %v2181 = vadd.f32 %v2004, %v2180
  %v2182 = vpop.f32.mrb[0].mxu0
  %2183 = vmatprep.mubr.f32.mxu0 0.0
  %2184 = vmatmul.mubr.f32.gmra.mrb[0].mxu0 %v2046
  %v2185 = vpop.f32.mrb[0].mxu0
  %v2186 = vadd.f32 %v2004, %v2185
  %v2187 = vpop.f32.mrb[0].mxu0
  %2188 = vmatprep.mubr.f32.mxu0 0.0
  %2189 = vmatmul.mubr.f32.gmra.mrb[0].mxu0 %v2049
  %v2190 = vpop.f32.mrb[0].mxu0
  %v2191 = vadd.f32 %v2004, %v2190
  %v2192 = vpop.f32.mrb[0].mxu0
  %2193 = vmatprep.mubr.f32.mxu0 0.0
  %2194 = vmatmul.mubr.f32.gmra.mrb[0].mxu0 %v2052
  %v2195 = vpop.f32.mrb[0].mxu0
  %v2196 = vadd.f32 %v2004, %v2195
  %v2197 = vpop.f32.mrb[0].mxu0
  %2198 = vdwg.mxu0
  %v2199 = vmax.f32 %v2121, 0.0
  %v2200 = vmax.f32 %v2126, 0.0
  %v2201 = vmax.f32 %v2131, 0.0
  %v2202 = vmax.f32 %v2136, 0.0
  %v2203 = vmax.f32 %v2141, 0.0
  %v2204 = vmax.f32 %v2146, 0.0
  %v2205 = vmax.f32 %v2151, 0.0
  %v2206 = vmax.f32 %v2156, 0.0
  %v2207 = vmax.f32 %v2161, 0.0
  %v2208 = vmax.f32 %v2166, 0.0
  %v2209 = vmax.f32 %v2171, 0.0
  %v2210 = vmax.f32 %v2176, 0.0
  %v2211 = vmax.f32 %v2181, 0.0
  %v2212 = vmax.f32 %v2186, 0.0
  %v2213 = vmax.f32 %v2191, 0.0
  %v2214 = vmax.f32 %v2196, 0.0
  %v2215 = vld [vmem:[%s39] sm:$0xff]
  %v2216 = vld [vmem:[%s39 + $0x8] sm:$0xff]
  %v2217 = vld [vmem:[%s39 + $0x10] sm:$0xff]
  %v2218 = vld [vmem:[%s39 + $0x18] sm:$0xff]
  %v2219 = vld [vmem:[%s41] sm:$0x1]
  %v2221 = vlaneseq
  %v2222 = vshrl.u32 %v2221, 7
  %v2223 = vsub.s32 0, %v2222
  %v2224 = vrot.slane %v2219, %v2223
  %vm2226 = vcmask 261120
  %v2228 = vsel %vm2226, %v2199, 0
  %v2231 = vsel %vm2226, %v2200, 0
  %v2234 = vsel %vm2226, %v2201, 0
  %v2237 = vsel %vm2226, %v2202, 0
  %v2240 = vsel %vm2226, %v2203, 0
  %v2243 = vsel %vm2226, %v2204, 0
  %v2246 = vsel %vm2226, %v2205, 0
  %v2249 = vsel %vm2226, %v2206, 0
  %v2252 = vsel %vm2226, %v2207, 0
  %v2255 = vsel %vm2226, %v2208, 0
  %v2258 = vsel %vm2226, %v2209, 0
  %v2261 = vsel %vm2226, %v2210, 0
  %v2264 = vsel %vm2226, %v2211, 0
  %v2267 = vsel %vm2226, %v2212, 0
  %v2270 = vsel %vm2226, %v2213, 0
  %v2273 = vsel %vm2226, %v2214, 0
  %2275 = vmatprep.subr.mxu0 0.0
  %2276 = vmatpush1.msra.mxu0 %v2215
  %2277 = vmatprep.subr.mxu0 0.0
  %2278 = vmatpush1.msra.mxu0 %v2216
  %2279 = vmatprep.subr.mxu0 0.0
  %2280 = vmatpush1.msra.mxu0 %v2217
  %2281 = vmatprep.subr.mxu0 0.0
  %2282 = vmatpush1.msra.mxu0 %v2218
  %2283 = vmatprep.subr.mxu0 0.0
  %2284 = vmatpush1.msra.mxu0 0.0
  %2285 = vmatprep.subr.mxu0 0.0
  %2286 = vmatpush1.msra.mxu0 0.0
  %2287 = vmatprep.subr.mxu0 0.0
  %2288 = vmatpush1.msra.mxu0 0.0
  %2289 = vmatprep.subr.mxu0 0.0
  %2290 = vmatpush1.msra.mxu0 0.0
  %2291 = vmatprep.subr.mxu0 0.0
  %2292 = vmatpush1.msra.mxu0 0.0
  %2293 = vmatprep.subr.mxu0 0.0
  %2294 = vmatpush1.msra.mxu0 0.0
  %2295 = vmatprep.subr.mxu0 0.0
  %2296 = vmatpush1.msra.mxu0 0.0
  %2297 = vmatprep.subr.mxu0 0.0
  %2298 = vmatpush1.msra.mxu0 0.0
  %2299 = vmatprep.subr.mxu0 0.0
  %2300 = vmatpush1.msra.mxu0 0.0
  %2301 = vmatprep.subr.mxu0 0.0
  %2302 = vmatpush1.msra.mxu0 0.0
  %2303 = vmatprep.subr.mxu0 0.0
  %2304 = vmatpush1.msra.mxu0 0.0
  %2305 = vmatprep.subr.mxu0 0.0
  %2306 = vmatpush1.msra.mxu0 0.0
  %2307 = vmatprep.subr.mxu0 0.0
  %2308 = vmatpush1.msra.mxu0 0.0
  %2309 = vmatprep.subr.mxu0 0.0
  %2310 = vmatpush1.msra.mxu0 0.0
  %2311 = vmatprep.subr.mxu0 0.0
  %2312 = vmatpush1.msra.mxu0 0.0
  %2313 = vmatprep.subr.mxu0 0.0
  %2314 = vmatpush1.msra.mxu0 0.0
  %2315 = vmatprep.subr.mxu0 0.0
  %2316 = vmatpush1.msra.mxu0 0.0
  %2317 = vmatprep.subr.mxu0 0.0
  %2318 = vmatpush1.msra.mxu0 0.0
  %2319 = vmatprep.subr.mxu0 0.0
  %2320 = vmatpush1.msra.mxu0 0.0
  %2321 = vmatprep.subr.mxu0 0.0
  %2322 = vmatpush1.msra.mxu0 0.0
  %2323 = vmatprep.subr.mxu0 0.0
  %2324 = vmatpush1.msra.mxu0 0.0
  %2325 = vmatprep.subr.mxu0 0.0
  %2326 = vmatpush1.msra.mxu0 0.0
  %2327 = vmatprep.subr.mxu0 0.0
  %2328 = vmatpush1.msra.mxu0 0.0
  %2329 = vmatprep.subr.mxu0 0.0
  %2330 = vmatpush1.msra.mxu0 0.0
  %2331 = vmatprep.subr.mxu0 0.0
  %2332 = vmatpush1.msra.mxu0 0.0
  %2333 = vmatprep.subr.mxu0 0.0
  %2334 = vmatpush1.msra.mxu0 0.0
  %2335 = vmatprep.subr.mxu0 0.0
  %2336 = vmatpush1.msra.mxu0 0.0
  %2337 = vmatprep.subr.mxu0 0.0
  %2338 = vmatpush1.msra.mxu0 0.0
  %2339 = vmatprep.mubr.f32.mxu0 0.0
  %2340 = vmatmul.mubr.f32.gmra.mrb[0].mxu0 %v2228
  %v2341 = vpop.f32.mrb[0].mxu0
  %v2342 = vadd.f32 %v2224, %v2341
  %v2343 = vpop.f32.mrb[0].mxu0
  %2344 = vmatprep.mubr.f32.mxu0 0.0
  %2345 = vmatmul.mubr.f32.gmra.mrb[0].mxu0 %v2231
  %v2346 = vpop.f32.mrb[0].mxu0
  %v2347 = vadd.f32 %v2224, %v2346
  %v2348 = vpop.f32.mrb[0].mxu0
  %2349 = vmatprep.mubr.f32.mxu0 0.0
  %2350 = vmatmul.mubr.f32.gmra.mrb[0].mxu0 %v2234
  %v2351 = vpop.f32.mrb[0].mxu0
  %v2352 = vadd.f32 %v2224, %v2351
  %v2353 = vpop.f32.mrb[0].mxu0
  %2354 = vmatprep.mubr.f32.mxu0 0.0
  %2355 = vmatmul.mubr.f32.gmra.mrb[0].mxu0 %v2237
  %v2356 = vpop.f32.mrb[0].mxu0
  %v2357 = vadd.f32 %v2224, %v2356
  %v2358 = vpop.f32.mrb[0].mxu0
  %2359 = vmatprep.mubr.f32.mxu0 0.0
  %2360 = vmatmul.mubr.f32.gmra.mrb[0].mxu0 %v2240
  %v2361 = vpop.f32.mrb[0].mxu0
  %v2362 = vadd.f32 %v2224, %v2361
  %v2363 = vpop.f32.mrb[0].mxu0
  %2364 = vmatprep.mubr.f32.mxu0 0.0
  %2365 = vmatmul.mubr.f32.gmra.mrb[0].mxu0 %v2243
  %v2366 = vpop.f32.mrb[0].mxu0
  %v2367 = vadd.f32 %v2224, %v2366
  %v2368 = vpop.f32.mrb[0].mxu0
  %2369 = vmatprep.mubr.f32.mxu0 0.0
  %2370 = vmatmul.mubr.f32.gmra.mrb[0].mxu0 %v2246
  %v2371 = vpop.f32.mrb[0].mxu0
  %v2372 = vadd.f32 %v2224, %v2371
  %v2373 = vpop.f32.mrb[0].mxu0
  %2374 = vmatprep.mubr.f32.mxu0 0.0
  %2375 = vmatmul.mubr.f32.gmra.mrb[0].mxu0 %v2249
  %v2376 = vpop.f32.mrb[0].mxu0
  %v2377 = vadd.f32 %v2224, %v2376
  %v2378 = vpop.f32.mrb[0].mxu0
  %2379 = vmatprep.mubr.f32.mxu0 0.0
  %2380 = vmatmul.mubr.f32.gmra.mrb[0].mxu0 %v2252
  %v2381 = vpop.f32.mrb[0].mxu0
  %v2382 = vadd.f32 %v2224, %v2381
  %v2383 = vpop.f32.mrb[0].mxu0
  %2384 = vmatprep.mubr.f32.mxu0 0.0
  %2385 = vmatmul.mubr.f32.gmra.mrb[0].mxu0 %v2255
  %v2386 = vpop.f32.mrb[0].mxu0
  %v2387 = vadd.f32 %v2224, %v2386
  %v2388 = vpop.f32.mrb[0].mxu0
  %2389 = vmatprep.mubr.f32.mxu0 0.0
  %2390 = vmatmul.mubr.f32.gmra.mrb[0].mxu0 %v2258
  %v2391 = vpop.f32.mrb[0].mxu0
  %v2392 = vadd.f32 %v2224, %v2391
  %v2393 = vpop.f32.mrb[0].mxu0
  %2394 = vmatprep.mubr.f32.mxu0 0.0
  %2395 = vmatmul.mubr.f32.gmra.mrb[0].mxu0 %v2261
  %v2396 = vpop.f32.mrb[0].mxu0
  %v2397 = vadd.f32 %v2224, %v2396
  %v2398 = vpop.f32.mrb[0].mxu0
  %2399 = vmatprep.mubr.f32.mxu0 0.0
  %2400 = vmatmul.mubr.f32.gmra.mrb[0].mxu0 %v2264
  %v2401 = vpop.f32.mrb[0].mxu0
  %v2402 = vadd.f32 %v2224, %v2401
  %v2403 = vpop.f32.mrb[0].mxu0
  %2404 = vmatprep.mubr.f32.mxu0 0.0
  %2405 = vmatmul.mubr.f32.gmra.mrb[0].mxu0 %v2267
  %v2406 = vpop.f32.mrb[0].mxu0
  %v2407 = vadd.f32 %v2224, %v2406
  %v2408 = vpop.f32.mrb[0].mxu0
  %2409 = vmatprep.mubr.f32.mxu0 0.0
  %2410 = vmatmul.mubr.f32.gmra.mrb[0].mxu0 %v2270
  %v2411 = vpop.f32.mrb[0].mxu0
  %v2412 = vadd.f32 %v2224, %v2411
  %v2413 = vpop.f32.mrb[0].mxu0
  %2414 = vmatprep.mubr.f32.mxu0 0.0
  %2415 = vmatmul.mubr.f32.gmra.mrb[0].mxu0 %v2273
  %v2416 = vpop.f32.mrb[0].mxu0
  %v2417 = vadd.f32 %v2224, %v2416
  %v2418 = vpop.f32.mrb[0].mxu0
  %2419 = vdwg.mxu0
  %v2420 = vld [vmem:[%s43] sm:$0xff]
  %v2421 = vld [vmem:[%s43 + $0x8] sm:$0xff]
  %v2422 = vld [vmem:[%s45] sm:$0x1]
  %v2424 = vlaneseq
  %v2425 = vshrl.u32 %v2424, 7
  %v2426 = vsub.s32 0, %v2425
  %v2427 = vrot.slane %v2422, %v2426
  %2429 = vmatprep.subr.mxu0 0.0
  %2430 = vmatpush1.msra.mxu0 %v2420
  %2431 = vmatprep.subr.mxu0 0.0
  %2432 = vmatpush1.msra.mxu0 %v2421
  %2433 = vmatprep.subr.mxu0 0.0
  %2434 = vmatpush1.msra.mxu0 0.0
  %2435 = vmatprep.subr.mxu0 0.0
  %2436 = vmatpush1.msra.mxu0 0.0
  %2437 = vmatprep.subr.mxu0 0.0
  %2438 = vmatpush1.msra.mxu0 0.0
  %2439 = vmatprep.subr.mxu0 0.0
  %2440 = vmatpush1.msra.mxu0 0.0
  %2441 = vmatprep.subr.mxu0 0.0
  %2442 = vmatpush1.msra.mxu0 0.0
  %2443 = vmatprep.subr.mxu0 0.0
  %2444 = vmatpush1.msra.mxu0 0.0
  %2445 = vmatprep.subr.mxu0 0.0
  %2446 = vmatpush1.msra.mxu0 0.0
  %2447 = vmatprep.subr.mxu0 0.0
  %2448 = vmatpush1.msra.mxu0 0.0
  %2449 = vmatprep.subr.mxu0 0.0
  %2450 = vmatpush1.msra.mxu0 0.0
  %2451 = vmatprep.subr.mxu0 0.0
  %2452 = vmatpush1.msra.mxu0 0.0
  %2453 = vmatprep.subr.mxu0 0.0
  %2454 = vmatpush1.msra.mxu0 0.0
  %2455 = vmatprep.subr.mxu0 0.0
  %2456 = vmatpush1.msra.mxu0 0.0
  %2457 = vmatprep.subr.mxu0 0.0
  %2458 = vmatpush1.msra.mxu0 0.0
  %2459 = vmatprep.subr.mxu0 0.0
  %2460 = vmatpush1.msra.mxu0 0.0
  %2461 = vmatprep.subr.mxu0 0.0
  %2462 = vmatpush1.msra.mxu0 0.0
  %2463 = vmatprep.subr.mxu0 0.0
  %2464 = vmatpush1.msra.mxu0 0.0
  %2465 = vmatprep.subr.mxu0 0.0
  %2466 = vmatpush1.msra.mxu0 0.0
  %2467 = vmatprep.subr.mxu0 0.0
  %2468 = vmatpush1.msra.mxu0 0.0
  %2469 = vmatprep.subr.mxu0 0.0
  %2470 = vmatpush1.msra.mxu0 0.0
  %2471 = vmatprep.subr.mxu0 0.0
  %2472 = vmatpush1.msra.mxu0 0.0
  %2473 = vmatprep.subr.mxu0 0.0
  %2474 = vmatpush1.msra.mxu0 0.0
  %2475 = vmatprep.subr.mxu0 0.0
  %2476 = vmatpush1.msra.mxu0 0.0
  %2477 = vmatprep.subr.mxu0 0.0
  %2478 = vmatpush1.msra.mxu0 0.0
  %2479 = vmatprep.subr.mxu0 0.0
  %2480 = vmatpush1.msra.mxu0 0.0
  %2481 = vmatprep.subr.mxu0 0.0
  %2482 = vmatpush1.msra.mxu0 0.0
  %2483 = vmatprep.subr.mxu0 0.0
  %2484 = vmatpush1.msra.mxu0 0.0
  %2485 = vmatprep.subr.mxu0 0.0
  %2486 = vmatpush1.msra.mxu0 0.0
  %2487 = vmatprep.subr.mxu0 0.0
  %2488 = vmatpush1.msra.mxu0 0.0
  %2489 = vmatprep.subr.mxu0 0.0
  %2490 = vmatpush1.msra.mxu0 0.0
  %2491 = vmatprep.subr.mxu0 0.0
  %2492 = vmatpush1.msra.mxu0 0.0
  %2493 = vmatprep.mubr.f32.mxu0 0.0
  %2494 = vmatmul.mubr.f32.gmra.mrb[0].mxu0 %v2007
  %v2495 = vpop.f32.mrb[0].mxu0
  %v2496 = vadd.f32 %v2427, %v2495
  %v2497 = vpop.f32.mrb[0].mxu0
  %2498 = vmatprep.mubr.f32.mxu0 0.0
  %2499 = vmatmul.mubr.f32.gmra.mrb[0].mxu0 %v2010
  %v2500 = vpop.f32.mrb[0].mxu0
  %v2501 = vadd.f32 %v2427, %v2500
  %v2502 = vpop.f32.mrb[0].mxu0
  %2503 = vmatprep.mubr.f32.mxu0 0.0
  %2504 = vmatmul.mubr.f32.gmra.mrb[0].mxu0 %v2013
  %v2505 = vpop.f32.mrb[0].mxu0
  %v2506 = vadd.f32 %v2427, %v2505
  %v2507 = vpop.f32.mrb[0].mxu0
  %2508 = vmatprep.mubr.f32.mxu0 0.0
  %2509 = vmatmul.mubr.f32.gmra.mrb[0].mxu0 %v2016
  %v2510 = vpop.f32.mrb[0].mxu0
  %v2511 = vadd.f32 %v2427, %v2510
  %v2512 = vpop.f32.mrb[0].mxu0
  %2513 = vmatprep.mubr.f32.mxu0 0.0
  %2514 = vmatmul.mubr.f32.gmra.mrb[0].mxu0 %v2019
  %v2515 = vpop.f32.mrb[0].mxu0
  %v2516 = vadd.f32 %v2427, %v2515
  %v2517 = vpop.f32.mrb[0].mxu0
  %2518 = vmatprep.mubr.f32.mxu0 0.0
  %2519 = vmatmul.mubr.f32.gmra.mrb[0].mxu0 %v2022
  %v2520 = vpop.f32.mrb[0].mxu0
  %v2521 = vadd.f32 %v2427, %v2520
  %v2522 = vpop.f32.mrb[0].mxu0
  %2523 = vmatprep.mubr.f32.mxu0 0.0
  %2524 = vmatmul.mubr.f32.gmra.mrb[0].mxu0 %v2025
  %v2525 = vpop.f32.mrb[0].mxu0
  %v2526 = vadd.f32 %v2427, %v2525
  %v2527 = vpop.f32.mrb[0].mxu0
  %2528 = vmatprep.mubr.f32.mxu0 0.0
  %2529 = vmatmul.mubr.f32.gmra.mrb[0].mxu0 %v2028
  %v2530 = vpop.f32.mrb[0].mxu0
  %v2531 = vadd.f32 %v2427, %v2530
  %v2532 = vpop.f32.mrb[0].mxu0
  %2533 = vmatprep.mubr.f32.mxu0 0.0
  %2534 = vmatmul.mubr.f32.gmra.mrb[0].mxu0 %v2031
  %v2535 = vpop.f32.mrb[0].mxu0
  %v2536 = vadd.f32 %v2427, %v2535
  %v2537 = vpop.f32.mrb[0].mxu0
  %2538 = vmatprep.mubr.f32.mxu0 0.0
  %2539 = vmatmul.mubr.f32.gmra.mrb[0].mxu0 %v2034
  %v2540 = vpop.f32.mrb[0].mxu0
  %v2541 = vadd.f32 %v2427, %v2540
  %v2542 = vpop.f32.mrb[0].mxu0
  %2543 = vmatprep.mubr.f32.mxu0 0.0
  %2544 = vmatmul.mubr.f32.gmra.mrb[0].mxu0 %v2037
  %v2545 = vpop.f32.mrb[0].mxu0
  %v2546 = vadd.f32 %v2427, %v2545
  %v2547 = vpop.f32.mrb[0].mxu0
  %2548 = vmatprep.mubr.f32.mxu0 0.0
  %2549 = vmatmul.mubr.f32.gmra.mrb[0].mxu0 %v2040
  %v2550 = vpop.f32.mrb[0].mxu0
  %v2551 = vadd.f32 %v2427, %v2550
  %v2552 = vpop.f32.mrb[0].mxu0
  %2553 = vmatprep.mubr.f32.mxu0 0.0
  %2554 = vmatmul.mubr.f32.gmra.mrb[0].mxu0 %v2043
  %v2555 = vpop.f32.mrb[0].mxu0
  %v2556 = vadd.f32 %v2427, %v2555
  %v2557 = vpop.f32.mrb[0].mxu0
  %2558 = vmatprep.mubr.f32.mxu0 0.0
  %2559 = vmatmul.mubr.f32.gmra.mrb[0].mxu0 %v2046
  %v2560 = vpop.f32.mrb[0].mxu0
  %v2561 = vadd.f32 %v2427, %v2560
  %v2562 = vpop.f32.mrb[0].mxu0
  %2563 = vmatprep.mubr.f32.mxu0 0.0
  %2564 = vmatmul.mubr.f32.gmra.mrb[0].mxu0 %v2049
  %v2565 = vpop.f32.mrb[0].mxu0
  %v2566 = vadd.f32 %v2427, %v2565
  %v2567 = vpop.f32.mrb[0].mxu0
  %2568 = vmatprep.mubr.f32.mxu0 0.0
  %2569 = vmatmul.mubr.f32.gmra.mrb[0].mxu0 %v2052
  %v2570 = vpop.f32.mrb[0].mxu0
  %v2571 = vadd.f32 %v2427, %v2570
  %v2572 = vpop.f32.mrb[0].mxu0
  %2573 = vdwg.mxu0
  %v2574 = vadd.f32 %v2342, %v2496
  %v2575 = vadd.f32 %v2347, %v2501
  %v2576 = vadd.f32 %v2352, %v2506
  %v2577 = vadd.f32 %v2357, %v2511
  %v2578 = vadd.f32 %v2362, %v2516
  %v2579 = vadd.f32 %v2367, %v2521
  %v2580 = vadd.f32 %v2372, %v2526
  %v2581 = vadd.f32 %v2377, %v2531
  %v2582 = vadd.f32 %v2382, %v2536
  %v2583 = vadd.f32 %v2387, %v2541
  %v2584 = vadd.f32 %v2392, %v2546
  %v2585 = vadd.f32 %v2397, %v2551
  %v2586 = vadd.f32 %v2402, %v2556
  %v2587 = vadd.f32 %v2407, %v2561
  %v2588 = vadd.f32 %v2412, %v2566
  %v2589 = vadd.f32 %v2417, %v2571
  %v2590 = vmax.f32 %v2574, 0.0
  %v2591 = vmax.f32 %v2575, 0.0
  %v2592 = vmax.f32 %v2576, 0.0
  %v2593 = vmax.f32 %v2577, 0.0
  %v2594 = vmax.f32 %v2578, 0.0
  %v2595 = vmax.f32 %v2579, 0.0
  %v2596 = vmax.f32 %v2580, 0.0
  %v2597 = vmax.f32 %v2581, 0.0
  %v2598 = vmax.f32 %v2582, 0.0
  %v2599 = vmax.f32 %v2583, 0.0
  %v2600 = vmax.f32 %v2584, 0.0
  %v2601 = vmax.f32 %v2585, 0.0
  %v2602 = vmax.f32 %v2586, 0.0
  %v2603 = vmax.f32 %v2587, 0.0
  %v2604 = vmax.f32 %v2588, 0.0
  %v2605 = vmax.f32 %v2589, 0.0
  %v2606 = vld [vmem:[%s47] sm:$0xff]
  %v2607 = vld [vmem:[%s47 + $0x8] sm:$0xff]
  %v2608 = vld [vmem:[%s47 + $0x10] sm:$0xff]
  %v2609 = vld [vmem:[%s47 + $0x18] sm:$0xff]
  %v2610 = vld [vmem:[%s49] sm:$0x1]
  %v2612 = vlaneseq
  %v2613 = vshrl.u32 %v2612, 7
  %v2614 = vsub.s32 0, %v2613
  %v2615 = vrot.slane %v2610, %v2614
  %v2618 = vsel %vm2226, %v2590, 0
  %v2621 = vsel %vm2226, %v2591, 0
  %v2624 = vsel %vm2226, %v2592, 0
  %v2627 = vsel %vm2226, %v2593, 0
  %v2630 = vsel %vm2226, %v2594, 0
  %v2633 = vsel %vm2226, %v2595, 0
  %v2636 = vsel %vm2226, %v2596, 0
  %v2639 = vsel %vm2226, %v2597, 0
  %v2642 = vsel %vm2226, %v2598, 0
  %v2645 = vsel %vm2226, %v2599, 0
  %v2648 = vsel %vm2226, %v2600, 0
  %v2651 = vsel %vm2226, %v2601, 0
  %v2654 = vsel %vm2226, %v2602, 0
  %v2657 = vsel %vm2226, %v2603, 0
  %v2660 = vsel %vm2226, %v2604, 0
  %v2663 = vsel %vm2226, %v2605, 0
  %2665 = vmatprep.subr.mxu0 0.0
  %2666 = vmatpush1.msra.mxu0 %v2606
  %2667 = vmatprep.subr.mxu0 0.0
  %2668 = vmatpush1.msra.mxu0 %v2607
  %2669 = vmatprep.subr.mxu0 0.0
  %2670 = vmatpush1.msra.mxu0 %v2608
  %2671 = vmatprep.subr.mxu0 0.0
  %2672 = vmatpush1.msra.mxu0 %v2609
  %2673 = vmatprep.subr.mxu0 0.0
  %2674 = vmatpush1.msra.mxu0 0.0
  %2675 = vmatprep.subr.mxu0 0.0
  %2676 = vmatpush1.msra.mxu0 0.0
  %2677 = vmatprep.subr.mxu0 0.0
  %2678 = vmatpush1.msra.mxu0 0.0
  %2679 = vmatprep.subr.mxu0 0.0
  %2680 = vmatpush1.msra.mxu0 0.0
  %2681 = vmatprep.subr.mxu0 0.0
  %2682 = vmatpush1.msra.mxu0 0.0
  %2683 = vmatprep.subr.mxu0 0.0
  %2684 = vmatpush1.msra.mxu0 0.0
  %2685 = vmatprep.subr.mxu0 0.0
  %2686 = vmatpush1.msra.mxu0 0.0
  %2687 = vmatprep.subr.mxu0 0.0
  %2688 = vmatpush1.msra.mxu0 0.0
  %2689 = vmatprep.subr.mxu0 0.0
  %2690 = vmatpush1.msra.mxu0 0.0
  %2691 = vmatprep.subr.mxu0 0.0
  %2692 = vmatpush1.msra.mxu0 0.0
  %2693 = vmatprep.subr.mxu0 0.0
  %2694 = vmatpush1.msra.mxu0 0.0
  %2695 = vmatprep.subr.mxu0 0.0
  %2696 = vmatpush1.msra.mxu0 0.0
  %2697 = vmatprep.subr.mxu0 0.0
  %2698 = vmatpush1.msra.mxu0 0.0
  %2699 = vmatprep.subr.mxu0 0.0
  %2700 = vmatpush1.msra.mxu0 0.0
  %2701 = vmatprep.subr.mxu0 0.0
  %2702 = vmatpush1.msra.mxu0 0.0
  %2703 = vmatprep.subr.mxu0 0.0
  %2704 = vmatpush1.msra.mxu0 0.0
  %2705 = vmatprep.subr.mxu0 0.0
  %2706 = vmatpush1.msra.mxu0 0.0
  %2707 = vmatprep.subr.mxu0 0.0
  %2708 = vmatpush1.msra.mxu0 0.0
  %2709 = vmatprep.subr.mxu0 0.0
  %2710 = vmatpush1.msra.mxu0 0.0
  %2711 = vmatprep.subr.mxu0 0.0
  %2712 = vmatpush1.msra.mxu0 0.0
  %2713 = vmatprep.subr.mxu0 0.0
  %2714 = vmatpush1.msra.mxu0 0.0
  %2715 = vmatprep.subr.mxu0 0.0
  %2716 = vmatpush1.msra.mxu0 0.0
  %2717 = vmatprep.subr.mxu0 0.0
  %2718 = vmatpush1.msra.mxu0 0.0
  %2719 = vmatprep.subr.mxu0 0.0
  %2720 = vmatpush1.msra.mxu0 0.0
  %2721 = vmatprep.subr.mxu0 0.0
  %2722 = vmatpush1.msra.mxu0 0.0
  %2723 = vmatprep.subr.mxu0 0.0
  %2724 = vmatpush1.msra.mxu0 0.0
  %2725 = vmatprep.subr.mxu0 0.0
  %2726 = vmatpush1.msra.mxu0 0.0
  %2727 = vmatprep.subr.mxu0 0.0
  %2728 = vmatpush1.msra.mxu0 0.0
  %2729 = vmatprep.mubr.f32.mxu0 0.0
  %2730 = vmatmul.mubr.f32.gmra.mrb[0].mxu0 %v2618
  %v2731 = vpop.f32.mrb[0].mxu0
  %v2732 = vadd.f32 %v2615, %v2731
  %v2733 = vpop.f32.mrb[0].mxu0
  %2734 = vmatprep.mubr.f32.mxu0 0.0
  %2735 = vmatmul.mubr.f32.gmra.mrb[0].mxu0 %v2621
  %v2736 = vpop.f32.mrb[0].mxu0
  %v2737 = vadd.f32 %v2615, %v2736
  %v2738 = vpop.f32.mrb[0].mxu0
  %2739 = vmatprep.mubr.f32.mxu0 0.0
  %2740 = vmatmul.mubr.f32.gmra.mrb[0].mxu0 %v2624
  %v2741 = vpop.f32.mrb[0].mxu0
  %v2742 = vadd.f32 %v2615, %v2741
  %v2743 = vpop.f32.mrb[0].mxu0
  %2744 = vmatprep.mubr.f32.mxu0 0.0
  %2745 = vmatmul.mubr.f32.gmra.mrb[0].mxu0 %v2627
  %v2746 = vpop.f32.mrb[0].mxu0
  %v2747 = vadd.f32 %v2615, %v2746
  %v2748 = vpop.f32.mrb[0].mxu0
  %2749 = vmatprep.mubr.f32.mxu0 0.0
  %2750 = vmatmul.mubr.f32.gmra.mrb[0].mxu0 %v2630
  %v2751 = vpop.f32.mrb[0].mxu0
  %v2752 = vadd.f32 %v2615, %v2751
  %v2753 = vpop.f32.mrb[0].mxu0
  %2754 = vmatprep.mubr.f32.mxu0 0.0
  %2755 = vmatmul.mubr.f32.gmra.mrb[0].mxu0 %v2633
  %v2756 = vpop.f32.mrb[0].mxu0
  %v2757 = vadd.f32 %v2615, %v2756
  %v2758 = vpop.f32.mrb[0].mxu0
  %2759 = vmatprep.mubr.f32.mxu0 0.0
  %2760 = vmatmul.mubr.f32.gmra.mrb[0].mxu0 %v2636
  %v2761 = vpop.f32.mrb[0].mxu0
  %v2762 = vadd.f32 %v2615, %v2761
  %v2763 = vpop.f32.mrb[0].mxu0
  %2764 = vmatprep.mubr.f32.mxu0 0.0
  %2765 = vmatmul.mubr.f32.gmra.mrb[0].mxu0 %v2639
  %v2766 = vpop.f32.mrb[0].mxu0
  %v2767 = vadd.f32 %v2615, %v2766
  %v2768 = vpop.f32.mrb[0].mxu0
  %2769 = vmatprep.mubr.f32.mxu0 0.0
  %2770 = vmatmul.mubr.f32.gmra.mrb[0].mxu0 %v2642
  %v2771 = vpop.f32.mrb[0].mxu0
  %v2772 = vadd.f32 %v2615, %v2771
  %v2773 = vpop.f32.mrb[0].mxu0
  %2774 = vmatprep.mubr.f32.mxu0 0.0
  %2775 = vmatmul.mubr.f32.gmra.mrb[0].mxu0 %v2645
  %v2776 = vpop.f32.mrb[0].mxu0
  %v2777 = vadd.f32 %v2615, %v2776
  %v2778 = vpop.f32.mrb[0].mxu0
  %2779 = vmatprep.mubr.f32.mxu0 0.0
  %2780 = vmatmul.mubr.f32.gmra.mrb[0].mxu0 %v2648
  %v2781 = vpop.f32.mrb[0].mxu0
  %v2782 = vadd.f32 %v2615, %v2781
  %v2783 = vpop.f32.mrb[0].mxu0
  %2784 = vmatprep.mubr.f32.mxu0 0.0
  %2785 = vmatmul.mubr.f32.gmra.mrb[0].mxu0 %v2651
  %v2786 = vpop.f32.mrb[0].mxu0
  %v2787 = vadd.f32 %v2615, %v2786
  %v2788 = vpop.f32.mrb[0].mxu0
  %2789 = vmatprep.mubr.f32.mxu0 0.0
  %2790 = vmatmul.mubr.f32.gmra.mrb[0].mxu0 %v2654
  %v2791 = vpop.f32.mrb[0].mxu0
  %v2792 = vadd.f32 %v2615, %v2791
  %v2793 = vpop.f32.mrb[0].mxu0
  %2794 = vmatprep.mubr.f32.mxu0 0.0
  %2795 = vmatmul.mubr.f32.gmra.mrb[0].mxu0 %v2657
  %v2796 = vpop.f32.mrb[0].mxu0
  %v2797 = vadd.f32 %v2615, %v2796
  %v2798 = vpop.f32.mrb[0].mxu0
  %2799 = vmatprep.mubr.f32.mxu0 0.0
  %2800 = vmatmul.mubr.f32.gmra.mrb[0].mxu0 %v2660
  %v2801 = vpop.f32.mrb[0].mxu0
  %v2802 = vadd.f32 %v2615, %v2801
  %v2803 = vpop.f32.mrb[0].mxu0
  %2804 = vmatprep.mubr.f32.mxu0 0.0
  %2805 = vmatmul.mubr.f32.gmra.mrb[0].mxu0 %v2663
  %v2806 = vpop.f32.mrb[0].mxu0
  %v2807 = vadd.f32 %v2615, %v2806
  %v2808 = vpop.f32.mrb[0].mxu0
  %2809 = vdwg.mxu0
  %v2810 = vmax.f32 %v2732, 0.0
  %v2811 = vmax.f32 %v2737, 0.0
  %v2812 = vmax.f32 %v2742, 0.0
  %v2813 = vmax.f32 %v2747, 0.0
  %v2814 = vmax.f32 %v2752, 0.0
  %v2815 = vmax.f32 %v2757, 0.0
  %v2816 = vmax.f32 %v2762, 0.0
  %v2817 = vmax.f32 %v2767, 0.0
  %v2818 = vmax.f32 %v2772, 0.0
  %v2819 = vmax.f32 %v2777, 0.0
  %v2820 = vmax.f32 %v2782, 0.0
  %v2821 = vmax.f32 %v2787, 0.0
  %v2822 = vmax.f32 %v2792, 0.0
  %v2823 = vmax.f32 %v2797, 0.0
  %v2824 = vmax.f32 %v2802, 0.0
  %v2825 = vmax.f32 %v2807, 0.0
  %v2826 = vld [vmem:[%s51] sm:$0xff]
  %v2827 = vld [vmem:[%s51 + $0x8] sm:$0xff]
  %v2828 = vld [vmem:[%s51 + $0x10] sm:$0xff]
  %v2829 = vld [vmem:[%s51 + $0x18] sm:$0xff]
  %v2830 = vld [vmem:[%s53] sm:$0x1]
  %v2832 = vlaneseq
  %v2833 = vshrl.u32 %v2832, 7
  %v2834 = vsub.s32 0, %v2833
  %v2835 = vrot.slane %v2830, %v2834
  %v2838 = vsel %vm2226, %v2810, 0
  %v2841 = vsel %vm2226, %v2811, 0
  %v2844 = vsel %vm2226, %v2812, 0
  %v2847 = vsel %vm2226, %v2813, 0
  %v2850 = vsel %vm2226, %v2814, 0
  %v2853 = vsel %vm2226, %v2815, 0
  %v2856 = vsel %vm2226, %v2816, 0
  %v2859 = vsel %vm2226, %v2817, 0
  %v2862 = vsel %vm2226, %v2818, 0
  %v2865 = vsel %vm2226, %v2819, 0
  %v2868 = vsel %vm2226, %v2820, 0
  %v2871 = vsel %vm2226, %v2821, 0
  %v2874 = vsel %vm2226, %v2822, 0
  %v2877 = vsel %vm2226, %v2823, 0
  %v2880 = vsel %vm2226, %v2824, 0
  %v2883 = vsel %vm2226, %v2825, 0
  %2885 = vmatprep.subr.mxu0 0.0
  %2886 = vmatpush1.msra.mxu0 %v2826
  %2887 = vmatprep.subr.mxu0 0.0
  %2888 = vmatpush1.msra.mxu0 %v2827
  %2889 = vmatprep.subr.mxu0 0.0
  %2890 = vmatpush1.msra.mxu0 %v2828
  %2891 = vmatprep.subr.mxu0 0.0
  %2892 = vmatpush1.msra.mxu0 %v2829
  %2893 = vmatprep.subr.mxu0 0.0
  %2894 = vmatpush1.msra.mxu0 0.0
  %2895 = vmatprep.subr.mxu0 0.0
  %2896 = vmatpush1.msra.mxu0 0.0
  %2897 = vmatprep.subr.mxu0 0.0
  %2898 = vmatpush1.msra.mxu0 0.0
  %2899 = vmatprep.subr.mxu0 0.0
  %2900 = vmatpush1.msra.mxu0 0.0
  %2901 = vmatprep.subr.mxu0 0.0
  %2902 = vmatpush1.msra.mxu0 0.0
  %2903 = vmatprep.subr.mxu0 0.0
  %2904 = vmatpush1.msra.mxu0 0.0
  %2905 = vmatprep.subr.mxu0 0.0
  %2906 = vmatpush1.msra.mxu0 0.0
  %2907 = vmatprep.subr.mxu0 0.0
  %2908 = vmatpush1.msra.mxu0 0.0
  %2909 = vmatprep.subr.mxu0 0.0
  %2910 = vmatpush1.msra.mxu0 0.0
  %2911 = vmatprep.subr.mxu0 0.0
  %2912 = vmatpush1.msra.mxu0 0.0
  %2913 = vmatprep.subr.mxu0 0.0
  %2914 = vmatpush1.msra.mxu0 0.0
  %2915 = vmatprep.subr.mxu0 0.0
  %2916 = vmatpush1.msra.mxu0 0.0
  %2917 = vmatprep.subr.mxu0 0.0
  %2918 = vmatpush1.msra.mxu0 0.0
  %2919 = vmatprep.subr.mxu0 0.0
  %2920 = vmatpush1.msra.mxu0 0.0
  %2921 = vmatprep.subr.mxu0 0.0
  %2922 = vmatpush1.msra.mxu0 0.0
  %2923 = vmatprep.subr.mxu0 0.0
  %2924 = vmatpush1.msra.mxu0 0.0
  %2925 = vmatprep.subr.mxu0 0.0
  %2926 = vmatpush1.msra.mxu0 0.0
  %2927 = vmatprep.subr.mxu0 0.0
  %2928 = vmatpush1.msra.mxu0 0.0
  %2929 = vmatprep.subr.mxu0 0.0
  %2930 = vmatpush1.msra.mxu0 0.0
  %2931 = vmatprep.subr.mxu0 0.0
  %2932 = vmatpush1.msra.mxu0 0.0
  %2933 = vmatprep.subr.mxu0 0.0
  %2934 = vmatpush1.msra.mxu0 0.0
  %2935 = vmatprep.subr.mxu0 0.0
  %2936 = vmatpush1.msra.mxu0 0.0
  %2937 = vmatprep.subr.mxu0 0.0
  %2938 = vmatpush1.msra.mxu0 0.0
  %2939 = vmatprep.subr.mxu0 0.0
  %2940 = vmatpush1.msra.mxu0 0.0
  %2941 = vmatprep.subr.mxu0 0.0
  %2942 = vmatpush1.msra.mxu0 0.0
  %2943 = vmatprep.subr.mxu0 0.0
  %2944 = vmatpush1.msra.mxu0 0.0
  %2945 = vmatprep.subr.mxu0 0.0
  %2946 = vmatpush1.msra.mxu0 0.0
  %2947 = vmatprep.subr.mxu0 0.0
  %2948 = vmatpush1.msra.mxu0 0.0
  %2949 = vmatprep.mubr.f32.mxu0 0.0
  %2950 = vmatmul.mubr.f32.gmra.mrb[0].mxu0 %v2838
  %v2951 = vpop.f32.mrb[0].mxu0
  %v2952 = vadd.f32 %v2835, %v2951
  %v2953 = vpop.f32.mrb[0].mxu0
  %2954 = vmatprep.mubr.f32.mxu0 0.0
  %2955 = vmatmul.mubr.f32.gmra.mrb[0].mxu0 %v2841
  %v2956 = vpop.f32.mrb[0].mxu0
  %v2957 = vadd.f32 %v2835, %v2956
  %v2958 = vpop.f32.mrb[0].mxu0
  %2959 = vmatprep.mubr.f32.mxu0 0.0
  %2960 = vmatmul.mubr.f32.gmra.mrb[0].mxu0 %v2844
  %v2961 = vpop.f32.mrb[0].mxu0
  %v2962 = vadd.f32 %v2835, %v2961
  %v2963 = vpop.f32.mrb[0].mxu0
  %2964 = vmatprep.mubr.f32.mxu0 0.0
  %2965 = vmatmul.mubr.f32.gmra.mrb[0].mxu0 %v2847
  %v2966 = vpop.f32.mrb[0].mxu0
  %v2967 = vadd.f32 %v2835, %v2966
  %v2968 = vpop.f32.mrb[0].mxu0
  %2969 = vmatprep.mubr.f32.mxu0 0.0
  %2970 = vmatmul.mubr.f32.gmra.mrb[0].mxu0 %v2850
  %v2971 = vpop.f32.mrb[0].mxu0
  %v2972 = vadd.f32 %v2835, %v2971
  %v2973 = vpop.f32.mrb[0].mxu0
  %2974 = vmatprep.mubr.f32.mxu0 0.0
  %2975 = vmatmul.mubr.f32.gmra.mrb[0].mxu0 %v2853
  %v2976 = vpop.f32.mrb[0].mxu0
  %v2977 = vadd.f32 %v2835, %v2976
  %v2978 = vpop.f32.mrb[0].mxu0
  %2979 = vmatprep.mubr.f32.mxu0 0.0
  %2980 = vmatmul.mubr.f32.gmra.mrb[0].mxu0 %v2856
  %v2981 = vpop.f32.mrb[0].mxu0
  %v2982 = vadd.f32 %v2835, %v2981
  %v2983 = vpop.f32.mrb[0].mxu0
  %2984 = vmatprep.mubr.f32.mxu0 0.0
  %2985 = vmatmul.mubr.f32.gmra.mrb[0].mxu0 %v2859
  %v2986 = vpop.f32.mrb[0].mxu0
  %v2987 = vadd.f32 %v2835, %v2986
  %v2988 = vpop.f32.mrb[0].mxu0
  %2989 = vmatprep.mubr.f32.mxu0 0.0
  %2990 = vmatmul.mubr.f32.gmra.mrb[0].mxu0 %v2862
  %v2991 = vpop.f32.mrb[0].mxu0
  %v2992 = vadd.f32 %v2835, %v2991
  %v2993 = vpop.f32.mrb[0].mxu0
  %2994 = vmatprep.mubr.f32.mxu0 0.0
  %2995 = vmatmul.mubr.f32.gmra.mrb[0].mxu0 %v2865
  %v2996 = vpop.f32.mrb[0].mxu0
  %v2997 = vadd.f32 %v2835, %v2996
  %v2998 = vpop.f32.mrb[0].mxu0
  %2999 = vmatprep.mubr.f32.mxu0 0.0
  %3000 = vmatmul.mubr.f32.gmra.mrb[0].mxu0 %v2868
  %v3001 = vpop.f32.mrb[0].mxu0
  %v3002 = vadd.f32 %v2835, %v3001
  %v3003 = vpop.f32.mrb[0].mxu0
  %3004 = vmatprep.mubr.f32.mxu0 0.0
  %3005 = vmatmul.mubr.f32.gmra.mrb[0].mxu0 %v2871
  %v3006 = vpop.f32.mrb[0].mxu0
  %v3007 = vadd.f32 %v2835, %v3006
  %v3008 = vpop.f32.mrb[0].mxu0
  %3009 = vmatprep.mubr.f32.mxu0 0.0
  %3010 = vmatmul.mubr.f32.gmra.mrb[0].mxu0 %v2874
  %v3011 = vpop.f32.mrb[0].mxu0
  %v3012 = vadd.f32 %v2835, %v3011
  %v3013 = vpop.f32.mrb[0].mxu0
  %3014 = vmatprep.mubr.f32.mxu0 0.0
  %3015 = vmatmul.mubr.f32.gmra.mrb[0].mxu0 %v2877
  %v3016 = vpop.f32.mrb[0].mxu0
  %v3017 = vadd.f32 %v2835, %v3016
  %v3018 = vpop.f32.mrb[0].mxu0
  %3019 = vmatprep.mubr.f32.mxu0 0.0
  %3020 = vmatmul.mubr.f32.gmra.mrb[0].mxu0 %v2880
  %v3021 = vpop.f32.mrb[0].mxu0
  %v3022 = vadd.f32 %v2835, %v3021
  %v3023 = vpop.f32.mrb[0].mxu0
  %3024 = vmatprep.mubr.f32.mxu0 0.0
  %3025 = vmatmul.mubr.f32.gmra.mrb[0].mxu0 %v2883
  %v3026 = vpop.f32.mrb[0].mxu0
  %v3027 = vadd.f32 %v2835, %v3026
  %v3028 = vpop.f32.mrb[0].mxu0
  %3029 = vdwg.mxu0
  %v3030 = vadd.f32 %v2952, %v2590
  %v3031 = vadd.f32 %v2957, %v2591
  %v3032 = vadd.f32 %v2962, %v2592
  %v3033 = vadd.f32 %v2967, %v2593
  %v3034 = vadd.f32 %v2972, %v2594
  %v3035 = vadd.f32 %v2977, %v2595
  %v3036 = vadd.f32 %v2982, %v2596
  %v3037 = vadd.f32 %v2987, %v2597
  %v3038 = vadd.f32 %v2992, %v2598
  %v3039 = vadd.f32 %v2997, %v2599
  %v3040 = vadd.f32 %v3002, %v2600
  %v3041 = vadd.f32 %v3007, %v2601
  %v3042 = vadd.f32 %v3012, %v2602
  %v3043 = vadd.f32 %v3017, %v2603
  %v3044 = vadd.f32 %v3022, %v2604
  %v3045 = vadd.f32 %v3027, %v2605
  %v3046 = vmax.f32 %v3030, 0.0
  %v3047 = vmax.f32 %v3031, 0.0
  %v3048 = vmax.f32 %v3032, 0.0
  %v3049 = vmax.f32 %v3033, 0.0
  %v3050 = vmax.f32 %v3034, 0.0
  %v3051 = vmax.f32 %v3035, 0.0
  %v3052 = vmax.f32 %v3036, 0.0
  %v3053 = vmax.f32 %v3037, 0.0
  %v3054 = vmax.f32 %v3038, 0.0
  %v3055 = vmax.f32 %v3039, 0.0
  %v3056 = vmax.f32 %v3040, 0.0
  %v3057 = vmax.f32 %v3041, 0.0
  %v3058 = vmax.f32 %v3042, 0.0
  %v3059 = vmax.f32 %v3043, 0.0
  %v3060 = vmax.f32 %v3044, 0.0
  %v3061 = vmax.f32 %v3045, 0.0
  %v3062 = vld [vmem:[%s55] sm:$0xff]
  %v3063 = vld [vmem:[%s55 + $0x8] sm:$0xff]
  %v3064 = vld [vmem:[%s55 + $0x10] sm:$0xff]
  %v3065 = vld [vmem:[%s55 + $0x18] sm:$0xff]
  %v3066 = vld [vmem:[%s57] sm:$0x1]
  %v3068 = vlaneseq
  %v3069 = vshrl.u32 %v3068, 7
  %v3070 = vsub.s32 0, %v3069
  %v3071 = vrot.slane %v3066, %v3070
  %v3074 = vsel %vm2226, %v3054, 0
  %v3077 = vsel %vm2226, %v3055, 0
  %v3080 = vsel %vm2226, %v3056, 0
  %v3083 = vsel %vm2226, %v3057, 0
  %v3086 = vsel %vm2226, %v3058, 0
  %v3089 = vsel %vm2226, %v3059, 0
  %v3092 = vsel %vm2226, %v3060, 0
  %v3095 = vsel %vm2226, %v3061, 0
  %3097 = vmatprep.subr.mxu0 0.0
  %3098 = vmatpush1.msra.mxu0 %v3062
  %3099 = vmatprep.subr.mxu0 0.0
  %3100 = vmatpush1.msra.mxu0 %v3063
  %3101 = vmatprep.subr.mxu0 0.0
  %3102 = vmatpush1.msra.mxu0 %v3064
  %3103 = vmatprep.subr.mxu0 0.0
  %3104 = vmatpush1.msra.mxu0 %v3065
  %3105 = vmatprep.subr.mxu0 0.0
  %3106 = vmatpush1.msra.mxu0 0.0
  %3107 = vmatprep.subr.mxu0 0.0
  %3108 = vmatpush1.msra.mxu0 0.0
  %3109 = vmatprep.subr.mxu0 0.0
  %3110 = vmatpush1.msra.mxu0 0.0
  %3111 = vmatprep.subr.mxu0 0.0
  %3112 = vmatpush1.msra.mxu0 0.0
  %3113 = vmatprep.subr.mxu0 0.0
  %3114 = vmatpush1.msra.mxu0 0.0
  %3115 = vmatprep.subr.mxu0 0.0
  %3116 = vmatpush1.msra.mxu0 0.0
  %3117 = vmatprep.subr.mxu0 0.0
  %3118 = vmatpush1.msra.mxu0 0.0
  %3119 = vmatprep.subr.mxu0 0.0
  %3120 = vmatpush1.msra.mxu0 0.0
  %3121 = vmatprep.subr.mxu0 0.0
  %3122 = vmatpush1.msra.mxu0 0.0
  %3123 = vmatprep.subr.mxu0 0.0
  %3124 = vmatpush1.msra.mxu0 0.0
  %3125 = vmatprep.subr.mxu0 0.0
  %3126 = vmatpush1.msra.mxu0 0.0
  %3127 = vmatprep.subr.mxu0 0.0
  %3128 = vmatpush1.msra.mxu0 0.0
  %3129 = vmatprep.subr.mxu0 0.0
  %3130 = vmatpush1.msra.mxu0 0.0
  %3131 = vmatprep.subr.mxu0 0.0
  %3132 = vmatpush1.msra.mxu0 0.0
  %3133 = vmatprep.subr.mxu0 0.0
  %3134 = vmatpush1.msra.mxu0 0.0
  %3135 = vmatprep.subr.mxu0 0.0
  %3136 = vmatpush1.msra.mxu0 0.0
  %3137 = vmatprep.subr.mxu0 0.0
  %3138 = vmatpush1.msra.mxu0 0.0
  %3139 = vmatprep.subr.mxu0 0.0
  %3140 = vmatpush1.msra.mxu0 0.0
  %3141 = vmatprep.subr.mxu0 0.0
  %3142 = vmatpush1.msra.mxu0 0.0
  %3143 = vmatprep.subr.mxu0 0.0
  %3144 = vmatpush1.msra.mxu0 0.0
  %3145 = vmatprep.subr.mxu0 0.0
  %3146 = vmatpush1.msra.mxu0 0.0
  %3147 = vmatprep.subr.mxu0 0.0
  %3148 = vmatpush1.msra.mxu0 0.0
  %3149 = vmatprep.subr.mxu0 0.0
  %3150 = vmatpush1.msra.mxu0 0.0
  %3151 = vmatprep.subr.mxu0 0.0
  %3152 = vmatpush1.msra.mxu0 0.0
  %3153 = vmatprep.subr.mxu0 0.0
  %3154 = vmatpush1.msra.mxu0 0.0
  %3155 = vmatprep.subr.mxu0 0.0
  %3156 = vmatpush1.msra.mxu0 0.0
  %3157 = vmatprep.subr.mxu0 0.0
  %3158 = vmatpush1.msra.mxu0 0.0
  %3159 = vmatprep.subr.mxu0 0.0
  %3160 = vmatpush1.msra.mxu0 0.0
  %3161 = vmatprep.mubr.f32.mxu0 0.0
  %3162 = vmatmul.mubr.f32.gmra.mrb[0].mxu0 %v3074
  %v3163 = vpop.f32.mrb[0].mxu0
  %v3164 = vadd.f32 %v3071, %v3163
  %v3165 = vpop.f32.mrb[0].mxu0
  %3166 = vmatprep.mubr.f32.mxu0 0.0
  %3167 = vmatmul.mubr.f32.gmra.mrb[0].mxu0 %v3077
  %v3168 = vpop.f32.mrb[0].mxu0
  %v3169 = vadd.f32 %v3071, %v3168
  %v3170 = vpop.f32.mrb[0].mxu0
  %3171 = vmatprep.mubr.f32.mxu0 0.0
  %3172 = vmatmul.mubr.f32.gmra.mrb[0].mxu0 %v3080
  %v3173 = vpop.f32.mrb[0].mxu0
  %v3174 = vadd.f32 %v3071, %v3173
  %v3175 = vpop.f32.mrb[0].mxu0
  %3176 = vmatprep.mubr.f32.mxu0 0.0
  %3177 = vmatmul.mubr.f32.gmra.mrb[0].mxu0 %v3083
  %v3178 = vpop.f32.mrb[0].mxu0
  %v3179 = vadd.f32 %v3071, %v3178
  %v3180 = vpop.f32.mrb[0].mxu0
  %3181 = vmatprep.mubr.f32.mxu0 0.0
  %3182 = vmatmul.mubr.f32.gmra.mrb[0].mxu0 %v3086
  %v3183 = vpop.f32.mrb[0].mxu0
  %v3184 = vadd.f32 %v3071, %v3183
  %v3185 = vpop.f32.mrb[0].mxu0
  %3186 = vmatprep.mubr.f32.mxu0 0.0
  %3187 = vmatmul.mubr.f32.gmra.mrb[0].mxu0 %v3089
  %v3188 = vpop.f32.mrb[0].mxu0
  %v3189 = vadd.f32 %v3071, %v3188
  %v3190 = vpop.f32.mrb[0].mxu0
  %3191 = vmatprep.mubr.f32.mxu0 0.0
  %3192 = vmatmul.mubr.f32.gmra.mrb[0].mxu0 %v3092
  %v3193 = vpop.f32.mrb[0].mxu0
  %v3194 = vadd.f32 %v3071, %v3193
  %v3195 = vpop.f32.mrb[0].mxu0
  %3196 = vmatprep.mubr.f32.mxu0 0.0
  %3197 = vmatmul.mubr.f32.gmra.mrb[0].mxu0 %v3095
  %v3198 = vpop.f32.mrb[0].mxu0
  %v3199 = vadd.f32 %v3071, %v3198
  %v3200 = vpop.f32.mrb[0].mxu0
  %3201 = vdwg.mxu0
  %v3202 = vld [vmem:[%s59] sm:$0xff]
  %v3203 = vld [vmem:[%s59 + $0x8] sm:$0xff]
  %v3204 = vld [vmem:[%s59 + $0x10] sm:$0xff]
  %v3205 = vld [vmem:[%s59 + $0x18] sm:$0xff]
  %v3206 = vld [vmem:[%s61] sm:$0x1]
  %v3208 = vlaneseq
  %v3209 = vshrl.u32 %v3208, 7
  %v3210 = vsub.s32 0, %v3209
  %v3211 = vrot.slane %v3206, %v3210
  %v3214 = vsel %vm2226, %v3046, 0
  %v3217 = vsel %vm2226, %v3047, 0
  %v3220 = vsel %vm2226, %v3048, 0
  %v3223 = vsel %vm2226, %v3049, 0
  %v3226 = vsel %vm2226, %v3050, 0
  %v3229 = vsel %vm2226, %v3051, 0
  %v3232 = vsel %vm2226, %v3052, 0
  %v3235 = vsel %vm2226, %v3053, 0
  %3237 = vmatprep.subr.mxu0 0.0
  %3238 = vmatpush1.msra.mxu0 %v3202
  %3239 = vmatprep.subr.mxu0 0.0
  %3240 = vmatpush1.msra.mxu0 %v3203
  %3241 = vmatprep.subr.mxu0 0.0
  %3242 = vmatpush1.msra.mxu0 %v3204
  %3243 = vmatprep.subr.mxu0 0.0
  %3244 = vmatpush1.msra.mxu0 %v3205
  %3245 = vmatprep.subr.mxu0 0.0
  %3246 = vmatpush1.msra.mxu0 0.0
  %3247 = vmatprep.subr.mxu0 0.0
  %3248 = vmatpush1.msra.mxu0 0.0
  %3249 = vmatprep.subr.mxu0 0.0
  %3250 = vmatpush1.msra.mxu0 0.0
  %3251 = vmatprep.subr.mxu0 0.0
  %3252 = vmatpush1.msra.mxu0 0.0
  %3253 = vmatprep.subr.mxu0 0.0
  %3254 = vmatpush1.msra.mxu0 0.0
  %3255 = vmatprep.subr.mxu0 0.0
  %3256 = vmatpush1.msra.mxu0 0.0
  %3257 = vmatprep.subr.mxu0 0.0
  %3258 = vmatpush1.msra.mxu0 0.0
  %3259 = vmatprep.subr.mxu0 0.0
  %3260 = vmatpush1.msra.mxu0 0.0
  %3261 = vmatprep.subr.mxu0 0.0
  %3262 = vmatpush1.msra.mxu0 0.0
  %3263 = vmatprep.subr.mxu0 0.0
  %3264 = vmatpush1.msra.mxu0 0.0
  %3265 = vmatprep.subr.mxu0 0.0
  %3266 = vmatpush1.msra.mxu0 0.0
  %3267 = vmatprep.subr.mxu0 0.0
  %3268 = vmatpush1.msra.mxu0 0.0
  %3269 = vmatprep.subr.mxu0 0.0
  %3270 = vmatpush1.msra.mxu0 0.0
  %3271 = vmatprep.subr.mxu0 0.0
  %3272 = vmatpush1.msra.mxu0 0.0
  %3273 = vmatprep.subr.mxu0 0.0
  %3274 = vmatpush1.msra.mxu0 0.0
  %3275 = vmatprep.subr.mxu0 0.0
  %3276 = vmatpush1.msra.mxu0 0.0
  %3277 = vmatprep.subr.mxu0 0.0
  %3278 = vmatpush1.msra.mxu0 0.0
  %3279 = vmatprep.subr.mxu0 0.0
  %3280 = vmatpush1.msra.mxu0 0.0
  %3281 = vmatprep.subr.mxu0 0.0
  %3282 = vmatpush1.msra.mxu0 0.0
  %3283 = vmatprep.subr.mxu0 0.0
  %3284 = vmatpush1.msra.mxu0 0.0
  %3285 = vmatprep.subr.mxu0 0.0
  %3286 = vmatpush1.msra.mxu0 0.0
  %3287 = vmatprep.subr.mxu0 0.0
  %3288 = vmatpush1.msra.mxu0 0.0
  %3289 = vmatprep.subr.mxu0 0.0
  %3290 = vmatpush1.msra.mxu0 0.0
  %3291 = vmatprep.subr.mxu0 0.0
  %3292 = vmatpush1.msra.mxu0 0.0
  %3293 = vmatprep.subr.mxu0 0.0
  %3294 = vmatpush1.msra.mxu0 0.0
  %3295 = vmatprep.subr.mxu0 0.0
  %3296 = vmatpush1.msra.mxu0 0.0
  %3297 = vmatprep.subr.mxu0 0.0
  %3298 = vmatpush1.msra.mxu0 0.0
  %3299 = vmatprep.subr.mxu0 0.0
  %3300 = vmatpush1.msra.mxu0 0.0
  %3301 = vmatprep.mubr.f32.mxu0 0.0
  %3302 = vmatmul.mubr.f32.gmra.mrb[0].mxu0 %v3214
  %v3303 = vpop.f32.mrb[0].mxu0
  %v3304 = vadd.f32 %v3211, %v3303
  %v3305 = vpop.f32.mrb[0].mxu0
  %3306 = vmatprep.mubr.f32.mxu0 0.0
  %3307 = vmatmul.mubr.f32.gmra.mrb[0].mxu0 %v3217
  %v3308 = vpop.f32.mrb[0].mxu0
  %v3309 = vadd.f32 %v3211, %v3308
  %v3310 = vpop.f32.mrb[0].mxu0
  %3311 = vmatprep.mubr.f32.mxu0 0.0
  %3312 = vmatmul.mubr.f32.gmra.mrb[0].mxu0 %v3220
  %v3313 = vpop.f32.mrb[0].mxu0
  %v3314 = vadd.f32 %v3211, %v3313
  %v3315 = vpop.f32.mrb[0].mxu0
  %3316 = vmatprep.mubr.f32.mxu0 0.0
  %3317 = vmatmul.mubr.f32.gmra.mrb[0].mxu0 %v3223
  %v3318 = vpop.f32.mrb[0].mxu0
  %v3319 = vadd.f32 %v3211, %v3318
  %v3320 = vpop.f32.mrb[0].mxu0
  %3321 = vmatprep.mubr.f32.mxu0 0.0
  %3322 = vmatmul.mubr.f32.gmra.mrb[0].mxu0 %v3226
  %v3323 = vpop.f32.mrb[0].mxu0
  %v3324 = vadd.f32 %v3211, %v3323
  %v3325 = vpop.f32.mrb[0].mxu0
  %3326 = vmatprep.mubr.f32.mxu0 0.0
  %3327 = vmatmul.mubr.f32.gmra.mrb[0].mxu0 %v3229
  %v3328 = vpop.f32.mrb[0].mxu0
  %v3329 = vadd.f32 %v3211, %v3328
  %v3330 = vpop.f32.mrb[0].mxu0
  %3331 = vmatprep.mubr.f32.mxu0 0.0
  %3332 = vmatmul.mubr.f32.gmra.mrb[0].mxu0 %v3232
  %v3333 = vpop.f32.mrb[0].mxu0
  %v3334 = vadd.f32 %v3211, %v3333
  %v3335 = vpop.f32.mrb[0].mxu0
  %3336 = vmatprep.mubr.f32.mxu0 0.0
  %3337 = vmatmul.mubr.f32.gmra.mrb[0].mxu0 %v3235
  %v3338 = vpop.f32.mrb[0].mxu0
  %v3339 = vadd.f32 %v3211, %v3338
  %v3340 = vpop.f32.mrb[0].mxu0
  %3341 = vdwg.mxu0
  %v3342 = vld [vmem:[%s63] sm:$0xff]
  %v3343 = vld [vmem:[%s63 + $0x8] sm:$0xff]
  %v3344 = vld [vmem:[%s63 + $0x10] sm:$0xff]
  %v3345 = vld [vmem:[%s63 + $0x18] sm:$0xff]
  %v3346 = vld [vmem:[%s65] sm:$0x1]
  %v3348 = vlaneseq
  %v3349 = vshrl.u32 %v3348, 7
  %v3350 = vsub.s32 0, %v3349
  %v3351 = vrot.slane %v3346, %v3350
  %3353 = vmatprep.subr.mxu0 0.0
  %3354 = vmatpush1.msra.mxu0 %v3342
  %3355 = vmatprep.subr.mxu0 0.0
  %3356 = vmatpush1.msra.mxu0 %v3343
  %3357 = vmatprep.subr.mxu0 0.0
  %3358 = vmatpush1.msra.mxu0 %v3344
  %3359 = vmatprep.subr.mxu0 0.0
  %3360 = vmatpush1.msra.mxu0 %v3345
  %3361 = vmatprep.subr.mxu0 0.0
  %3362 = vmatpush1.msra.mxu0 0.0
  %3363 = vmatprep.subr.mxu0 0.0
  %3364 = vmatpush1.msra.mxu0 0.0
  %3365 = vmatprep.subr.mxu0 0.0
  %3366 = vmatpush1.msra.mxu0 0.0
  %3367 = vmatprep.subr.mxu0 0.0
  %3368 = vmatpush1.msra.mxu0 0.0
  %3369 = vmatprep.subr.mxu0 0.0
  %3370 = vmatpush1.msra.mxu0 0.0
  %3371 = vmatprep.subr.mxu0 0.0
  %3372 = vmatpush1.msra.mxu0 0.0
  %3373 = vmatprep.subr.mxu0 0.0
  %3374 = vmatpush1.msra.mxu0 0.0
  %3375 = vmatprep.subr.mxu0 0.0
  %3376 = vmatpush1.msra.mxu0 0.0
  %3377 = vmatprep.subr.mxu0 0.0
  %3378 = vmatpush1.msra.mxu0 0.0
  %3379 = vmatprep.subr.mxu0 0.0
  %3380 = vmatpush1.msra.mxu0 0.0
  %3381 = vmatprep.subr.mxu0 0.0
  %3382 = vmatpush1.msra.mxu0 0.0
  %3383 = vmatprep.subr.mxu0 0.0
  %3384 = vmatpush1.msra.mxu0 0.0
  %3385 = vmatprep.subr.mxu0 0.0
  %3386 = vmatpush1.msra.mxu0 0.0
  %3387 = vmatprep.subr.mxu0 0.0
  %3388 = vmatpush1.msra.mxu0 0.0
  %3389 = vmatprep.subr.mxu0 0.0
  %3390 = vmatpush1.msra.mxu0 0.0
  %3391 = vmatprep.subr.mxu0 0.0
  %3392 = vmatpush1.msra.mxu0 0.0
  %3393 = vmatprep.subr.mxu0 0.0
  %3394 = vmatpush1.msra.mxu0 0.0
  %3395 = vmatprep.subr.mxu0 0.0
  %3396 = vmatpush1.msra.mxu0 0.0
  %3397 = vmatprep.subr.mxu0 0.0
  %3398 = vmatpush1.msra.mxu0 0.0
  %3399 = vmatprep.subr.mxu0 0.0
  %3400 = vmatpush1.msra.mxu0 0.0
  %3401 = vmatprep.subr.mxu0 0.0
  %3402 = vmatpush1.msra.mxu0 0.0
  %3403 = vmatprep.subr.mxu0 0.0
  %3404 = vmatpush1.msra.mxu0 0.0
  %3405 = vmatprep.subr.mxu0 0.0
  %3406 = vmatpush1.msra.mxu0 0.0
  %3407 = vmatprep.subr.mxu0 0.0
  %3408 = vmatpush1.msra.mxu0 0.0
  %3409 = vmatprep.subr.mxu0 0.0
  %3410 = vmatpush1.msra.mxu0 0.0
  %3411 = vmatprep.subr.mxu0 0.0
  %3412 = vmatpush1.msra.mxu0 0.0
  %3413 = vmatprep.subr.mxu0 0.0
  %3414 = vmatpush1.msra.mxu0 0.0
  %3415 = vmatprep.subr.mxu0 0.0
  %3416 = vmatpush1.msra.mxu0 0.0
  %3417 = vmatprep.mubr.f32.mxu0 0.0
  %3418 = vmatmul.mubr.f32.gmra.mrb[0].mxu0 %v3214
  %v3419 = vpop.f32.mrb[0].mxu0
  %v3420 = vadd.f32 %v3351, %v3419
  %v3421 = vpop.f32.mrb[0].mxu0
  %3422 = vmatprep.mubr.f32.mxu0 0.0
  %3423 = vmatmul.mubr.f32.gmra.mrb[0].mxu0 %v3217
  %v3424 = vpop.f32.mrb[0].mxu0
  %v3425 = vadd.f32 %v3351, %v3424
  %v3426 = vpop.f32.mrb[0].mxu0
  %3427 = vmatprep.mubr.f32.mxu0 0.0
  %3428 = vmatmul.mubr.f32.gmra.mrb[0].mxu0 %v3220
  %v3429 = vpop.f32.mrb[0].mxu0
  %v3430 = vadd.f32 %v3351, %v3429
  %v3431 = vpop.f32.mrb[0].mxu0
  %3432 = vmatprep.mubr.f32.mxu0 0.0
  %3433 = vmatmul.mubr.f32.gmra.mrb[0].mxu0 %v3223
  %v3434 = vpop.f32.mrb[0].mxu0
  %v3435 = vadd.f32 %v3351, %v3434
  %v3436 = vpop.f32.mrb[0].mxu0
  %3437 = vmatprep.mubr.f32.mxu0 0.0
  %3438 = vmatmul.mubr.f32.gmra.mrb[0].mxu0 %v3226
  %v3439 = vpop.f32.mrb[0].mxu0
  %v3440 = vadd.f32 %v3351, %v3439
  %v3441 = vpop.f32.mrb[0].mxu0
  %3442 = vmatprep.mubr.f32.mxu0 0.0
  %3443 = vmatmul.mubr.f32.gmra.mrb[0].mxu0 %v3229
  %v3444 = vpop.f32.mrb[0].mxu0
  %v3445 = vadd.f32 %v3351, %v3444
  %v3446 = vpop.f32.mrb[0].mxu0
  %3447 = vmatprep.mubr.f32.mxu0 0.0
  %3448 = vmatmul.mubr.f32.gmra.mrb[0].mxu0 %v3232
  %v3449 = vpop.f32.mrb[0].mxu0
  %v3450 = vadd.f32 %v3351, %v3449
  %v3451 = vpop.f32.mrb[0].mxu0
  %3452 = vmatprep.mubr.f32.mxu0 0.0
  %3453 = vmatmul.mubr.f32.gmra.mrb[0].mxu0 %v3235
  %v3454 = vpop.f32.mrb[0].mxu0
  %v3455 = vadd.f32 %v3351, %v3454
  %v3456 = vpop.f32.mrb[0].mxu0
  %3457 = vdwg.mxu0
  %v3459 = vsel %vm2226, %v3164, 0
  %v3462 = vsel %vm2226, %v3169, 0
  %v3465 = vsel %vm2226, %v3174, 0
  %v3468 = vsel %vm2226, %v3179, 0
  %v3471 = vsel %vm2226, %v3184, 0
  %v3474 = vsel %vm2226, %v3189, 0
  %v3477 = vsel %vm2226, %v3194, 0
  %v3480 = vsel %vm2226, %v3199, 0
  %v3483 = vsel %vm2226, %v3304, 0
  %v3486 = vsel %vm2226, %v3309, 0
  %v3489 = vsel %vm2226, %v3314, 0
  %v3492 = vsel %vm2226, %v3319, 0
  %v3495 = vsel %vm2226, %v3324, 0
  %v3498 = vsel %vm2226, %v3329, 0
  %v3501 = vsel %vm2226, %v3334, 0
  %v3504 = vsel %vm2226, %v3339, 0
  %3506 = vmatprep.subr.mxu0 0.0
  %3507 = vmatpush1.xpose.msra.mxu0 %v3483
  %3508 = vmatprep.subr.mxu0 0.0
  %3509 = vmatpush1.xpose.msra.mxu0 %v3486
  %3510 = vmatprep.subr.mxu0 0.0
  %3511 = vmatpush1.xpose.msra.mxu0 %v3489
  %3512 = vmatprep.subr.mxu0 0.0
  %3513 = vmatpush1.xpose.msra.mxu0 %v3492
  %3514 = vmatprep.subr.mxu0 0.0
  %3515 = vmatpush1.xpose.msra.mxu0 %v3495
  %3516 = vmatprep.subr.mxu0 0.0
  %3517 = vmatpush1.xpose.msra.mxu0 %v3498
  %3518 = vmatprep.subr.mxu0 0.0
  %3519 = vmatpush1.xpose.msra.mxu0 %v3501
  %3520 = vmatprep.subr.mxu0 0.0
  %3521 = vmatpush1.xpose.msra.mxu0 %v3504
  %3522 = vmatprep.subr.mxu0 0.0
  %3523 = vmatpush1.xpose.msra.mxu0 0.0
  %3524 = vmatprep.subr.mxu0 0.0
  %3525 = vmatpush1.xpose.msra.mxu0 0.0
  %3526 = vmatprep.subr.mxu0 0.0
  %3527 = vmatpush1.xpose.msra.mxu0 0.0
  %3528 = vmatprep.subr.mxu0 0.0
  %3529 = vmatpush1.xpose.msra.mxu0 0.0
  %3530 = vmatprep.subr.mxu0 0.0
  %3531 = vmatpush1.xpose.msra.mxu0 0.0
  %3532 = vmatprep.subr.mxu0 0.0
  %3533 = vmatpush1.xpose.msra.mxu0 0.0
  %3534 = vmatprep.subr.mxu0 0.0
  %3535 = vmatpush1.xpose.msra.mxu0 0.0
  %3536 = vmatprep.subr.mxu0 0.0
  %3537 = vmatpush1.xpose.msra.mxu0 0.0
  %3538 = vmatprep.subr.mxu0 0.0
  %3539 = vmatpush1.xpose.msra.mxu0 0.0
  %3540 = vmatprep.subr.mxu0 0.0
  %3541 = vmatpush1.xpose.msra.mxu0 0.0
  %3542 = vmatprep.subr.mxu0 0.0
  %3543 = vmatpush1.xpose.msra.mxu0 0.0
  %3544 = vmatprep.subr.mxu0 0.0
  %3545 = vmatpush1.xpose.msra.mxu0 0.0
  %3546 = vmatprep.subr.mxu0 0.0
  %3547 = vmatpush1.xpose.msra.mxu0 0.0
  %3548 = vmatprep.subr.mxu0 0.0
  %3549 = vmatpush1.xpose.msra.mxu0 0.0
  %3550 = vmatprep.subr.mxu0 0.0
  %3551 = vmatpush1.xpose.msra.mxu0 0.0
  %3552 = vmatprep.subr.mxu0 0.0
  %3553 = vmatpush1.xpose.msra.mxu0 0.0
  %3554 = vmatprep.subr.mxu0 0.0
  %3555 = vmatpush1.xpose.msra.mxu0 0.0
  %3556 = vmatprep.subr.mxu0 0.0
  %3557 = vmatpush1.xpose.msra.mxu0 0.0
  %3558 = vmatprep.subr.mxu0 0.0
  %3559 = vmatpush1.xpose.msra.mxu0 0.0
  %3560 = vmatprep.subr.mxu0 0.0
  %3561 = vmatpush1.xpose.msra.mxu0 0.0
  %3562 = vmatprep.subr.mxu0 0.0
  %3563 = vmatpush1.xpose.msra.mxu0 0.0
  %3564 = vmatprep.subr.mxu0 0.0
  %3565 = vmatpush1.xpose.msra.mxu0 0.0
  %3566 = vmatprep.subr.mxu0 0.0
  %3567 = vmatpush1.xpose.msra.mxu0 0.0
  %3568 = vmatprep.subr.mxu0 0.0
  %3569 = vmatpush1.xpose.msra.mxu0 0.0
  %3570 = vmatprep.mubr.f32.mxu0 0.0
  %3571 = vmatmul.mubr.f32.gmra.mrb[0].mxu0 %v3459
  %v3572 = vpop.f32.mrb[0].mxu0
  %v3573 = vadd.f32 0.0, %v3572
  %v3574 = vpop.f32.mrb[0].mxu0
  %3575 = vmatprep.mubr.f32.mxu0 0.0
  %3576 = vmatmul.mubr.f32.gmra.mrb[0].mxu0 %v3462
  %v3577 = vpop.f32.mrb[0].mxu0
  %v3578 = vadd.f32 0.0, %v3577
  %v3579 = vpop.f32.mrb[0].mxu0
  %3580 = vmatprep.mubr.f32.mxu0 0.0
  %3581 = vmatmul.mubr.f32.gmra.mrb[0].mxu0 %v3465
  %v3582 = vpop.f32.mrb[0].mxu0
  %v3583 = vadd.f32 0.0, %v3582
  %v3584 = vpop.f32.mrb[0].mxu0
  %3585 = vmatprep.mubr.f32.mxu0 0.0
  %3586 = vmatmul.mubr.f32.gmra.mrb[0].mxu0 %v3468
  %v3587 = vpop.f32.mrb[0].mxu0
  %v3588 = vadd.f32 0.0, %v3587
  %v3589 = vpop.f32.mrb[0].mxu0
  %3590 = vmatprep.mubr.f32.mxu0 0.0
  %3591 = vmatmul.mubr.f32.gmra.mrb[0].mxu0 %v3471
  %v3592 = vpop.f32.mrb[0].mxu0
  %v3593 = vadd.f32 0.0, %v3592
  %v3594 = vpop.f32.mrb[0].mxu0
  %3595 = vmatprep.mubr.f32.mxu0 0.0
  %3596 = vmatmul.mubr.f32.gmra.mrb[0].mxu0 %v3474
  %v3597 = vpop.f32.mrb[0].mxu0
  %v3598 = vadd.f32 0.0, %v3597
  %v3599 = vpop.f32.mrb[0].mxu0
  %3600 = vmatprep.mubr.f32.mxu0 0.0
  %3601 = vmatmul.mubr.f32.gmra.mrb[0].mxu0 %v3477
  %v3602 = vpop.f32.mrb[0].mxu0
  %v3603 = vadd.f32 0.0, %v3602
  %v3604 = vpop.f32.mrb[0].mxu0
  %3605 = vmatprep.mubr.f32.mxu0 0.0
  %3606 = vmatmul.mubr.f32.gmra.mrb[0].mxu0 %v3480
  %v3607 = vpop.f32.mrb[0].mxu0
  %v3608 = vadd.f32 0.0, %v3607
  %v3609 = vpop.f32.mrb[0].mxu0
  %3610 = vdwg.mxu0
  %vm3611 = vcmask 523264
  %v3612 = vsel %vm3611, %v3573, -inf
  %3613 = vmax.xlane.f32.xlu0 %v3612
  %v3614 = vpop.xlane.xlu0 %3613
  %v3615 = vsel %vm3611, %v3578, -inf
  %3616 = vmax.xlane.f32.xlu0 %v3615
  %v3617 = vpop.xlane.xlu0 %3616
  %v3618 = vsel %vm3611, %v3583, -inf
  %3619 = vmax.xlane.f32.xlu0 %v3618
  %v3620 = vpop.xlane.xlu0 %3619
  %v3621 = vsel %vm3611, %v3588, -inf
  %3622 = vmax.xlane.f32.xlu0 %v3621
  %v3623 = vpop.xlane.xlu0 %3622
  %v3624 = vsel %vm3611, %v3593, -inf
  %3625 = vmax.xlane.f32.xlu0 %v3624
  %v3626 = vpop.xlane.xlu0 %3625
  %v3627 = vsel %vm3611, %v3598, -inf
  %3628 = vmax.xlane.f32.xlu0 %v3627
  %v3629 = vpop.xlane.xlu0 %3628
  %v3630 = vsel %vm3611, %v3603, -inf
  %3631 = vmax.xlane.f32.xlu0 %v3630
  %v3632 = vpop.xlane.xlu0 %3631
  %v3633 = vsel %vm3611, %v3608, -inf
  %3634 = vmax.xlane.f32.xlu0 %v3633
  %v3635 = vpop.xlane.xlu0 %3634
  %v3636 = vsub.f32 %v3573, %v3614
  %v3637 = vsub.f32 %v3578, %v3617
  %v3638 = vsub.f32 %v3583, %v3620
  %v3639 = vsub.f32 %v3588, %v3623
  %v3640 = vsub.f32 %v3593, %v3626
  %v3641 = vsub.f32 %v3598, %v3629
  %v3642 = vsub.f32 %v3603, %v3632
  %v3643 = vsub.f32 %v3608, %v3635
  %v3644 = vmul.f32 %v3636, 1.442695
  %v3645 = vpow.pop %v3644
  %v3646 = vmul.f32 %v3637, 1.442695
  %v3647 = vpow.pop %v3646
  %v3648 = vmul.f32 %v3638, 1.442695
  %v3649 = vpow.pop %v3648
  %v3650 = vmul.f32 %v3639, 1.442695
  %v3651 = vpow.pop %v3650
  %v3652 = vmul.f32 %v3640, 1.442695
  %v3653 = vpow.pop %v3652
  %v3654 = vmul.f32 %v3641, 1.442695
  %v3655 = vpow.pop %v3654
  %v3656 = vmul.f32 %v3642, 1.442695
  %v3657 = vpow.pop %v3656
  %v3658 = vmul.f32 %v3643, 1.442695
  %v3659 = vpow.pop %v3658
  %v3660 = vsel %vm3611, %v3645, 0.0
  %3661 = vadd.xlane.f32.xlu0 %v3660
  %v3662 = vpop.xlane.xlu0 %3661
  %v3663 = vsel %vm3611, %v3647, 0.0
  %3664 = vadd.xlane.f32.xlu0 %v3663
  %v3665 = vpop.xlane.xlu0 %3664
  %v3666 = vsel %vm3611, %v3649, 0.0
  %3667 = vadd.xlane.f32.xlu0 %v3666
  %v3668 = vpop.xlane.xlu0 %3667
  %v3669 = vsel %vm3611, %v3651, 0.0
  %3670 = vadd.xlane.f32.xlu0 %v3669
  %v3671 = vpop.xlane.xlu0 %3670
  %v3672 = vsel %vm3611, %v3653, 0.0
  %3673 = vadd.xlane.f32.xlu0 %v3672
  %v3674 = vpop.xlane.xlu0 %3673
  %v3675 = vsel %vm3611, %v3655, 0.0
  %3676 = vadd.xlane.f32.xlu0 %v3675
  %v3677 = vpop.xlane.xlu0 %3676
  %v3678 = vsel %vm3611, %v3657, 0.0
  %3679 = vadd.xlane.f32.xlu0 %v3678
  %v3680 = vpop.xlane.xlu0 %3679
  %v3681 = vsel %vm3611, %v3659, 0.0
  %3682 = vadd.xlane.f32.xlu0 %v3681
  %v3683 = vpop.xlane.xlu0 %3682
  %v3685 = vsel %vm3611, %v3645, 0
  %v3688 = vsel %vm3611, %v3647, 0
  %v3691 = vsel %vm3611, %v3649, 0
  %v3694 = vsel %vm3611, %v3651, 0
  %v3697 = vsel %vm3611, %v3653, 0
  %v3700 = vsel %vm3611, %v3655, 0
  %v3703 = vsel %vm3611, %v3657, 0
  %v3706 = vsel %vm3611, %v3659, 0
  %3708 = vmatprep.subr.mxu0 0.0
  %3709 = vmatpush1.msra.mxu0 %v3420
  %3710 = vmatprep.subr.mxu0 0.0
  %3711 = vmatpush1.msra.mxu0 %v3425
  %3712 = vmatprep.subr.mxu0 0.0
  %3713 = vmatpush1.msra.mxu0 %v3430
  %3714 = vmatprep.subr.mxu0 0.0
  %3715 = vmatpush1.msra.mxu0 %v3435
  %3716 = vmatprep.subr.mxu0 0.0
  %3717 = vmatpush1.msra.mxu0 %v3440
  %3718 = vmatprep.subr.mxu0 0.0
  %3719 = vmatpush1.msra.mxu0 %v3445
  %3720 = vmatprep.subr.mxu0 0.0
  %3721 = vmatpush1.msra.mxu0 %v3450
  %3722 = vmatprep.subr.mxu0 0.0
  %3723 = vmatpush1.msra.mxu0 %v3455
  %3724 = vmatprep.subr.mxu0 0.0
  %3725 = vmatpush1.msra.mxu0 0.0
  %3726 = vmatprep.subr.mxu0 0.0
  %3727 = vmatpush1.msra.mxu0 0.0
  %3728 = vmatprep.subr.mxu0 0.0
  %3729 = vmatpush1.msra.mxu0 0.0
  %3730 = vmatprep.subr.mxu0 0.0
  %3731 = vmatpush1.msra.mxu0 0.0
  %3732 = vmatprep.subr.mxu0 0.0
  %3733 = vmatpush1.msra.mxu0 0.0
  %3734 = vmatprep.subr.mxu0 0.0
  %3735 = vmatpush1.msra.mxu0 0.0
  %3736 = vmatprep.subr.mxu0 0.0
  %3737 = vmatpush1.msra.mxu0 0.0
  %3738 = vmatprep.subr.mxu0 0.0
  %3739 = vmatpush1.msra.mxu0 0.0
  %3740 = vmatprep.subr.mxu0 0.0
  %3741 = vmatpush1.msra.mxu0 0.0
  %3742 = vmatprep.subr.mxu0 0.0
  %3743 = vmatpush1.msra.mxu0 0.0
  %3744 = vmatprep.subr.mxu0 0.0
  %3745 = vmatpush1.msra.mxu0 0.0
  %3746 = vmatprep.subr.mxu0 0.0
  %3747 = vmatpush1.msra.mxu0 0.0
  %3748 = vmatprep.subr.mxu0 0.0
  %3749 = vmatpush1.msra.mxu0 0.0
  %3750 = vmatprep.subr.mxu0 0.0
  %3751 = vmatpush1.msra.mxu0 0.0
  %3752 = vmatprep.subr.mxu0 0.0
  %3753 = vmatpush1.msra.mxu0 0.0
  %3754 = vmatprep.subr.mxu0 0.0
  %3755 = vmatpush1.msra.mxu0 0.0
  %3756 = vmatprep.subr.mxu0 0.0
  %3757 = vmatpush1.msra.mxu0 0.0
  %3758 = vmatprep.subr.mxu0 0.0
  %3759 = vmatpush1.msra.mxu0 0.0
  %3760 = vmatprep.subr.mxu0 0.0
  %3761 = vmatpush1.msra.mxu0 0.0
  %3762 = vmatprep.subr.mxu0 0.0
  %3763 = vmatpush1.msra.mxu0 0.0
  %3764 = vmatprep.subr.mxu0 0.0
  %3765 = vmatpush1.msra.mxu0 0.0
  %3766 = vmatprep.subr.mxu0 0.0
  %3767 = vmatpush1.msra.mxu0 0.0
  %3768 = vmatprep.subr.mxu0 0.0
  %3769 = vmatpush1.msra.mxu0 0.0
  %3770 = vmatprep.subr.mxu0 0.0
  %3771 = vmatpush1.msra.mxu0 0.0
  %3772 = vmatprep.mubr.f32.mxu0 0.0
  %3773 = vmatmul.mubr.f32.gmra.mrb[0].mxu0 %v3685
  %v3774 = vpop.f32.mrb[0].mxu0
  %v3775 = vadd.f32 0.0, %v3774
  %v3776 = vpop.f32.mrb[0].mxu0
  %3777 = vmatprep.mubr.f32.mxu0 0.0
  %3778 = vmatmul.mubr.f32.gmra.mrb[0].mxu0 %v3688
  %v3779 = vpop.f32.mrb[0].mxu0
  %v3780 = vadd.f32 0.0, %v3779
  %v3781 = vpop.f32.mrb[0].mxu0
  %3782 = vmatprep.mubr.f32.mxu0 0.0
  %3783 = vmatmul.mubr.f32.gmra.mrb[0].mxu0 %v3691
  %v3784 = vpop.f32.mrb[0].mxu0
  %v3785 = vadd.f32 0.0, %v3784
  %v3786 = vpop.f32.mrb[0].mxu0
  %3787 = vmatprep.mubr.f32.mxu0 0.0
  %3788 = vmatmul.mubr.f32.gmra.mrb[0].mxu0 %v3694
  %v3789 = vpop.f32.mrb[0].mxu0
  %v3790 = vadd.f32 0.0, %v3789
  %v3791 = vpop.f32.mrb[0].mxu0
  %3792 = vmatprep.mubr.f32.mxu0 0.0
  %3793 = vmatmul.mubr.f32.gmra.mrb[0].mxu0 %v3697
  %v3794 = vpop.f32.mrb[0].mxu0
  %v3795 = vadd.f32 0.0, %v3794
  %v3796 = vpop.f32.mrb[0].mxu0
  %3797 = vmatprep.mubr.f32.mxu0 0.0
  %3798 = vmatmul.mubr.f32.gmra.mrb[0].mxu0 %v3700
  %v3799 = vpop.f32.mrb[0].mxu0
  %v3800 = vadd.f32 0.0, %v3799
  %v3801 = vpop.f32.mrb[0].mxu0
  %3802 = vmatprep.mubr.f32.mxu0 0.0
  %3803 = vmatmul.mubr.f32.gmra.mrb[0].mxu0 %v3703
  %v3804 = vpop.f32.mrb[0].mxu0
  %v3805 = vadd.f32 0.0, %v3804
  %v3806 = vpop.f32.mrb[0].mxu0
  %3807 = vmatprep.mubr.f32.mxu0 0.0
  %3808 = vmatmul.mubr.f32.gmra.mrb[0].mxu0 %v3706
  %v3809 = vpop.f32.mrb[0].mxu0
  %v3810 = vadd.f32 0.0, %v3809
  %v3811 = vpop.f32.mrb[0].mxu0
  %3812 = vdwg.mxu0
  %v3813 = vrcp.pop %v3662
  %v3814 = vrcp.pop %v3665
  %v3815 = vrcp.pop %v3668
  %v3816 = vrcp.pop %v3671
  %v3817 = vrcp.pop %v3674
  %v3818 = vrcp.pop %v3677
  %v3819 = vrcp.pop %v3680
  %v3820 = vrcp.pop %v3683
  %v3821 = vmul.f32 %v3775, %v3813
  %v3822 = vmul.f32 %v3780, %v3814
  %v3823 = vmul.f32 %v3785, %v3815
  %v3824 = vmul.f32 %v3790, %v3816
  %v3825 = vmul.f32 %v3795, %v3817
  %v3826 = vmul.f32 %v3800, %v3818
  %v3827 = vmul.f32 %v3805, %v3819
  %v3828 = vmul.f32 %v3810, %v3820
  %v3829 = vld [vmem:[%s67] sm:$0xff]
  %v3830 = vld [vmem:[%s69] sm:$0x1]
  %v3832 = vlaneseq
  %v3833 = vshrl.u32 %v3832, 7
  %v3834 = vsub.s32 0, %v3833
  %v3835 = vrot.slane %v3830, %v3834
  %3837 = vmatprep.subr.mxu0 0.0
  %3838 = vmatpush1.msra.mxu0 %v3829
  %3839 = vmatprep.subr.mxu0 0.0
  %3840 = vmatpush1.msra.mxu0 0.0
  %3841 = vmatprep.subr.mxu0 0.0
  %3842 = vmatpush1.msra.mxu0 0.0
  %3843 = vmatprep.subr.mxu0 0.0
  %3844 = vmatpush1.msra.mxu0 0.0
  %3845 = vmatprep.subr.mxu0 0.0
  %3846 = vmatpush1.msra.mxu0 0.0
  %3847 = vmatprep.subr.mxu0 0.0
  %3848 = vmatpush1.msra.mxu0 0.0
  %3849 = vmatprep.subr.mxu0 0.0
  %3850 = vmatpush1.msra.mxu0 0.0
  %3851 = vmatprep.subr.mxu0 0.0
  %3852 = vmatpush1.msra.mxu0 0.0
  %3853 = vmatprep.subr.mxu0 0.0
  %3854 = vmatpush1.msra.mxu0 0.0
  %3855 = vmatprep.subr.mxu0 0.0
  %3856 = vmatpush1.msra.mxu0 0.0
  %3857 = vmatprep.subr.mxu0 0.0
  %3858 = vmatpush1.msra.mxu0 0.0
  %3859 = vmatprep.subr.mxu0 0.0
  %3860 = vmatpush1.msra.mxu0 0.0
  %3861 = vmatprep.subr.mxu0 0.0
  %3862 = vmatpush1.msra.mxu0 0.0
  %3863 = vmatprep.subr.mxu0 0.0
  %3864 = vmatpush1.msra.mxu0 0.0
  %3865 = vmatprep.subr.mxu0 0.0
  %3866 = vmatpush1.msra.mxu0 0.0
  %3867 = vmatprep.subr.mxu0 0.0
  %3868 = vmatpush1.msra.mxu0 0.0
  %3869 = vmatprep.subr.mxu0 0.0
  %3870 = vmatpush1.msra.mxu0 0.0
  %3871 = vmatprep.subr.mxu0 0.0
  %3872 = vmatpush1.msra.mxu0 0.0
  %3873 = vmatprep.subr.mxu0 0.0
  %3874 = vmatpush1.msra.mxu0 0.0
  %3875 = vmatprep.subr.mxu0 0.0
  %3876 = vmatpush1.msra.mxu0 0.0
  %3877 = vmatprep.subr.mxu0 0.0
  %3878 = vmatpush1.msra.mxu0 0.0
  %3879 = vmatprep.subr.mxu0 0.0
  %3880 = vmatpush1.msra.mxu0 0.0
  %3881 = vmatprep.subr.mxu0 0.0
  %3882 = vmatpush1.msra.mxu0 0.0
  %3883 = vmatprep.subr.mxu0 0.0
  %3884 = vmatpush1.msra.mxu0 0.0
  %3885 = vmatprep.subr.mxu0 0.0
  %3886 = vmatpush1.msra.mxu0 0.0
  %3887 = vmatprep.subr.mxu0 0.0
  %3888 = vmatpush1.msra.mxu0 0.0
  %3889 = vmatprep.subr.mxu0 0.0
  %3890 = vmatpush1.msra.mxu0 0.0
  %3891 = vmatprep.subr.mxu0 0.0
  %3892 = vmatpush1.msra.mxu0 0.0
  %3893 = vmatprep.subr.mxu0 0.0
  %3894 = vmatpush1.msra.mxu0 0.0
  %3895 = vmatprep.subr.mxu0 0.0
  %3896 = vmatpush1.msra.mxu0 0.0
  %3897 = vmatprep.subr.mxu0 0.0
  %3898 = vmatpush1.msra.mxu0 0.0
  %3899 = vmatprep.subr.mxu0 0.0
  %3900 = vmatpush1.msra.mxu0 0.0
  %3901 = vmatprep.mubr.f32.mxu0 0.0
  %3902 = vmatmul.mubr.f32.gmra.mrb[0].mxu0 %v538
  %v3903 = vpop.f32.mrb[0].mxu0
  %v3904 = vadd.f32 %v3835, %v3903
  %v3905 = vpop.f32.mrb[0].mxu0
  %3906 = vmatprep.mubr.f32.mxu0 0.0
  %3907 = vmatmul.mubr.f32.gmra.mrb[0].mxu0 %v541
  %v3908 = vpop.f32.mrb[0].mxu0
  %v3909 = vadd.f32 %v3835, %v3908
  %v3910 = vpop.f32.mrb[0].mxu0
  %3911 = vmatprep.mubr.f32.mxu0 0.0
  %3912 = vmatmul.mubr.f32.gmra.mrb[0].mxu0 %v544
  %v3913 = vpop.f32.mrb[0].mxu0
  %v3914 = vadd.f32 %v3835, %v3913
  %v3915 = vpop.f32.mrb[0].mxu0
  %3916 = vmatprep.mubr.f32.mxu0 0.0
  %3917 = vmatmul.mubr.f32.gmra.mrb[0].mxu0 %v547
  %v3918 = vpop.f32.mrb[0].mxu0
  %v3919 = vadd.f32 %v3835, %v3918
  %v3920 = vpop.f32.mrb[0].mxu0
  %3921 = vmatprep.mubr.f32.mxu0 0.0
  %3922 = vmatmul.mubr.f32.gmra.mrb[0].mxu0 %v550
  %v3923 = vpop.f32.mrb[0].mxu0
  %v3924 = vadd.f32 %v3835, %v3923
  %v3925 = vpop.f32.mrb[0].mxu0
  %3926 = vmatprep.mubr.f32.mxu0 0.0
  %3927 = vmatmul.mubr.f32.gmra.mrb[0].mxu0 %v553
  %v3928 = vpop.f32.mrb[0].mxu0
  %v3929 = vadd.f32 %v3835, %v3928
  %v3930 = vpop.f32.mrb[0].mxu0
  %3931 = vmatprep.mubr.f32.mxu0 0.0
  %3932 = vmatmul.mubr.f32.gmra.mrb[0].mxu0 %v556
  %v3933 = vpop.f32.mrb[0].mxu0
  %v3934 = vadd.f32 %v3835, %v3933
  %v3935 = vpop.f32.mrb[0].mxu0
  %3936 = vmatprep.mubr.f32.mxu0 0.0
  %3937 = vmatmul.mubr.f32.gmra.mrb[0].mxu0 %v559
  %v3938 = vpop.f32.mrb[0].mxu0
  %v3939 = vadd.f32 %v3835, %v3938
  %v3940 = vpop.f32.mrb[0].mxu0
  %3941 = vdwg.mxu0
  %v3942 = vmax.f32 %v3904, 0.0
  %v3943 = vmax.f32 %v3909, 0.0
  %v3944 = vmax.f32 %v3914, 0.0
  %v3945 = vmax.f32 %v3919, 0.0
  %v3946 = vmax.f32 %v3924, 0.0
  %v3947 = vmax.f32 %v3929, 0.0
  %v3948 = vmax.f32 %v3934, 0.0
  %v3949 = vmax.f32 %v3939, 0.0
  %v3950 = vadd.f32 %v3821, %v3942
  %v3951 = vadd.f32 %v3822, %v3943
  %v3952 = vadd.f32 %v3823, %v3944
  %v3953 = vadd.f32 %v3824, %v3945
  %v3954 = vadd.f32 %v3825, %v3946
  %v3955 = vadd.f32 %v3826, %v3947
  %v3956 = vadd.f32 %v3827, %v3948
  %v3957 = vadd.f32 %v3828, %v3949
  %v3958 = vld [vmem:[%s71] sm:$0xff]
  %v3959 = vld [vmem:[%s71 + $0x8] sm:$0xff]
  %v3960 = vld [vmem:[%s71 + $0x10] sm:$0xff]
  %v3961 = vld [vmem:[%s71 + $0x18] sm:$0xff]
  %v3962 = vld [vmem:[%s73] sm:$0x1]
  %v3964 = vlaneseq
  %v3965 = vshrl.u32 %v3964, 7
  %v3966 = vsub.s32 0, %v3965
  %v3967 = vrot.slane %v3962, %v3966
  %v3970 = vsel %vm2226, %v3950, 0
  %v3973 = vsel %vm2226, %v3951, 0
  %v3976 = vsel %vm2226, %v3952, 0
  %v3979 = vsel %vm2226, %v3953, 0
  %v3982 = vsel %vm2226, %v3954, 0
  %v3985 = vsel %vm2226, %v3955, 0
  %v3988 = vsel %vm2226, %v3956, 0
  %v3991 = vsel %vm2226, %v3957, 0
  %3993 = vmatprep.subr.mxu0 0.0
  %3994 = vmatpush1.msra.mxu0 %v3958
  %3995 = vmatprep.subr.mxu0 0.0
  %3996 = vmatpush1.msra.mxu0 %v3959
  %3997 = vmatprep.subr.mxu0 0.0
  %3998 = vmatpush1.msra.mxu0 %v3960
  %3999 = vmatprep.subr.mxu0 0.0
  %4000 = vmatpush1.msra.mxu0 %v3961
  %4001 = vmatprep.subr.mxu0 0.0
  %4002 = vmatpush1.msra.mxu0 0.0
  %4003 = vmatprep.subr.mxu0 0.0
  %4004 = vmatpush1.msra.mxu0 0.0
  %4005 = vmatprep.subr.mxu0 0.0
  %4006 = vmatpush1.msra.mxu0 0.0
  %4007 = vmatprep.subr.mxu0 0.0
  %4008 = vmatpush1.msra.mxu0 0.0
  %4009 = vmatprep.subr.mxu0 0.0
  %4010 = vmatpush1.msra.mxu0 0.0
  %4011 = vmatprep.subr.mxu0 0.0
  %4012 = vmatpush1.msra.mxu0 0.0
  %4013 = vmatprep.subr.mxu0 0.0
  %4014 = vmatpush1.msra.mxu0 0.0
  %4015 = vmatprep.subr.mxu0 0.0
  %4016 = vmatpush1.msra.mxu0 0.0
  %4017 = vmatprep.subr.mxu0 0.0
  %4018 = vmatpush1.msra.mxu0 0.0
  %4019 = vmatprep.subr.mxu0 0.0
  %4020 = vmatpush1.msra.mxu0 0.0
  %4021 = vmatprep.subr.mxu0 0.0
  %4022 = vmatpush1.msra.mxu0 0.0
  %4023 = vmatprep.subr.mxu0 0.0
  %4024 = vmatpush1.msra.mxu0 0.0
  %4025 = vmatprep.subr.mxu0 0.0
  %4026 = vmatpush1.msra.mxu0 0.0
  %4027 = vmatprep.subr.mxu0 0.0
  %4028 = vmatpush1.msra.mxu0 0.0
  %4029 = vmatprep.subr.mxu0 0.0
  %4030 = vmatpush1.msra.mxu0 0.0
  %4031 = vmatprep.subr.mxu0 0.0
  %4032 = vmatpush1.msra.mxu0 0.0
  %4033 = vmatprep.subr.mxu0 0.0
  %4034 = vmatpush1.msra.mxu0 0.0
  %4035 = vmatprep.subr.mxu0 0.0
  %4036 = vmatpush1.msra.mxu0 0.0
  %4037 = vmatprep.subr.mxu0 0.0
  %4038 = vmatpush1.msra.mxu0 0.0
  %4039 = vmatprep.subr.mxu0 0.0
  %4040 = vmatpush1.msra.mxu0 0.0
  %4041 = vmatprep.subr.mxu0 0.0
  %4042 = vmatpush1.msra.mxu0 0.0
  %4043 = vmatprep.subr.mxu0 0.0
  %4044 = vmatpush1.msra.mxu0 0.0
  %4045 = vmatprep.subr.mxu0 0.0
  %4046 = vmatpush1.msra.mxu0 0.0
  %4047 = vmatprep.subr.mxu0 0.0
  %4048 = vmatpush1.msra.mxu0 0.0
  %4049 = vmatprep.subr.mxu0 0.0
  %4050 = vmatpush1.msra.mxu0 0.0
  %4051 = vmatprep.subr.mxu0 0.0
  %4052 = vmatpush1.msra.mxu0 0.0
  %4053 = vmatprep.subr.mxu0 0.0
  %4054 = vmatpush1.msra.mxu0 0.0
  %4055 = vmatprep.subr.mxu0 0.0
  %4056 = vmatpush1.msra.mxu0 0.0
  %4057 = vmatprep.mubr.f32.mxu0 0.0
  %4058 = vmatmul.mubr.f32.gmra.mrb[0].mxu0 %v3970
  %v4059 = vpop.f32.mrb[0].mxu0
  %v4060 = vadd.f32 %v3967, %v4059
  %v4061 = vpop.f32.mrb[0].mxu0
  %4062 = vmatprep.mubr.f32.mxu0 0.0
  %4063 = vmatmul.mubr.f32.gmra.mrb[0].mxu0 %v3973
  %v4064 = vpop.f32.mrb[0].mxu0
  %v4065 = vadd.f32 %v3967, %v4064
  %v4066 = vpop.f32.mrb[0].mxu0
  %4067 = vmatprep.mubr.f32.mxu0 0.0
  %4068 = vmatmul.mubr.f32.gmra.mrb[0].mxu0 %v3976
  %v4069 = vpop.f32.mrb[0].mxu0
  %v4070 = vadd.f32 %v3967, %v4069
  %v4071 = vpop.f32.mrb[0].mxu0
  %4072 = vmatprep.mubr.f32.mxu0 0.0
  %4073 = vmatmul.mubr.f32.gmra.mrb[0].mxu0 %v3979
  %v4074 = vpop.f32.mrb[0].mxu0
  %v4075 = vadd.f32 %v3967, %v4074
  %v4076 = vpop.f32.mrb[0].mxu0
  %4077 = vmatprep.mubr.f32.mxu0 0.0
  %4078 = vmatmul.mubr.f32.gmra.mrb[0].mxu0 %v3982
  %v4079 = vpop.f32.mrb[0].mxu0
  %v4080 = vadd.f32 %v3967, %v4079
  %v4081 = vpop.f32.mrb[0].mxu0
  %4082 = vmatprep.mubr.f32.mxu0 0.0
  %4083 = vmatmul.mubr.f32.gmra.mrb[0].mxu0 %v3985
  %v4084 = vpop.f32.mrb[0].mxu0
  %v4085 = vadd.f32 %v3967, %v4084
  %v4086 = vpop.f32.mrb[0].mxu0
  %4087 = vmatprep.mubr.f32.mxu0 0.0
  %4088 = vmatmul.mubr.f32.gmra.mrb[0].mxu0 %v3988
  %v4089 = vpop.f32.mrb[0].mxu0
  %v4090 = vadd.f32 %v3967, %v4089
  %v4091 = vpop.f32.mrb[0].mxu0
  %4092 = vmatprep.mubr.f32.mxu0 0.0
  %4093 = vmatmul.mubr.f32.gmra.mrb[0].mxu0 %v3991
  %v4094 = vpop.f32.mrb[0].mxu0
  %v4095 = vadd.f32 %v3967, %v4094
  %v4096 = vpop.f32.mrb[0].mxu0
  %4097 = vdwg.mxu0
  %v4098 = vmax.f32 %v4060, 0.0
  %v4099 = vmax.f32 %v4065, 0.0
  %v4100 = vmax.f32 %v4070, 0.0
  %v4101 = vmax.f32 %v4075, 0.0
  %v4102 = vmax.f32 %v4080, 0.0
  %v4103 = vmax.f32 %v4085, 0.0
  %v4104 = vmax.f32 %v4090, 0.0
  %v4105 = vmax.f32 %v4095, 0.0
  %v4106 = vld [vmem:[%s75] sm:$0xff]
  %v4107 = vld [vmem:[%s75 + $0x8] sm:$0xff]
  %v4108 = vld [vmem:[%s75 + $0x10] sm:$0xff]
  %v4109 = vld [vmem:[%s77] sm:$0xff]
  %v4110 = vld [vmem:[%s77 + $0x8] sm:$0xff]
  %v4111 = vld [vmem:[%s79] sm:$0x1]
  %4112 = vmatprep.subr.mxu0 0.0
  %4113 = vmatpush1.msra.mxu0 %v4109
  %4114 = vmatprep.subr.mxu0 0.0
  %4115 = vmatpush1.msra.mxu0 %v4110
  %4116 = vmatprep.subr.mxu0 0.0
  %4117 = vmatpush1.msra.mxu0 0.0
  %4118 = vmatprep.subr.mxu0 0.0
  %4119 = vmatpush1.msra.mxu0 0.0
  %4120 = vmatprep.subr.mxu0 0.0
  %4121 = vmatpush1.msra.mxu0 0.0
  %4122 = vmatprep.subr.mxu0 0.0
  %4123 = vmatpush1.msra.mxu0 0.0
  %4124 = vmatprep.subr.mxu0 0.0
  %4125 = vmatpush1.msra.mxu0 0.0
  %4126 = vmatprep.subr.mxu0 0.0
  %4127 = vmatpush1.msra.mxu0 0.0
  %4128 = vmatprep.subr.mxu0 0.0
  %4129 = vmatpush1.msra.mxu0 0.0
  %4130 = vmatprep.subr.mxu0 0.0
  %4131 = vmatpush1.msra.mxu0 0.0
  %4132 = vmatprep.subr.mxu0 0.0
  %4133 = vmatpush1.msra.mxu0 0.0
  %4134 = vmatprep.subr.mxu0 0.0
  %4135 = vmatpush1.msra.mxu0 0.0
  %4136 = vmatprep.subr.mxu0 0.0
  %4137 = vmatpush1.msra.mxu0 0.0
  %4138 = vmatprep.subr.mxu0 0.0
  %4139 = vmatpush1.msra.mxu0 0.0
  %4140 = vmatprep.subr.mxu0 0.0
  %4141 = vmatpush1.msra.mxu0 0.0
  %4142 = vmatprep.subr.mxu0 0.0
  %4143 = vmatpush1.msra.mxu0 0.0
  %4144 = vmatprep.subr.mxu0 0.0
  %4145 = vmatpush1.msra.mxu0 0.0
  %4146 = vmatprep.subr.mxu0 0.0
  %4147 = vmatpush1.msra.mxu0 0.0
  %4148 = vmatprep.subr.mxu0 0.0
  %4149 = vmatpush1.msra.mxu0 0.0
  %4150 = vmatprep.subr.mxu0 0.0
  %4151 = vmatpush1.msra.mxu0 0.0
  %4152 = vmatprep.subr.mxu0 0.0
  %4153 = vmatpush1.msra.mxu0 0.0
  %4154 = vmatprep.subr.mxu0 0.0
  %4155 = vmatpush1.msra.mxu0 0.0
  %4156 = vmatprep.subr.mxu0 0.0
  %4157 = vmatpush1.msra.mxu0 0.0
  %4158 = vmatprep.subr.mxu0 0.0
  %4159 = vmatpush1.msra.mxu0 0.0
  %4160 = vmatprep.subr.mxu0 0.0
  %4161 = vmatpush1.msra.mxu0 0.0
  %4162 = vmatprep.subr.mxu0 0.0
  %4163 = vmatpush1.msra.mxu0 0.0
  %4164 = vmatprep.subr.mxu0 0.0
  %4165 = vmatpush1.msra.mxu0 0.0
  %4166 = vmatprep.subr.mxu0 0.0
  %4167 = vmatpush1.msra.mxu0 0.0
  %4168 = vmatprep.subr.mxu0 0.0
  %4169 = vmatpush1.msra.mxu0 0.0
  %4170 = vmatprep.subr.mxu0 0.0
  %4171 = vmatpush1.msra.mxu0 0.0
  %4172 = vmatprep.subr.mxu0 0.0
  %4173 = vmatpush1.msra.mxu0 0.0
  %4174 = vmatprep.subr.mxu0 0.0
  %4175 = vmatpush1.msra.mxu0 0.0
  %4176 = vmatprep.mubr.f32.mxu0 0.0
  %4177 = vmatmul.mubr.f32.gmra.mrb[0].mxu0 %v1813
  %v4178 = vpop.f32.mrb[0].mxu0
  %v4179 = vadd.f32 0.0, %v4178
  %v4180 = vpop.f32.mrb[0].mxu0
  %4181 = vmatprep.mubr.f32.mxu0 0.0
  %4182 = vmatmul.mubr.f32.gmra.mrb[0].mxu0 %v1816
  %v4183 = vpop.f32.mrb[0].mxu0
  %v4184 = vadd.f32 0.0, %v4183
  %v4185 = vpop.f32.mrb[0].mxu0
  %4186 = vmatprep.mubr.f32.mxu0 0.0
  %4187 = vmatmul.mubr.f32.gmra.mrb[0].mxu0 %v1819
  %v4188 = vpop.f32.mrb[0].mxu0
  %v4189 = vadd.f32 0.0, %v4188
  %v4190 = vpop.f32.mrb[0].mxu0
  %4191 = vmatprep.mubr.f32.mxu0 0.0
  %4192 = vmatmul.mubr.f32.gmra.mrb[0].mxu0 %v1822
  %v4193 = vpop.f32.mrb[0].mxu0
  %v4194 = vadd.f32 0.0, %v4193
  %v4195 = vpop.f32.mrb[0].mxu0
  %4196 = vmatprep.mubr.f32.mxu0 0.0
  %4197 = vmatmul.mubr.f32.gmra.mrb[0].mxu0 %v1825
  %v4198 = vpop.f32.mrb[0].mxu0
  %v4199 = vadd.f32 0.0, %v4198
  %v4200 = vpop.f32.mrb[0].mxu0
  %4201 = vmatprep.mubr.f32.mxu0 0.0
  %4202 = vmatmul.mubr.f32.gmra.mrb[0].mxu0 %v1828
  %v4203 = vpop.f32.mrb[0].mxu0
  %v4204 = vadd.f32 0.0, %v4203
  %v4205 = vpop.f32.mrb[0].mxu0
  %4206 = vmatprep.mubr.f32.mxu0 0.0
  %4207 = vmatmul.mubr.f32.gmra.mrb[0].mxu0 %v1831
  %v4208 = vpop.f32.mrb[0].mxu0
  %v4209 = vadd.f32 0.0, %v4208
  %v4210 = vpop.f32.mrb[0].mxu0
  %4211 = vmatprep.mubr.f32.mxu0 0.0
  %4212 = vmatmul.mubr.f32.gmra.mrb[0].mxu0 %v1834
  %v4213 = vpop.f32.mrb[0].mxu0
  %v4214 = vadd.f32 0.0, %v4213
  %v4215 = vpop.f32.mrb[0].mxu0
  %4216 = vdwg.mxu0
  %vm4217 = vcmask 195584
  %v4219 = vsel %vm4217, %v4098, 0
  %v4222 = vsel %vm4217, %v4099, 0
  %v4225 = vsel %vm4217, %v4100, 0
  %v4228 = vsel %vm4217, %v4101, 0
  %v4231 = vsel %vm4217, %v4102, 0
  %v4234 = vsel %vm4217, %v4103, 0
  %v4237 = vsel %vm4217, %v4104, 0
  %v4240 = vsel %vm4217, %v4105, 0
  %4242 = vmatprep.subr.mxu0 0.0
  %4243 = vmatpush1.msra.mxu0 %v4106
  %4244 = vmatprep.subr.mxu0 0.0
  %4245 = vmatpush1.msra.mxu0 %v4107
  %4246 = vmatprep.subr.mxu0 0.0
  %4247 = vmatpush1.msra.mxu0 %v4108
  %4248 = vmatprep.subr.mxu0 0.0
  %4249 = vmatpush1.msra.mxu0 0.0
  %4250 = vmatprep.subr.mxu0 0.0
  %4251 = vmatpush1.msra.mxu0 0.0
  %4252 = vmatprep.subr.mxu0 0.0
  %4253 = vmatpush1.msra.mxu0 0.0
  %4254 = vmatprep.subr.mxu0 0.0
  %4255 = vmatpush1.msra.mxu0 0.0
  %4256 = vmatprep.subr.mxu0 0.0
  %4257 = vmatpush1.msra.mxu0 0.0
  %4258 = vmatprep.subr.mxu0 0.0
  %4259 = vmatpush1.msra.mxu0 0.0
  %4260 = vmatprep.subr.mxu0 0.0
  %4261 = vmatpush1.msra.mxu0 0.0
  %4262 = vmatprep.subr.mxu0 0.0
  %4263 = vmatpush1.msra.mxu0 0.0
  %4264 = vmatprep.subr.mxu0 0.0
  %4265 = vmatpush1.msra.mxu0 0.0
  %4266 = vmatprep.subr.mxu0 0.0
  %4267 = vmatpush1.msra.mxu0 0.0
  %4268 = vmatprep.subr.mxu0 0.0
  %4269 = vmatpush1.msra.mxu0 0.0
  %4270 = vmatprep.subr.mxu0 0.0
  %4271 = vmatpush1.msra.mxu0 0.0
  %4272 = vmatprep.subr.mxu0 0.0
  %4273 = vmatpush1.msra.mxu0 0.0
  %4274 = vmatprep.subr.mxu0 0.0
  %4275 = vmatpush1.msra.mxu0 0.0
  %4276 = vmatprep.subr.mxu0 0.0
  %4277 = vmatpush1.msra.mxu0 0.0
  %4278 = vmatprep.subr.mxu0 0.0
  %4279 = vmatpush1.msra.mxu0 0.0
  %4280 = vmatprep.subr.mxu0 0.0
  %4281 = vmatpush1.msra.mxu0 0.0
  %4282 = vmatprep.subr.mxu0 0.0
  %4283 = vmatpush1.msra.mxu0 0.0
  %4284 = vmatprep.subr.mxu0 0.0
  %4285 = vmatpush1.msra.mxu0 0.0
  %4286 = vmatprep.subr.mxu0 0.0
  %4287 = vmatpush1.msra.mxu0 0.0
  %4288 = vmatprep.subr.mxu0 0.0
  %4289 = vmatpush1.msra.mxu0 0.0
  %4290 = vmatprep.subr.mxu0 0.0
  %4291 = vmatpush1.msra.mxu0 0.0
  %4292 = vmatprep.subr.mxu0 0.0
  %4293 = vmatpush1.msra.mxu0 0.0
  %4294 = vmatprep.subr.mxu0 0.0
  %4295 = vmatpush1.msra.mxu0 0.0
  %4296 = vmatprep.subr.mxu0 0.0
  %4297 = vmatpush1.msra.mxu0 0.0
  %4298 = vmatprep.subr.mxu0 0.0
  %4299 = vmatpush1.msra.mxu0 0.0
  %4300 = vmatprep.subr.mxu0 0.0
  %4301 = vmatpush1.msra.mxu0 0.0
  %4302 = vmatprep.subr.mxu0 0.0
  %4303 = vmatpush1.msra.mxu0 0.0
  %4304 = vmatprep.subr.mxu0 0.0
  %4305 = vmatpush1.msra.mxu0 0.0
  %4306 = vmatprep.mubr.f32.mxu0 0.0
  %4307 = vmatmul.mubr.f32.gmra.mrb[0].mxu0 %v4219
  %v4308 = vpop.f32.mrb[0].mxu0
  %v4309 = vadd.f32 %v4179, %v4308
  %v4310 = vpop.f32.mrb[0].mxu0
  %4311 = vmatprep.mubr.f32.mxu0 0.0
  %4312 = vmatmul.mubr.f32.gmra.mrb[0].mxu0 %v4222
  %v4313 = vpop.f32.mrb[0].mxu0
  %v4314 = vadd.f32 %v4184, %v4313
  %v4315 = vpop.f32.mrb[0].mxu0
  %4316 = vmatprep.mubr.f32.mxu0 0.0
  %4317 = vmatmul.mubr.f32.gmra.mrb[0].mxu0 %v4225
  %v4318 = vpop.f32.mrb[0].mxu0
  %v4319 = vadd.f32 %v4189, %v4318
  %v4320 = vpop.f32.mrb[0].mxu0
  %4321 = vmatprep.mubr.f32.mxu0 0.0
  %4322 = vmatmul.mubr.f32.gmra.mrb[0].mxu0 %v4228
  %v4323 = vpop.f32.mrb[0].mxu0
  %v4324 = vadd.f32 %v4194, %v4323
  %v4325 = vpop.f32.mrb[0].mxu0
  %4326 = vmatprep.mubr.f32.mxu0 0.0
  %4327 = vmatmul.mubr.f32.gmra.mrb[0].mxu0 %v4231
  %v4328 = vpop.f32.mrb[0].mxu0
  %v4329 = vadd.f32 %v4199, %v4328
  %v4330 = vpop.f32.mrb[0].mxu0
  %4331 = vmatprep.mubr.f32.mxu0 0.0
  %4332 = vmatmul.mubr.f32.gmra.mrb[0].mxu0 %v4234
  %v4333 = vpop.f32.mrb[0].mxu0
  %v4334 = vadd.f32 %v4204, %v4333
  %v4335 = vpop.f32.mrb[0].mxu0
  %4336 = vmatprep.mubr.f32.mxu0 0.0
  %4337 = vmatmul.mubr.f32.gmra.mrb[0].mxu0 %v4237
  %v4338 = vpop.f32.mrb[0].mxu0
  %v4339 = vadd.f32 %v4209, %v4338
  %v4340 = vpop.f32.mrb[0].mxu0
  %4341 = vmatprep.mubr.f32.mxu0 0.0
  %4342 = vmatmul.mubr.f32.gmra.mrb[0].mxu0 %v4240
  %v4343 = vpop.f32.mrb[0].mxu0
  %v4344 = vadd.f32 %v4214, %v4343
  %v4345 = vpop.f32.mrb[0].mxu0
  %4346 = vdwg.mxu0
  %v4348 = vlaneseq
  %v4349 = vshrl.u32 %v4348, 7
  %v4350 = vsub.s32 0, %v4349
  %v4351 = vrot.slane %v4111, %v4350
  %v4353 = vadd.f32 %v4309, %v4351
  %v4354 = vadd.f32 %v4314, %v4351
  %v4355 = vadd.f32 %v4319, %v4351
  %v4356 = vadd.f32 %v4324, %v4351
  %v4357 = vadd.f32 %v4329, %v4351
  %v4358 = vadd.f32 %v4334, %v4351
  %v4359 = vadd.f32 %v4339, %v4351
  %v4360 = vadd.f32 %v4344, %v4351
  %v4361 = vmax.f32 %v4353, 0.0
  %v4362 = vmax.f32 %v4354, 0.0
  %v4363 = vmax.f32 %v4355, 0.0
  %v4364 = vmax.f32 %v4356, 0.0
  %v4365 = vmax.f32 %v4357, 0.0
  %v4366 = vmax.f32 %v4358, 0.0
  %v4367 = vmax.f32 %v4359, 0.0
  %v4368 = vmax.f32 %v4360, 0.0
  %v4369 = vld [vmem:[%s81] sm:$0xff]
  %v4370 = vld [vmem:[%s81 + $0x8] sm:$0xff]
  %v4371 = vld [vmem:[%s81 + $0x10] sm:$0xff]
  %v4372 = vld [vmem:[%s83] sm:$0x1]
  %v4374 = vlaneseq
  %v4375 = vshrl.u32 %v4374, 7
  %v4376 = vsub.s32 0, %v4375
  %v4377 = vrot.slane %v4372, %v4376
  %v4380 = vsel %vm4217, %v4361, 0
  %v4383 = vsel %vm4217, %v4362, 0
  %v4386 = vsel %vm4217, %v4363, 0
  %v4389 = vsel %vm4217, %v4364, 0
  %v4392 = vsel %vm4217, %v4365, 0
  %v4395 = vsel %vm4217, %v4366, 0
  %v4398 = vsel %vm4217, %v4367, 0
  %v4401 = vsel %vm4217, %v4368, 0
  %4403 = vmatprep.subr.mxu0 0.0
  %4404 = vmatpush1.msra.mxu0 %v4369
  %4405 = vmatprep.subr.mxu0 0.0
  %4406 = vmatpush1.msra.mxu0 %v4370
  %4407 = vmatprep.subr.mxu0 0.0
  %4408 = vmatpush1.msra.mxu0 %v4371
  %4409 = vmatprep.subr.mxu0 0.0
  %4410 = vmatpush1.msra.mxu0 0.0
  %4411 = vmatprep.subr.mxu0 0.0
  %4412 = vmatpush1.msra.mxu0 0.0
  %4413 = vmatprep.subr.mxu0 0.0
  %4414 = vmatpush1.msra.mxu0 0.0
  %4415 = vmatprep.subr.mxu0 0.0
  %4416 = vmatpush1.msra.mxu0 0.0
  %4417 = vmatprep.subr.mxu0 0.0
  %4418 = vmatpush1.msra.mxu0 0.0
  %4419 = vmatprep.subr.mxu0 0.0
  %4420 = vmatpush1.msra.mxu0 0.0
  %4421 = vmatprep.subr.mxu0 0.0
  %4422 = vmatpush1.msra.mxu0 0.0
  %4423 = vmatprep.subr.mxu0 0.0
  %4424 = vmatpush1.msra.mxu0 0.0
  %4425 = vmatprep.subr.mxu0 0.0
  %4426 = vmatpush1.msra.mxu0 0.0
  %4427 = vmatprep.subr.mxu0 0.0
  %4428 = vmatpush1.msra.mxu0 0.0
  %4429 = vmatprep.subr.mxu0 0.0
  %4430 = vmatpush1.msra.mxu0 0.0
  %4431 = vmatprep.subr.mxu0 0.0
  %4432 = vmatpush1.msra.mxu0 0.0
  %4433 = vmatprep.subr.mxu0 0.0
  %4434 = vmatpush1.msra.mxu0 0.0
  %4435 = vmatprep.subr.mxu0 0.0
  %4436 = vmatpush1.msra.mxu0 0.0
  %4437 = vmatprep.subr.mxu0 0.0
  %4438 = vmatpush1.msra.mxu0 0.0
  %4439 = vmatprep.subr.mxu0 0.0
  %4440 = vmatpush1.msra.mxu0 0.0
  %4441 = vmatprep.subr.mxu0 0.0
  %4442 = vmatpush1.msra.mxu0 0.0
  %4443 = vmatprep.subr.mxu0 0.0
  %4444 = vmatpush1.msra.mxu0 0.0
  %4445 = vmatprep.subr.mxu0 0.0
  %4446 = vmatpush1.msra.mxu0 0.0
  %4447 = vmatprep.subr.mxu0 0.0
  %4448 = vmatpush1.msra.mxu0 0.0
  %4449 = vmatprep.subr.mxu0 0.0
  %4450 = vmatpush1.msra.mxu0 0.0
  %4451 = vmatprep.subr.mxu0 0.0
  %4452 = vmatpush1.msra.mxu0 0.0
  %4453 = vmatprep.subr.mxu0 0.0
  %4454 = vmatpush1.msra.mxu0 0.0
  %4455 = vmatprep.subr.mxu0 0.0
  %4456 = vmatpush1.msra.mxu0 0.0
  %4457 = vmatprep.subr.mxu0 0.0
  %4458 = vmatpush1.msra.mxu0 0.0
  %4459 = vmatprep.subr.mxu0 0.0
  %4460 = vmatpush1.msra.mxu0 0.0
  %4461 = vmatprep.subr.mxu0 0.0
  %4462 = vmatpush1.msra.mxu0 0.0
  %4463 = vmatprep.subr.mxu0 0.0
  %4464 = vmatpush1.msra.mxu0 0.0
  %4465 = vmatprep.subr.mxu0 0.0
  %4466 = vmatpush1.msra.mxu0 0.0
  %4467 = vmatprep.mubr.f32.mxu0 0.0
  %4468 = vmatmul.mubr.f32.gmra.mrb[0].mxu0 %v4380
  %v4469 = vpop.f32.mrb[0].mxu0
  %v4470 = vadd.f32 %v4377, %v4469
  %v4471 = vpop.f32.mrb[0].mxu0
  %4472 = vmatprep.mubr.f32.mxu0 0.0
  %4473 = vmatmul.mubr.f32.gmra.mrb[0].mxu0 %v4383
  %v4474 = vpop.f32.mrb[0].mxu0
  %v4475 = vadd.f32 %v4377, %v4474
  %v4476 = vpop.f32.mrb[0].mxu0
  %4477 = vmatprep.mubr.f32.mxu0 0.0
  %4478 = vmatmul.mubr.f32.gmra.mrb[0].mxu0 %v4386
  %v4479 = vpop.f32.mrb[0].mxu0
  %v4480 = vadd.f32 %v4377, %v4479
  %v4481 = vpop.f32.mrb[0].mxu0
  %4482 = vmatprep.mubr.f32.mxu0 0.0
  %4483 = vmatmul.mubr.f32.gmra.mrb[0].mxu0 %v4389
  %v4484 = vpop.f32.mrb[0].mxu0
  %v4485 = vadd.f32 %v4377, %v4484
  %v4486 = vpop.f32.mrb[0].mxu0
  %4487 = vmatprep.mubr.f32.mxu0 0.0
  %4488 = vmatmul.mubr.f32.gmra.mrb[0].mxu0 %v4392
  %v4489 = vpop.f32.mrb[0].mxu0
  %v4490 = vadd.f32 %v4377, %v4489
  %v4491 = vpop.f32.mrb[0].mxu0
  %4492 = vmatprep.mubr.f32.mxu0 0.0
  %4493 = vmatmul.mubr.f32.gmra.mrb[0].mxu0 %v4395
  %v4494 = vpop.f32.mrb[0].mxu0
  %v4495 = vadd.f32 %v4377, %v4494
  %v4496 = vpop.f32.mrb[0].mxu0
  %4497 = vmatprep.mubr.f32.mxu0 0.0
  %4498 = vmatmul.mubr.f32.gmra.mrb[0].mxu0 %v4398
  %v4499 = vpop.f32.mrb[0].mxu0
  %v4500 = vadd.f32 %v4377, %v4499
  %v4501 = vpop.f32.mrb[0].mxu0
  %4502 = vmatprep.mubr.f32.mxu0 0.0
  %4503 = vmatmul.mubr.f32.gmra.mrb[0].mxu0 %v4401
  %v4504 = vpop.f32.mrb[0].mxu0
  %v4505 = vadd.f32 %v4377, %v4504
  %v4506 = vpop.f32.mrb[0].mxu0
  %4507 = vdwg.mxu0
  %v4508 = vld [vmem:[%s85] sm:$0xff]
  %v4509 = vld [vmem:[%s85 + $0x8] sm:$0xff]
  %v4510 = vld [vmem:[%s85 + $0x10] sm:$0xff]
  %v4511 = vld [vmem:[%s87] sm:$0xff]
  %v4512 = vld [vmem:[%s87 + $0x8] sm:$0xff]
  %v4513 = vld [vmem:[%s89] sm:$0x1]
  %4514 = vmatprep.subr.mxu0 0.0
  %4515 = vmatpush1.msra.mxu0 %v4511
  %4516 = vmatprep.subr.mxu0 0.0
  %4517 = vmatpush1.msra.mxu0 %v4512
  %4518 = vmatprep.subr.mxu0 0.0
  %4519 = vmatpush1.msra.mxu0 0.0
  %4520 = vmatprep.subr.mxu0 0.0
  %4521 = vmatpush1.msra.mxu0 0.0
  %4522 = vmatprep.subr.mxu0 0.0
  %4523 = vmatpush1.msra.mxu0 0.0
  %4524 = vmatprep.subr.mxu0 0.0
  %4525 = vmatpush1.msra.mxu0 0.0
  %4526 = vmatprep.subr.mxu0 0.0
  %4527 = vmatpush1.msra.mxu0 0.0
  %4528 = vmatprep.subr.mxu0 0.0
  %4529 = vmatpush1.msra.mxu0 0.0
  %4530 = vmatprep.subr.mxu0 0.0
  %4531 = vmatpush1.msra.mxu0 0.0
  %4532 = vmatprep.subr.mxu0 0.0
  %4533 = vmatpush1.msra.mxu0 0.0
  %4534 = vmatprep.subr.mxu0 0.0
  %4535 = vmatpush1.msra.mxu0 0.0
  %4536 = vmatprep.subr.mxu0 0.0
  %4537 = vmatpush1.msra.mxu0 0.0
  %4538 = vmatprep.subr.mxu0 0.0
  %4539 = vmatpush1.msra.mxu0 0.0
  %4540 = vmatprep.subr.mxu0 0.0
  %4541 = vmatpush1.msra.mxu0 0.0
  %4542 = vmatprep.subr.mxu0 0.0
  %4543 = vmatpush1.msra.mxu0 0.0
  %4544 = vmatprep.subr.mxu0 0.0
  %4545 = vmatpush1.msra.mxu0 0.0
  %4546 = vmatprep.subr.mxu0 0.0
  %4547 = vmatpush1.msra.mxu0 0.0
  %4548 = vmatprep.subr.mxu0 0.0
  %4549 = vmatpush1.msra.mxu0 0.0
  %4550 = vmatprep.subr.mxu0 0.0
  %4551 = vmatpush1.msra.mxu0 0.0
  %4552 = vmatprep.subr.mxu0 0.0
  %4553 = vmatpush1.msra.mxu0 0.0
  %4554 = vmatprep.subr.mxu0 0.0
  %4555 = vmatpush1.msra.mxu0 0.0
  %4556 = vmatprep.subr.mxu0 0.0
  %4557 = vmatpush1.msra.mxu0 0.0
  %4558 = vmatprep.subr.mxu0 0.0
  %4559 = vmatpush1.msra.mxu0 0.0
  %4560 = vmatprep.subr.mxu0 0.0
  %4561 = vmatpush1.msra.mxu0 0.0
  %4562 = vmatprep.subr.mxu0 0.0
  %4563 = vmatpush1.msra.mxu0 0.0
  %4564 = vmatprep.subr.mxu0 0.0
  %4565 = vmatpush1.msra.mxu0 0.0
  %4566 = vmatprep.subr.mxu0 0.0
  %4567 = vmatpush1.msra.mxu0 0.0
  %4568 = vmatprep.subr.mxu0 0.0
  %4569 = vmatpush1.msra.mxu0 0.0
  %4570 = vmatprep.subr.mxu0 0.0
  %4571 = vmatpush1.msra.mxu0 0.0
  %4572 = vmatprep.subr.mxu0 0.0
  %4573 = vmatpush1.msra.mxu0 0.0
  %4574 = vmatprep.subr.mxu0 0.0
  %4575 = vmatpush1.msra.mxu0 0.0
  %4576 = vmatprep.subr.mxu0 0.0
  %4577 = vmatpush1.msra.mxu0 0.0
  %4578 = vmatprep.mubr.f32.mxu0 0.0
  %4579 = vmatmul.mubr.f32.gmra.mrb[0].mxu0 %v1813
  %v4580 = vpop.f32.mrb[0].mxu0
  %v4581 = vadd.f32 0.0, %v4580
  %v4582 = vpop.f32.mrb[0].mxu0
  %4583 = vmatprep.mubr.f32.mxu0 0.0
  %4584 = vmatmul.mubr.f32.gmra.mrb[0].mxu0 %v1816
  %v4585 = vpop.f32.mrb[0].mxu0
  %v4586 = vadd.f32 0.0, %v4585
  %v4587 = vpop.f32.mrb[0].mxu0
  %4588 = vmatprep.mubr.f32.mxu0 0.0
  %4589 = vmatmul.mubr.f32.gmra.mrb[0].mxu0 %v1819
  %v4590 = vpop.f32.mrb[0].mxu0
  %v4591 = vadd.f32 0.0, %v4590
  %v4592 = vpop.f32.mrb[0].mxu0
  %4593 = vmatprep.mubr.f32.mxu0 0.0
  %4594 = vmatmul.mubr.f32.gmra.mrb[0].mxu0 %v1822
  %v4595 = vpop.f32.mrb[0].mxu0
  %v4596 = vadd.f32 0.0, %v4595
  %v4597 = vpop.f32.mrb[0].mxu0
  %4598 = vmatprep.mubr.f32.mxu0 0.0
  %4599 = vmatmul.mubr.f32.gmra.mrb[0].mxu0 %v1825
  %v4600 = vpop.f32.mrb[0].mxu0
  %v4601 = vadd.f32 0.0, %v4600
  %v4602 = vpop.f32.mrb[0].mxu0
  %4603 = vmatprep.mubr.f32.mxu0 0.0
  %4604 = vmatmul.mubr.f32.gmra.mrb[0].mxu0 %v1828
  %v4605 = vpop.f32.mrb[0].mxu0
  %v4606 = vadd.f32 0.0, %v4605
  %v4607 = vpop.f32.mrb[0].mxu0
  %4608 = vmatprep.mubr.f32.mxu0 0.0
  %4609 = vmatmul.mubr.f32.gmra.mrb[0].mxu0 %v1831
  %v4610 = vpop.f32.mrb[0].mxu0
  %v4611 = vadd.f32 0.0, %v4610
  %v4612 = vpop.f32.mrb[0].mxu0
  %4613 = vmatprep.mubr.f32.mxu0 0.0
  %4614 = vmatmul.mubr.f32.gmra.mrb[0].mxu0 %v1834
  %v4615 = vpop.f32.mrb[0].mxu0
  %v4616 = vadd.f32 0.0, %v4615
  %v4617 = vpop.f32.mrb[0].mxu0
  %4618 = vdwg.mxu0
  %4619 = vmatprep.subr.mxu0 0.0
  %4620 = vmatpush1.msra.mxu0 %v4508
  %4621 = vmatprep.subr.mxu0 0.0
  %4622 = vmatpush1.msra.mxu0 %v4509
  %4623 = vmatprep.subr.mxu0 0.0
  %4624 = vmatpush1.msra.mxu0 %v4510
  %4625 = vmatprep.subr.mxu0 0.0
  %4626 = vmatpush1.msra.mxu0 0.0
  %4627 = vmatprep.subr.mxu0 0.0
  %4628 = vmatpush1.msra.mxu0 0.0
  %4629 = vmatprep.subr.mxu0 0.0
  %4630 = vmatpush1.msra.mxu0 0.0
  %4631 = vmatprep.subr.mxu0 0.0
  %4632 = vmatpush1.msra.mxu0 0.0
  %4633 = vmatprep.subr.mxu0 0.0
  %4634 = vmatpush1.msra.mxu0 0.0
  %4635 = vmatprep.subr.mxu0 0.0
  %4636 = vmatpush1.msra.mxu0 0.0
  %4637 = vmatprep.subr.mxu0 0.0
  %4638 = vmatpush1.msra.mxu0 0.0
  %4639 = vmatprep.subr.mxu0 0.0
  %4640 = vmatpush1.msra.mxu0 0.0
  %4641 = vmatprep.subr.mxu0 0.0
  %4642 = vmatpush1.msra.mxu0 0.0
  %4643 = vmatprep.subr.mxu0 0.0
  %4644 = vmatpush1.msra.mxu0 0.0
  %4645 = vmatprep.subr.mxu0 0.0
  %4646 = vmatpush1.msra.mxu0 0.0
  %4647 = vmatprep.subr.mxu0 0.0
  %4648 = vmatpush1.msra.mxu0 0.0
  %4649 = vmatprep.subr.mxu0 0.0
  %4650 = vmatpush1.msra.mxu0 0.0
  %4651 = vmatprep.subr.mxu0 0.0
  %4652 = vmatpush1.msra.mxu0 0.0
  %4653 = vmatprep.subr.mxu0 0.0
  %4654 = vmatpush1.msra.mxu0 0.0
  %4655 = vmatprep.subr.mxu0 0.0
  %4656 = vmatpush1.msra.mxu0 0.0
  %4657 = vmatprep.subr.mxu0 0.0
  %4658 = vmatpush1.msra.mxu0 0.0
  %4659 = vmatprep.subr.mxu0 0.0
  %4660 = vmatpush1.msra.mxu0 0.0
  %4661 = vmatprep.subr.mxu0 0.0
  %4662 = vmatpush1.msra.mxu0 0.0
  %4663 = vmatprep.subr.mxu0 0.0
  %4664 = vmatpush1.msra.mxu0 0.0
  %4665 = vmatprep.subr.mxu0 0.0
  %4666 = vmatpush1.msra.mxu0 0.0
  %4667 = vmatprep.subr.mxu0 0.0
  %4668 = vmatpush1.msra.mxu0 0.0
  %4669 = vmatprep.subr.mxu0 0.0
  %4670 = vmatpush1.msra.mxu0 0.0
  %4671 = vmatprep.subr.mxu0 0.0
  %4672 = vmatpush1.msra.mxu0 0.0
  %4673 = vmatprep.subr.mxu0 0.0
  %4674 = vmatpush1.msra.mxu0 0.0
  %4675 = vmatprep.subr.mxu0 0.0
  %4676 = vmatpush1.msra.mxu0 0.0
  %4677 = vmatprep.subr.mxu0 0.0
  %4678 = vmatpush1.msra.mxu0 0.0
  %4679 = vmatprep.subr.mxu0 0.0
  %4680 = vmatpush1.msra.mxu0 0.0
  %4681 = vmatprep.subr.mxu0 0.0
  %4682 = vmatpush1.msra.mxu0 0.0
  %4683 = vmatprep.mubr.f32.mxu0 0.0
  %4684 = vmatmul.mubr.f32.gmra.mrb[0].mxu0 %v4219
  %v4685 = vpop.f32.mrb[0].mxu0
  %v4686 = vadd.f32 %v4581, %v4685
  %v4687 = vpop.f32.mrb[0].mxu0
  %4688 = vmatprep.mubr.f32.mxu0 0.0
  %4689 = vmatmul.mubr.f32.gmra.mrb[0].mxu0 %v4222
  %v4690 = vpop.f32.mrb[0].mxu0
  %v4691 = vadd.f32 %v4586, %v4690
  %v4692 = vpop.f32.mrb[0].mxu0
  %4693 = vmatprep.mubr.f32.mxu0 0.0
  %4694 = vmatmul.mubr.f32.gmra.mrb[0].mxu0 %v4225
  %v4695 = vpop.f32.mrb[0].mxu0
  %v4696 = vadd.f32 %v4591, %v4695
  %v4697 = vpop.f32.mrb[0].mxu0
  %4698 = vmatprep.mubr.f32.mxu0 0.0
  %4699 = vmatmul.mubr.f32.gmra.mrb[0].mxu0 %v4228
  %v4700 = vpop.f32.mrb[0].mxu0
  %v4701 = vadd.f32 %v4596, %v4700
  %v4702 = vpop.f32.mrb[0].mxu0
  %4703 = vmatprep.mubr.f32.mxu0 0.0
  %4704 = vmatmul.mubr.f32.gmra.mrb[0].mxu0 %v4231
  %v4705 = vpop.f32.mrb[0].mxu0
  %v4706 = vadd.f32 %v4601, %v4705
  %v4707 = vpop.f32.mrb[0].mxu0
  %4708 = vmatprep.mubr.f32.mxu0 0.0
  %4709 = vmatmul.mubr.f32.gmra.mrb[0].mxu0 %v4234
  %v4710 = vpop.f32.mrb[0].mxu0
  %v4711 = vadd.f32 %v4606, %v4710
  %v4712 = vpop.f32.mrb[0].mxu0
  %4713 = vmatprep.mubr.f32.mxu0 0.0
  %4714 = vmatmul.mubr.f32.gmra.mrb[0].mxu0 %v4237
  %v4715 = vpop.f32.mrb[0].mxu0
  %v4716 = vadd.f32 %v4611, %v4715
  %v4717 = vpop.f32.mrb[0].mxu0
  %4718 = vmatprep.mubr.f32.mxu0 0.0
  %4719 = vmatmul.mubr.f32.gmra.mrb[0].mxu0 %v4240
  %v4720 = vpop.f32.mrb[0].mxu0
  %v4721 = vadd.f32 %v4616, %v4720
  %v4722 = vpop.f32.mrb[0].mxu0
  %4723 = vdwg.mxu0
  %v4725 = vlaneseq
  %v4726 = vshrl.u32 %v4725, 7
  %v4727 = vsub.s32 0, %v4726
  %v4728 = vrot.slane %v4513, %v4727
  %v4730 = vadd.f32 %v4686, %v4728
  %v4731 = vadd.f32 %v4691, %v4728
  %v4732 = vadd.f32 %v4696, %v4728
  %v4733 = vadd.f32 %v4701, %v4728
  %v4734 = vadd.f32 %v4706, %v4728
  %v4735 = vadd.f32 %v4711, %v4728
  %v4736 = vadd.f32 %v4716, %v4728
  %v4737 = vadd.f32 %v4721, %v4728
  %v4738 = vadd.f32 %v4470, %v4730
  %v4739 = vadd.f32 %v4475, %v4731
  %v4740 = vadd.f32 %v4480, %v4732
  %v4741 = vadd.f32 %v4485, %v4733
  %v4742 = vadd.f32 %v4490, %v4734
  %v4743 = vadd.f32 %v4495, %v4735
  %v4744 = vadd.f32 %v4500, %v4736
  %v4745 = vadd.f32 %v4505, %v4737
  %v4746 = vmax.f32 %v4738, 0.0
  %v4747 = vmax.f32 %v4739, 0.0
  %v4748 = vmax.f32 %v4740, 0.0
  %v4749 = vmax.f32 %v4741, 0.0
  %v4750 = vmax.f32 %v4742, 0.0
  %v4751 = vmax.f32 %v4743, 0.0
  %v4752 = vmax.f32 %v4744, 0.0
  %v4753 = vmax.f32 %v4745, 0.0
  %v4754 = vld [vmem:[%s91] sm:$0xff]
  %v4755 = vld [vmem:[%s91 + $0x8] sm:$0xff]
  %v4756 = vld [vmem:[%s91 + $0x10] sm:$0xff]
  %v4757 = vld [vmem:[%s93] sm:$0x1]
  %v4759 = vlaneseq
  %v4760 = vshrl.u32 %v4759, 7
  %v4761 = vsub.s32 0, %v4760
  %v4762 = vrot.slane %v4757, %v4761
  %v4765 = vsel %vm4217, %v4746, 0
  %v4768 = vsel %vm4217, %v4747, 0
  %v4771 = vsel %vm4217, %v4748, 0
  %v4774 = vsel %vm4217, %v4749, 0
  %v4777 = vsel %vm4217, %v4750, 0
  %v4780 = vsel %vm4217, %v4751, 0
  %v4783 = vsel %vm4217, %v4752, 0
  %v4786 = vsel %vm4217, %v4753, 0
  %4788 = vmatprep.subr.mxu0 0.0
  %4789 = vmatpush1.msra.mxu0 %v4754
  %4790 = vmatprep.subr.mxu0 0.0
  %4791 = vmatpush1.msra.mxu0 %v4755
  %4792 = vmatprep.subr.mxu0 0.0
  %4793 = vmatpush1.msra.mxu0 %v4756
  %4794 = vmatprep.subr.mxu0 0.0
  %4795 = vmatpush1.msra.mxu0 0.0
  %4796 = vmatprep.subr.mxu0 0.0
  %4797 = vmatpush1.msra.mxu0 0.0
  %4798 = vmatprep.subr.mxu0 0.0
  %4799 = vmatpush1.msra.mxu0 0.0
  %4800 = vmatprep.subr.mxu0 0.0
  %4801 = vmatpush1.msra.mxu0 0.0
  %4802 = vmatprep.subr.mxu0 0.0
  %4803 = vmatpush1.msra.mxu0 0.0
  %4804 = vmatprep.subr.mxu0 0.0
  %4805 = vmatpush1.msra.mxu0 0.0
  %4806 = vmatprep.subr.mxu0 0.0
  %4807 = vmatpush1.msra.mxu0 0.0
  %4808 = vmatprep.subr.mxu0 0.0
  %4809 = vmatpush1.msra.mxu0 0.0
  %4810 = vmatprep.subr.mxu0 0.0
  %4811 = vmatpush1.msra.mxu0 0.0
  %4812 = vmatprep.subr.mxu0 0.0
  %4813 = vmatpush1.msra.mxu0 0.0
  %4814 = vmatprep.subr.mxu0 0.0
  %4815 = vmatpush1.msra.mxu0 0.0
  %4816 = vmatprep.subr.mxu0 0.0
  %4817 = vmatpush1.msra.mxu0 0.0
  %4818 = vmatprep.subr.mxu0 0.0
  %4819 = vmatpush1.msra.mxu0 0.0
  %4820 = vmatprep.subr.mxu0 0.0
  %4821 = vmatpush1.msra.mxu0 0.0
  %4822 = vmatprep.subr.mxu0 0.0
  %4823 = vmatpush1.msra.mxu0 0.0
  %4824 = vmatprep.subr.mxu0 0.0
  %4825 = vmatpush1.msra.mxu0 0.0
  %4826 = vmatprep.subr.mxu0 0.0
  %4827 = vmatpush1.msra.mxu0 0.0
  %4828 = vmatprep.subr.mxu0 0.0
  %4829 = vmatpush1.msra.mxu0 0.0
  %4830 = vmatprep.subr.mxu0 0.0
  %4831 = vmatpush1.msra.mxu0 0.0
  %4832 = vmatprep.subr.mxu0 0.0
  %4833 = vmatpush1.msra.mxu0 0.0
  %4834 = vmatprep.subr.mxu0 0.0
  %4835 = vmatpush1.msra.mxu0 0.0
  %4836 = vmatprep.subr.mxu0 0.0
  %4837 = vmatpush1.msra.mxu0 0.0
  %4838 = vmatprep.subr.mxu0 0.0
  %4839 = vmatpush1.msra.mxu0 0.0
  %4840 = vmatprep.subr.mxu0 0.0
  %4841 = vmatpush1.msra.mxu0 0.0
  %4842 = vmatprep.subr.mxu0 0.0
  %4843 = vmatpush1.msra.mxu0 0.0
  %4844 = vmatprep.subr.mxu0 0.0
  %4845 = vmatpush1.msra.mxu0 0.0
  %4846 = vmatprep.subr.mxu0 0.0
  %4847 = vmatpush1.msra.mxu0 0.0
  %4848 = vmatprep.subr.mxu0 0.0
  %4849 = vmatpush1.msra.mxu0 0.0
  %4850 = vmatprep.subr.mxu0 0.0
  %4851 = vmatpush1.msra.mxu0 0.0
  %4852 = vmatprep.mubr.f32.mxu0 0.0
  %4853 = vmatmul.mubr.f32.gmra.mrb[0].mxu0 %v4765
  %v4854 = vpop.f32.mrb[0].mxu0
  %v4855 = vadd.f32 %v4762, %v4854
  %v4856 = vpop.f32.mrb[0].mxu0
  %4857 = vmatprep.mubr.f32.mxu0 0.0
  %4858 = vmatmul.mubr.f32.gmra.mrb[0].mxu0 %v4768
  %v4859 = vpop.f32.mrb[0].mxu0
  %v4860 = vadd.f32 %v4762, %v4859
  %v4861 = vpop.f32.mrb[0].mxu0
  %4862 = vmatprep.mubr.f32.mxu0 0.0
  %4863 = vmatmul.mubr.f32.gmra.mrb[0].mxu0 %v4771
  %v4864 = vpop.f32.mrb[0].mxu0
  %v4865 = vadd.f32 %v4762, %v4864
  %v4866 = vpop.f32.mrb[0].mxu0
  %4867 = vmatprep.mubr.f32.mxu0 0.0
  %4868 = vmatmul.mubr.f32.gmra.mrb[0].mxu0 %v4774
  %v4869 = vpop.f32.mrb[0].mxu0
  %v4870 = vadd.f32 %v4762, %v4869
  %v4871 = vpop.f32.mrb[0].mxu0
  %4872 = vmatprep.mubr.f32.mxu0 0.0
  %4873 = vmatmul.mubr.f32.gmra.mrb[0].mxu0 %v4777
  %v4874 = vpop.f32.mrb[0].mxu0
  %v4875 = vadd.f32 %v4762, %v4874
  %v4876 = vpop.f32.mrb[0].mxu0
  %4877 = vmatprep.mubr.f32.mxu0 0.0
  %4878 = vmatmul.mubr.f32.gmra.mrb[0].mxu0 %v4780
  %v4879 = vpop.f32.mrb[0].mxu0
  %v4880 = vadd.f32 %v4762, %v4879
  %v4881 = vpop.f32.mrb[0].mxu0
  %4882 = vmatprep.mubr.f32.mxu0 0.0
  %4883 = vmatmul.mubr.f32.gmra.mrb[0].mxu0 %v4783
  %v4884 = vpop.f32.mrb[0].mxu0
  %v4885 = vadd.f32 %v4762, %v4884
  %v4886 = vpop.f32.mrb[0].mxu0
  %4887 = vmatprep.mubr.f32.mxu0 0.0
  %4888 = vmatmul.mubr.f32.gmra.mrb[0].mxu0 %v4786
  %v4889 = vpop.f32.mrb[0].mxu0
  %v4890 = vadd.f32 %v4762, %v4889
  %v4891 = vpop.f32.mrb[0].mxu0
  %4892 = vdwg.mxu0
  %v4893 = vmax.f32 %v4855, 0.0
  %v4894 = vmax.f32 %v4860, 0.0
  %v4895 = vmax.f32 %v4865, 0.0
  %v4896 = vmax.f32 %v4870, 0.0
  %v4897 = vmax.f32 %v4875, 0.0
  %v4898 = vmax.f32 %v4880, 0.0
  %v4899 = vmax.f32 %v4885, 0.0
  %v4900 = vmax.f32 %v4890, 0.0
  %v4901 = vld [vmem:[%s95] sm:$0xff]
  %v4902 = vld [vmem:[%s95 + $0x8] sm:$0xff]
  %v4903 = vld [vmem:[%s95 + $0x10] sm:$0xff]
  %v4904 = vld [vmem:[%s97] sm:$0x1]
  %v4906 = vlaneseq
  %v4907 = vshrl.u32 %v4906, 7
  %v4908 = vsub.s32 0, %v4907
  %v4909 = vrot.slane %v4904, %v4908
  %v4912 = vsel %vm4217, %v4893, 0
  %v4915 = vsel %vm4217, %v4894, 0
  %v4918 = vsel %vm4217, %v4895, 0
  %v4921 = vsel %vm4217, %v4896, 0
  %v4924 = vsel %vm4217, %v4897, 0
  %v4927 = vsel %vm4217, %v4898, 0
  %v4930 = vsel %vm4217, %v4899, 0
  %v4933 = vsel %vm4217, %v4900, 0
  %4935 = vmatprep.subr.mxu0 0.0
  %4936 = vmatpush1.msra.mxu0 %v4901
  %4937 = vmatprep.subr.mxu0 0.0
  %4938 = vmatpush1.msra.mxu0 %v4902
  %4939 = vmatprep.subr.mxu0 0.0
  %4940 = vmatpush1.msra.mxu0 %v4903
  %4941 = vmatprep.subr.mxu0 0.0
  %4942 = vmatpush1.msra.mxu0 0.0
  %4943 = vmatprep.subr.mxu0 0.0
  %4944 = vmatpush1.msra.mxu0 0.0
  %4945 = vmatprep.subr.mxu0 0.0
  %4946 = vmatpush1.msra.mxu0 0.0
  %4947 = vmatprep.subr.mxu0 0.0
  %4948 = vmatpush1.msra.mxu0 0.0
  %4949 = vmatprep.subr.mxu0 0.0
  %4950 = vmatpush1.msra.mxu0 0.0
  %4951 = vmatprep.subr.mxu0 0.0
  %4952 = vmatpush1.msra.mxu0 0.0
  %4953 = vmatprep.subr.mxu0 0.0
  %4954 = vmatpush1.msra.mxu0 0.0
  %4955 = vmatprep.subr.mxu0 0.0
  %4956 = vmatpush1.msra.mxu0 0.0
  %4957 = vmatprep.subr.mxu0 0.0
  %4958 = vmatpush1.msra.mxu0 0.0
  %4959 = vmatprep.subr.mxu0 0.0
  %4960 = vmatpush1.msra.mxu0 0.0
  %4961 = vmatprep.subr.mxu0 0.0
  %4962 = vmatpush1.msra.mxu0 0.0
  %4963 = vmatprep.subr.mxu0 0.0
  %4964 = vmatpush1.msra.mxu0 0.0
  %4965 = vmatprep.subr.mxu0 0.0
  %4966 = vmatpush1.msra.mxu0 0.0
  %4967 = vmatprep.subr.mxu0 0.0
  %4968 = vmatpush1.msra.mxu0 0.0
  %4969 = vmatprep.subr.mxu0 0.0
  %4970 = vmatpush1.msra.mxu0 0.0
  %4971 = vmatprep.subr.mxu0 0.0
  %4972 = vmatpush1.msra.mxu0 0.0
  %4973 = vmatprep.subr.mxu0 0.0
  %4974 = vmatpush1.msra.mxu0 0.0
  %4975 = vmatprep.subr.mxu0 0.0
  %4976 = vmatpush1.msra.mxu0 0.0
  %4977 = vmatprep.subr.mxu0 0.0
  %4978 = vmatpush1.msra.mxu0 0.0
  %4979 = vmatprep.subr.mxu0 0.0
  %4980 = vmatpush1.msra.mxu0 0.0
  %4981 = vmatprep.subr.mxu0 0.0
  %4982 = vmatpush1.msra.mxu0 0.0
  %4983 = vmatprep.subr.mxu0 0.0
  %4984 = vmatpush1.msra.mxu0 0.0
  %4985 = vmatprep.subr.mxu0 0.0
  %4986 = vmatpush1.msra.mxu0 0.0
  %4987 = vmatprep.subr.mxu0 0.0
  %4988 = vmatpush1.msra.mxu0 0.0
  %4989 = vmatprep.subr.mxu0 0.0
  %4990 = vmatpush1.msra.mxu0 0.0
  %4991 = vmatprep.subr.mxu0 0.0
  %4992 = vmatpush1.msra.mxu0 0.0
  %4993 = vmatprep.subr.mxu0 0.0
  %4994 = vmatpush1.msra.mxu0 0.0
  %4995 = vmatprep.subr.mxu0 0.0
  %4996 = vmatpush1.msra.mxu0 0.0
  %4997 = vmatprep.subr.mxu0 0.0
  %4998 = vmatpush1.msra.mxu0 0.0
  %4999 = vmatprep.mubr.f32.mxu0 0.0
  %5000 = vmatmul.mubr.f32.gmra.mrb[0].mxu0 %v4912
  %v5001 = vpop.f32.mrb[0].mxu0
  %v5002 = vadd.f32 %v4909, %v5001
  %v5003 = vpop.f32.mrb[0].mxu0
  %5004 = vmatprep.mubr.f32.mxu0 0.0
  %5005 = vmatmul.mubr.f32.gmra.mrb[0].mxu0 %v4915
  %v5006 = vpop.f32.mrb[0].mxu0
  %v5007 = vadd.f32 %v4909, %v5006
  %v5008 = vpop.f32.mrb[0].mxu0
  %5009 = vmatprep.mubr.f32.mxu0 0.0
  %5010 = vmatmul.mubr.f32.gmra.mrb[0].mxu0 %v4918
  %v5011 = vpop.f32.mrb[0].mxu0
  %v5012 = vadd.f32 %v4909, %v5011
  %v5013 = vpop.f32.mrb[0].mxu0
  %5014 = vmatprep.mubr.f32.mxu0 0.0
  %5015 = vmatmul.mubr.f32.gmra.mrb[0].mxu0 %v4921
  %v5016 = vpop.f32.mrb[0].mxu0
  %v5017 = vadd.f32 %v4909, %v5016
  %v5018 = vpop.f32.mrb[0].mxu0
  %5019 = vmatprep.mubr.f32.mxu0 0.0
  %5020 = vmatmul.mubr.f32.gmra.mrb[0].mxu0 %v4924
  %v5021 = vpop.f32.mrb[0].mxu0
  %v5022 = vadd.f32 %v4909, %v5021
  %v5023 = vpop.f32.mrb[0].mxu0
  %5024 = vmatprep.mubr.f32.mxu0 0.0
  %5025 = vmatmul.mubr.f32.gmra.mrb[0].mxu0 %v4927
  %v5026 = vpop.f32.mrb[0].mxu0
  %v5027 = vadd.f32 %v4909, %v5026
  %v5028 = vpop.f32.mrb[0].mxu0
  %5029 = vmatprep.mubr.f32.mxu0 0.0
  %5030 = vmatmul.mubr.f32.gmra.mrb[0].mxu0 %v4930
  %v5031 = vpop.f32.mrb[0].mxu0
  %v5032 = vadd.f32 %v4909, %v5031
  %v5033 = vpop.f32.mrb[0].mxu0
  %5034 = vmatprep.mubr.f32.mxu0 0.0
  %5035 = vmatmul.mubr.f32.gmra.mrb[0].mxu0 %v4933
  %v5036 = vpop.f32.mrb[0].mxu0
  %v5037 = vadd.f32 %v4909, %v5036
  %v5038 = vpop.f32.mrb[0].mxu0
  %5039 = vdwg.mxu0
  %v5040 = vadd.f32 %v5002, %v4746
  %v5041 = vadd.f32 %v5007, %v4747
  %v5042 = vadd.f32 %v5012, %v4748
  %v5043 = vadd.f32 %v5017, %v4749
  %v5044 = vadd.f32 %v5022, %v4750
  %v5045 = vadd.f32 %v5027, %v4751
  %v5046 = vadd.f32 %v5032, %v4752
  %v5047 = vadd.f32 %v5037, %v4753
  %v5048 = vmax.f32 %v5040, 0.0
  %v5049 = vmax.f32 %v5041, 0.0
  %v5050 = vmax.f32 %v5042, 0.0
  %v5051 = vmax.f32 %v5043, 0.0
  %v5052 = vmax.f32 %v5044, 0.0
  %v5053 = vmax.f32 %v5045, 0.0
  %v5054 = vmax.f32 %v5046, 0.0
  %v5055 = vmax.f32 %v5047, 0.0
  %v5056 = vld [vmem:[%s99] sm:$0xff]
  %v5057 = vld [vmem:[%s99 + $0x8] sm:$0xff]
  %v5058 = vld [vmem:[%s99 + $0x10] sm:$0xff]
  %v5059 = vld [vmem:[%s101] sm:$0x1]
  %v5061 = vlaneseq
  %v5062 = vshrl.u32 %v5061, 7
  %v5063 = vsub.s32 0, %v5062
  %v5064 = vrot.slane %v5059, %v5063
  %v5067 = vsel %vm4217, %v5048, 0
  %v5070 = vsel %vm4217, %v5049, 0
  %v5073 = vsel %vm4217, %v5050, 0
  %v5076 = vsel %vm4217, %v5051, 0
  %v5079 = vsel %vm4217, %v5052, 0
  %v5082 = vsel %vm4217, %v5053, 0
  %v5085 = vsel %vm4217, %v5054, 0
  %v5088 = vsel %vm4217, %v5055, 0
  %5090 = vmatprep.subr.mxu0 0.0
  %5091 = vmatpush1.msra.mxu0 %v5056
  %5092 = vmatprep.subr.mxu0 0.0
  %5093 = vmatpush1.msra.mxu0 %v5057
  %5094 = vmatprep.subr.mxu0 0.0
  %5095 = vmatpush1.msra.mxu0 %v5058
  %5096 = vmatprep.subr.mxu0 0.0
  %5097 = vmatpush1.msra.mxu0 0.0
  %5098 = vmatprep.subr.mxu0 0.0
  %5099 = vmatpush1.msra.mxu0 0.0
  %5100 = vmatprep.subr.mxu0 0.0
  %5101 = vmatpush1.msra.mxu0 0.0
  %5102 = vmatprep.subr.mxu0 0.0
  %5103 = vmatpush1.msra.mxu0 0.0
  %5104 = vmatprep.subr.mxu0 0.0
  %5105 = vmatpush1.msra.mxu0 0.0
  %5106 = vmatprep.subr.mxu0 0.0
  %5107 = vmatpush1.msra.mxu0 0.0
  %5108 = vmatprep.subr.mxu0 0.0
  %5109 = vmatpush1.msra.mxu0 0.0
  %5110 = vmatprep.subr.mxu0 0.0
  %5111 = vmatpush1.msra.mxu0 0.0
  %5112 = vmatprep.subr.mxu0 0.0
  %5113 = vmatpush1.msra.mxu0 0.0
  %5114 = vmatprep.subr.mxu0 0.0
  %5115 = vmatpush1.msra.mxu0 0.0
  %5116 = vmatprep.subr.mxu0 0.0
  %5117 = vmatpush1.msra.mxu0 0.0
  %5118 = vmatprep.subr.mxu0 0.0
  %5119 = vmatpush1.msra.mxu0 0.0
  %5120 = vmatprep.subr.mxu0 0.0
  %5121 = vmatpush1.msra.mxu0 0.0
  %5122 = vmatprep.subr.mxu0 0.0
  %5123 = vmatpush1.msra.mxu0 0.0
  %5124 = vmatprep.subr.mxu0 0.0
  %5125 = vmatpush1.msra.mxu0 0.0
  %5126 = vmatprep.subr.mxu0 0.0
  %5127 = vmatpush1.msra.mxu0 0.0
  %5128 = vmatprep.subr.mxu0 0.0
  %5129 = vmatpush1.msra.mxu0 0.0
  %5130 = vmatprep.subr.mxu0 0.0
  %5131 = vmatpush1.msra.mxu0 0.0
  %5132 = vmatprep.subr.mxu0 0.0
  %5133 = vmatpush1.msra.mxu0 0.0
  %5134 = vmatprep.subr.mxu0 0.0
  %5135 = vmatpush1.msra.mxu0 0.0
  %5136 = vmatprep.subr.mxu0 0.0
  %5137 = vmatpush1.msra.mxu0 0.0
  %5138 = vmatprep.subr.mxu0 0.0
  %5139 = vmatpush1.msra.mxu0 0.0
  %5140 = vmatprep.subr.mxu0 0.0
  %5141 = vmatpush1.msra.mxu0 0.0
  %5142 = vmatprep.subr.mxu0 0.0
  %5143 = vmatpush1.msra.mxu0 0.0
  %5144 = vmatprep.subr.mxu0 0.0
  %5145 = vmatpush1.msra.mxu0 0.0
  %5146 = vmatprep.subr.mxu0 0.0
  %5147 = vmatpush1.msra.mxu0 0.0
  %5148 = vmatprep.subr.mxu0 0.0
  %5149 = vmatpush1.msra.mxu0 0.0
  %5150 = vmatprep.subr.mxu0 0.0
  %5151 = vmatpush1.msra.mxu0 0.0
  %5152 = vmatprep.subr.mxu0 0.0
  %5153 = vmatpush1.msra.mxu0 0.0
  %5154 = vmatprep.mubr.f32.mxu0 0.0
  %5155 = vmatmul.mubr.f32.gmra.mrb[0].mxu0 %v5067
  %v5156 = vpop.f32.mrb[0].mxu0
  %v5157 = vadd.f32 %v5064, %v5156
  %v5158 = vpop.f32.mrb[0].mxu0
  %5159 = vmatprep.mubr.f32.mxu0 0.0
  %5160 = vmatmul.mubr.f32.gmra.mrb[0].mxu0 %v5070
  %v5161 = vpop.f32.mrb[0].mxu0
  %v5162 = vadd.f32 %v5064, %v5161
  %v5163 = vpop.f32.mrb[0].mxu0
  %5164 = vmatprep.mubr.f32.mxu0 0.0
  %5165 = vmatmul.mubr.f32.gmra.mrb[0].mxu0 %v5073
  %v5166 = vpop.f32.mrb[0].mxu0
  %v5167 = vadd.f32 %v5064, %v5166
  %v5168 = vpop.f32.mrb[0].mxu0
  %5169 = vmatprep.mubr.f32.mxu0 0.0
  %5170 = vmatmul.mubr.f32.gmra.mrb[0].mxu0 %v5076
  %v5171 = vpop.f32.mrb[0].mxu0
  %v5172 = vadd.f32 %v5064, %v5171
  %v5173 = vpop.f32.mrb[0].mxu0
  %5174 = vmatprep.mubr.f32.mxu0 0.0
  %5175 = vmatmul.mubr.f32.gmra.mrb[0].mxu0 %v5079
  %v5176 = vpop.f32.mrb[0].mxu0
  %v5177 = vadd.f32 %v5064, %v5176
  %v5178 = vpop.f32.mrb[0].mxu0
  %5179 = vmatprep.mubr.f32.mxu0 0.0
  %5180 = vmatmul.mubr.f32.gmra.mrb[0].mxu0 %v5082
  %v5181 = vpop.f32.mrb[0].mxu0
  %v5182 = vadd.f32 %v5064, %v5181
  %v5183 = vpop.f32.mrb[0].mxu0
  %5184 = vmatprep.mubr.f32.mxu0 0.0
  %5185 = vmatmul.mubr.f32.gmra.mrb[0].mxu0 %v5085
  %v5186 = vpop.f32.mrb[0].mxu0
  %v5187 = vadd.f32 %v5064, %v5186
  %v5188 = vpop.f32.mrb[0].mxu0
  %5189 = vmatprep.mubr.f32.mxu0 0.0
  %5190 = vmatmul.mubr.f32.gmra.mrb[0].mxu0 %v5088
  %v5191 = vpop.f32.mrb[0].mxu0
  %v5192 = vadd.f32 %v5064, %v5191
  %v5193 = vpop.f32.mrb[0].mxu0
  %5194 = vdwg.mxu0
  %v5195 = vmax.f32 %v5157, 0.0
  %v5196 = vmax.f32 %v5162, 0.0
  %v5197 = vmax.f32 %v5167, 0.0
  %v5198 = vmax.f32 %v5172, 0.0
  %v5199 = vmax.f32 %v5177, 0.0
  %v5200 = vmax.f32 %v5182, 0.0
  %v5201 = vmax.f32 %v5187, 0.0
  %v5202 = vmax.f32 %v5192, 0.0
  %v5203 = vld [vmem:[%s103] sm:$0xff]
  %v5204 = vld [vmem:[%s103 + $0x8] sm:$0xff]
  %v5205 = vld [vmem:[%s103 + $0x10] sm:$0xff]
  %v5206 = vld [vmem:[%s105] sm:$0xff]
  %v5207 = vld [vmem:[%s107] sm:$0x1]
  %5208 = vmatprep.subr.mxu0 0.0
  %5209 = vmatpush1.msra.mxu0 %v5206
  %5210 = vmatprep.subr.mxu0 0.0
  %5211 = vmatpush1.msra.mxu0 0.0
  %5212 = vmatprep.subr.mxu0 0.0
  %5213 = vmatpush1.msra.mxu0 0.0
  %5214 = vmatprep.subr.mxu0 0.0
  %5215 = vmatpush1.msra.mxu0 0.0
  %5216 = vmatprep.subr.mxu0 0.0
  %5217 = vmatpush1.msra.mxu0 0.0
  %5218 = vmatprep.subr.mxu0 0.0
  %5219 = vmatpush1.msra.mxu0 0.0
  %5220 = vmatprep.subr.mxu0 0.0
  %5221 = vmatpush1.msra.mxu0 0.0
  %5222 = vmatprep.subr.mxu0 0.0
  %5223 = vmatpush1.msra.mxu0 0.0
  %5224 = vmatprep.subr.mxu0 0.0
  %5225 = vmatpush1.msra.mxu0 0.0
  %5226 = vmatprep.subr.mxu0 0.0
  %5227 = vmatpush1.msra.mxu0 0.0
  %5228 = vmatprep.subr.mxu0 0.0
  %5229 = vmatpush1.msra.mxu0 0.0
  %5230 = vmatprep.subr.mxu0 0.0
  %5231 = vmatpush1.msra.mxu0 0.0
  %5232 = vmatprep.subr.mxu0 0.0
  %5233 = vmatpush1.msra.mxu0 0.0
  %5234 = vmatprep.subr.mxu0 0.0
  %5235 = vmatpush1.msra.mxu0 0.0
  %5236 = vmatprep.subr.mxu0 0.0
  %5237 = vmatpush1.msra.mxu0 0.0
  %5238 = vmatprep.subr.mxu0 0.0
  %5239 = vmatpush1.msra.mxu0 0.0
  %5240 = vmatprep.subr.mxu0 0.0
  %5241 = vmatpush1.msra.mxu0 0.0
  %5242 = vmatprep.subr.mxu0 0.0
  %5243 = vmatpush1.msra.mxu0 0.0
  %5244 = vmatprep.subr.mxu0 0.0
  %5245 = vmatpush1.msra.mxu0 0.0
  %5246 = vmatprep.subr.mxu0 0.0
  %5247 = vmatpush1.msra.mxu0 0.0
  %5248 = vmatprep.subr.mxu0 0.0
  %5249 = vmatpush1.msra.mxu0 0.0
  %5250 = vmatprep.subr.mxu0 0.0
  %5251 = vmatpush1.msra.mxu0 0.0
  %5252 = vmatprep.subr.mxu0 0.0
  %5253 = vmatpush1.msra.mxu0 0.0
  %5254 = vmatprep.subr.mxu0 0.0
  %5255 = vmatpush1.msra.mxu0 0.0
  %5256 = vmatprep.subr.mxu0 0.0
  %5257 = vmatpush1.msra.mxu0 0.0
  %5258 = vmatprep.subr.mxu0 0.0
  %5259 = vmatpush1.msra.mxu0 0.0
  %5260 = vmatprep.subr.mxu0 0.0
  %5261 = vmatpush1.msra.mxu0 0.0
  %5262 = vmatprep.subr.mxu0 0.0
  %5263 = vmatpush1.msra.mxu0 0.0
  %5264 = vmatprep.subr.mxu0 0.0
  %5265 = vmatpush1.msra.mxu0 0.0
  %5266 = vmatprep.subr.mxu0 0.0
  %5267 = vmatpush1.msra.mxu0 0.0
  %5268 = vmatprep.subr.mxu0 0.0
  %5269 = vmatpush1.msra.mxu0 0.0
  %5270 = vmatprep.subr.mxu0 0.0
  %5271 = vmatpush1.msra.mxu0 0.0
  %5272 = vmatprep.mubr.f32.mxu0 0.0
  %5273 = vmatmul.mubr.f32.gmra.mrb[0].mxu0 %v538
  %v5274 = vpop.f32.mrb[0].mxu0
  %v5275 = vadd.f32 0.0, %v5274
  %v5276 = vpop.f32.mrb[0].mxu0
  %5277 = vmatprep.mubr.f32.mxu0 0.0
  %5278 = vmatmul.mubr.f32.gmra.mrb[0].mxu0 %v541
  %v5279 = vpop.f32.mrb[0].mxu0
  %v5280 = vadd.f32 0.0, %v5279
  %v5281 = vpop.f32.mrb[0].mxu0
  %5282 = vmatprep.mubr.f32.mxu0 0.0
  %5283 = vmatmul.mubr.f32.gmra.mrb[0].mxu0 %v544
  %v5284 = vpop.f32.mrb[0].mxu0
  %v5285 = vadd.f32 0.0, %v5284
  %v5286 = vpop.f32.mrb[0].mxu0
  %5287 = vmatprep.mubr.f32.mxu0 0.0
  %5288 = vmatmul.mubr.f32.gmra.mrb[0].mxu0 %v547
  %v5289 = vpop.f32.mrb[0].mxu0
  %v5290 = vadd.f32 0.0, %v5289
  %v5291 = vpop.f32.mrb[0].mxu0
  %5292 = vmatprep.mubr.f32.mxu0 0.0
  %5293 = vmatmul.mubr.f32.gmra.mrb[0].mxu0 %v550
  %v5294 = vpop.f32.mrb[0].mxu0
  %v5295 = vadd.f32 0.0, %v5294
  %v5296 = vpop.f32.mrb[0].mxu0
  %5297 = vmatprep.mubr.f32.mxu0 0.0
  %5298 = vmatmul.mubr.f32.gmra.mrb[0].mxu0 %v553
  %v5299 = vpop.f32.mrb[0].mxu0
  %v5300 = vadd.f32 0.0, %v5299
  %v5301 = vpop.f32.mrb[0].mxu0
  %5302 = vmatprep.mubr.f32.mxu0 0.0
  %5303 = vmatmul.mubr.f32.gmra.mrb[0].mxu0 %v556
  %v5304 = vpop.f32.mrb[0].mxu0
  %v5305 = vadd.f32 0.0, %v5304
  %v5306 = vpop.f32.mrb[0].mxu0
  %5307 = vmatprep.mubr.f32.mxu0 0.0
  %5308 = vmatmul.mubr.f32.gmra.mrb[0].mxu0 %v559
  %v5309 = vpop.f32.mrb[0].mxu0
  %v5310 = vadd.f32 0.0, %v5309
  %v5311 = vpop.f32.mrb[0].mxu0
  %5312 = vdwg.mxu0
  %v5314 = vsel %vm4217, %v5195, 0
  %v5317 = vsel %vm4217, %v5196, 0
  %v5320 = vsel %vm4217, %v5197, 0
  %v5323 = vsel %vm4217, %v5198, 0
  %v5326 = vsel %vm4217, %v5199, 0
  %v5329 = vsel %vm4217, %v5200, 0
  %v5332 = vsel %vm4217, %v5201, 0
  %v5335 = vsel %vm4217, %v5202, 0
  %5337 = vmatprep.subr.mxu0 0.0
  %5338 = vmatpush1.msra.mxu0 %v5203
  %5339 = vmatprep.subr.mxu0 0.0
  %5340 = vmatpush1.msra.mxu0 %v5204
  %5341 = vmatprep.subr.mxu0 0.0
  %5342 = vmatpush1.msra.mxu0 %v5205
  %5343 = vmatprep.subr.mxu0 0.0
  %5344 = vmatpush1.msra.mxu0 0.0
  %5345 = vmatprep.subr.mxu0 0.0
  %5346 = vmatpush1.msra.mxu0 0.0
  %5347 = vmatprep.subr.mxu0 0.0
  %5348 = vmatpush1.msra.mxu0 0.0
  %5349 = vmatprep.subr.mxu0 0.0
  %5350 = vmatpush1.msra.mxu0 0.0
  %5351 = vmatprep.subr.mxu0 0.0
  %5352 = vmatpush1.msra.mxu0 0.0
  %5353 = vmatprep.subr.mxu0 0.0
  %5354 = vmatpush1.msra.mxu0 0.0
  %5355 = vmatprep.subr.mxu0 0.0
  %5356 = vmatpush1.msra.mxu0 0.0
  %5357 = vmatprep.subr.mxu0 0.0
  %5358 = vmatpush1.msra.mxu0 0.0
  %5359 = vmatprep.subr.mxu0 0.0
  %5360 = vmatpush1.msra.mxu0 0.0
  %5361 = vmatprep.subr.mxu0 0.0
  %5362 = vmatpush1.msra.mxu0 0.0
  %5363 = vmatprep.subr.mxu0 0.0
  %5364 = vmatpush1.msra.mxu0 0.0
  %5365 = vmatprep.subr.mxu0 0.0
  %5366 = vmatpush1.msra.mxu0 0.0
  %5367 = vmatprep.subr.mxu0 0.0
  %5368 = vmatpush1.msra.mxu0 0.0
  %5369 = vmatprep.subr.mxu0 0.0
  %5370 = vmatpush1.msra.mxu0 0.0
  %5371 = vmatprep.subr.mxu0 0.0
  %5372 = vmatpush1.msra.mxu0 0.0
  %5373 = vmatprep.subr.mxu0 0.0
  %5374 = vmatpush1.msra.mxu0 0.0
  %5375 = vmatprep.subr.mxu0 0.0
  %5376 = vmatpush1.msra.mxu0 0.0
  %5377 = vmatprep.subr.mxu0 0.0
  %5378 = vmatpush1.msra.mxu0 0.0
  %5379 = vmatprep.subr.mxu0 0.0
  %5380 = vmatpush1.msra.mxu0 0.0
  %5381 = vmatprep.subr.mxu0 0.0
  %5382 = vmatpush1.msra.mxu0 0.0
  %5383 = vmatprep.subr.mxu0 0.0
  %5384 = vmatpush1.msra.mxu0 0.0
  %5385 = vmatprep.subr.mxu0 0.0
  %5386 = vmatpush1.msra.mxu0 0.0
  %5387 = vmatprep.subr.mxu0 0.0
  %5388 = vmatpush1.msra.mxu0 0.0
  %5389 = vmatprep.subr.mxu0 0.0
  %5390 = vmatpush1.msra.mxu0 0.0
  %5391 = vmatprep.subr.mxu0 0.0
  %5392 = vmatpush1.msra.mxu0 0.0
  %5393 = vmatprep.subr.mxu0 0.0
  %5394 = vmatpush1.msra.mxu0 0.0
  %5395 = vmatprep.subr.mxu0 0.0
  %5396 = vmatpush1.msra.mxu0 0.0
  %5397 = vmatprep.subr.mxu0 0.0
  %5398 = vmatpush1.msra.mxu0 0.0
  %5399 = vmatprep.subr.mxu0 0.0
  %5400 = vmatpush1.msra.mxu0 0.0
  %5401 = vmatprep.mubr.f32.mxu0 0.0
  %5402 = vmatmul.mubr.f32.gmra.mrb[0].mxu0 %v5314
  %v5403 = vpop.f32.mrb[0].mxu0
  %v5404 = vadd.f32 %v5275, %v5403
  %v5405 = vpop.f32.mrb[0].mxu0
  %5406 = vmatprep.mubr.f32.mxu0 0.0
  %5407 = vmatmul.mubr.f32.gmra.mrb[0].mxu0 %v5317
  %v5408 = vpop.f32.mrb[0].mxu0
  %v5409 = vadd.f32 %v5280, %v5408
  %v5410 = vpop.f32.mrb[0].mxu0
  %5411 = vmatprep.mubr.f32.mxu0 0.0
  %5412 = vmatmul.mubr.f32.gmra.mrb[0].mxu0 %v5320
  %v5413 = vpop.f32.mrb[0].mxu0
  %v5414 = vadd.f32 %v5285, %v5413
  %v5415 = vpop.f32.mrb[0].mxu0
  %5416 = vmatprep.mubr.f32.mxu0 0.0
  %5417 = vmatmul.mubr.f32.gmra.mrb[0].mxu0 %v5323
  %v5418 = vpop.f32.mrb[0].mxu0
  %v5419 = vadd.f32 %v5290, %v5418
  %v5420 = vpop.f32.mrb[0].mxu0
  %5421 = vmatprep.mubr.f32.mxu0 0.0
  %5422 = vmatmul.mubr.f32.gmra.mrb[0].mxu0 %v5326
  %v5423 = vpop.f32.mrb[0].mxu0
  %v5424 = vadd.f32 %v5295, %v5423
  %v5425 = vpop.f32.mrb[0].mxu0
  %5426 = vmatprep.mubr.f32.mxu0 0.0
  %5427 = vmatmul.mubr.f32.gmra.mrb[0].mxu0 %v5329
  %v5428 = vpop.f32.mrb[0].mxu0
  %v5429 = vadd.f32 %v5300, %v5428
  %v5430 = vpop.f32.mrb[0].mxu0
  %5431 = vmatprep.mubr.f32.mxu0 0.0
  %5432 = vmatmul.mubr.f32.gmra.mrb[0].mxu0 %v5332
  %v5433 = vpop.f32.mrb[0].mxu0
  %v5434 = vadd.f32 %v5305, %v5433
  %v5435 = vpop.f32.mrb[0].mxu0
  %5436 = vmatprep.mubr.f32.mxu0 0.0
  %5437 = vmatmul.mubr.f32.gmra.mrb[0].mxu0 %v5335
  %v5438 = vpop.f32.mrb[0].mxu0
  %v5439 = vadd.f32 %v5310, %v5438
  %v5440 = vpop.f32.mrb[0].mxu0
  %5441 = vdwg.mxu0
  %v5443 = vlaneseq
  %v5444 = vshrl.u32 %v5443, 7
  %v5445 = vsub.s32 0, %v5444
  %v5446 = vrot.slane %v5207, %v5445
  %v5448 = vadd.f32 %v5404, %v5446
  %v5449 = vadd.f32 %v5409, %v5446
  %v5450 = vadd.f32 %v5414, %v5446
  %v5451 = vadd.f32 %v5419, %v5446
  %v5452 = vadd.f32 %v5424, %v5446
  %v5453 = vadd.f32 %v5429, %v5446
  %v5454 = vadd.f32 %v5434, %v5446
  %v5455 = vadd.f32 %v5439, %v5446
  %v5456 = vmax.f32 %v5448, 0.0
  %v5457 = vmax.f32 %v5449, 0.0
  %v5458 = vmax.f32 %v5450, 0.0
  %v5459 = vmax.f32 %v5451, 0.0
  %v5460 = vmax.f32 %v5452, 0.0
  %v5461 = vmax.f32 %v5453, 0.0
  %v5462 = vmax.f32 %v5454, 0.0
  %v5463 = vmax.f32 %v5455, 0.0
  %v5464 = vld [vmem:[%s109] sm:$0xff]
  %v5465 = vld [vmem:[%s109 + $0x8] sm:$0xff]
  %v5466 = vld [vmem:[%s109 + $0x10] sm:$0xff]
  %v5467 = vld [vmem:[%s111] sm:$0x1]
  %v5469 = vlaneseq
  %v5470 = vshrl.u32 %v5469, 7
  %v5471 = vsub.s32 0, %v5470
  %v5472 = vrot.slane %v5467, %v5471
  %v5475 = vsel %vm4217, %v5456, 0
  %v5478 = vsel %vm4217, %v5457, 0
  %v5481 = vsel %vm4217, %v5458, 0
  %v5484 = vsel %vm4217, %v5459, 0
  %v5487 = vsel %vm4217, %v5460, 0
  %v5490 = vsel %vm4217, %v5461, 0
  %v5493 = vsel %vm4217, %v5462, 0
  %v5496 = vsel %vm4217, %v5463, 0
  %5498 = vmatprep.subr.mxu0 0.0
  %5499 = vmatpush1.msra.mxu0 %v5464
  %5500 = vmatprep.subr.mxu0 0.0
  %5501 = vmatpush1.msra.mxu0 %v5465
  %5502 = vmatprep.subr.mxu0 0.0
  %5503 = vmatpush1.msra.mxu0 %v5466
  %5504 = vmatprep.subr.mxu0 0.0
  %5505 = vmatpush1.msra.mxu0 0.0
  %5506 = vmatprep.subr.mxu0 0.0
  %5507 = vmatpush1.msra.mxu0 0.0
  %5508 = vmatprep.subr.mxu0 0.0
  %5509 = vmatpush1.msra.mxu0 0.0
  %5510 = vmatprep.subr.mxu0 0.0
  %5511 = vmatpush1.msra.mxu0 0.0
  %5512 = vmatprep.subr.mxu0 0.0
  %5513 = vmatpush1.msra.mxu0 0.0
  %5514 = vmatprep.subr.mxu0 0.0
  %5515 = vmatpush1.msra.mxu0 0.0
  %5516 = vmatprep.subr.mxu0 0.0
  %5517 = vmatpush1.msra.mxu0 0.0
  %5518 = vmatprep.subr.mxu0 0.0
  %5519 = vmatpush1.msra.mxu0 0.0
  %5520 = vmatprep.subr.mxu0 0.0
  %5521 = vmatpush1.msra.mxu0 0.0
  %5522 = vmatprep.subr.mxu0 0.0
  %5523 = vmatpush1.msra.mxu0 0.0
  %5524 = vmatprep.subr.mxu0 0.0
  %5525 = vmatpush1.msra.mxu0 0.0
  %5526 = vmatprep.subr.mxu0 0.0
  %5527 = vmatpush1.msra.mxu0 0.0
  %5528 = vmatprep.subr.mxu0 0.0
  %5529 = vmatpush1.msra.mxu0 0.0
  %5530 = vmatprep.subr.mxu0 0.0
  %5531 = vmatpush1.msra.mxu0 0.0
  %5532 = vmatprep.subr.mxu0 0.0
  %5533 = vmatpush1.msra.mxu0 0.0
  %5534 = vmatprep.subr.mxu0 0.0
  %5535 = vmatpush1.msra.mxu0 0.0
  %5536 = vmatprep.subr.mxu0 0.0
  %5537 = vmatpush1.msra.mxu0 0.0
  %5538 = vmatprep.subr.mxu0 0.0
  %5539 = vmatpush1.msra.mxu0 0.0
  %5540 = vmatprep.subr.mxu0 0.0
  %5541 = vmatpush1.msra.mxu0 0.0
  %5542 = vmatprep.subr.mxu0 0.0
  %5543 = vmatpush1.msra.mxu0 0.0
  %5544 = vmatprep.subr.mxu0 0.0
  %5545 = vmatpush1.msra.mxu0 0.0
  %5546 = vmatprep.subr.mxu0 0.0
  %5547 = vmatpush1.msra.mxu0 0.0
  %5548 = vmatprep.subr.mxu0 0.0
  %5549 = vmatpush1.msra.mxu0 0.0
  %5550 = vmatprep.subr.mxu0 0.0
  %5551 = vmatpush1.msra.mxu0 0.0
  %5552 = vmatprep.subr.mxu0 0.0
  %5553 = vmatpush1.msra.mxu0 0.0
  %5554 = vmatprep.subr.mxu0 0.0
  %5555 = vmatpush1.msra.mxu0 0.0
  %5556 = vmatprep.subr.mxu0 0.0
  %5557 = vmatpush1.msra.mxu0 0.0
  %5558 = vmatprep.subr.mxu0 0.0
  %5559 = vmatpush1.msra.mxu0 0.0
  %5560 = vmatprep.subr.mxu0 0.0
  %5561 = vmatpush1.msra.mxu0 0.0
  %5562 = vmatprep.mubr.f32.mxu0 0.0
  %5563 = vmatmul.mubr.f32.gmra.mrb[0].mxu0 %v5475
  %v5564 = vpop.f32.mrb[0].mxu0
  %v5565 = vadd.f32 %v5472, %v5564
  %v5566 = vpop.f32.mrb[0].mxu0
  %5567 = vmatprep.mubr.f32.mxu0 0.0
  %5568 = vmatmul.mubr.f32.gmra.mrb[0].mxu0 %v5478
  %v5569 = vpop.f32.mrb[0].mxu0
  %v5570 = vadd.f32 %v5472, %v5569
  %v5571 = vpop.f32.mrb[0].mxu0
  %5572 = vmatprep.mubr.f32.mxu0 0.0
  %5573 = vmatmul.mubr.f32.gmra.mrb[0].mxu0 %v5481
  %v5574 = vpop.f32.mrb[0].mxu0
  %v5575 = vadd.f32 %v5472, %v5574
  %v5576 = vpop.f32.mrb[0].mxu0
  %5577 = vmatprep.mubr.f32.mxu0 0.0
  %5578 = vmatmul.mubr.f32.gmra.mrb[0].mxu0 %v5484
  %v5579 = vpop.f32.mrb[0].mxu0
  %v5580 = vadd.f32 %v5472, %v5579
  %v5581 = vpop.f32.mrb[0].mxu0
  %5582 = vmatprep.mubr.f32.mxu0 0.0
  %5583 = vmatmul.mubr.f32.gmra.mrb[0].mxu0 %v5487
  %v5584 = vpop.f32.mrb[0].mxu0
  %v5585 = vadd.f32 %v5472, %v5584
  %v5586 = vpop.f32.mrb[0].mxu0
  %5587 = vmatprep.mubr.f32.mxu0 0.0
  %5588 = vmatmul.mubr.f32.gmra.mrb[0].mxu0 %v5490
  %v5589 = vpop.f32.mrb[0].mxu0
  %v5590 = vadd.f32 %v5472, %v5589
  %v5591 = vpop.f32.mrb[0].mxu0
  %5592 = vmatprep.mubr.f32.mxu0 0.0
  %5593 = vmatmul.mubr.f32.gmra.mrb[0].mxu0 %v5493
  %v5594 = vpop.f32.mrb[0].mxu0
  %v5595 = vadd.f32 %v5472, %v5594
  %v5596 = vpop.f32.mrb[0].mxu0
  %5597 = vmatprep.mubr.f32.mxu0 0.0
  %5598 = vmatmul.mubr.f32.gmra.mrb[0].mxu0 %v5496
  %v5599 = vpop.f32.mrb[0].mxu0
  %v5600 = vadd.f32 %v5472, %v5599
  %v5601 = vpop.f32.mrb[0].mxu0
  %5602 = vdwg.mxu0
  %v5603 = vld [vmem:[%s113] sm:$0xff]
  %v5604 = vld [vmem:[%s113 + $0x8] sm:$0xff]
  %v5605 = vld [vmem:[%s113 + $0x10] sm:$0xff]
  %v5606 = vld [vmem:[%s115] sm:$0xff]
  %v5607 = vld [vmem:[%s117] sm:$0x1]
  %5608 = vmatprep.subr.mxu0 0.0
  %5609 = vmatpush1.msra.mxu0 %v5606
  %5610 = vmatprep.subr.mxu0 0.0
  %5611 = vmatpush1.msra.mxu0 0.0
  %5612 = vmatprep.subr.mxu0 0.0
  %5613 = vmatpush1.msra.mxu0 0.0
  %5614 = vmatprep.subr.mxu0 0.0
  %5615 = vmatpush1.msra.mxu0 0.0
  %5616 = vmatprep.subr.mxu0 0.0
  %5617 = vmatpush1.msra.mxu0 0.0
  %5618 = vmatprep.subr.mxu0 0.0
  %5619 = vmatpush1.msra.mxu0 0.0
  %5620 = vmatprep.subr.mxu0 0.0
  %5621 = vmatpush1.msra.mxu0 0.0
  %5622 = vmatprep.subr.mxu0 0.0
  %5623 = vmatpush1.msra.mxu0 0.0
  %5624 = vmatprep.subr.mxu0 0.0
  %5625 = vmatpush1.msra.mxu0 0.0
  %5626 = vmatprep.subr.mxu0 0.0
  %5627 = vmatpush1.msra.mxu0 0.0
  %5628 = vmatprep.subr.mxu0 0.0
  %5629 = vmatpush1.msra.mxu0 0.0
  %5630 = vmatprep.subr.mxu0 0.0
  %5631 = vmatpush1.msra.mxu0 0.0
  %5632 = vmatprep.subr.mxu0 0.0
  %5633 = vmatpush1.msra.mxu0 0.0
  %5634 = vmatprep.subr.mxu0 0.0
  %5635 = vmatpush1.msra.mxu0 0.0
  %5636 = vmatprep.subr.mxu0 0.0
  %5637 = vmatpush1.msra.mxu0 0.0
  %5638 = vmatprep.subr.mxu0 0.0
  %5639 = vmatpush1.msra.mxu0 0.0
  %5640 = vmatprep.subr.mxu0 0.0
  %5641 = vmatpush1.msra.mxu0 0.0
  %5642 = vmatprep.subr.mxu0 0.0
  %5643 = vmatpush1.msra.mxu0 0.0
  %5644 = vmatprep.subr.mxu0 0.0
  %5645 = vmatpush1.msra.mxu0 0.0
  %5646 = vmatprep.subr.mxu0 0.0
  %5647 = vmatpush1.msra.mxu0 0.0
  %5648 = vmatprep.subr.mxu0 0.0
  %5649 = vmatpush1.msra.mxu0 0.0
  %5650 = vmatprep.subr.mxu0 0.0
  %5651 = vmatpush1.msra.mxu0 0.0
  %5652 = vmatprep.subr.mxu0 0.0
  %5653 = vmatpush1.msra.mxu0 0.0
  %5654 = vmatprep.subr.mxu0 0.0
  %5655 = vmatpush1.msra.mxu0 0.0
  %5656 = vmatprep.subr.mxu0 0.0
  %5657 = vmatpush1.msra.mxu0 0.0
  %5658 = vmatprep.subr.mxu0 0.0
  %5659 = vmatpush1.msra.mxu0 0.0
  %5660 = vmatprep.subr.mxu0 0.0
  %5661 = vmatpush1.msra.mxu0 0.0
  %5662 = vmatprep.subr.mxu0 0.0
  %5663 = vmatpush1.msra.mxu0 0.0
  %5664 = vmatprep.subr.mxu0 0.0
  %5665 = vmatpush1.msra.mxu0 0.0
  %5666 = vmatprep.subr.mxu0 0.0
  %5667 = vmatpush1.msra.mxu0 0.0
  %5668 = vmatprep.subr.mxu0 0.0
  %5669 = vmatpush1.msra.mxu0 0.0
  %5670 = vmatprep.subr.mxu0 0.0
  %5671 = vmatpush1.msra.mxu0 0.0
  %5672 = vmatprep.mubr.f32.mxu0 0.0
  %5673 = vmatmul.mubr.f32.gmra.mrb[0].mxu0 %v538
  %v5674 = vpop.f32.mrb[0].mxu0
  %v5675 = vadd.f32 0.0, %v5674
  %v5676 = vpop.f32.mrb[0].mxu0
  %5677 = vmatprep.mubr.f32.mxu0 0.0
  %5678 = vmatmul.mubr.f32.gmra.mrb[0].mxu0 %v541
  %v5679 = vpop.f32.mrb[0].mxu0
  %v5680 = vadd.f32 0.0, %v5679
  %v5681 = vpop.f32.mrb[0].mxu0
  %5682 = vmatprep.mubr.f32.mxu0 0.0
  %5683 = vmatmul.mubr.f32.gmra.mrb[0].mxu0 %v544
  %v5684 = vpop.f32.mrb[0].mxu0
  %v5685 = vadd.f32 0.0, %v5684
  %v5686 = vpop.f32.mrb[0].mxu0
  %5687 = vmatprep.mubr.f32.mxu0 0.0
  %5688 = vmatmul.mubr.f32.gmra.mrb[0].mxu0 %v547
  %v5689 = vpop.f32.mrb[0].mxu0
  %v5690 = vadd.f32 0.0, %v5689
  %v5691 = vpop.f32.mrb[0].mxu0
  %5692 = vmatprep.mubr.f32.mxu0 0.0
  %5693 = vmatmul.mubr.f32.gmra.mrb[0].mxu0 %v550
  %v5694 = vpop.f32.mrb[0].mxu0
  %v5695 = vadd.f32 0.0, %v5694
  %v5696 = vpop.f32.mrb[0].mxu0
  %5697 = vmatprep.mubr.f32.mxu0 0.0
  %5698 = vmatmul.mubr.f32.gmra.mrb[0].mxu0 %v553
  %v5699 = vpop.f32.mrb[0].mxu0
  %v5700 = vadd.f32 0.0, %v5699
  %v5701 = vpop.f32.mrb[0].mxu0
  %5702 = vmatprep.mubr.f32.mxu0 0.0
  %5703 = vmatmul.mubr.f32.gmra.mrb[0].mxu0 %v556
  %v5704 = vpop.f32.mrb[0].mxu0
  %v5705 = vadd.f32 0.0, %v5704
  %v5706 = vpop.f32.mrb[0].mxu0
  %5707 = vmatprep.mubr.f32.mxu0 0.0
  %5708 = vmatmul.mubr.f32.gmra.mrb[0].mxu0 %v559
  %v5709 = vpop.f32.mrb[0].mxu0
  %v5710 = vadd.f32 0.0, %v5709
  %v5711 = vpop.f32.mrb[0].mxu0
  %5712 = vdwg.mxu0
  %5713 = vmatprep.subr.mxu0 0.0
  %5714 = vmatpush1.msra.mxu0 %v5603
  %5715 = vmatprep.subr.mxu0 0.0
  %5716 = vmatpush1.msra.mxu0 %v5604
  %5717 = vmatprep.subr.mxu0 0.0
  %5718 = vmatpush1.msra.mxu0 %v5605
  %5719 = vmatprep.subr.mxu0 0.0
  %5720 = vmatpush1.msra.mxu0 0.0
  %5721 = vmatprep.subr.mxu0 0.0
  %5722 = vmatpush1.msra.mxu0 0.0
  %5723 = vmatprep.subr.mxu0 0.0
  %5724 = vmatpush1.msra.mxu0 0.0
  %5725 = vmatprep.subr.mxu0 0.0
  %5726 = vmatpush1.msra.mxu0 0.0
  %5727 = vmatprep.subr.mxu0 0.0
  %5728 = vmatpush1.msra.mxu0 0.0
  %5729 = vmatprep.subr.mxu0 0.0
  %5730 = vmatpush1.msra.mxu0 0.0
  %5731 = vmatprep.subr.mxu0 0.0
  %5732 = vmatpush1.msra.mxu0 0.0
  %5733 = vmatprep.subr.mxu0 0.0
  %5734 = vmatpush1.msra.mxu0 0.0
  %5735 = vmatprep.subr.mxu0 0.0
  %5736 = vmatpush1.msra.mxu0 0.0
  %5737 = vmatprep.subr.mxu0 0.0
  %5738 = vmatpush1.msra.mxu0 0.0
  %5739 = vmatprep.subr.mxu0 0.0
  %5740 = vmatpush1.msra.mxu0 0.0
  %5741 = vmatprep.subr.mxu0 0.0
  %5742 = vmatpush1.msra.mxu0 0.0
  %5743 = vmatprep.subr.mxu0 0.0
  %5744 = vmatpush1.msra.mxu0 0.0
  %5745 = vmatprep.subr.mxu0 0.0
  %5746 = vmatpush1.msra.mxu0 0.0
  %5747 = vmatprep.subr.mxu0 0.0
  %5748 = vmatpush1.msra.mxu0 0.0
  %5749 = vmatprep.subr.mxu0 0.0
  %5750 = vmatpush1.msra.mxu0 0.0
  %5751 = vmatprep.subr.mxu0 0.0
  %5752 = vmatpush1.msra.mxu0 0.0
  %5753 = vmatprep.subr.mxu0 0.0
  %5754 = vmatpush1.msra.mxu0 0.0
  %5755 = vmatprep.subr.mxu0 0.0
  %5756 = vmatpush1.msra.mxu0 0.0
  %5757 = vmatprep.subr.mxu0 0.0
  %5758 = vmatpush1.msra.mxu0 0.0
  %5759 = vmatprep.subr.mxu0 0.0
  %5760 = vmatpush1.msra.mxu0 0.0
  %5761 = vmatprep.subr.mxu0 0.0
  %5762 = vmatpush1.msra.mxu0 0.0
  %5763 = vmatprep.subr.mxu0 0.0
  %5764 = vmatpush1.msra.mxu0 0.0
  %5765 = vmatprep.subr.mxu0 0.0
  %5766 = vmatpush1.msra.mxu0 0.0
  %5767 = vmatprep.subr.mxu0 0.0
  %5768 = vmatpush1.msra.mxu0 0.0
  %5769 = vmatprep.subr.mxu0 0.0
  %5770 = vmatpush1.msra.mxu0 0.0
  %5771 = vmatprep.subr.mxu0 0.0
  %5772 = vmatpush1.msra.mxu0 0.0
  %5773 = vmatprep.subr.mxu0 0.0
  %5774 = vmatpush1.msra.mxu0 0.0
  %5775 = vmatprep.subr.mxu0 0.0
  %5776 = vmatpush1.msra.mxu0 0.0
  %5777 = vmatprep.mubr.f32.mxu0 0.0
  %5778 = vmatmul.mubr.f32.gmra.mrb[0].mxu0 %v5314
  %v5779 = vpop.f32.mrb[0].mxu0
  %v5780 = vadd.f32 %v5675, %v5779
  %v5781 = vpop.f32.mrb[0].mxu0
  %5782 = vmatprep.mubr.f32.mxu0 0.0
  %5783 = vmatmul.mubr.f32.gmra.mrb[0].mxu0 %v5317
  %v5784 = vpop.f32.mrb[0].mxu0
  %v5785 = vadd.f32 %v5680, %v5784
  %v5786 = vpop.f32.mrb[0].mxu0
  %5787 = vmatprep.mubr.f32.mxu0 0.0
  %5788 = vmatmul.mubr.f32.gmra.mrb[0].mxu0 %v5320
  %v5789 = vpop.f32.mrb[0].mxu0
  %v5790 = vadd.f32 %v5685, %v5789
  %v5791 = vpop.f32.mrb[0].mxu0
  %5792 = vmatprep.mubr.f32.mxu0 0.0
  %5793 = vmatmul.mubr.f32.gmra.mrb[0].mxu0 %v5323
  %v5794 = vpop.f32.mrb[0].mxu0
  %v5795 = vadd.f32 %v5690, %v5794
  %v5796 = vpop.f32.mrb[0].mxu0
  %5797 = vmatprep.mubr.f32.mxu0 0.0
  %5798 = vmatmul.mubr.f32.gmra.mrb[0].mxu0 %v5326
  %v5799 = vpop.f32.mrb[0].mxu0
  %v5800 = vadd.f32 %v5695, %v5799
  %v5801 = vpop.f32.mrb[0].mxu0
  %5802 = vmatprep.mubr.f32.mxu0 0.0
  %5803 = vmatmul.mubr.f32.gmra.mrb[0].mxu0 %v5329
  %v5804 = vpop.f32.mrb[0].mxu0
  %v5805 = vadd.f32 %v5700, %v5804
  %v5806 = vpop.f32.mrb[0].mxu0
  %5807 = vmatprep.mubr.f32.mxu0 0.0
  %5808 = vmatmul.mubr.f32.gmra.mrb[0].mxu0 %v5332
  %v5809 = vpop.f32.mrb[0].mxu0
  %v5810 = vadd.f32 %v5705, %v5809
  %v5811 = vpop.f32.mrb[0].mxu0
  %5812 = vmatprep.mubr.f32.mxu0 0.0
  %5813 = vmatmul.mubr.f32.gmra.mrb[0].mxu0 %v5335
  %v5814 = vpop.f32.mrb[0].mxu0
  %v5815 = vadd.f32 %v5710, %v5814
  %v5816 = vpop.f32.mrb[0].mxu0
  %5817 = vdwg.mxu0
  %v5819 = vlaneseq
  %v5820 = vshrl.u32 %v5819, 7
  %v5821 = vsub.s32 0, %v5820
  %v5822 = vrot.slane %v5607, %v5821
  %v5824 = vadd.f32 %v5780, %v5822
  %v5825 = vadd.f32 %v5785, %v5822
  %v5826 = vadd.f32 %v5790, %v5822
  %v5827 = vadd.f32 %v5795, %v5822
  %v5828 = vadd.f32 %v5800, %v5822
  %v5829 = vadd.f32 %v5805, %v5822
  %v5830 = vadd.f32 %v5810, %v5822
  %v5831 = vadd.f32 %v5815, %v5822
  %v5832 = vadd.f32 %v5565, %v5824
  %v5833 = vadd.f32 %v5570, %v5825
  %v5834 = vadd.f32 %v5575, %v5826
  %v5835 = vadd.f32 %v5580, %v5827
  %v5836 = vadd.f32 %v5585, %v5828
  %v5837 = vadd.f32 %v5590, %v5829
  %v5838 = vadd.f32 %v5595, %v5830
  %v5839 = vadd.f32 %v5600, %v5831
  %v5840 = vmax.f32 %v5832, 0.0
  %v5841 = vmax.f32 %v5833, 0.0
  %v5842 = vmax.f32 %v5834, 0.0
  %v5843 = vmax.f32 %v5835, 0.0
  %v5844 = vmax.f32 %v5836, 0.0
  %v5845 = vmax.f32 %v5837, 0.0
  %v5846 = vmax.f32 %v5838, 0.0
  %v5847 = vmax.f32 %v5839, 0.0
  %v5848 = vld [vmem:[%s119] sm:$0xff]
  %v5849 = vld [vmem:[%s119 + $0x8] sm:$0xff]
  %v5850 = vld [vmem:[%s119 + $0x10] sm:$0xff]
  %v5851 = vld [vmem:[%s121] sm:$0x1]
  %v5853 = vlaneseq
  %v5854 = vshrl.u32 %v5853, 7
  %v5855 = vsub.s32 0, %v5854
  %v5856 = vrot.slane %v5851, %v5855
  %v5859 = vsel %vm4217, %v5840, 0
  %v5862 = vsel %vm4217, %v5841, 0
  %v5865 = vsel %vm4217, %v5842, 0
  %v5868 = vsel %vm4217, %v5843, 0
  %v5871 = vsel %vm4217, %v5844, 0
  %v5874 = vsel %vm4217, %v5845, 0
  %v5877 = vsel %vm4217, %v5846, 0
  %v5880 = vsel %vm4217, %v5847, 0
  %5882 = vmatprep.subr.mxu0 0.0
  %5883 = vmatpush1.msra.mxu0 %v5848
  %5884 = vmatprep.subr.mxu0 0.0
  %5885 = vmatpush1.msra.mxu0 %v5849
  %5886 = vmatprep.subr.mxu0 0.0
  %5887 = vmatpush1.msra.mxu0 %v5850
  %5888 = vmatprep.subr.mxu0 0.0
  %5889 = vmatpush1.msra.mxu0 0.0
  %5890 = vmatprep.subr.mxu0 0.0
  %5891 = vmatpush1.msra.mxu0 0.0
  %5892 = vmatprep.subr.mxu0 0.0
  %5893 = vmatpush1.msra.mxu0 0.0
  %5894 = vmatprep.subr.mxu0 0.0
  %5895 = vmatpush1.msra.mxu0 0.0
  %5896 = vmatprep.subr.mxu0 0.0
  %5897 = vmatpush1.msra.mxu0 0.0
  %5898 = vmatprep.subr.mxu0 0.0
  %5899 = vmatpush1.msra.mxu0 0.0
  %5900 = vmatprep.subr.mxu0 0.0
  %5901 = vmatpush1.msra.mxu0 0.0
  %5902 = vmatprep.subr.mxu0 0.0
  %5903 = vmatpush1.msra.mxu0 0.0
  %5904 = vmatprep.subr.mxu0 0.0
  %5905 = vmatpush1.msra.mxu0 0.0
  %5906 = vmatprep.subr.mxu0 0.0
  %5907 = vmatpush1.msra.mxu0 0.0
  %5908 = vmatprep.subr.mxu0 0.0
  %5909 = vmatpush1.msra.mxu0 0.0
  %5910 = vmatprep.subr.mxu0 0.0
  %5911 = vmatpush1.msra.mxu0 0.0
  %5912 = vmatprep.subr.mxu0 0.0
  %5913 = vmatpush1.msra.mxu0 0.0
  %5914 = vmatprep.subr.mxu0 0.0
  %5915 = vmatpush1.msra.mxu0 0.0
  %5916 = vmatprep.subr.mxu0 0.0
  %5917 = vmatpush1.msra.mxu0 0.0
  %5918 = vmatprep.subr.mxu0 0.0
  %5919 = vmatpush1.msra.mxu0 0.0
  %5920 = vmatprep.subr.mxu0 0.0
  %5921 = vmatpush1.msra.mxu0 0.0
  %5922 = vmatprep.subr.mxu0 0.0
  %5923 = vmatpush1.msra.mxu0 0.0
  %5924 = vmatprep.subr.mxu0 0.0
  %5925 = vmatpush1.msra.mxu0 0.0
  %5926 = vmatprep.subr.mxu0 0.0
  %5927 = vmatpush1.msra.mxu0 0.0
  %5928 = vmatprep.subr.mxu0 0.0
  %5929 = vmatpush1.msra.mxu0 0.0
  %5930 = vmatprep.subr.mxu0 0.0
  %5931 = vmatpush1.msra.mxu0 0.0
  %5932 = vmatprep.subr.mxu0 0.0
  %5933 = vmatpush1.msra.mxu0 0.0
  %5934 = vmatprep.subr.mxu0 0.0
  %5935 = vmatpush1.msra.mxu0 0.0
  %5936 = vmatprep.subr.mxu0 0.0
  %5937 = vmatpush1.msra.mxu0 0.0
  %5938 = vmatprep.subr.mxu0 0.0
  %5939 = vmatpush1.msra.mxu0 0.0
  %5940 = vmatprep.subr.mxu0 0.0
  %5941 = vmatpush1.msra.mxu0 0.0
  %5942 = vmatprep.subr.mxu0 0.0
  %5943 = vmatpush1.msra.mxu0 0.0
  %5944 = vmatprep.subr.mxu0 0.0
  %5945 = vmatpush1.msra.mxu0 0.0
  %5946 = vmatprep.mubr.f32.mxu0 0.0
  %5947 = vmatmul.mubr.f32.gmra.mrb[0].mxu0 %v5859
  %v5948 = vpop.f32.mrb[0].mxu0
  %v5949 = vadd.f32 %v5856, %v5948
  %v5950 = vpop.f32.mrb[0].mxu0
  %5951 = vmatprep.mubr.f32.mxu0 0.0
  %5952 = vmatmul.mubr.f32.gmra.mrb[0].mxu0 %v5862
  %v5953 = vpop.f32.mrb[0].mxu0
  %v5954 = vadd.f32 %v5856, %v5953
  %v5955 = vpop.f32.mrb[0].mxu0
  %5956 = vmatprep.mubr.f32.mxu0 0.0
  %5957 = vmatmul.mubr.f32.gmra.mrb[0].mxu0 %v5865
  %v5958 = vpop.f32.mrb[0].mxu0
  %v5959 = vadd.f32 %v5856, %v5958
  %v5960 = vpop.f32.mrb[0].mxu0
  %5961 = vmatprep.mubr.f32.mxu0 0.0
  %5962 = vmatmul.mubr.f32.gmra.mrb[0].mxu0 %v5868
  %v5963 = vpop.f32.mrb[0].mxu0
  %v5964 = vadd.f32 %v5856, %v5963
  %v5965 = vpop.f32.mrb[0].mxu0
  %5966 = vmatprep.mubr.f32.mxu0 0.0
  %5967 = vmatmul.mubr.f32.gmra.mrb[0].mxu0 %v5871
  %v5968 = vpop.f32.mrb[0].mxu0
  %v5969 = vadd.f32 %v5856, %v5968
  %v5970 = vpop.f32.mrb[0].mxu0
  %5971 = vmatprep.mubr.f32.mxu0 0.0
  %5972 = vmatmul.mubr.f32.gmra.mrb[0].mxu0 %v5874
  %v5973 = vpop.f32.mrb[0].mxu0
  %v5974 = vadd.f32 %v5856, %v5973
  %v5975 = vpop.f32.mrb[0].mxu0
  %5976 = vmatprep.mubr.f32.mxu0 0.0
  %5977 = vmatmul.mubr.f32.gmra.mrb[0].mxu0 %v5877
  %v5978 = vpop.f32.mrb[0].mxu0
  %v5979 = vadd.f32 %v5856, %v5978
  %v5980 = vpop.f32.mrb[0].mxu0
  %5981 = vmatprep.mubr.f32.mxu0 0.0
  %5982 = vmatmul.mubr.f32.gmra.mrb[0].mxu0 %v5880
  %v5983 = vpop.f32.mrb[0].mxu0
  %v5984 = vadd.f32 %v5856, %v5983
  %v5985 = vpop.f32.mrb[0].mxu0
  %5986 = vdwg.mxu0
  %v5987 = vmax.f32 %v5949, 0.0
  %v5988 = vmax.f32 %v5954, 0.0
  %v5989 = vmax.f32 %v5959, 0.0
  %v5990 = vmax.f32 %v5964, 0.0
  %v5991 = vmax.f32 %v5969, 0.0
  %v5992 = vmax.f32 %v5974, 0.0
  %v5993 = vmax.f32 %v5979, 0.0
  %v5994 = vmax.f32 %v5984, 0.0
  %v5995 = vld [vmem:[%s123] sm:$0xff]
  %v5996 = vld [vmem:[%s123 + $0x8] sm:$0xff]
  %v5997 = vld [vmem:[%s123 + $0x10] sm:$0xff]
  %v5998 = vld [vmem:[%s125] sm:$0x1]
  %v6000 = vlaneseq
  %v6001 = vshrl.u32 %v6000, 7
  %v6002 = vsub.s32 0, %v6001
  %v6003 = vrot.slane %v5998, %v6002
  %v6006 = vsel %vm4217, %v5987, 0
  %v6009 = vsel %vm4217, %v5988, 0
  %v6012 = vsel %vm4217, %v5989, 0
  %v6015 = vsel %vm4217, %v5990, 0
  %v6018 = vsel %vm4217, %v5991, 0
  %v6021 = vsel %vm4217, %v5992, 0
  %v6024 = vsel %vm4217, %v5993, 0
  %v6027 = vsel %vm4217, %v5994, 0
  %6029 = vmatprep.subr.mxu0 0.0
  %6030 = vmatpush1.msra.mxu0 %v5995
  %6031 = vmatprep.subr.mxu0 0.0
  %6032 = vmatpush1.msra.mxu0 %v5996
  %6033 = vmatprep.subr.mxu0 0.0
  %6034 = vmatpush1.msra.mxu0 %v5997
  %6035 = vmatprep.subr.mxu0 0.0
  %6036 = vmatpush1.msra.mxu0 0.0
  %6037 = vmatprep.subr.mxu0 0.0
  %6038 = vmatpush1.msra.mxu0 0.0
  %6039 = vmatprep.subr.mxu0 0.0
  %6040 = vmatpush1.msra.mxu0 0.0
  %6041 = vmatprep.subr.mxu0 0.0
  %6042 = vmatpush1.msra.mxu0 0.0
  %6043 = vmatprep.subr.mxu0 0.0
  %6044 = vmatpush1.msra.mxu0 0.0
  %6045 = vmatprep.subr.mxu0 0.0
  %6046 = vmatpush1.msra.mxu0 0.0
  %6047 = vmatprep.subr.mxu0 0.0
  %6048 = vmatpush1.msra.mxu0 0.0
  %6049 = vmatprep.subr.mxu0 0.0
  %6050 = vmatpush1.msra.mxu0 0.0
  %6051 = vmatprep.subr.mxu0 0.0
  %6052 = vmatpush1.msra.mxu0 0.0
  %6053 = vmatprep.subr.mxu0 0.0
  %6054 = vmatpush1.msra.mxu0 0.0
  %6055 = vmatprep.subr.mxu0 0.0
  %6056 = vmatpush1.msra.mxu0 0.0
  %6057 = vmatprep.subr.mxu0 0.0
  %6058 = vmatpush1.msra.mxu0 0.0
  %6059 = vmatprep.subr.mxu0 0.0
  %6060 = vmatpush1.msra.mxu0 0.0
  %6061 = vmatprep.subr.mxu0 0.0
  %6062 = vmatpush1.msra.mxu0 0.0
  %6063 = vmatprep.subr.mxu0 0.0
  %6064 = vmatpush1.msra.mxu0 0.0
  %6065 = vmatprep.subr.mxu0 0.0
  %6066 = vmatpush1.msra.mxu0 0.0
  %6067 = vmatprep.subr.mxu0 0.0
  %6068 = vmatpush1.msra.mxu0 0.0
  %6069 = vmatprep.subr.mxu0 0.0
  %6070 = vmatpush1.msra.mxu0 0.0
  %6071 = vmatprep.subr.mxu0 0.0
  %6072 = vmatpush1.msra.mxu0 0.0
  %6073 = vmatprep.subr.mxu0 0.0
  %6074 = vmatpush1.msra.mxu0 0.0
  %6075 = vmatprep.subr.mxu0 0.0
  %6076 = vmatpush1.msra.mxu0 0.0
  %6077 = vmatprep.subr.mxu0 0.0
  %6078 = vmatpush1.msra.mxu0 0.0
  %6079 = vmatprep.subr.mxu0 0.0
  %6080 = vmatpush1.msra.mxu0 0.0
  %6081 = vmatprep.subr.mxu0 0.0
  %6082 = vmatpush1.msra.mxu0 0.0
  %6083 = vmatprep.subr.mxu0 0.0
  %6084 = vmatpush1.msra.mxu0 0.0
  %6085 = vmatprep.subr.mxu0 0.0
  %6086 = vmatpush1.msra.mxu0 0.0
  %6087 = vmatprep.subr.mxu0 0.0
  %6088 = vmatpush1.msra.mxu0 0.0
  %6089 = vmatprep.subr.mxu0 0.0
  %6090 = vmatpush1.msra.mxu0 0.0
  %6091 = vmatprep.subr.mxu0 0.0
  %6092 = vmatpush1.msra.mxu0 0.0
  %6093 = vmatprep.mubr.f32.mxu0 0.0
  %6094 = vmatmul.mubr.f32.gmra.mrb[0].mxu0 %v6006
  %v6095 = vpop.f32.mrb[0].mxu0
  %v6096 = vadd.f32 %v6003, %v6095
  %v6097 = vpop.f32.mrb[0].mxu0
  %6098 = vmatprep.mubr.f32.mxu0 0.0
  %6099 = vmatmul.mubr.f32.gmra.mrb[0].mxu0 %v6009
  %v6100 = vpop.f32.mrb[0].mxu0
  %v6101 = vadd.f32 %v6003, %v6100
  %v6102 = vpop.f32.mrb[0].mxu0
  %6103 = vmatprep.mubr.f32.mxu0 0.0
  %6104 = vmatmul.mubr.f32.gmra.mrb[0].mxu0 %v6012
  %v6105 = vpop.f32.mrb[0].mxu0
  %v6106 = vadd.f32 %v6003, %v6105
  %v6107 = vpop.f32.mrb[0].mxu0
  %6108 = vmatprep.mubr.f32.mxu0 0.0
  %6109 = vmatmul.mubr.f32.gmra.mrb[0].mxu0 %v6015
  %v6110 = vpop.f32.mrb[0].mxu0
  %v6111 = vadd.f32 %v6003, %v6110
  %v6112 = vpop.f32.mrb[0].mxu0
  %6113 = vmatprep.mubr.f32.mxu0 0.0
  %6114 = vmatmul.mubr.f32.gmra.mrb[0].mxu0 %v6018
  %v6115 = vpop.f32.mrb[0].mxu0
  %v6116 = vadd.f32 %v6003, %v6115
  %v6117 = vpop.f32.mrb[0].mxu0
  %6118 = vmatprep.mubr.f32.mxu0 0.0
  %6119 = vmatmul.mubr.f32.gmra.mrb[0].mxu0 %v6021
  %v6120 = vpop.f32.mrb[0].mxu0
  %v6121 = vadd.f32 %v6003, %v6120
  %v6122 = vpop.f32.mrb[0].mxu0
  %6123 = vmatprep.mubr.f32.mxu0 0.0
  %6124 = vmatmul.mubr.f32.gmra.mrb[0].mxu0 %v6024
  %v6125 = vpop.f32.mrb[0].mxu0
  %v6126 = vadd.f32 %v6003, %v6125
  %v6127 = vpop.f32.mrb[0].mxu0
  %6128 = vmatprep.mubr.f32.mxu0 0.0
  %6129 = vmatmul.mubr.f32.gmra.mrb[0].mxu0 %v6027
  %v6130 = vpop.f32.mrb[0].mxu0
  %v6131 = vadd.f32 %v6003, %v6130
  %v6132 = vpop.f32.mrb[0].mxu0
  %6133 = vdwg.mxu0
  %v6134 = vadd.f32 %v6096, %v5840
  %v6135 = vadd.f32 %v6101, %v5841
  %v6136 = vadd.f32 %v6106, %v5842
  %v6137 = vadd.f32 %v6111, %v5843
  %v6138 = vadd.f32 %v6116, %v5844
  %v6139 = vadd.f32 %v6121, %v5845
  %v6140 = vadd.f32 %v6126, %v5846
  %v6141 = vadd.f32 %v6131, %v5847
  %v6142 = vmax.f32 %v6134, 0.0
  %v6143 = vmax.f32 %v6135, 0.0
  %v6144 = vmax.f32 %v6136, 0.0
  %v6145 = vmax.f32 %v6137, 0.0
  %v6146 = vmax.f32 %v6138, 0.0
  %v6147 = vmax.f32 %v6139, 0.0
  %v6148 = vmax.f32 %v6140, 0.0
  %v6149 = vmax.f32 %v6141, 0.0
  %v6150 = vld [vmem:[%s127] sm:$0xff]
  %v6151 = vld [vmem:[%s127 + $0x8] sm:$0xff]
  %v6152 = vld [vmem:[%s127 + $0x10] sm:$0xff]
  %v6153 = vld [vmem:[%s127 + $0x18] sm:$0xff]
  %v6154 = vld [vmem:[%s129] sm:$0x1]
  %v6156 = vlaneseq
  %v6157 = vshrl.u32 %v6156, 7
  %v6158 = vsub.s32 0, %v6157
  %v6159 = vrot.slane %v6154, %v6158
  %6161 = vmatprep.subr.mxu0 0.0
  %6162 = vmatpush1.msra.mxu0 %v6150
  %6163 = vmatprep.subr.mxu0 0.0
  %6164 = vmatpush1.msra.mxu0 %v6151
  %6165 = vmatprep.subr.mxu0 0.0
  %6166 = vmatpush1.msra.mxu0 %v6152
  %6167 = vmatprep.subr.mxu0 0.0
  %6168 = vmatpush1.msra.mxu0 %v6153
  %6169 = vmatprep.subr.mxu0 0.0
  %6170 = vmatpush1.msra.mxu0 0.0
  %6171 = vmatprep.subr.mxu0 0.0
  %6172 = vmatpush1.msra.mxu0 0.0
  %6173 = vmatprep.subr.mxu0 0.0
  %6174 = vmatpush1.msra.mxu0 0.0
  %6175 = vmatprep.subr.mxu0 0.0
  %6176 = vmatpush1.msra.mxu0 0.0
  %6177 = vmatprep.subr.mxu0 0.0
  %6178 = vmatpush1.msra.mxu0 0.0
  %6179 = vmatprep.subr.mxu0 0.0
  %6180 = vmatpush1.msra.mxu0 0.0
  %6181 = vmatprep.subr.mxu0 0.0
  %6182 = vmatpush1.msra.mxu0 0.0
  %6183 = vmatprep.subr.mxu0 0.0
  %6184 = vmatpush1.msra.mxu0 0.0
  %6185 = vmatprep.subr.mxu0 0.0
  %6186 = vmatpush1.msra.mxu0 0.0
  %6187 = vmatprep.subr.mxu0 0.0
  %6188 = vmatpush1.msra.mxu0 0.0
  %6189 = vmatprep.subr.mxu0 0.0
  %6190 = vmatpush1.msra.mxu0 0.0
  %6191 = vmatprep.subr.mxu0 0.0
  %6192 = vmatpush1.msra.mxu0 0.0
  %6193 = vmatprep.subr.mxu0 0.0
  %6194 = vmatpush1.msra.mxu0 0.0
  %6195 = vmatprep.subr.mxu0 0.0
  %6196 = vmatpush1.msra.mxu0 0.0
  %6197 = vmatprep.subr.mxu0 0.0
  %6198 = vmatpush1.msra.mxu0 0.0
  %6199 = vmatprep.subr.mxu0 0.0
  %6200 = vmatpush1.msra.mxu0 0.0
  %6201 = vmatprep.subr.mxu0 0.0
  %6202 = vmatpush1.msra.mxu0 0.0
  %6203 = vmatprep.subr.mxu0 0.0
  %6204 = vmatpush1.msra.mxu0 0.0
  %6205 = vmatprep.subr.mxu0 0.0
  %6206 = vmatpush1.msra.mxu0 0.0
  %6207 = vmatprep.subr.mxu0 0.0
  %6208 = vmatpush1.msra.mxu0 0.0
  %6209 = vmatprep.subr.mxu0 0.0
  %6210 = vmatpush1.msra.mxu0 0.0
  %6211 = vmatprep.subr.mxu0 0.0
  %6212 = vmatpush1.msra.mxu0 0.0
  %6213 = vmatprep.subr.mxu0 0.0
  %6214 = vmatpush1.msra.mxu0 0.0
  %6215 = vmatprep.subr.mxu0 0.0
  %6216 = vmatpush1.msra.mxu0 0.0
  %6217 = vmatprep.subr.mxu0 0.0
  %6218 = vmatpush1.msra.mxu0 0.0
  %6219 = vmatprep.subr.mxu0 0.0
  %6220 = vmatpush1.msra.mxu0 0.0
  %6221 = vmatprep.subr.mxu0 0.0
  %6222 = vmatpush1.msra.mxu0 0.0
  %6223 = vmatprep.subr.mxu0 0.0
  %6224 = vmatpush1.msra.mxu0 0.0
  %6225 = vmatprep.mubr.f32.mxu0 0.0
  %6226 = vmatmul.mubr.f32.gmra.mrb[0].mxu0 %v3970
  %v6227 = vpop.f32.mrb[0].mxu0
  %v6228 = vadd.f32 %v6159, %v6227
  %v6229 = vpop.f32.mrb[0].mxu0
  %6230 = vmatprep.mubr.f32.mxu0 0.0
  %6231 = vmatmul.mubr.f32.gmra.mrb[0].mxu0 %v3973
  %v6232 = vpop.f32.mrb[0].mxu0
  %v6233 = vadd.f32 %v6159, %v6232
  %v6234 = vpop.f32.mrb[0].mxu0
  %6235 = vmatprep.mubr.f32.mxu0 0.0
  %6236 = vmatmul.mubr.f32.gmra.mrb[0].mxu0 %v3976
  %v6237 = vpop.f32.mrb[0].mxu0
  %v6238 = vadd.f32 %v6159, %v6237
  %v6239 = vpop.f32.mrb[0].mxu0
  %6240 = vmatprep.mubr.f32.mxu0 0.0
  %6241 = vmatmul.mubr.f32.gmra.mrb[0].mxu0 %v3979
  %v6242 = vpop.f32.mrb[0].mxu0
  %v6243 = vadd.f32 %v6159, %v6242
  %v6244 = vpop.f32.mrb[0].mxu0
  %6245 = vmatprep.mubr.f32.mxu0 0.0
  %6246 = vmatmul.mubr.f32.gmra.mrb[0].mxu0 %v3982
  %v6247 = vpop.f32.mrb[0].mxu0
  %v6248 = vadd.f32 %v6159, %v6247
  %v6249 = vpop.f32.mrb[0].mxu0
  %6250 = vmatprep.mubr.f32.mxu0 0.0
  %6251 = vmatmul.mubr.f32.gmra.mrb[0].mxu0 %v3985
  %v6252 = vpop.f32.mrb[0].mxu0
  %v6253 = vadd.f32 %v6159, %v6252
  %v6254 = vpop.f32.mrb[0].mxu0
  %6255 = vmatprep.mubr.f32.mxu0 0.0
  %6256 = vmatmul.mubr.f32.gmra.mrb[0].mxu0 %v3988
  %v6257 = vpop.f32.mrb[0].mxu0
  %v6258 = vadd.f32 %v6159, %v6257
  %v6259 = vpop.f32.mrb[0].mxu0
  %6260 = vmatprep.mubr.f32.mxu0 0.0
  %6261 = vmatmul.mubr.f32.gmra.mrb[0].mxu0 %v3991
  %v6262 = vpop.f32.mrb[0].mxu0
  %v6263 = vadd.f32 %v6159, %v6262
  %v6264 = vpop.f32.mrb[0].mxu0
  %6265 = vdwg.mxu0
  %v6266 = vmax.f32 %v6228, 0.0
  %v6267 = vmax.f32 %v6233, 0.0
  %v6268 = vmax.f32 %v6238, 0.0
  %v6269 = vmax.f32 %v6243, 0.0
  %v6270 = vmax.f32 %v6248, 0.0
  %v6271 = vmax.f32 %v6253, 0.0
  %v6272 = vmax.f32 %v6258, 0.0
  %v6273 = vmax.f32 %v6263, 0.0
  %v6274 = vadd.f32 %v6142, %v6266
  %v6275 = vadd.f32 %v6143, %v6267
  %v6276 = vadd.f32 %v6144, %v6268
  %v6277 = vadd.f32 %v6145, %v6269
  %v6278 = vadd.f32 %v6146, %v6270
  %v6279 = vadd.f32 %v6147, %v6271
  %v6280 = vadd.f32 %v6148, %v6272
  %v6281 = vadd.f32 %v6149, %v6273
  %6282 = vst.msk [vmem:[%s131] sm:$0xff] %vm4217, %v6274
  %6283 = vst.msk [vmem:[%s131 + $0x8] sm:$0xff] %vm4217, %v6275
  %6284 = vst.msk [vmem:[%s131 + $0x10] sm:$0xff] %vm4217, %v6276
  %6285 = vst.msk [vmem:[%s131 + $0x18] sm:$0xff] %vm4217, %v6277
  %6286 = vst.msk [vmem:[%s131 + $0x20] sm:$0xff] %vm4217, %v6278
  %6287 = vst.msk [vmem:[%s131 + $0x28] sm:$0xff] %vm4217, %v6279
  %6288 = vst.msk [vmem:[%s131 + $0x30] sm:$0xff] %vm4217, %v6280
  %6289 = vst.msk [vmem:[%s131 + $0x38] sm:$0xff] %vm4217, %v6281
  // Predicated region
  $region262: #{attention_block2_forward.1} parent=0 // pred_check
    _
  $region263: #{attention_block2_forward.1} parent=0 // pred_check_branch
    %6291 = sbr.rel (0) target = $region265
  $region264: #{attention_block2_forward.1} parent=0 // pred_region
    _
  $region265: #{attention_block2_forward.1} parent=0 // pred_fallthru
    _
  // Predicated region
  $region266: #{attention_block2_forward.1} parent=0 // pred_check
    _
  $region267: #{attention_block2_forward.1} parent=0 // pred_check_branch
    %6293 = sbr.rel (0) target = $region269
  $region268: #{attention_block2_forward.1} parent=0 // pred_region
    _
  $region269: #{attention_block2_forward.1} parent=0 // pred_fallthru
    _

</llo_original>
